<compile_context>
chip_gen: v5e
topology: v5e:2x2
jax: 0.10.0
libtpu: 0.0.40
codegen_flags: <defaults>
</compile_context>

<pallas_src>
import jax
import jax.numpy as jnp
import numpy as np
from jax.experimental import pallas as pl
from jax.experimental.pallas import tpu as pltpu

EMBED_DIM = 21                               # embedding_dim (conv in-channels)
FILTER_NUM = 64                              # filter_num (per-size conv out-channels)
FILTER_SIZES = (3, 5, 7, 9)                  # square filters (3,3),(5,5),(7,7),(9,9)
KMAX = max(FILTER_SIZES)                     # merged filter size (9)
NF_TOTAL = len(FILTER_SIZES) * FILTER_NUM    # 256 merged out-channels
FC_OUT = 1024                                # nn.Linear(4*64, 1024)


# ----------------------------------------------------------------------------- kernels
def make_conv_pool_kernel(H, W, C):
    KC = KMAX * C
    inv_hw = 1.0 / float(H * W)
    # ~64-row matmul chunks: chunk f32 accumulator = 16 vregs, lives in registers.
    ch_rows = max(1, min(H, max(1, 64 // W)))

    def kernel(x_ref, w_ref, b_ref, pooled_ref):
        # x_ref:      (1, H + KMAX - 1, W, KMAX*C) bf16  (dx offsets folded into lanes)
        # w_ref:      (KMAX, KMAX*C, NF_TOTAL)     bf16
        # b_ref:      (1, NF_TOTAL)                f32
        # pooled_ref: (1, 1, NF_TOTAL)             f32
        bias = b_ref[...]                                     # hoisted once
        pooled = jnp.zeros((1, NF_TOTAL), jnp.float32)
        r0 = 0
        while r0 < H:                                         # static chunk loop
            ch = min(ch_rows, H - r0)
            rows = ch * W
            acc = None
            for dy in range(KMAX):                            # 9 MXU matmuls, K = 9*C
                patch = x_ref[0, r0 + dy:r0 + dy + ch, :, :].reshape(rows, KC)
                d = jnp.dot(patch, w_ref[dy], preferred_element_type=jnp.float32)
                acc = d if acc is None else acc + d           # register / MRB accumulate
            y = jnp.maximum(acc + bias, 0.0)                  # conv bias + ReLU (chunk)
            pooled = pooled + jnp.sum(y, axis=0, keepdims=True)   # streaming avg-pool
            r0 += ch
        pooled_ref[0] = pooled * inv_hw

    return kernel


def fc_kernel(p_ref, w_ref, b_ref, o_ref):
    # p_ref: (B, 256) f32, w_ref: (256, 1024) f32, b_ref: (1, 1024) f32, o_ref: (B, 1024)
    o_ref[...] = jnp.dot(p_ref[...], w_ref[...],
                         preferred_element_type=jnp.float32) + b_ref[...]


# ------------------------------------------------------------------- one-time preprocessing
def _merge_conv_weights(conv_params):
    """Zero-pad every filter to KMAX x KMAX, concatenate out-channels.

    Returns:
      w_k: (KMAX, KMAX*EMBED_DIM, NF_TOTAL) bf16, row index = dx*EMBED_DIM + c
      b_k: (1, NF_TOTAL) f32
    """
    w_blocks, b_blocks = [], []
    for (w, b), K in zip(conv_params, FILTER_SIZES):
        off = (KMAX - K) // 2
        w9 = jnp.zeros((FILTER_NUM, EMBED_DIM, KMAX, KMAX), jnp.float32)
        w9 = w9.at[:, :, off:off + K, off:off + K].set(w)
        w_blocks.append(w9)
        b_blocks.append(b)
    w_all = jnp.concatenate(w_blocks, axis=0)        # (NF_TOTAL, C, 9, 9) OIHW, exact merge
    b_all = jnp.concatenate(b_blocks, axis=0)        # (NF_TOTAL,)
    # OIHW -> (KH, KW, C, O) -> (KH, KW*C, O): matches the patch layout [dx*C + c].
    w_k = jnp.transpose(w_all, (2, 3, 1, 0)).reshape(KMAX, KMAX * EMBED_DIM, NF_TOTAL)
    return w_k.astype(jnp.bfloat16), b_all.reshape(1, NF_TOTAL).astype(jnp.float32)


def prepare_params(params):
    """Hoisted out of the forward path: call once at init."""
    conv_params, fc_w, fc_b = params
    w_k, b_k = _merge_conv_weights(conv_params)
    return (w_k, b_k,
            fc_w.astype(jnp.float32),                       # keep FC in f32 for accuracy
            fc_b.reshape(1, FC_OUT).astype(jnp.float32))


def _unfold_width(x):
    """(B,H,W,C) f32 -> (B, H+8, W, 9*C) bf16 with dx folded into lanes + 'same' zero pad."""
    B, H, W, C = x.shape
    p = KMAX // 2
    xb = x.astype(jnp.bfloat16)                                               # cast FIRST
    xw = jnp.pad(xb, ((0, 0), (0, 0), (p, p), (0, 0)))                        # pad W
    cols = jnp.concatenate([xw[:, :, dx:dx + W, :] for dx in range(KMAX)], -1)  # (B,H,W,9C)
    return jnp.pad(cols, ((0, 0), (p, p), (0, 0), (0, 0)))                    # pad H


# --------------------------------------------------------------------------------- forward
def structural_forward(x, prepared):
    """x: (B, H, W, C) float32 NHWC.  Returns (B, FC_OUT) float32."""
    w_k, b_k, fc_w, fc_b = prepared
    B, H, W, C = x.shape
    assert C == EMBED_DIM
    # TODO(synk): for W not a multiple of 16, pad/mask W in the wrapper to keep the per-dy
    #             reshape a free relayout; test shape uses W=16.
    x_cols = _unfold_width(x)                      # (B, H+8, W, 9*C) bf16
    Hp = H + KMAX - 1
    KC = KMAX * C

    pooled = pl.pallas_call(
        make_conv_pool_kernel(H, W, C),
        grid=(B,),
        in_specs=[
            pl.BlockSpec((1, Hp, W, KC), lambda b: (b, 0, 0, 0)),
            pl.BlockSpec((KMAX, KC, NF_TOTAL), lambda b: (0, 0, 0)),
            pl.BlockSpec((1, NF_TOTAL), lambda b: (0, 0)),
        ],
        out_specs=pl.BlockSpec((1, 1, NF_TOTAL), lambda b: (b, 0, 0)),
        out_shape=jax.ShapeDtypeStruct((B, 1, NF_TOTAL), jnp.float32),
        compiler_params=pltpu.CompilerParams(dimension_semantics=("parallel",)),
    )(x_cols, w_k, b_k)

    pooled = pooled.reshape(B, NF_TOTAL)           # (B, 256) f32

    out = pl.pallas_call(
        fc_kernel,
        grid=(1,),
        in_specs=[
            pl.BlockSpec((B, NF_TOTAL), lambda i: (0, 0)),
            pl.BlockSpec((NF_TOTAL, FC_OUT), lambda i: (0, 0)),
            pl.BlockSpec((1, FC_OUT), lambda i: (0, 0)),
        ],
        out_specs=pl.BlockSpec((B, FC_OUT), lambda i: (0, 0)),
        out_shape=jax.ShapeDtypeStruct((B, FC_OUT), jnp.float32),
    )(pooled, fc_w, fc_b)
    # TODO(synk): nn.Dropout(0.5) is identity at inference; training-mode dropout omitted.
    return out


# ----------------------------------------------------------------------- params / reference
def init_params(key):
    conv_params = []
    for K in FILTER_SIZES:
        key, kw, kb = jax.random.split(key, 3)
        fan_in = EMBED_DIM * K * K
        w = jax.random.normal(kw, (FILTER_NUM, EMBED_DIM, K, K), jnp.float32) / np.sqrt(fan_in)
        b = jax.random.normal(kb, (FILTER_NUM,), jnp.float32) * 0.01
        conv_params.append((w, b))
    key, kw, kb = jax.random.split(key, 3)
    fan_in = len(FILTER_SIZES) * FILTER_NUM
    fc_w = jax.random.normal(kw, (fan_in, FC_OUT), jnp.float32) / np.sqrt(fan_in)
    fc_b = jax.random.normal(kb, (FC_OUT,), jnp.float32) * 0.01
    return conv_params, fc_w, fc_b


def reference_forward(x, params):
    """Pure-JAX f32 reference mirroring the PyTorch forward (eval mode)."""
    conv_params, fc_w, fc_b = params
    xt = jnp.transpose(x, (0, 3, 1, 2))                          # NHWC -> NCHW
    pooled = []
    for (w, b), K in zip(conv_params, FILTER_SIZES):
        p = K // 2
        y = jax.lax.conv_general_dilated(
            xt, w, (1, 1), [(p, p), (p, p)],
            dimension_numbers=('NCHW', 'OIHW', 'NCHW'),
            precision=jax.lax.Precision.HIGHEST)
        y = jnp.maximum(y + b[None, :, None, None], 0.0)
        pooled.append(jnp.mean(y, axis=(2, 3)))
    cat = jnp.concatenate(pooled, axis=1)
    return cat @ fc_w + fc_b[None, :]


if __name__ == "__main__":
    key = jax.random.PRNGKey(0)
    pkey, xkey = jax.random.split(key)
    params = init_params(pkey)
    prepared = jax.block_until_ready(prepare_params(params))     # one-time, outside forward

    B, L = 2, 16                                                 # batch=2, spatial 16x16
    x = jax.random.normal(xkey, (B, L, L, EMBED_DIM), jnp.float32)

    fwd = jax.jit(structural_forward)
    out = jax.block_until_ready(fwd(x, prepared))

    ref = reference_forward(x, params)
    assert out.shape == (B, FC_OUT)
    np.testing.assert_allclose(np.asarray(out), np.asarray(ref), rtol=2e-2, atol=2e-2)
    print("KERNEL_OK")
</pallas_src>

<mosaic_0001>
module attributes {stable_mosaic.version = 11 : i64} {
  func.func @fc_kernel(%arg0: i32, %arg1: memref<2x256xf32, #tpu.memory_space<vmem>>, %arg2: memref<256x1024xf32, #tpu.memory_space<vmem>>, %arg3: memref<1x1024xf32, #tpu.memory_space<vmem>>, %arg4: memref<2x1024xf32, #tpu.memory_space<vmem>>) attributes {dimension_semantics = [#tpu.dimension_semantics<arbitrary>], iteration_bounds = array<i64: 1>, scalar_prefetch = 0 : i64, scratch_operands = 0 : i64, tpu.core_type = #tpu.core_type<tc>, window_params = [{pipeline_mode = #tpu.pipeline_mode<synchronous>, transform_indices = @transform_0, window_bounds = array<i64: 2, 256>}, {pipeline_mode = #tpu.pipeline_mode<synchronous>, transform_indices = @transform_1, window_bounds = array<i64: 256, 1024>}, {pipeline_mode = #tpu.pipeline_mode<synchronous>, transform_indices = @transform_2, window_bounds = array<i64: 1, 1024>}, {pipeline_mode = #tpu.pipeline_mode<synchronous>, transform_indices = @transform_3, window_bounds = array<i64: 2, 1024>}]} {
    %c0 = arith.constant 0 : index
    %c0_0 = arith.constant 0 : index
    %0 = vector.load %arg1[%c0, %c0_0] : memref<2x256xf32, #tpu.memory_space<vmem>>, vector<2x256xf32>
    %c0_1 = arith.constant 0 : index
    %c0_2 = arith.constant 0 : index
    %1 = vector.load %arg2[%c0_1, %c0_2] : memref<256x1024xf32, #tpu.memory_space<vmem>>, vector<256x1024xf32>
    %cst = arith.constant dense<0.000000e+00> : vector<2x1024xf32>
    %2 = tpu.matmul %0, %1, %cst {dimension_numbers = #tpu.dot_dimension_numbers<[1], [0], [0], [1], [0, 0, 1, 1], [], []>} : vector<2x256xf32>, vector<256x1024xf32>, vector<2x1024xf32> -> vector<2x1024xf32>
    %c0_3 = arith.constant 0 : index
    %c0_4 = arith.constant 0 : index
    %3 = vector.load %arg3[%c0_3, %c0_4] : memref<1x1024xf32, #tpu.memory_space<vmem>>, vector<1x1024xf32>
    %4 = vector.broadcast %3 : vector<1x1024xf32> to vector<2x1024xf32>
    %5 = arith.addf %2, %4 : vector<2x1024xf32>
    %c0_5 = arith.constant 0 : index
    %c0_6 = arith.constant 0 : index
    %6 = vector.load %arg4[%c0_5, %c0_6] : memref<2x1024xf32, #tpu.memory_space<vmem>>, vector<2x1024xf32>
    tpu.vector_store %arg4[%c0_5, %c0_6], %5 {strides = array<i32>} : memref<2x1024xf32, #tpu.memory_space<vmem>>, vector<2x1024xf32>,
    return
  }
  func.func @transform_0(%arg0: i32) -> (i32, i32) {
    %c0_i32 = arith.constant 0 : i32
    %c0_i32_0 = arith.constant 0 : i32
    %c0_i32_1 = arith.constant 0 : i32
    return %c0_i32, %c0_i32_0 : i32, i32
  }
  func.func @transform_1(%arg0: i32) -> (i32, i32) {
    %c0_i32 = arith.constant 0 : i32
    %c0_i32_0 = arith.constant 0 : i32
    %c0_i32_1 = arith.constant 0 : i32
    return %c0_i32, %c0_i32_0 : i32, i32
  }
  func.func @transform_2(%arg0: i32) -> (i32, i32) {
    %c0_i32 = arith.constant 0 : i32
    %c0_i32_0 = arith.constant 0 : i32
    %c0_i32_1 = arith.constant 0 : i32
    return %c0_i32, %c0_i32_0 : i32, i32
  }
  func.func @transform_3(%arg0: i32) -> (i32, i32) {
    %c0_i32 = arith.constant 0 : i32
    %c0_i32_0 = arith.constant 0 : i32
    %c0_i32_1 = arith.constant 0 : i32
    return %c0_i32, %c0_i32_0 : i32, i32
  }
}

module attributes {stable_mosaic.version = 11 : i64} {
  func.func @kernel(%arg0: i32, %arg1: memref<1x24x16x189xbf16, #tpu.memory_space<vmem>>, %arg2: memref<9x189x256xbf16, #tpu.memory_space<vmem>>, %arg3: memref<1x256xf32, #tpu.memory_space<vmem>>, %arg4: memref<1x1x256xf32, #tpu.memory_space<vmem>>) attributes {dimension_semantics = [#tpu.dimension_semantics<parallel>], iteration_bounds = array<i64: 2>, scalar_prefetch = 0 : i64, scratch_operands = 0 : i64, tpu.core_type = #tpu.core_type<tc>, window_params = [{transform_indices = @transform_0, window_bounds = array<i64: 1, 24, 16, 189>}, {pipeline_mode = #tpu.pipeline_mode<synchronous>, transform_indices = @transform_1, window_bounds = array<i64: 9, 189, 256>}, {pipeline_mode = #tpu.pipeline_mode<synchronous>, transform_indices = @transform_2, window_bounds = array<i64: 1, 256>}, {transform_indices = @transform_3, window_bounds = array<i64: 1, 1, 256>}]} {
    %c0 = arith.constant 0 : index
    %c0_0 = arith.constant 0 : index
    %0 = vector.load %arg3[%c0, %c0_0] : memref<1x256xf32, #tpu.memory_space<vmem>>, vector<1x256xf32>
    %cst = arith.constant 0.000000e+00 : f32
    %1 = vector.broadcast %cst : f32 to vector<1x256xf32>
    %c0_1 = arith.constant 0 : index
    %c0_2 = arith.constant 0 : index
    %c0_3 = arith.constant 0 : index
    %c0_4 = arith.constant 0 : index
    %2 = vector.load %arg1[%c0_1, %c0_2, %c0_3, %c0_4] : memref<1x24x16x189xbf16, #tpu.memory_space<vmem>>, vector<1x4x16x189xbf16>
    %3 = vector.shape_cast %2 : vector<1x4x16x189xbf16> to vector<4x16x189xbf16>
    %4 = vector.shape_cast %3 : vector<4x16x189xbf16> to vector<64x189xbf16>
    %c0_5 = arith.constant 0 : index
    %c0_6 = arith.constant 0 : index
    %c0_7 = arith.constant 0 : index
    %5 = vector.load %arg2[%c0_5, %c0_6, %c0_7] : memref<9x189x256xbf16, #tpu.memory_space<vmem>>, vector<1x189x256xbf16>
    %6 = vector.shape_cast %5 : vector<1x189x256xbf16> to vector<189x256xbf16>
    %cst_8 = arith.constant dense<0.000000e+00> : vector<64x256xf32>
    %7 = tpu.matmul %4, %6, %cst_8 {dimension_numbers = #tpu.dot_dimension_numbers<[1], [0], [0], [1], [0, 0, 1, 1], [], []>} : vector<64x189xbf16>, vector<189x256xbf16>, vector<64x256xf32> -> vector<64x256xf32>
    %c0_9 = arith.constant 0 : index
    %c1 = arith.constant 1 : index
    %c0_10 = arith.constant 0 : index
    %c0_11 = arith.constant 0 : index
    %8 = vector.load %arg1[%c0_9, %c1, %c0_10, %c0_11] : memref<1x24x16x189xbf16, #tpu.memory_space<vmem>>, vector<1x4x16x189xbf16>
    %9 = vector.shape_cast %8 : vector<1x4x16x189xbf16> to vector<4x16x189xbf16>
    %10 = vector.shape_cast %9 : vector<4x16x189xbf16> to vector<64x189xbf16>
    %c1_12 = arith.constant 1 : index
    %c0_13 = arith.constant 0 : index
    %c0_14 = arith.constant 0 : index
    %11 = vector.load %arg2[%c1_12, %c0_13, %c0_14] : memref<9x189x256xbf16, #tpu.memory_space<vmem>>, vector<1x189x256xbf16>
    %12 = vector.shape_cast %11 : vector<1x189x256xbf16> to vector<189x256xbf16>
    %cst_15 = arith.constant dense<0.000000e+00> : vector<64x256xf32>
    %13 = tpu.matmul %10, %12, %cst_15 {dimension_numbers = #tpu.dot_dimension_numbers<[1], [0], [0], [1], [0, 0, 1, 1], [], []>} : vector<64x189xbf16>, vector<189x256xbf16>, vector<64x256xf32> -> vector<64x256xf32>
    %14 = arith.addf %7, %13 : vector<64x256xf32>
    %c0_16 = arith.constant 0 : index
    %c2 = arith.constant 2 : index
    %c0_17 = arith.constant 0 : index
    %c0_18 = arith.constant 0 : index
    %15 = vector.load %arg1[%c0_16, %c2, %c0_17, %c0_18] : memref<1x24x16x189xbf16, #tpu.memory_space<vmem>>, vector<1x4x16x189xbf16>
    %16 = vector.shape_cast %15 : vector<1x4x16x189xbf16> to vector<4x16x189xbf16>
    %17 = vector.shape_cast %16 : vector<4x16x189xbf16> to vector<64x189xbf16>
    %c2_19 = arith.constant 2 : index
    %c0_20 = arith.constant 0 : index
    %c0_21 = arith.constant 0 : index
    %18 = vector.load %arg2[%c2_19, %c0_20, %c0_21] : memref<9x189x256xbf16, #tpu.memory_space<vmem>>, vector<1x189x256xbf16>
    %19 = vector.shape_cast %18 : vector<1x189x256xbf16> to vector<189x256xbf16>
    %cst_22 = arith.constant dense<0.000000e+00> : vector<64x256xf32>
    %20 = tpu.matmul %17, %19, %cst_22 {dimension_numbers = #tpu.dot_dimension_numbers<[1], [0], [0], [1], [0, 0, 1, 1], [], []>} : vector<64x189xbf16>, vector<189x256xbf16>, vector<64x256xf32> -> vector<64x256xf32>
    %21 = arith.addf %14, %20 : vector<64x256xf32>
    %c0_23 = arith.constant 0 : index
    %c3 = arith.constant 3 : index
    %c0_24 = arith.constant 0 : index
    %c0_25 = arith.constant 0 : index
    %22 = vector.load %arg1[%c0_23, %c3, %c0_24, %c0_25] : memref<1x24x16x189xbf16, #tpu.memory_space<vmem>>, vector<1x4x16x189xbf16>
    %23 = vector.shape_cast %22 : vector<1x4x16x189xbf16> to vector<4x16x189xbf16>
    %24 = vector.shape_cast %23 : vector<4x16x189xbf16> to vector<64x189xbf16>
    %c3_26 = arith.constant 3 : index
    %c0_27 = arith.constant 0 : index
    %c0_28 = arith.constant 0 : index
    %25 = vector.load %arg2[%c3_26, %c0_27, %c0_28] : memref<9x189x256xbf16, #tpu.memory_space<vmem>>, vector<1x189x256xbf16>
    %26 = vector.shape_cast %25 : vector<1x189x256xbf16> to vector<189x256xbf16>
    %cst_29 = arith.constant dense<0.000000e+00> : vector<64x256xf32>
    %27 = tpu.matmul %24, %26, %cst_29 {dimension_numbers = #tpu.dot_dimension_numbers<[1], [0], [0], [1], [0, 0, 1, 1], [], []>} : vector<64x189xbf16>, vector<189x256xbf16>, vector<64x256xf32> -> vector<64x256xf32>
    %28 = arith.addf %21, %27 : vector<64x256xf32>
    %c0_30 = arith.constant 0 : index
    %c4 = arith.constant 4 : index
    %c0_31 = arith.constant 0 : index
    %c0_32 = arith.constant 0 : index
    %29 = vector.load %arg1[%c0_30, %c4, %c0_31, %c0_32] : memref<1x24x16x189xbf16, #tpu.memory_space<vmem>>, vector<1x4x16x189xbf16>
    %30 = vector.shape_cast %29 : vector<1x4x16x189xbf16> to vector<4x16x189xbf16>
    %31 = vector.shape_cast %30 : vector<4x16x189xbf16> to vector<64x189xbf16>
    %c4_33 = arith.constant 4 : index
    %c0_34 = arith.constant 0 : index
    %c0_35 = arith.constant 0 : index
    %32 = vector.load %arg2[%c4_33, %c0_34, %c0_35] : memref<9x189x256xbf16, #tpu.memory_space<vmem>>, vector<1x189x256xbf16>
    %33 = vector.shape_cast %32 : vector<1x189x256xbf16> to vector<189x256xbf16>
    %cst_36 = arith.constant dense<0.000000e+00> : vector<64x256xf32>
    %34 = tpu.matmul %31, %33, %cst_36 {dimension_numbers = #tpu.dot_dimension_numbers<[1], [0], [0], [1], [0, 0, 1, 1], [], []>} : vector<64x189xbf16>, vector<189x256xbf16>, vector<64x256xf32> -> vector<64x256xf32>
    %35 = arith.addf %28, %34 : vector<64x256xf32>
    %c0_37 = arith.constant 0 : index
    %c5 = arith.constant 5 : index
    %c0_38 = arith.constant 0 : index
    %c0_39 = arith.constant 0 : index
    %36 = vector.load %arg1[%c0_37, %c5, %c0_38, %c0_39] : memref<1x24x16x189xbf16, #tpu.memory_space<vmem>>, vector<1x4x16x189xbf16>
    %37 = vector.shape_cast %36 : vector<1x4x16x189xbf16> to vector<4x16x189xbf16>
    %38 = vector.shape_cast %37 : vector<4x16x189xbf16> to vector<64x189xbf16>
    %c5_40 = arith.constant 5 : index
    %c0_41 = arith.constant 0 : index
    %c0_42 = arith.constant 0 : index
    %39 = vector.load %arg2[%c5_40, %c0_41, %c0_42] : memref<9x189x256xbf16, #tpu.memory_space<vmem>>, vector<1x189x256xbf16>
    %40 = vector.shape_cast %39 : vector<1x189x256xbf16> to vector<189x256xbf16>
    %cst_43 = arith.constant dense<0.000000e+00> : vector<64x256xf32>
    %41 = tpu.matmul %38, %40, %cst_43 {dimension_numbers = #tpu.dot_dimension_numbers<[1], [0], [0], [1], [0, 0, 1, 1], [], []>} : vector<64x189xbf16>, vector<189x256xbf16>, vector<64x256xf32> -> vector<64x256xf32>
    %42 = arith.addf %35, %41 : vector<64x256xf32>
    %c0_44 = arith.constant 0 : index
    %c6 = arith.constant 6 : index
    %c0_45 = arith.constant 0 : index
    %c0_46 = arith.constant 0 : index
    %43 = vector.load %arg1[%c0_44, %c6, %c0_45, %c0_46] : memref<1x24x16x189xbf16, #tpu.memory_space<vmem>>, vector<1x4x16x189xbf16>
    %44 = vector.shape_cast %43 : vector<1x4x16x189xbf16> to vector<4x16x189xbf16>
    %45 = vector.shape_cast %44 : vector<4x16x189xbf16> to vector<64x189xbf16>
    %c6_47 = arith.constant 6 : index
    %c0_48 = arith.constant 0 : index
    %c0_49 = arith.constant 0 : index
    %46 = vector.load %arg2[%c6_47, %c0_48, %c0_49] : memref<9x189x256xbf16, #tpu.memory_space<vmem>>, vector<1x189x256xbf16>
    %47 = vector.shape_cast %46 : vector<1x189x256xbf16> to vector<189x256xbf16>
    %cst_50 = arith.constant dense<0.000000e+00> : vector<64x256xf32>
    %48 = tpu.matmul %45, %47, %cst_50 {dimension_numbers = #tpu.dot_dimension_numbers<[1], [0], [0], [1], [0, 0, 1, 1], [], []>} : vector<64x189xbf16>, vector<189x256xbf16>, vector<64x256xf32> -> vector<64x256xf32>
    %49 = arith.addf %42, %48 : vector<64x256xf32>
    %c0_51 = arith.constant 0 : index
    %c7 = arith.constant 7 : index
    %c0_52 = arith.constant 0 : index
    %c0_53 = arith.constant 0 : index
    %50 = vector.load %arg1[%c0_51, %c7, %c0_52, %c0_53] : memref<1x24x16x189xbf16, #tpu.memory_space<vmem>>, vector<1x4x16x189xbf16>
    %51 = vector.shape_cast %50 : vector<1x4x16x189xbf16> to vector<4x16x189xbf16>
    %52 = vector.shape_cast %51 : vector<4x16x189xbf16> to vector<64x189xbf16>
    %c7_54 = arith.constant 7 : index
    %c0_55 = arith.constant 0 : index
    %c0_56 = arith.constant 0 : index
    %53 = vector.load %arg2[%c7_54, %c0_55, %c0_56] : memref<9x189x256xbf16, #tpu.memory_space<vmem>>, vector<1x189x256xbf16>
    %54 = vector.shape_cast %53 : vector<1x189x256xbf16> to vector<189x256xbf16>
    %cst_57 = arith.constant dense<0.000000e+00> : vector<64x256xf32>
    %55 = tpu.matmul %52, %54, %cst_57 {dimension_numbers = #tpu.dot_dimension_numbers<[1], [0], [0], [1], [0, 0, 1, 1], [], []>} : vector<64x189xbf16>, vector<189x256xbf16>, vector<64x256xf32> -> vector<64x256xf32>
    %56 = arith.addf %49, %55 : vector<64x256xf32>
    %c0_58 = arith.constant 0 : index
    %c8 = arith.constant 8 : index
    %c0_59 = arith.constant 0 : index
    %c0_60 = arith.constant 0 : index
    %57 = vector.load %arg1[%c0_58, %c8, %c0_59, %c0_60] : memref<1x24x16x189xbf16, #tpu.memory_space<vmem>>, vector<1x4x16x189xbf16>
    %58 = vector.shape_cast %57 : vector<1x4x16x189xbf16> to vector<4x16x189xbf16>
    %59 = vector.shape_cast %58 : vector<4x16x189xbf16> to vector<64x189xbf16>
    %c8_61 = arith.constant 8 : index
    %c0_62 = arith.constant 0 : index
    %c0_63 = arith.constant 0 : index
    %60 = vector.load %arg2[%c8_61, %c0_62, %c0_63] : memref<9x189x256xbf16, #tpu.memory_space<vmem>>, vector<1x189x256xbf16>
    %61 = vector.shape_cast %60 : vector<1x189x256xbf16> to vector<189x256xbf16>
    %cst_64 = arith.constant dense<0.000000e+00> : vector<64x256xf32>
    %62 = tpu.matmul %59, %61, %cst_64 {dimension_numbers = #tpu.dot_dimension_numbers<[1], [0], [0], [1], [0, 0, 1, 1], [], []>} : vector<64x189xbf16>, vector<189x256xbf16>, vector<64x256xf32> -> vector<64x256xf32>
    %63 = arith.addf %56, %62 : vector<64x256xf32>
    %64 = vector.broadcast %0 : vector<1x256xf32> to vector<64x256xf32>
    %65 = arith.addf %63, %64 : vector<64x256xf32>
    %cst_65 = arith.constant 0.000000e+00 : f32
    %66 = vector.broadcast %cst_65 : f32 to vector<64x256xf32>
    %67 = arith.maximumf %65, %66 : vector<64x256xf32>
    %cst_66 = arith.constant dense<0.000000e+00> : vector<256xf32>
    %68 = vector.multi_reduction <add>, %67, %cst_66 [0] : vector<64x256xf32> to vector<256xf32>
    %69 = vector.shape_cast %68 : vector<256xf32> to vector<1x256xf32>
    %70 = arith.addf %1, %69 : vector<1x256xf32>
    %c0_67 = arith.constant 0 : index
    %c4_68 = arith.constant 4 : index
    %c0_69 = arith.constant 0 : index
    %c0_70 = arith.constant 0 : index
    %71 = vector.load %arg1[%c0_67, %c4_68, %c0_69, %c0_70] : memref<1x24x16x189xbf16, #tpu.memory_space<vmem>>, vector<1x4x16x189xbf16>
    %72 = vector.shape_cast %71 : vector<1x4x16x189xbf16> to vector<4x16x189xbf16>
    %73 = vector.shape_cast %72 : vector<4x16x189xbf16> to vector<64x189xbf16>
    %c0_71 = arith.constant 0 : index
    %c0_72 = arith.constant 0 : index
    %c0_73 = arith.constant 0 : index
    %74 = vector.load %arg2[%c0_71, %c0_72, %c0_73] : memref<9x189x256xbf16, #tpu.memory_space<vmem>>, vector<1x189x256xbf16>
    %75 = vector.shape_cast %74 : vector<1x189x256xbf16> to vector<189x256xbf16>
    %cst_74 = arith.constant dense<0.000000e+00> : vector<64x256xf32>
    %76 = tpu.matmul %73, %75, %cst_74 {dimension_numbers = #tpu.dot_dimension_numbers<[1], [0], [0], [1], [0, 0, 1, 1], [], []>} : vector<64x189xbf16>, vector<189x256xbf16>, vector<64x256xf32> -> vector<64x256xf32>
    %c0_75 = arith.constant 0 : index
    %c5_76 = arith.constant 5 : index
    %c0_77 = arith.constant 0 : index
    %c0_78 = arith.constant 0 : index
    %77 = vector.load %arg1[%c0_75, %c5_76, %c0_77, %c0_78] : memref<1x24x16x189xbf16, #tpu.memory_space<vmem>>, vector<1x4x16x189xbf16>
    %78 = vector.shape_cast %77 : vector<1x4x16x189xbf16> to vector<4x16x189xbf16>
    %79 = vector.shape_cast %78 : vector<4x16x189xbf16> to vector<64x189xbf16>
    %c1_79 = arith.constant 1 : index
    %c0_80 = arith.constant 0 : index
    %c0_81 = arith.constant 0 : index
    %80 = vector.load %arg2[%c1_79, %c0_80, %c0_81] : memref<9x189x256xbf16, #tpu.memory_space<vmem>>, vector<1x189x256xbf16>
    %81 = vector.shape_cast %80 : vector<1x189x256xbf16> to vector<189x256xbf16>
    %cst_82 = arith.constant dense<0.000000e+00> : vector<64x256xf32>
    %82 = tpu.matmul %79, %81, %cst_82 {dimension_numbers = #tpu.dot_dimension_numbers<[1], [0], [0], [1], [0, 0, 1, 1], [], []>} : vector<64x189xbf16>, vector<189x256xbf16>, vector<64x256xf32> -> vector<64x256xf32>
    %83 = arith.addf %76, %82 : vector<64x256xf32>
    %c0_83 = arith.constant 0 : index
    %c6_84 = arith.constant 6 : index
    %c0_85 = arith.constant 0 : index
    %c0_86 = arith.constant 0 : index
    %84 = vector.load %arg1[%c0_83, %c6_84, %c0_85, %c0_86] : memref<1x24x16x189xbf16, #tpu.memory_space<vmem>>, vector<1x4x16x189xbf16>
    %85 = vector.shape_cast %84 : vector<1x4x16x189xbf16> to vector<4x16x189xbf16>
    %86 = vector.shape_cast %85 : vector<4x16x189xbf16> to vector<64x189xbf16>
    %c2_87 = arith.constant 2 : index
    %c0_88 = arith.constant 0 : index
    %c0_89 = arith.constant 0 : index
    %87 = vector.load %arg2[%c2_87, %c0_88, %c0_89] : memref<9x189x256xbf16, #tpu.memory_space<vmem>>, vector<1x189x256xbf16>
    %88 = vector.shape_cast %87 : vector<1x189x256xbf16> to vector<189x256xbf16>
    %cst_90 = arith.constant dense<0.000000e+00> : vector<64x256xf32>
    %89 = tpu.matmul %86, %88, %cst_90 {dimension_numbers = #tpu.dot_dimension_numbers<[1], [0], [0], [1], [0, 0, 1, 1], [], []>} : vector<64x189xbf16>, vector<189x256xbf16>, vector<64x256xf32> -> vector<64x256xf32>
    %90 = arith.addf %83, %89 : vector<64x256xf32>
    %c0_91 = arith.constant 0 : index
    %c7_92 = arith.constant 7 : index
    %c0_93 = arith.constant 0 : index
    %c0_94 = arith.constant 0 : index
    %91 = vector.load %arg1[%c0_91, %c7_92, %c0_93, %c0_94] : memref<1x24x16x189xbf16, #tpu.memory_space<vmem>>, vector<1x4x16x189xbf16>
    %92 = vector.shape_cast %91 : vector<1x4x16x189xbf16> to vector<4x16x189xbf16>
    %93 = vector.shape_cast %92 : vector<4x16x189xbf16> to vector<64x189xbf16>
    %c3_95 = arith.constant 3 : index
    %c0_96 = arith.constant 0 : index
    %c0_97 = arith.constant 0 : index
    %94 = vector.load %arg2[%c3_95, %c0_96, %c0_97] : memref<9x189x256xbf16, #tpu.memory_space<vmem>>, vector<1x189x256xbf16>
    %95 = vector.shape_cast %94 : vector<1x189x256xbf16> to vector<189x256xbf16>
    %cst_98 = arith.constant dense<0.000000e+00> : vector<64x256xf32>
    %96 = tpu.matmul %93, %95, %cst_98 {dimension_numbers = #tpu.dot_dimension_numbers<[1], [0], [0], [1], [0, 0, 1, 1], [], []>} : vector<64x189xbf16>, vector<189x256xbf16>, vector<64x256xf32> -> vector<64x256xf32>
    %97 = arith.addf %90, %96 : vector<64x256xf32>
    %c0_99 = arith.constant 0 : index
    %c8_100 = arith.constant 8 : index
    %c0_101 = arith.constant 0 : index
    %c0_102 = arith.constant 0 : index
    %98 = vector.load %arg1[%c0_99, %c8_100, %c0_101, %c0_102] : memref<1x24x16x189xbf16, #tpu.memory_space<vmem>>, vector<1x4x16x189xbf16>
    %99 = vector.shape_cast %98 : vector<1x4x16x189xbf16> to vector<4x16x189xbf16>
    %100 = vector.shape_cast %99 : vector<4x16x189xbf16> to vector<64x189xbf16>
    %c4_103 = arith.constant 4 : index
    %c0_104 = arith.constant 0 : index
    %c0_105 = arith.constant 0 : index
    %101 = vector.load %arg2[%c4_103, %c0_104, %c0_105] : memref<9x189x256xbf16, #tpu.memory_space<vmem>>, vector<1x189x256xbf16>
    %102 = vector.shape_cast %101 : vector<1x189x256xbf16> to vector<189x256xbf16>
    %cst_106 = arith.constant dense<0.000000e+00> : vector<64x256xf32>
    %103 = tpu.matmul %100, %102, %cst_106 {dimension_numbers = #tpu.dot_dimension_numbers<[1], [0], [0], [1], [0, 0, 1, 1], [], []>} : vector<64x189xbf16>, vector<189x256xbf16>, vector<64x256xf32> -> vector<64x256xf32>
    %104 = arith.addf %97, %103 : vector<64x256xf32>
    %c0_107 = arith.constant 0 : index
    %c9 = arith.constant 9 : index
    %c0_108 = arith.constant 0 : index
    %c0_109 = arith.constant 0 : index
    %105 = vector.load %arg1[%c0_107, %c9, %c0_108, %c0_109] : memref<1x24x16x189xbf16, #tpu.memory_space<vmem>>, vector<1x4x16x189xbf16>
    %106 = vector.shape_cast %105 : vector<1x4x16x189xbf16> to vector<4x16x189xbf16>
    %107 = vector.shape_cast %106 : vector<4x16x189xbf16> to vector<64x189xbf16>
    %c5_110 = arith.constant 5 : index
    %c0_111 = arith.constant 0 : index
    %c0_112 = arith.constant 0 : index
    %108 = vector.load %arg2[%c5_110, %c0_111, %c0_112] : memref<9x189x256xbf16, #tpu.memory_space<vmem>>, vector<1x189x256xbf16>
    %109 = vector.shape_cast %108 : vector<1x189x256xbf16> to vector<189x256xbf16>
    %cst_113 = arith.constant dense<0.000000e+00> : vector<64x256xf32>
    %110 = tpu.matmul %107, %109, %cst_113 {dimension_numbers = #tpu.dot_dimension_numbers<[1], [0], [0], [1], [0, 0, 1, 1], [], []>} : vector<64x189xbf16>, vector<189x256xbf16>, vector<64x256xf32> -> vector<64x256xf32>
    %111 = arith.addf %104, %110 : vector<64x256xf32>
    %c0_114 = arith.constant 0 : index
    %c10 = arith.constant 10 : index
    %c0_115 = arith.constant 0 : index
    %c0_116 = arith.constant 0 : index
    %112 = vector.load %arg1[%c0_114, %c10, %c0_115, %c0_116] : memref<1x24x16x189xbf16, #tpu.memory_space<vmem>>, vector<1x4x16x189xbf16>
    %113 = vector.shape_cast %112 : vector<1x4x16x189xbf16> to vector<4x16x189xbf16>
    %114 = vector.shape_cast %113 : vector<4x16x189xbf16> to vector<64x189xbf16>
    %c6_117 = arith.constant 6 : index
    %c0_118 = arith.constant 0 : index
    %c0_119 = arith.constant 0 : index
    %115 = vector.load %arg2[%c6_117, %c0_118, %c0_119] : memref<9x189x256xbf16, #tpu.memory_space<vmem>>, vector<1x189x256xbf16>
    %116 = vector.shape_cast %115 : vector<1x189x256xbf16> to vector<189x256xbf16>
    %cst_120 = arith.constant dense<0.000000e+00> : vector<64x256xf32>
    %117 = tpu.matmul %114, %116, %cst_120 {dimension_numbers = #tpu.dot_dimension_numbers<[1], [0], [0], [1], [0, 0, 1, 1], [], []>} : vector<64x189xbf16>, vector<189x256xbf16>, vector<64x256xf32> -> vector<64x256xf32>
    %118 = arith.addf %111, %117 : vector<64x256xf32>
    %c0_121 = arith.constant 0 : index
    %c11 = arith.constant 11 : index
    %c0_122 = arith.constant 0 : index
    %c0_123 = arith.constant 0 : index
    %119 = vector.load %arg1[%c0_121, %c11, %c0_122, %c0_123] : memref<1x24x16x189xbf16, #tpu.memory_space<vmem>>, vector<1x4x16x189xbf16>
    %120 = vector.shape_cast %119 : vector<1x4x16x189xbf16> to vector<4x16x189xbf16>
    %121 = vector.shape_cast %120 : vector<4x16x189xbf16> to vector<64x189xbf16>
    %c7_124 = arith.constant 7 : index
    %c0_125 = arith.constant 0 : index
    %c0_126 = arith.constant 0 : index
    %122 = vector.load %arg2[%c7_124, %c0_125, %c0_126] : memref<9x189x256xbf16, #tpu.memory_space<vmem>>, vector<1x189x256xbf16>
    %123 = vector.shape_cast %122 : vector<1x189x256xbf16> to vector<189x256xbf16>
    %cst_127 = arith.constant dense<0.000000e+00> : vector<64x256xf32>
    %124 = tpu.matmul %121, %123, %cst_127 {dimension_numbers = #tpu.dot_dimension_numbers<[1], [0], [0], [1], [0, 0, 1, 1], [], []>} : vector<64x189xbf16>, vector<189x256xbf16>, vector<64x256xf32> -> vector<64x256xf32>
    %125 = arith.addf %118, %124 : vector<64x256xf32>
    %c0_128 = arith.constant 0 : index
    %c12 = arith.constant 12 : index
    %c0_129 = arith.constant 0 : index
    %c0_130 = arith.constant 0 : index
    %126 = vector.load %arg1[%c0_128, %c12, %c0_129, %c0_130] : memref<1x24x16x189xbf16, #tpu.memory_space<vmem>>, vector<1x4x16x189xbf16>
    %127 = vector.shape_cast %126 : vector<1x4x16x189xbf16> to vector<4x16x189xbf16>
    %128 = vector.shape_cast %127 : vector<4x16x189xbf16> to vector<64x189xbf16>
    %c8_131 = arith.constant 8 : index
    %c0_132 = arith.constant 0 : index
    %c0_133 = arith.constant 0 : index
    %129 = vector.load %arg2[%c8_131, %c0_132, %c0_133] : memref<9x189x256xbf16, #tpu.memory_space<vmem>>, vector<1x189x256xbf16>
    %130 = vector.shape_cast %129 : vector<1x189x256xbf16> to vector<189x256xbf16>
    %cst_134 = arith.constant dense<0.000000e+00> : vector<64x256xf32>
    %131 = tpu.matmul %128, %130, %cst_134 {dimension_numbers = #tpu.dot_dimension_numbers<[1], [0], [0], [1], [0, 0, 1, 1], [], []>} : vector<64x189xbf16>, vector<189x256xbf16>, vector<64x256xf32> -> vector<64x256xf32>
    %132 = arith.addf %125, %131 : vector<64x256xf32>
    %133 = vector.broadcast %0 : vector<1x256xf32> to vector<64x256xf32>
    %134 = arith.addf %132, %133 : vector<64x256xf32>
    %cst_135 = arith.constant 0.000000e+00 : f32
    %135 = vector.broadcast %cst_135 : f32 to vector<64x256xf32>
    %136 = arith.maximumf %134, %135 : vector<64x256xf32>
    %cst_136 = arith.constant dense<0.000000e+00> : vector<256xf32>
    %137 = vector.multi_reduction <add>, %136, %cst_136 [0] : vector<64x256xf32> to vector<256xf32>
    %138 = vector.shape_cast %137 : vector<256xf32> to vector<1x256xf32>
    %139 = arith.addf %70, %138 : vector<1x256xf32>
    %c0_137 = arith.constant 0 : index
    %c8_138 = arith.constant 8 : index
    %c0_139 = arith.constant 0 : index
    %c0_140 = arith.constant 0 : index
    %140 = vector.load %arg1[%c0_137, %c8_138, %c0_139, %c0_140] : memref<1x24x16x189xbf16, #tpu.memory_space<vmem>>, vector<1x4x16x189xbf16>
    %141 = vector.shape_cast %140 : vector<1x4x16x189xbf16> to vector<4x16x189xbf16>
    %142 = vector.shape_cast %141 : vector<4x16x189xbf16> to vector<64x189xbf16>
    %c0_141 = arith.constant 0 : index
    %c0_142 = arith.constant 0 : index
    %c0_143 = arith.constant 0 : index
    %143 = vector.load %arg2[%c0_141, %c0_142, %c0_143] : memref<9x189x256xbf16, #tpu.memory_space<vmem>>, vector<1x189x256xbf16>
    %144 = vector.shape_cast %143 : vector<1x189x256xbf16> to vector<189x256xbf16>
    %cst_144 = arith.constant dense<0.000000e+00> : vector<64x256xf32>
    %145 = tpu.matmul %142, %144, %cst_144 {dimension_numbers = #tpu.dot_dimension_numbers<[1], [0], [0], [1], [0, 0, 1, 1], [], []>} : vector<64x189xbf16>, vector<189x256xbf16>, vector<64x256xf32> -> vector<64x256xf32>
    %c0_145 = arith.constant 0 : index
    %c9_146 = arith.constant 9 : index
    %c0_147 = arith.constant 0 : index
    %c0_148 = arith.constant 0 : index
    %146 = vector.load %arg1[%c0_145, %c9_146, %c0_147, %c0_148] : memref<1x24x16x189xbf16, #tpu.memory_space<vmem>>, vector<1x4x16x189xbf16>
    %147 = vector.shape_cast %146 : vector<1x4x16x189xbf16> to vector<4x16x189xbf16>
    %148 = vector.shape_cast %147 : vector<4x16x189xbf16> to vector<64x189xbf16>
    %c1_149 = arith.constant 1 : index
    %c0_150 = arith.constant 0 : index
    %c0_151 = arith.constant 0 : index
    %149 = vector.load %arg2[%c1_149, %c0_150, %c0_151] : memref<9x189x256xbf16, #tpu.memory_space<vmem>>, vector<1x189x256xbf16>
    %150 = vector.shape_cast %149 : vector<1x189x256xbf16> to vector<189x256xbf16>
    %cst_152 = arith.constant dense<0.000000e+00> : vector<64x256xf32>
    %151 = tpu.matmul %148, %150, %cst_152 {dimension_numbers = #tpu.dot_dimension_numbers<[1], [0], [0], [1], [0, 0, 1, 1], [], []>} : vector<64x189xbf16>, vector<189x256xbf16>, vector<64x256xf32> -> vector<64x256xf32>
    %152 = arith.addf %145, %151 : vector<64x256xf32>
    %c0_153 = arith.constant 0 : index
    %c10_154 = arith.constant 10 : index
    %c0_155 = arith.constant 0 : index
    %c0_156 = arith.constant 0 : index
    %153 = vector.load %arg1[%c0_153, %c10_154, %c0_155, %c0_156] : memref<1x24x16x189xbf16, #tpu.memory_space<vmem>>, vector<1x4x16x189xbf16>
    %154 = vector.shape_cast %153 : vector<1x4x16x189xbf16> to vector<4x16x189xbf16>
    %155 = vector.shape_cast %154 : vector<4x16x189xbf16> to vector<64x189xbf16>
    %c2_157 = arith.constant 2 : index
    %c0_158 = arith.constant 0 : index
    %c0_159 = arith.constant 0 : index
    %156 = vector.load %arg2[%c2_157, %c0_158, %c0_159] : memref<9x189x256xbf16, #tpu.memory_space<vmem>>, vector<1x189x256xbf16>
    %157 = vector.shape_cast %156 : vector<1x189x256xbf16> to vector<189x256xbf16>
    %cst_160 = arith.constant dense<0.000000e+00> : vector<64x256xf32>
    %158 = tpu.matmul %155, %157, %cst_160 {dimension_numbers = #tpu.dot_dimension_numbers<[1], [0], [0], [1], [0, 0, 1, 1], [], []>} : vector<64x189xbf16>, vector<189x256xbf16>, vector<64x256xf32> -> vector<64x256xf32>
    %159 = arith.addf %152, %158 : vector<64x256xf32>
    %c0_161 = arith.constant 0 : index
    %c11_162 = arith.constant 11 : index
    %c0_163 = arith.constant 0 : index
    %c0_164 = arith.constant 0 : index
    %160 = vector.load %arg1[%c0_161, %c11_162, %c0_163, %c0_164] : memref<1x24x16x189xbf16, #tpu.memory_space<vmem>>, vector<1x4x16x189xbf16>
    %161 = vector.shape_cast %160 : vector<1x4x16x189xbf16> to vector<4x16x189xbf16>
    %162 = vector.shape_cast %161 : vector<4x16x189xbf16> to vector<64x189xbf16>
    %c3_165 = arith.constant 3 : index
    %c0_166 = arith.constant 0 : index
    %c0_167 = arith.constant 0 : index
    %163 = vector.load %arg2[%c3_165, %c0_166, %c0_167] : memref<9x189x256xbf16, #tpu.memory_space<vmem>>, vector<1x189x256xbf16>
    %164 = vector.shape_cast %163 : vector<1x189x256xbf16> to vector<189x256xbf16>
    %cst_168 = arith.constant dense<0.000000e+00> : vector<64x256xf32>
    %165 = tpu.matmul %162, %164, %cst_168 {dimension_numbers = #tpu.dot_dimension_numbers<[1], [0], [0], [1], [0, 0, 1, 1], [], []>} : vector<64x189xbf16>, vector<189x256xbf16>, vector<64x256xf32> -> vector<64x256xf32>
    %166 = arith.addf %159, %165 : vector<64x256xf32>
    %c0_169 = arith.constant 0 : index
    %c12_170 = arith.constant 12 : index
    %c0_171 = arith.constant 0 : index
    %c0_172 = arith.constant 0 : index
    %167 = vector.load %arg1[%c0_169, %c12_170, %c0_171, %c0_172] : memref<1x24x16x189xbf16, #tpu.memory_space<vmem>>, vector<1x4x16x189xbf16>
    %168 = vector.shape_cast %167 : vector<1x4x16x189xbf16> to vector<4x16x189xbf16>
    %169 = vector.shape_cast %168 : vector<4x16x189xbf16> to vector<64x189xbf16>
    %c4_173 = arith.constant 4 : index
    %c0_174 = arith.constant 0 : index
    %c0_175 = arith.constant 0 : index
    %170 = vector.load %arg2[%c4_173, %c0_174, %c0_175] : memref<9x189x256xbf16, #tpu.memory_space<vmem>>, vector<1x189x256xbf16>
    %171 = vector.shape_cast %170 : vector<1x189x256xbf16> to vector<189x256xbf16>
    %cst_176 = arith.constant dense<0.000000e+00> : vector<64x256xf32>
    %172 = tpu.matmul %169, %171, %cst_176 {dimension_numbers = #tpu.dot_dimension_numbers<[1], [0], [0], [1], [0, 0, 1, 1], [], []>} : vector<64x189xbf16>, vector<189x256xbf16>, vector<64x256xf32> -> vector<64x256xf32>
    %173 = arith.addf %166, %172 : vector<64x256xf32>
    %c0_177 = arith.constant 0 : index
    %c13 = arith.constant 13 : index
    %c0_178 = arith.constant 0 : index
    %c0_179 = arith.constant 0 : index
    %174 = vector.load %arg1[%c0_177, %c13, %c0_178, %c0_179] : memref<1x24x16x189xbf16, #tpu.memory_space<vmem>>, vector<1x4x16x189xbf16>
    %175 = vector.shape_cast %174 : vector<1x4x16x189xbf16> to vector<4x16x189xbf16>
    %176 = vector.shape_cast %175 : vector<4x16x189xbf16> to vector<64x189xbf16>
    %c5_180 = arith.constant 5 : index
    %c0_181 = arith.constant 0 : index
    %c0_182 = arith.constant 0 : index
    %177 = vector.load %arg2[%c5_180, %c0_181, %c0_182] : memref<9x189x256xbf16, #tpu.memory_space<vmem>>, vector<1x189x256xbf16>
    %178 = vector.shape_cast %177 : vector<1x189x256xbf16> to vector<189x256xbf16>
    %cst_183 = arith.constant dense<0.000000e+00> : vector<64x256xf32>
    %179 = tpu.matmul %176, %178, %cst_183 {dimension_numbers = #tpu.dot_dimension_numbers<[1], [0], [0], [1], [0, 0, 1, 1], [], []>} : vector<64x189xbf16>, vector<189x256xbf16>, vector<64x256xf32> -> vector<64x256xf32>
    %180 = arith.addf %173, %179 : vector<64x256xf32>
    %c0_184 = arith.constant 0 : index
    %c14 = arith.constant 14 : index
    %c0_185 = arith.constant 0 : index
    %c0_186 = arith.constant 0 : index
    %181 = vector.load %arg1[%c0_184, %c14, %c0_185, %c0_186] : memref<1x24x16x189xbf16, #tpu.memory_space<vmem>>, vector<1x4x16x189xbf16>
    %182 = vector.shape_cast %181 : vector<1x4x16x189xbf16> to vector<4x16x189xbf16>
    %183 = vector.shape_cast %182 : vector<4x16x189xbf16> to vector<64x189xbf16>
    %c6_187 = arith.constant 6 : index
    %c0_188 = arith.constant 0 : index
    %c0_189 = arith.constant 0 : index
    %184 = vector.load %arg2[%c6_187, %c0_188, %c0_189] : memref<9x189x256xbf16, #tpu.memory_space<vmem>>, vector<1x189x256xbf16>
    %185 = vector.shape_cast %184 : vector<1x189x256xbf16> to vector<189x256xbf16>
    %cst_190 = arith.constant dense<0.000000e+00> : vector<64x256xf32>
    %186 = tpu.matmul %183, %185, %cst_190 {dimension_numbers = #tpu.dot_dimension_numbers<[1], [0], [0], [1], [0, 0, 1, 1], [], []>} : vector<64x189xbf16>, vector<189x256xbf16>, vector<64x256xf32> -> vector<64x256xf32>
    %187 = arith.addf %180, %186 : vector<64x256xf32>
    %c0_191 = arith.constant 0 : index
    %c15 = arith.constant 15 : index
    %c0_192 = arith.constant 0 : index
    %c0_193 = arith.constant 0 : index
    %188 = vector.load %arg1[%c0_191, %c15, %c0_192, %c0_193] : memref<1x24x16x189xbf16, #tpu.memory_space<vmem>>, vector<1x4x16x189xbf16>
    %189 = vector.shape_cast %188 : vector<1x4x16x189xbf16> to vector<4x16x189xbf16>
    %190 = vector.shape_cast %189 : vector<4x16x189xbf16> to vector<64x189xbf16>
    %c7_194 = arith.constant 7 : index
    %c0_195 = arith.constant 0 : index
    %c0_196 = arith.constant 0 : index
    %191 = vector.load %arg2[%c7_194, %c0_195, %c0_196] : memref<9x189x256xbf16, #tpu.memory_space<vmem>>, vector<1x189x256xbf16>
    %192 = vector.shape_cast %191 : vector<1x189x256xbf16> to vector<189x256xbf16>
    %cst_197 = arith.constant dense<0.000000e+00> : vector<64x256xf32>
    %193 = tpu.matmul %190, %192, %cst_197 {dimension_numbers = #tpu.dot_dimension_numbers<[1], [0], [0], [1], [0, 0, 1, 1], [], []>} : vector<64x189xbf16>, vector<189x256xbf16>, vector<64x256xf32> -> vector<64x256xf32>
    %194 = arith.addf %187, %193 : vector<64x256xf32>
    %c0_198 = arith.constant 0 : index
    %c16 = arith.constant 16 : index
    %c0_199 = arith.constant 0 : index
    %c0_200 = arith.constant 0 : index
    %195 = vector.load %arg1[%c0_198, %c16, %c0_199, %c0_200] : memref<1x24x16x189xbf16, #tpu.memory_space<vmem>>, vector<1x4x16x189xbf16>
    %196 = vector.shape_cast %195 : vector<1x4x16x189xbf16> to vector<4x16x189xbf16>
    %197 = vector.shape_cast %196 : vector<4x16x189xbf16> to vector<64x189xbf16>
    %c8_201 = arith.constant 8 : index
    %c0_202 = arith.constant 0 : index
    %c0_203 = arith.constant 0 : index
    %198 = vector.load %arg2[%c8_201, %c0_202, %c0_203] : memref<9x189x256xbf16, #tpu.memory_space<vmem>>, vector<1x189x256xbf16>
    %199 = vector.shape_cast %198 : vector<1x189x256xbf16> to vector<189x256xbf16>
    %cst_204 = arith.constant dense<0.000000e+00> : vector<64x256xf32>
    %200 = tpu.matmul %197, %199, %cst_204 {dimension_numbers = #tpu.dot_dimension_numbers<[1], [0], [0], [1], [0, 0, 1, 1], [], []>} : vector<64x189xbf16>, vector<189x256xbf16>, vector<64x256xf32> -> vector<64x256xf32>
    %201 = arith.addf %194, %200 : vector<64x256xf32>
    %202 = vector.broadcast %0 : vector<1x256xf32> to vector<64x256xf32>
    %203 = arith.addf %201, %202 : vector<64x256xf32>
    %cst_205 = arith.constant 0.000000e+00 : f32
    %204 = vector.broadcast %cst_205 : f32 to vector<64x256xf32>
    %205 = arith.maximumf %203, %204 : vector<64x256xf32>
    %cst_206 = arith.constant dense<0.000000e+00> : vector<256xf32>
    %206 = vector.multi_reduction <add>, %205, %cst_206 [0] : vector<64x256xf32> to vector<256xf32>
    %207 = vector.shape_cast %206 : vector<256xf32> to vector<1x256xf32>
    %208 = arith.addf %139, %207 : vector<1x256xf32>
    %c0_207 = arith.constant 0 : index
    %c12_208 = arith.constant 12 : index
    %c0_209 = arith.constant 0 : index
    %c0_210 = arith.constant 0 : index
    %209 = vector.load %arg1[%c0_207, %c12_208, %c0_209, %c0_210] : memref<1x24x16x189xbf16, #tpu.memory_space<vmem>>, vector<1x4x16x189xbf16>
    %210 = vector.shape_cast %209 : vector<1x4x16x189xbf16> to vector<4x16x189xbf16>
    %211 = vector.shape_cast %210 : vector<4x16x189xbf16> to vector<64x189xbf16>
    %c0_211 = arith.constant 0 : index
    %c0_212 = arith.constant 0 : index
    %c0_213 = arith.constant 0 : index
    %212 = vector.load %arg2[%c0_211, %c0_212, %c0_213] : memref<9x189x256xbf16, #tpu.memory_space<vmem>>, vector<1x189x256xbf16>
    %213 = vector.shape_cast %212 : vector<1x189x256xbf16> to vector<189x256xbf16>
    %cst_214 = arith.constant dense<0.000000e+00> : vector<64x256xf32>
    %214 = tpu.matmul %211, %213, %cst_214 {dimension_numbers = #tpu.dot_dimension_numbers<[1], [0], [0], [1], [0, 0, 1, 1], [], []>} : vector<64x189xbf16>, vector<189x256xbf16>, vector<64x256xf32> -> vector<64x256xf32>
    %c0_215 = arith.constant 0 : index
    %c13_216 = arith.constant 13 : index
    %c0_217 = arith.constant 0 : index
    %c0_218 = arith.constant 0 : index
    %215 = vector.load %arg1[%c0_215, %c13_216, %c0_217, %c0_218] : memref<1x24x16x189xbf16, #tpu.memory_space<vmem>>, vector<1x4x16x189xbf16>
    %216 = vector.shape_cast %215 : vector<1x4x16x189xbf16> to vector<4x16x189xbf16>
    %217 = vector.shape_cast %216 : vector<4x16x189xbf16> to vector<64x189xbf16>
    %c1_219 = arith.constant 1 : index
    %c0_220 = arith.constant 0 : index
    %c0_221 = arith.constant 0 : index
    %218 = vector.load %arg2[%c1_219, %c0_220, %c0_221] : memref<9x189x256xbf16, #tpu.memory_space<vmem>>, vector<1x189x256xbf16>
    %219 = vector.shape_cast %218 : vector<1x189x256xbf16> to vector<189x256xbf16>
    %cst_222 = arith.constant dense<0.000000e+00> : vector<64x256xf32>
    %220 = tpu.matmul %217, %219, %cst_222 {dimension_numbers = #tpu.dot_dimension_numbers<[1], [0], [0], [1], [0, 0, 1, 1], [], []>} : vector<64x189xbf16>, vector<189x256xbf16>, vector<64x256xf32> -> vector<64x256xf32>
    %221 = arith.addf %214, %220 : vector<64x256xf32>
    %c0_223 = arith.constant 0 : index
    %c14_224 = arith.constant 14 : index
    %c0_225 = arith.constant 0 : index
    %c0_226 = arith.constant 0 : index
    %222 = vector.load %arg1[%c0_223, %c14_224, %c0_225, %c0_226] : memref<1x24x16x189xbf16, #tpu.memory_space<vmem>>, vector<1x4x16x189xbf16>
    %223 = vector.shape_cast %222 : vector<1x4x16x189xbf16> to vector<4x16x189xbf16>
    %224 = vector.shape_cast %223 : vector<4x16x189xbf16> to vector<64x189xbf16>
    %c2_227 = arith.constant 2 : index
    %c0_228 = arith.constant 0 : index
    %c0_229 = arith.constant 0 : index
    %225 = vector.load %arg2[%c2_227, %c0_228, %c0_229] : memref<9x189x256xbf16, #tpu.memory_space<vmem>>, vector<1x189x256xbf16>
    %226 = vector.shape_cast %225 : vector<1x189x256xbf16> to vector<189x256xbf16>
    %cst_230 = arith.constant dense<0.000000e+00> : vector<64x256xf32>
    %227 = tpu.matmul %224, %226, %cst_230 {dimension_numbers = #tpu.dot_dimension_numbers<[1], [0], [0], [1], [0, 0, 1, 1], [], []>} : vector<64x189xbf16>, vector<189x256xbf16>, vector<64x256xf32> -> vector<64x256xf32>
    %228 = arith.addf %221, %227 : vector<64x256xf32>
    %c0_231 = arith.constant 0 : index
    %c15_232 = arith.constant 15 : index
    %c0_233 = arith.constant 0 : index
    %c0_234 = arith.constant 0 : index
    %229 = vector.load %arg1[%c0_231, %c15_232, %c0_233, %c0_234] : memref<1x24x16x189xbf16, #tpu.memory_space<vmem>>, vector<1x4x16x189xbf16>
    %230 = vector.shape_cast %229 : vector<1x4x16x189xbf16> to vector<4x16x189xbf16>
    %231 = vector.shape_cast %230 : vector<4x16x189xbf16> to vector<64x189xbf16>
    %c3_235 = arith.constant 3 : index
    %c0_236 = arith.constant 0 : index
    %c0_237 = arith.constant 0 : index
    %232 = vector.load %arg2[%c3_235, %c0_236, %c0_237] : memref<9x189x256xbf16, #tpu.memory_space<vmem>>, vector<1x189x256xbf16>
    %233 = vector.shape_cast %232 : vector<1x189x256xbf16> to vector<189x256xbf16>
    %cst_238 = arith.constant dense<0.000000e+00> : vector<64x256xf32>
    %234 = tpu.matmul %231, %233, %cst_238 {dimension_numbers = #tpu.dot_dimension_numbers<[1], [0], [0], [1], [0, 0, 1, 1], [], []>} : vector<64x189xbf16>, vector<189x256xbf16>, vector<64x256xf32> -> vector<64x256xf32>
    %235 = arith.addf %228, %234 : vector<64x256xf32>
    %c0_239 = arith.constant 0 : index
    %c16_240 = arith.constant 16 : index
    %c0_241 = arith.constant 0 : index
    %c0_242 = arith.constant 0 : index
    %236 = vector.load %arg1[%c0_239, %c16_240, %c0_241, %c0_242] : memref<1x24x16x189xbf16, #tpu.memory_space<vmem>>, vector<1x4x16x189xbf16>
    %237 = vector.shape_cast %236 : vector<1x4x16x189xbf16> to vector<4x16x189xbf16>
    %238 = vector.shape_cast %237 : vector<4x16x189xbf16> to vector<64x189xbf16>
    %c4_243 = arith.constant 4 : index
    %c0_244 = arith.constant 0 : index
    %c0_245 = arith.constant 0 : index
    %239 = vector.load %arg2[%c4_243, %c0_244, %c0_245] : memref<9x189x256xbf16, #tpu.memory_space<vmem>>, vector<1x189x256xbf16>
    %240 = vector.shape_cast %239 : vector<1x189x256xbf16> to vector<189x256xbf16>
    %cst_246 = arith.constant dense<0.000000e+00> : vector<64x256xf32>
    %241 = tpu.matmul %238, %240, %cst_246 {dimension_numbers = #tpu.dot_dimension_numbers<[1], [0], [0], [1], [0, 0, 1, 1], [], []>} : vector<64x189xbf16>, vector<189x256xbf16>, vector<64x256xf32> -> vector<64x256xf32>
    %242 = arith.addf %235, %241 : vector<64x256xf32>
    %c0_247 = arith.constant 0 : index
    %c17 = arith.constant 17 : index
    %c0_248 = arith.constant 0 : index
    %c0_249 = arith.constant 0 : index
    %243 = vector.load %arg1[%c0_247, %c17, %c0_248, %c0_249] : memref<1x24x16x189xbf16, #tpu.memory_space<vmem>>, vector<1x4x16x189xbf16>
    %244 = vector.shape_cast %243 : vector<1x4x16x189xbf16> to vector<4x16x189xbf16>
    %245 = vector.shape_cast %244 : vector<4x16x189xbf16> to vector<64x189xbf16>
    %c5_250 = arith.constant 5 : index
    %c0_251 = arith.constant 0 : index
    %c0_252 = arith.constant 0 : index
    %246 = vector.load %arg2[%c5_250, %c0_251, %c0_252] : memref<9x189x256xbf16, #tpu.memory_space<vmem>>, vector<1x189x256xbf16>
    %247 = vector.shape_cast %246 : vector<1x189x256xbf16> to vector<189x256xbf16>
    %cst_253 = arith.constant dense<0.000000e+00> : vector<64x256xf32>
    %248 = tpu.matmul %245, %247, %cst_253 {dimension_numbers = #tpu.dot_dimension_numbers<[1], [0], [0], [1], [0, 0, 1, 1], [], []>} : vector<64x189xbf16>, vector<189x256xbf16>, vector<64x256xf32> -> vector<64x256xf32>
    %249 = arith.addf %242, %248 : vector<64x256xf32>
    %c0_254 = arith.constant 0 : index
    %c18 = arith.constant 18 : index
    %c0_255 = arith.constant 0 : index
    %c0_256 = arith.constant 0 : index
    %250 = vector.load %arg1[%c0_254, %c18, %c0_255, %c0_256] : memref<1x24x16x189xbf16, #tpu.memory_space<vmem>>, vector<1x4x16x189xbf16>
    %251 = vector.shape_cast %250 : vector<1x4x16x189xbf16> to vector<4x16x189xbf16>
    %252 = vector.shape_cast %251 : vector<4x16x189xbf16> to vector<64x189xbf16>
    %c6_257 = arith.constant 6 : index
    %c0_258 = arith.constant 0 : index
    %c0_259 = arith.constant 0 : index
    %253 = vector.load %arg2[%c6_257, %c0_258, %c0_259] : memref<9x189x256xbf16, #tpu.memory_space<vmem>>, vector<1x189x256xbf16>
    %254 = vector.shape_cast %253 : vector<1x189x256xbf16> to vector<189x256xbf16>
    %cst_260 = arith.constant dense<0.000000e+00> : vector<64x256xf32>
    %255 = tpu.matmul %252, %254, %cst_260 {dimension_numbers = #tpu.dot_dimension_numbers<[1], [0], [0], [1], [0, 0, 1, 1], [], []>} : vector<64x189xbf16>, vector<189x256xbf16>, vector<64x256xf32> -> vector<64x256xf32>
    %256 = arith.addf %249, %255 : vector<64x256xf32>
    %c0_261 = arith.constant 0 : index
    %c19 = arith.constant 19 : index
    %c0_262 = arith.constant 0 : index
    %c0_263 = arith.constant 0 : index
    %257 = vector.load %arg1[%c0_261, %c19, %c0_262, %c0_263] : memref<1x24x16x189xbf16, #tpu.memory_space<vmem>>, vector<1x4x16x189xbf16>
    %258 = vector.shape_cast %257 : vector<1x4x16x189xbf16> to vector<4x16x189xbf16>
    %259 = vector.shape_cast %258 : vector<4x16x189xbf16> to vector<64x189xbf16>
    %c7_264 = arith.constant 7 : index
    %c0_265 = arith.constant 0 : index
    %c0_266 = arith.constant 0 : index
    %260 = vector.load %arg2[%c7_264, %c0_265, %c0_266] : memref<9x189x256xbf16, #tpu.memory_space<vmem>>, vector<1x189x256xbf16>
    %261 = vector.shape_cast %260 : vector<1x189x256xbf16> to vector<189x256xbf16>
    %cst_267 = arith.constant dense<0.000000e+00> : vector<64x256xf32>
    %262 = tpu.matmul %259, %261, %cst_267 {dimension_numbers = #tpu.dot_dimension_numbers<[1], [0], [0], [1], [0, 0, 1, 1], [], []>} : vector<64x189xbf16>, vector<189x256xbf16>, vector<64x256xf32> -> vector<64x256xf32>
    %263 = arith.addf %256, %262 : vector<64x256xf32>
    %c0_268 = arith.constant 0 : index
    %c20 = arith.constant 20 : index
    %c0_269 = arith.constant 0 : index
    %c0_270 = arith.constant 0 : index
    %264 = vector.load %arg1[%c0_268, %c20, %c0_269, %c0_270] : memref<1x24x16x189xbf16, #tpu.memory_space<vmem>>, vector<1x4x16x189xbf16>
    %265 = vector.shape_cast %264 : vector<1x4x16x189xbf16> to vector<4x16x189xbf16>
    %266 = vector.shape_cast %265 : vector<4x16x189xbf16> to vector<64x189xbf16>
    %c8_271 = arith.constant 8 : index
    %c0_272 = arith.constant 0 : index
    %c0_273 = arith.constant 0 : index
    %267 = vector.load %arg2[%c8_271, %c0_272, %c0_273] : memref<9x189x256xbf16, #tpu.memory_space<vmem>>, vector<1x189x256xbf16>
    %268 = vector.shape_cast %267 : vector<1x189x256xbf16> to vector<189x256xbf16>
    %cst_274 = arith.constant dense<0.000000e+00> : vector<64x256xf32>
    %269 = tpu.matmul %266, %268, %cst_274 {dimension_numbers = #tpu.dot_dimension_numbers<[1], [0], [0], [1], [0, 0, 1, 1], [], []>} : vector<64x189xbf16>, vector<189x256xbf16>, vector<64x256xf32> -> vector<64x256xf32>
    %270 = arith.addf %263, %269 : vector<64x256xf32>
    %271 = vector.broadcast %0 : vector<1x256xf32> to vector<64x256xf32>
    %272 = arith.addf %270, %271 : vector<64x256xf32>
    %cst_275 = arith.constant 0.000000e+00 : f32
    %273 = vector.broadcast %cst_275 : f32 to vector<64x256xf32>
    %274 = arith.maximumf %272, %273 : vector<64x256xf32>
    %cst_276 = arith.constant dense<0.000000e+00> : vector<256xf32>
    %275 = vector.multi_reduction <add>, %274, %cst_276 [0] : vector<64x256xf32> to vector<256xf32>
    %276 = vector.shape_cast %275 : vector<256xf32> to vector<1x256xf32>
    %277 = arith.addf %208, %276 : vector<1x256xf32>
    %cst_277 = arith.constant 3.906250e-03 : f32
    %278 = vector.broadcast %cst_277 : f32 to vector<1x256xf32>
    %279 = arith.mulf %277, %278 : vector<1x256xf32>
    %c0_278 = arith.constant 0 : index
    %c0_279 = arith.constant 0 : index
    %c0_280 = arith.constant 0 : index
    %280 = vector.load %arg4[%c0_278, %c0_279, %c0_280] : memref<1x1x256xf32, #tpu.memory_space<vmem>>, vector<1x1x256xf32>
    %281 = vector.shape_cast %280 : vector<1x1x256xf32> to vector<1x256xf32>
    %282 = vector.shape_cast %279 : vector<1x256xf32> to vector<1x1x256xf32>
    tpu.vector_store %arg4[%c0_278, %c0_279, %c0_280], %282 {strides = array<i32>} : memref<1x1x256xf32, #tpu.memory_space<vmem>>, vector<1x1x256xf32>,
    return
  }
  func.func @transform_0(%arg0: i32) -> (i32, i32, i32, i32) {
    %c0_i32 = arith.constant 0 : i32
    %c0_i32_0 = arith.constant 0 : i32
    %c0_i32_1 = arith.constant 0 : i32
    %c0_i32_2 = arith.constant 0 : i32
    return %arg0, %c0_i32, %c0_i32_0, %c0_i32_1 : i32, i32, i32, i32
  }
  func.func @transform_1(%arg0: i32) -> (i32, i32, i32) {
    %c0_i32 = arith.constant 0 : i32
    %c0_i32_0 = arith.constant 0 : i32
    %c0_i32_1 = arith.constant 0 : i32
    %c0_i32_2 = arith.constant 0 : i32
    return %c0_i32, %c0_i32_0, %c0_i32_1 : i32, i32, i32
  }
  func.func @transform_2(%arg0: i32) -> (i32, i32) {
    %c0_i32 = arith.constant 0 : i32
    %c0_i32_0 = arith.constant 0 : i32
    %c0_i32_1 = arith.constant 0 : i32
    return %c0_i32, %c0_i32_0 : i32, i32
  }
  func.func @transform_3(%arg0: i32) -> (i32, i32, i32) {
    %c0_i32 = arith.constant 0 : i32
    %c0_i32_0 = arith.constant 0 : i32
    %c0_i32_1 = arith.constant 0 : i32
    return %arg0, %c0_i32, %c0_i32_0 : i32, i32, i32
  }
}

</mosaic_0001>

<llo_original>
// kernel: structural_forward.3
$region0: #{structural_forward.3}
  #allocation0 [shape = 'u32[]', space=smem, size = 0x4, offset = 0x4, fixed_abs, tag = 'smem constant byte address 0x4 - core index']
  #allocation1 [shape = 'u32[72,128]{1,0:T(1,128)}', space=vmem, size = 0x9000, scoped, tag = 'internal scratch']
  %s0 = inlined_call_operand.vmem [shape: f32[2,256], index: 0, kind: input, shape index: {}]
  %s1 = inlined_call_operand.vmem [shape: f32[256,1024], index: 1, kind: input, shape index: {}]
  %s2 = inlined_call_operand.vmem [shape: f32[1,1024], index: 2, kind: input, shape index: {}]
  %s3 = inlined_call_operand.hbm [shape: f32[2,1024], index: 3, kind: output, shape index: {}]
  %s4 = sld [smem:[#allocation0]]
  $region22: #{structural_forward.3} parent=0
    _
  %s6 = ssub.s32 1, %s4
  %s7 = scalar_select 0, %s6, %s4
  $region1: #{structural_forward.3} parent=0
    #allocation2 [shape = 'u8[8192]{0}', space=vmem, size = 0x2000, scoped, tag = 'output window, operand 0, single buffered']
    #allocation3 [shape = 's32[1]{0}', space=sflag, size = 0x4, scoped, tag = 'scoped memory for structural_forward.3']
    %8 = vsyncpa [#allocation3], 0
    // Predicated region
    $region2: #{structural_forward.3} parent=1 // pred_check
      _
    $region3: #{structural_forward.3} parent=1 // pred_check_branch
      %10 = sbr.rel (0) target = $region5
    $region4: #{structural_forward.3} parent=1 // pred_region
      _
    $region5: #{structural_forward.3} parent=1 // pred_fallthru
      _
    // Predicated region
    $region6: #{structural_forward.3} parent=1 // pred_check
      _
    $region7: #{structural_forward.3} parent=1 // pred_check_branch
      %12 = sbr.rel (0) target = $region9
    $region8: #{structural_forward.3} parent=1 // pred_region
      _
    $region9: #{structural_forward.3} parent=1 // pred_fallthru
      _
    // Predicated region
    $region10: #{structural_forward.3} parent=1 // pred_check
      _
    $region11: #{structural_forward.3} parent=1 // pred_check_branch
      %14 = sbr.rel (0) target = $region13
    $region12: #{structural_forward.3} parent=1 // pred_region
      _
    $region13: #{structural_forward.3} parent=1 // pred_fallthru
      _
    %v15 = vld [vmem:[%s0] sm:$0xf]
    %v16 = vld [vmem:[%s1] sm:$0xff]
    %v17 = vld [vmem:[%s1 + $0x8] sm:$0xff]
    %v18 = vld [vmem:[%s1 + $0x10] sm:$0xff]
    %v19 = vld [vmem:[%s1 + $0x18] sm:$0xff]
    %v20 = vld [vmem:[%s1 + $0x20] sm:$0xff]
    %v21 = vld [vmem:[%s1 + $0x28] sm:$0xff]
    %v22 = vld [vmem:[%s1 + $0x30] sm:$0xff]
    %v23 = vld [vmem:[%s1 + $0x38] sm:$0xff]
    %v24 = vld [vmem:[%s1 + $0x40] sm:$0xff]
    %v25 = vld [vmem:[%s1 + $0x48] sm:$0xff]
    %v26 = vld [vmem:[%s1 + $0x50] sm:$0xff]
    %v27 = vld [vmem:[%s1 + $0x58] sm:$0xff]
    %v28 = vld [vmem:[%s1 + $0x60] sm:$0xff]
    %v29 = vld [vmem:[%s1 + $0x68] sm:$0xff]
    %v30 = vld [vmem:[%s1 + $0x70] sm:$0xff]
    %v31 = vld [vmem:[%s1 + $0x78] sm:$0xff]
    %v32 = vld [vmem:[%s1 + $0x80] sm:$0xff]
    %v33 = vld [vmem:[%s1 + $0x88] sm:$0xff]
    %v34 = vld [vmem:[%s1 + $0x90] sm:$0xff]
    %v35 = vld [vmem:[%s1 + $0x98] sm:$0xff]
    %v36 = vld [vmem:[%s1 + $0xa0] sm:$0xff]
    %v37 = vld [vmem:[%s1 + $0xa8] sm:$0xff]
    %v38 = vld [vmem:[%s1 + $0xb0] sm:$0xff]
    %v39 = vld [vmem:[%s1 + $0xb8] sm:$0xff]
    %v40 = vld [vmem:[%s1 + $0xc0] sm:$0xff]
    %v41 = vld [vmem:[%s1 + $0xc8] sm:$0xff]
    %v42 = vld [vmem:[%s1 + $0xd0] sm:$0xff]
    %v43 = vld [vmem:[%s1 + $0xd8] sm:$0xff]
    %v44 = vld [vmem:[%s1 + $0xe0] sm:$0xff]
    %v45 = vld [vmem:[%s1 + $0xe8] sm:$0xff]
    %v46 = vld [vmem:[%s1 + $0xf0] sm:$0xff]
    %v47 = vld [vmem:[%s1 + $0xf8] sm:$0xff]
    %v48 = vld [vmem:[%s1 + $0x100] sm:$0xff]
    %v49 = vld [vmem:[%s1 + $0x108] sm:$0xff]
    %v50 = vld [vmem:[%s1 + $0x110] sm:$0xff]
    %v51 = vld [vmem:[%s1 + $0x118] sm:$0xff]
    %v52 = vld [vmem:[%s1 + $0x120] sm:$0xff]
    %v53 = vld [vmem:[%s1 + $0x128] sm:$0xff]
    %v54 = vld [vmem:[%s1 + $0x130] sm:$0xff]
    %v55 = vld [vmem:[%s1 + $0x138] sm:$0xff]
    %v56 = vld [vmem:[%s1 + $0x140] sm:$0xff]
    %v57 = vld [vmem:[%s1 + $0x148] sm:$0xff]
    %v58 = vld [vmem:[%s1 + $0x150] sm:$0xff]
    %v59 = vld [vmem:[%s1 + $0x158] sm:$0xff]
    %v60 = vld [vmem:[%s1 + $0x160] sm:$0xff]
    %v61 = vld [vmem:[%s1 + $0x168] sm:$0xff]
    %v62 = vld [vmem:[%s1 + $0x170] sm:$0xff]
    %v63 = vld [vmem:[%s1 + $0x178] sm:$0xff]
    %v64 = vld [vmem:[%s1 + $0x180] sm:$0xff]
    %v65 = vld [vmem:[%s1 + $0x188] sm:$0xff]
    %v66 = vld [vmem:[%s1 + $0x190] sm:$0xff]
    %v67 = vld [vmem:[%s1 + $0x198] sm:$0xff]
    %v68 = vld [vmem:[%s1 + $0x1a0] sm:$0xff]
    %v69 = vld [vmem:[%s1 + $0x1a8] sm:$0xff]
    %v70 = vld [vmem:[%s1 + $0x1b0] sm:$0xff]
    %v71 = vld [vmem:[%s1 + $0x1b8] sm:$0xff]
    %v72 = vld [vmem:[%s1 + $0x1c0] sm:$0xff]
    %v73 = vld [vmem:[%s1 + $0x1c8] sm:$0xff]
    %v74 = vld [vmem:[%s1 + $0x1d0] sm:$0xff]
    %v75 = vld [vmem:[%s1 + $0x1d8] sm:$0xff]
    %v76 = vld [vmem:[%s1 + $0x1e0] sm:$0xff]
    %v77 = vld [vmem:[%s1 + $0x1e8] sm:$0xff]
    %v78 = vld [vmem:[%s1 + $0x1f0] sm:$0xff]
    %v79 = vld [vmem:[%s1 + $0x1f8] sm:$0xff]
    %v80 = vld [vmem:[%s1 + $0x200] sm:$0xff]
    %v81 = vld [vmem:[%s1 + $0x208] sm:$0xff]
    %v82 = vld [vmem:[%s1 + $0x210] sm:$0xff]
    %v83 = vld [vmem:[%s1 + $0x218] sm:$0xff]
    %v84 = vld [vmem:[%s1 + $0x220] sm:$0xff]
    %v85 = vld [vmem:[%s1 + $0x228] sm:$0xff]
    %v86 = vld [vmem:[%s1 + $0x230] sm:$0xff]
    %v87 = vld [vmem:[%s1 + $0x238] sm:$0xff]
    %v88 = vld [vmem:[%s1 + $0x240] sm:$0xff]
    %v89 = vld [vmem:[%s1 + $0x248] sm:$0xff]
    %v90 = vld [vmem:[%s1 + $0x250] sm:$0xff]
    %v91 = vld [vmem:[%s1 + $0x258] sm:$0xff]
    %v92 = vld [vmem:[%s1 + $0x260] sm:$0xff]
    %v93 = vld [vmem:[%s1 + $0x268] sm:$0xff]
    %v94 = vld [vmem:[%s1 + $0x270] sm:$0xff]
    %v95 = vld [vmem:[%s1 + $0x278] sm:$0xff]
    %v96 = vld [vmem:[%s1 + $0x280] sm:$0xff]
    %v97 = vld [vmem:[%s1 + $0x288] sm:$0xff]
    %v98 = vld [vmem:[%s1 + $0x290] sm:$0xff]
    %v99 = vld [vmem:[%s1 + $0x298] sm:$0xff]
    %v100 = vld [vmem:[%s1 + $0x2a0] sm:$0xff]
    %v101 = vld [vmem:[%s1 + $0x2a8] sm:$0xff]
    %v102 = vld [vmem:[%s1 + $0x2b0] sm:$0xff]
    %v103 = vld [vmem:[%s1 + $0x2b8] sm:$0xff]
    %v104 = vld [vmem:[%s1 + $0x2c0] sm:$0xff]
    %v105 = vld [vmem:[%s1 + $0x2c8] sm:$0xff]
    %v106 = vld [vmem:[%s1 + $0x2d0] sm:$0xff]
    %v107 = vld [vmem:[%s1 + $0x2d8] sm:$0xff]
    %v108 = vld [vmem:[%s1 + $0x2e0] sm:$0xff]
    %v109 = vld [vmem:[%s1 + $0x2e8] sm:$0xff]
    %v110 = vld [vmem:[%s1 + $0x2f0] sm:$0xff]
    %v111 = vld [vmem:[%s1 + $0x2f8] sm:$0xff]
    %v112 = vld [vmem:[%s1 + $0x300] sm:$0xff]
    %v113 = vld [vmem:[%s1 + $0x308] sm:$0xff]
    %v114 = vld [vmem:[%s1 + $0x310] sm:$0xff]
    %v115 = vld [vmem:[%s1 + $0x318] sm:$0xff]
    %v116 = vld [vmem:[%s1 + $0x320] sm:$0xff]
    %v117 = vld [vmem:[%s1 + $0x328] sm:$0xff]
    %v118 = vld [vmem:[%s1 + $0x330] sm:$0xff]
    %v119 = vld [vmem:[%s1 + $0x338] sm:$0xff]
    %v120 = vld [vmem:[%s1 + $0x340] sm:$0xff]
    %v121 = vld [vmem:[%s1 + $0x348] sm:$0xff]
    %v122 = vld [vmem:[%s1 + $0x350] sm:$0xff]
    %v123 = vld [vmem:[%s1 + $0x358] sm:$0xff]
    %v124 = vld [vmem:[%s1 + $0x360] sm:$0xff]
    %v125 = vld [vmem:[%s1 + $0x368] sm:$0xff]
    %v126 = vld [vmem:[%s1 + $0x370] sm:$0xff]
    %v127 = vld [vmem:[%s1 + $0x378] sm:$0xff]
    %v128 = vld [vmem:[%s1 + $0x380] sm:$0xff]
    %v129 = vld [vmem:[%s1 + $0x388] sm:$0xff]
    %v130 = vld [vmem:[%s1 + $0x390] sm:$0xff]
    %v131 = vld [vmem:[%s1 + $0x398] sm:$0xff]
    %v132 = vld [vmem:[%s1 + $0x3a0] sm:$0xff]
    %v133 = vld [vmem:[%s1 + $0x3a8] sm:$0xff]
    %v134 = vld [vmem:[%s1 + $0x3b0] sm:$0xff]
    %v135 = vld [vmem:[%s1 + $0x3b8] sm:$0xff]
    %v136 = vld [vmem:[%s1 + $0x3c0] sm:$0xff]
    %v137 = vld [vmem:[%s1 + $0x3c8] sm:$0xff]
    %v138 = vld [vmem:[%s1 + $0x3d0] sm:$0xff]
    %v139 = vld [vmem:[%s1 + $0x3d8] sm:$0xff]
    %v140 = vld [vmem:[%s1 + $0x3e0] sm:$0xff]
    %v141 = vld [vmem:[%s1 + $0x3e8] sm:$0xff]
    %v142 = vld [vmem:[%s1 + $0x3f0] sm:$0xff]
    %v143 = vld [vmem:[%s1 + $0x3f8] sm:$0xff]
    %v144 = vld [vmem:[%s1 + $0x400] sm:$0xff]
    %v145 = vld [vmem:[%s1 + $0x408] sm:$0xff]
    %v146 = vld [vmem:[%s1 + $0x410] sm:$0xff]
    %v147 = vld [vmem:[%s1 + $0x418] sm:$0xff]
    %v148 = vld [vmem:[%s1 + $0x420] sm:$0xff]
    %v149 = vld [vmem:[%s1 + $0x428] sm:$0xff]
    %v150 = vld [vmem:[%s1 + $0x430] sm:$0xff]
    %v151 = vld [vmem:[%s1 + $0x438] sm:$0xff]
    %v152 = vld [vmem:[%s1 + $0x440] sm:$0xff]
    %v153 = vld [vmem:[%s1 + $0x448] sm:$0xff]
    %v154 = vld [vmem:[%s1 + $0x450] sm:$0xff]
    %v155 = vld [vmem:[%s1 + $0x458] sm:$0xff]
    %v156 = vld [vmem:[%s1 + $0x460] sm:$0xff]
    %v157 = vld [vmem:[%s1 + $0x468] sm:$0xff]
    %v158 = vld [vmem:[%s1 + $0x470] sm:$0xff]
    %v159 = vld [vmem:[%s1 + $0x478] sm:$0xff]
    %v160 = vld [vmem:[%s1 + $0x480] sm:$0xff]
    %v161 = vld [vmem:[%s1 + $0x488] sm:$0xff]
    %v162 = vld [vmem:[%s1 + $0x490] sm:$0xff]
    %v163 = vld [vmem:[%s1 + $0x498] sm:$0xff]
    %v164 = vld [vmem:[%s1 + $0x4a0] sm:$0xff]
    %v165 = vld [vmem:[%s1 + $0x4a8] sm:$0xff]
    %v166 = vld [vmem:[%s1 + $0x4b0] sm:$0xff]
    %v167 = vld [vmem:[%s1 + $0x4b8] sm:$0xff]
    %v168 = vld [vmem:[%s1 + $0x4c0] sm:$0xff]
    %v169 = vld [vmem:[%s1 + $0x4c8] sm:$0xff]
    %v170 = vld [vmem:[%s1 + $0x4d0] sm:$0xff]
    %v171 = vld [vmem:[%s1 + $0x4d8] sm:$0xff]
    %v172 = vld [vmem:[%s1 + $0x4e0] sm:$0xff]
    %v173 = vld [vmem:[%s1 + $0x4e8] sm:$0xff]
    %v174 = vld [vmem:[%s1 + $0x4f0] sm:$0xff]
    %v175 = vld [vmem:[%s1 + $0x4f8] sm:$0xff]
    %v176 = vld [vmem:[%s1 + $0x500] sm:$0xff]
    %v177 = vld [vmem:[%s1 + $0x508] sm:$0xff]
    %v178 = vld [vmem:[%s1 + $0x510] sm:$0xff]
    %v179 = vld [vmem:[%s1 + $0x518] sm:$0xff]
    %v180 = vld [vmem:[%s1 + $0x520] sm:$0xff]
    %v181 = vld [vmem:[%s1 + $0x528] sm:$0xff]
    %v182 = vld [vmem:[%s1 + $0x530] sm:$0xff]
    %v183 = vld [vmem:[%s1 + $0x538] sm:$0xff]
    %v184 = vld [vmem:[%s1 + $0x540] sm:$0xff]
    %v185 = vld [vmem:[%s1 + $0x548] sm:$0xff]
    %v186 = vld [vmem:[%s1 + $0x550] sm:$0xff]
    %v187 = vld [vmem:[%s1 + $0x558] sm:$0xff]
    %v188 = vld [vmem:[%s1 + $0x560] sm:$0xff]
    %v189 = vld [vmem:[%s1 + $0x568] sm:$0xff]
    %v190 = vld [vmem:[%s1 + $0x570] sm:$0xff]
    %v191 = vld [vmem:[%s1 + $0x578] sm:$0xff]
    %v192 = vld [vmem:[%s1 + $0x580] sm:$0xff]
    %v193 = vld [vmem:[%s1 + $0x588] sm:$0xff]
    %v194 = vld [vmem:[%s1 + $0x590] sm:$0xff]
    %v195 = vld [vmem:[%s1 + $0x598] sm:$0xff]
    %v196 = vld [vmem:[%s1 + $0x5a0] sm:$0xff]
    %v197 = vld [vmem:[%s1 + $0x5a8] sm:$0xff]
    %v198 = vld [vmem:[%s1 + $0x5b0] sm:$0xff]
    %v199 = vld [vmem:[%s1 + $0x5b8] sm:$0xff]
    %v200 = vld [vmem:[%s1 + $0x5c0] sm:$0xff]
    %v201 = vld [vmem:[%s1 + $0x5c8] sm:$0xff]
    %v202 = vld [vmem:[%s1 + $0x5d0] sm:$0xff]
    %v203 = vld [vmem:[%s1 + $0x5d8] sm:$0xff]
    %v204 = vld [vmem:[%s1 + $0x5e0] sm:$0xff]
    %v205 = vld [vmem:[%s1 + $0x5e8] sm:$0xff]
    %v206 = vld [vmem:[%s1 + $0x5f0] sm:$0xff]
    %v207 = vld [vmem:[%s1 + $0x5f8] sm:$0xff]
    %v208 = vld [vmem:[%s1 + $0x600] sm:$0xff]
    %v209 = vld [vmem:[%s1 + $0x608] sm:$0xff]
    %v210 = vld [vmem:[%s1 + $0x610] sm:$0xff]
    %v211 = vld [vmem:[%s1 + $0x618] sm:$0xff]
    %v212 = vld [vmem:[%s1 + $0x620] sm:$0xff]
    %v213 = vld [vmem:[%s1 + $0x628] sm:$0xff]
    %v214 = vld [vmem:[%s1 + $0x630] sm:$0xff]
    %v215 = vld [vmem:[%s1 + $0x638] sm:$0xff]
    %v216 = vld [vmem:[%s1 + $0x640] sm:$0xff]
    %v217 = vld [vmem:[%s1 + $0x648] sm:$0xff]
    %v218 = vld [vmem:[%s1 + $0x650] sm:$0xff]
    %v219 = vld [vmem:[%s1 + $0x658] sm:$0xff]
    %v220 = vld [vmem:[%s1 + $0x660] sm:$0xff]
    %v221 = vld [vmem:[%s1 + $0x668] sm:$0xff]
    %v222 = vld [vmem:[%s1 + $0x670] sm:$0xff]
    %v223 = vld [vmem:[%s1 + $0x678] sm:$0xff]
    %v224 = vld [vmem:[%s1 + $0x680] sm:$0xff]
    %v225 = vld [vmem:[%s1 + $0x688] sm:$0xff]
    %v226 = vld [vmem:[%s1 + $0x690] sm:$0xff]
    %v227 = vld [vmem:[%s1 + $0x698] sm:$0xff]
    %v228 = vld [vmem:[%s1 + $0x6a0] sm:$0xff]
    %v229 = vld [vmem:[%s1 + $0x6a8] sm:$0xff]
    %v230 = vld [vmem:[%s1 + $0x6b0] sm:$0xff]
    %v231 = vld [vmem:[%s1 + $0x6b8] sm:$0xff]
    %v232 = vld [vmem:[%s1 + $0x6c0] sm:$0xff]
    %v233 = vld [vmem:[%s1 + $0x6c8] sm:$0xff]
    %v234 = vld [vmem:[%s1 + $0x6d0] sm:$0xff]
    %v235 = vld [vmem:[%s1 + $0x6d8] sm:$0xff]
    %v236 = vld [vmem:[%s1 + $0x6e0] sm:$0xff]
    %v237 = vld [vmem:[%s1 + $0x6e8] sm:$0xff]
    %v238 = vld [vmem:[%s1 + $0x6f0] sm:$0xff]
    %v239 = vld [vmem:[%s1 + $0x6f8] sm:$0xff]
    %v240 = vld [vmem:[%s1 + $0x700] sm:$0xff]
    %v241 = vld [vmem:[%s1 + $0x708] sm:$0xff]
    %v242 = vld [vmem:[%s1 + $0x710] sm:$0xff]
    %v243 = vld [vmem:[%s1 + $0x718] sm:$0xff]
    %v244 = vld [vmem:[%s1 + $0x720] sm:$0xff]
    %v245 = vld [vmem:[%s1 + $0x728] sm:$0xff]
    %v246 = vld [vmem:[%s1 + $0x730] sm:$0xff]
    %v247 = vld [vmem:[%s1 + $0x738] sm:$0xff]
    %v248 = vld [vmem:[%s1 + $0x740] sm:$0xff]
    %v249 = vld [vmem:[%s1 + $0x748] sm:$0xff]
    %v250 = vld [vmem:[%s1 + $0x750] sm:$0xff]
    %v251 = vld [vmem:[%s1 + $0x758] sm:$0xff]
    %v252 = vld [vmem:[%s1 + $0x760] sm:$0xff]
    %v253 = vld [vmem:[%s1 + $0x768] sm:$0xff]
    %v254 = vld [vmem:[%s1 + $0x770] sm:$0xff]
    %v255 = vld [vmem:[%s1 + $0x778] sm:$0xff]
    %v256 = vld [vmem:[%s1 + $0x780] sm:$0xff]
    %v257 = vld [vmem:[%s1 + $0x788] sm:$0xff]
    %v258 = vld [vmem:[%s1 + $0x790] sm:$0xff]
    %v259 = vld [vmem:[%s1 + $0x798] sm:$0xff]
    %v260 = vld [vmem:[%s1 + $0x7a0] sm:$0xff]
    %v261 = vld [vmem:[%s1 + $0x7a8] sm:$0xff]
    %v262 = vld [vmem:[%s1 + $0x7b0] sm:$0xff]
    %v263 = vld [vmem:[%s1 + $0x7b8] sm:$0xff]
    %v264 = vld [vmem:[%s1 + $0x7c0] sm:$0xff]
    %v265 = vld [vmem:[%s1 + $0x7c8] sm:$0xff]
    %v266 = vld [vmem:[%s1 + $0x7d0] sm:$0xff]
    %v267 = vld [vmem:[%s1 + $0x7d8] sm:$0xff]
    %v268 = vld [vmem:[%s1 + $0x7e0] sm:$0xff]
    %v269 = vld [vmem:[%s1 + $0x7e8] sm:$0xff]
    %v270 = vld [vmem:[%s1 + $0x7f0] sm:$0xff]
    %v271 = vld [vmem:[%s1 + $0x7f8] sm:$0xff]
    %v272 = vld [vmem:[%s2] sm:$0xff]
    %v274 = vperm.slane %v272, 0
    %v275 = vperm.slane %v272, 1
    %v276 = vperm.slane %v272, 2
    %v277 = vperm.slane %v272, 3
    %v278 = vperm.slane %v272, 4
    %v279 = vperm.slane %v272, 5
    %v280 = vperm.slane %v272, 6
    %v281 = vperm.slane %v272, 7
    %291 = vst [vmem:[#allocation1] ss:$4 sm:$0xff] %v15
    %v292 = vld.sshfl [vmem:[#allocation1] sm:$0xff pattern:$0x73625140]
    %v293 = vld.sshfl [vmem:[#allocation1 + $0x8] sm:$0xff pattern:$0x73625140]
    %296 = vmatpush.msra.mxu0 %v136
    %297 = vmatpush.msra.mxu0 %v128
    %298 = vmatpush.msra.mxu0 %v120
    %299 = vmatpush.msra.mxu0 %v112
    %300 = vmatpush.msra.mxu0 %v104
    %301 = vmatpush.msra.mxu0 %v96
    %302 = vmatpush.msra.mxu0 %v88
    %303 = vmatpush.msra.mxu0 %v80
    %304 = vmatpush.msra.mxu0 %v72
    %305 = vmatpush.msra.mxu0 %v64
    %306 = vmatpush.msra.mxu0 %v56
    %307 = vmatpush.msra.mxu0 %v48
    %308 = vmatpush.msra.mxu0 %v40
    %309 = vmatpush.msra.mxu0 %v32
    %310 = vmatpush.msra.mxu0 %v24
    %311 = vmatpush.msra.mxu0 %v16
    %312 = vmatmul.f32.gmra.mxu0 %v292
    %v313 = vpop.f32.mrf.mxu0
    %v314 = vadd.f32 %v274, %v313
    %315 = vdwg.mxu0
    %316 = vmatpush.msra.mxu0 %v264
    %317 = vmatpush.msra.mxu0 %v256
    %318 = vmatpush.msra.mxu0 %v248
    %319 = vmatpush.msra.mxu0 %v240
    %320 = vmatpush.msra.mxu0 %v232
    %321 = vmatpush.msra.mxu0 %v224
    %322 = vmatpush.msra.mxu0 %v216
    %323 = vmatpush.msra.mxu0 %v208
    %324 = vmatpush.msra.mxu0 %v200
    %325 = vmatpush.msra.mxu0 %v192
    %326 = vmatpush.msra.mxu0 %v184
    %327 = vmatpush.msra.mxu0 %v176
    %328 = vmatpush.msra.mxu0 %v168
    %329 = vmatpush.msra.mxu0 %v160
    %330 = vmatpush.msra.mxu0 %v152
    %331 = vmatpush.msra.mxu0 %v144
    %332 = vmatmul.f32.gmra.mxu0 %v293
    %v333 = vpop.f32.mrf.mxu0
    %v334 = vadd.f32 %v314, %v333
    %335 = vdwg.mxu0
    %336 = vmatpush.msra.mxu0 %v137
    %337 = vmatpush.msra.mxu0 %v129
    %338 = vmatpush.msra.mxu0 %v121
    %339 = vmatpush.msra.mxu0 %v113
    %340 = vmatpush.msra.mxu0 %v105
    %341 = vmatpush.msra.mxu0 %v97
    %342 = vmatpush.msra.mxu0 %v89
    %343 = vmatpush.msra.mxu0 %v81
    %344 = vmatpush.msra.mxu0 %v73
    %345 = vmatpush.msra.mxu0 %v65
    %346 = vmatpush.msra.mxu0 %v57
    %347 = vmatpush.msra.mxu0 %v49
    %348 = vmatpush.msra.mxu0 %v41
    %349 = vmatpush.msra.mxu0 %v33
    %350 = vmatpush.msra.mxu0 %v25
    %351 = vmatpush.msra.mxu0 %v17
    %352 = vmatmul.f32.gmra.mxu0 %v292
    %v353 = vpop.f32.mrf.mxu0
    %v354 = vadd.f32 %v275, %v353
    %355 = vdwg.mxu0
    %356 = vmatpush.msra.mxu0 %v265
    %357 = vmatpush.msra.mxu0 %v257
    %358 = vmatpush.msra.mxu0 %v249
    %359 = vmatpush.msra.mxu0 %v241
    %360 = vmatpush.msra.mxu0 %v233
    %361 = vmatpush.msra.mxu0 %v225
    %362 = vmatpush.msra.mxu0 %v217
    %363 = vmatpush.msra.mxu0 %v209
    %364 = vmatpush.msra.mxu0 %v201
    %365 = vmatpush.msra.mxu0 %v193
    %366 = vmatpush.msra.mxu0 %v185
    %367 = vmatpush.msra.mxu0 %v177
    %368 = vmatpush.msra.mxu0 %v169
    %369 = vmatpush.msra.mxu0 %v161
    %370 = vmatpush.msra.mxu0 %v153
    %371 = vmatpush.msra.mxu0 %v145
    %372 = vmatmul.f32.gmra.mxu0 %v293
    %v373 = vpop.f32.mrf.mxu0
    %v374 = vadd.f32 %v354, %v373
    %375 = vdwg.mxu0
    %376 = vmatpush.msra.mxu0 %v138
    %377 = vmatpush.msra.mxu0 %v130
    %378 = vmatpush.msra.mxu0 %v122
    %379 = vmatpush.msra.mxu0 %v114
    %380 = vmatpush.msra.mxu0 %v106
    %381 = vmatpush.msra.mxu0 %v98
    %382 = vmatpush.msra.mxu0 %v90
    %383 = vmatpush.msra.mxu0 %v82
    %384 = vmatpush.msra.mxu0 %v74
    %385 = vmatpush.msra.mxu0 %v66
    %386 = vmatpush.msra.mxu0 %v58
    %387 = vmatpush.msra.mxu0 %v50
    %388 = vmatpush.msra.mxu0 %v42
    %389 = vmatpush.msra.mxu0 %v34
    %390 = vmatpush.msra.mxu0 %v26
    %391 = vmatpush.msra.mxu0 %v18
    %392 = vmatmul.f32.gmra.mxu0 %v292
    %v393 = vpop.f32.mrf.mxu0
    %v394 = vadd.f32 %v276, %v393
    %395 = vdwg.mxu0
    %396 = vmatpush.msra.mxu0 %v266
    %397 = vmatpush.msra.mxu0 %v258
    %398 = vmatpush.msra.mxu0 %v250
    %399 = vmatpush.msra.mxu0 %v242
    %400 = vmatpush.msra.mxu0 %v234
    %401 = vmatpush.msra.mxu0 %v226
    %402 = vmatpush.msra.mxu0 %v218
    %403 = vmatpush.msra.mxu0 %v210
    %404 = vmatpush.msra.mxu0 %v202
    %405 = vmatpush.msra.mxu0 %v194
    %406 = vmatpush.msra.mxu0 %v186
    %407 = vmatpush.msra.mxu0 %v178
    %408 = vmatpush.msra.mxu0 %v170
    %409 = vmatpush.msra.mxu0 %v162
    %410 = vmatpush.msra.mxu0 %v154
    %411 = vmatpush.msra.mxu0 %v146
    %412 = vmatmul.f32.gmra.mxu0 %v293
    %v413 = vpop.f32.mrf.mxu0
    %v414 = vadd.f32 %v394, %v413
    %415 = vdwg.mxu0
    %416 = vmatpush.msra.mxu0 %v139
    %417 = vmatpush.msra.mxu0 %v131
    %418 = vmatpush.msra.mxu0 %v123
    %419 = vmatpush.msra.mxu0 %v115
    %420 = vmatpush.msra.mxu0 %v107
    %421 = vmatpush.msra.mxu0 %v99
    %422 = vmatpush.msra.mxu0 %v91
    %423 = vmatpush.msra.mxu0 %v83
    %424 = vmatpush.msra.mxu0 %v75
    %425 = vmatpush.msra.mxu0 %v67
    %426 = vmatpush.msra.mxu0 %v59
    %427 = vmatpush.msra.mxu0 %v51
    %428 = vmatpush.msra.mxu0 %v43
    %429 = vmatpush.msra.mxu0 %v35
    %430 = vmatpush.msra.mxu0 %v27
    %431 = vmatpush.msra.mxu0 %v19
    %432 = vmatmul.f32.gmra.mxu0 %v292
    %v433 = vpop.f32.mrf.mxu0
    %v434 = vadd.f32 %v277, %v433
    %435 = vdwg.mxu0
    %436 = vmatpush.msra.mxu0 %v267
    %437 = vmatpush.msra.mxu0 %v259
    %438 = vmatpush.msra.mxu0 %v251
    %439 = vmatpush.msra.mxu0 %v243
    %440 = vmatpush.msra.mxu0 %v235
    %441 = vmatpush.msra.mxu0 %v227
    %442 = vmatpush.msra.mxu0 %v219
    %443 = vmatpush.msra.mxu0 %v211
    %444 = vmatpush.msra.mxu0 %v203
    %445 = vmatpush.msra.mxu0 %v195
    %446 = vmatpush.msra.mxu0 %v187
    %447 = vmatpush.msra.mxu0 %v179
    %448 = vmatpush.msra.mxu0 %v171
    %449 = vmatpush.msra.mxu0 %v163
    %450 = vmatpush.msra.mxu0 %v155
    %451 = vmatpush.msra.mxu0 %v147
    %452 = vmatmul.f32.gmra.mxu0 %v293
    %v453 = vpop.f32.mrf.mxu0
    %v454 = vadd.f32 %v434, %v453
    %455 = vdwg.mxu0
    %456 = vmatpush.msra.mxu0 %v140
    %457 = vmatpush.msra.mxu0 %v132
    %458 = vmatpush.msra.mxu0 %v124
    %459 = vmatpush.msra.mxu0 %v116
    %460 = vmatpush.msra.mxu0 %v108
    %461 = vmatpush.msra.mxu0 %v100
    %462 = vmatpush.msra.mxu0 %v92
    %463 = vmatpush.msra.mxu0 %v84
    %464 = vmatpush.msra.mxu0 %v76
    %465 = vmatpush.msra.mxu0 %v68
    %466 = vmatpush.msra.mxu0 %v60
    %467 = vmatpush.msra.mxu0 %v52
    %468 = vmatpush.msra.mxu0 %v44
    %469 = vmatpush.msra.mxu0 %v36
    %470 = vmatpush.msra.mxu0 %v28
    %471 = vmatpush.msra.mxu0 %v20
    %472 = vmatmul.f32.gmra.mxu0 %v292
    %v473 = vpop.f32.mrf.mxu0
    %v474 = vadd.f32 %v278, %v473
    %475 = vdwg.mxu0
    %476 = vmatpush.msra.mxu0 %v268
    %477 = vmatpush.msra.mxu0 %v260
    %478 = vmatpush.msra.mxu0 %v252
    %479 = vmatpush.msra.mxu0 %v244
    %480 = vmatpush.msra.mxu0 %v236
    %481 = vmatpush.msra.mxu0 %v228
    %482 = vmatpush.msra.mxu0 %v220
    %483 = vmatpush.msra.mxu0 %v212
    %484 = vmatpush.msra.mxu0 %v204
    %485 = vmatpush.msra.mxu0 %v196
    %486 = vmatpush.msra.mxu0 %v188
    %487 = vmatpush.msra.mxu0 %v180
    %488 = vmatpush.msra.mxu0 %v172
    %489 = vmatpush.msra.mxu0 %v164
    %490 = vmatpush.msra.mxu0 %v156
    %491 = vmatpush.msra.mxu0 %v148
    %492 = vmatmul.f32.gmra.mxu0 %v293
    %v493 = vpop.f32.mrf.mxu0
    %v494 = vadd.f32 %v474, %v493
    %495 = vdwg.mxu0
    %496 = vmatpush.msra.mxu0 %v141
    %497 = vmatpush.msra.mxu0 %v133
    %498 = vmatpush.msra.mxu0 %v125
    %499 = vmatpush.msra.mxu0 %v117
    %500 = vmatpush.msra.mxu0 %v109
    %501 = vmatpush.msra.mxu0 %v101
    %502 = vmatpush.msra.mxu0 %v93
    %503 = vmatpush.msra.mxu0 %v85
    %504 = vmatpush.msra.mxu0 %v77
    %505 = vmatpush.msra.mxu0 %v69
    %506 = vmatpush.msra.mxu0 %v61
    %507 = vmatpush.msra.mxu0 %v53
    %508 = vmatpush.msra.mxu0 %v45
    %509 = vmatpush.msra.mxu0 %v37
    %510 = vmatpush.msra.mxu0 %v29
    %511 = vmatpush.msra.mxu0 %v21
    %512 = vmatmul.f32.gmra.mxu0 %v292
    %v513 = vpop.f32.mrf.mxu0
    %v514 = vadd.f32 %v279, %v513
    %515 = vdwg.mxu0
    %516 = vmatpush.msra.mxu0 %v269
    %517 = vmatpush.msra.mxu0 %v261
    %518 = vmatpush.msra.mxu0 %v253
    %519 = vmatpush.msra.mxu0 %v245
    %520 = vmatpush.msra.mxu0 %v237
    %521 = vmatpush.msra.mxu0 %v229
    %522 = vmatpush.msra.mxu0 %v221
    %523 = vmatpush.msra.mxu0 %v213
    %524 = vmatpush.msra.mxu0 %v205
    %525 = vmatpush.msra.mxu0 %v197
    %526 = vmatpush.msra.mxu0 %v189
    %527 = vmatpush.msra.mxu0 %v181
    %528 = vmatpush.msra.mxu0 %v173
    %529 = vmatpush.msra.mxu0 %v165
    %530 = vmatpush.msra.mxu0 %v157
    %531 = vmatpush.msra.mxu0 %v149
    %532 = vmatmul.f32.gmra.mxu0 %v293
    %v533 = vpop.f32.mrf.mxu0
    %v534 = vadd.f32 %v514, %v533
    %535 = vdwg.mxu0
    %536 = vmatpush.msra.mxu0 %v142
    %537 = vmatpush.msra.mxu0 %v134
    %538 = vmatpush.msra.mxu0 %v126
    %539 = vmatpush.msra.mxu0 %v118
    %540 = vmatpush.msra.mxu0 %v110
    %541 = vmatpush.msra.mxu0 %v102
    %542 = vmatpush.msra.mxu0 %v94
    %543 = vmatpush.msra.mxu0 %v86
    %544 = vmatpush.msra.mxu0 %v78
    %545 = vmatpush.msra.mxu0 %v70
    %546 = vmatpush.msra.mxu0 %v62
    %547 = vmatpush.msra.mxu0 %v54
    %548 = vmatpush.msra.mxu0 %v46
    %549 = vmatpush.msra.mxu0 %v38
    %550 = vmatpush.msra.mxu0 %v30
    %551 = vmatpush.msra.mxu0 %v22
    %552 = vmatmul.f32.gmra.mxu0 %v292
    %v553 = vpop.f32.mrf.mxu0
    %v554 = vadd.f32 %v280, %v553
    %555 = vdwg.mxu0
    %556 = vmatpush.msra.mxu0 %v270
    %557 = vmatpush.msra.mxu0 %v262
    %558 = vmatpush.msra.mxu0 %v254
    %559 = vmatpush.msra.mxu0 %v246
    %560 = vmatpush.msra.mxu0 %v238
    %561 = vmatpush.msra.mxu0 %v230
    %562 = vmatpush.msra.mxu0 %v222
    %563 = vmatpush.msra.mxu0 %v214
    %564 = vmatpush.msra.mxu0 %v206
    %565 = vmatpush.msra.mxu0 %v198
    %566 = vmatpush.msra.mxu0 %v190
    %567 = vmatpush.msra.mxu0 %v182
    %568 = vmatpush.msra.mxu0 %v174
    %569 = vmatpush.msra.mxu0 %v166
    %570 = vmatpush.msra.mxu0 %v158
    %571 = vmatpush.msra.mxu0 %v150
    %572 = vmatmul.f32.gmra.mxu0 %v293
    %v573 = vpop.f32.mrf.mxu0
    %v574 = vadd.f32 %v554, %v573
    %575 = vdwg.mxu0
    %576 = vmatpush.msra.mxu0 %v143
    %577 = vmatpush.msra.mxu0 %v135
    %578 = vmatpush.msra.mxu0 %v127
    %579 = vmatpush.msra.mxu0 %v119
    %580 = vmatpush.msra.mxu0 %v111
    %581 = vmatpush.msra.mxu0 %v103
    %582 = vmatpush.msra.mxu0 %v95
    %583 = vmatpush.msra.mxu0 %v87
    %584 = vmatpush.msra.mxu0 %v79
    %585 = vmatpush.msra.mxu0 %v71
    %586 = vmatpush.msra.mxu0 %v63
    %587 = vmatpush.msra.mxu0 %v55
    %588 = vmatpush.msra.mxu0 %v47
    %589 = vmatpush.msra.mxu0 %v39
    %590 = vmatpush.msra.mxu0 %v31
    %591 = vmatpush.msra.mxu0 %v23
    %592 = vmatmul.f32.gmra.mxu0 %v292
    %v593 = vpop.f32.mrf.mxu0
    %v594 = vadd.f32 %v281, %v593
    %595 = vdwg.mxu0
    %596 = vmatpush.msra.mxu0 %v271
    %597 = vmatpush.msra.mxu0 %v263
    %598 = vmatpush.msra.mxu0 %v255
    %599 = vmatpush.msra.mxu0 %v247
    %600 = vmatpush.msra.mxu0 %v239
    %601 = vmatpush.msra.mxu0 %v231
    %602 = vmatpush.msra.mxu0 %v223
    %603 = vmatpush.msra.mxu0 %v215
    %604 = vmatpush.msra.mxu0 %v207
    %605 = vmatpush.msra.mxu0 %v199
    %606 = vmatpush.msra.mxu0 %v191
    %607 = vmatpush.msra.mxu0 %v183
    %608 = vmatpush.msra.mxu0 %v175
    %609 = vmatpush.msra.mxu0 %v167
    %610 = vmatpush.msra.mxu0 %v159
    %611 = vmatpush.msra.mxu0 %v151
    %612 = vmatmul.f32.gmra.mxu0 %v293
    %v613 = vpop.f32.mrf.mxu0
    %v614 = vadd.f32 %v594, %v613
    %615 = vdwg.mxu0
    %v624 = vrot.slane %v374, 6
    %v625 = vrot.slane %v414, 4
    %v626 = vrot.slane %v454, 2
    %v627 = vrot.slane %v534, 6
    %v628 = vrot.slane %v574, 4
    %v629 = vrot.slane %v614, 2
    %vm630 = vcmask 1041408
    %v631 = vsel %vm630, %v334, %v624
    %vm632 = vcmask 1045508
    %v633 = vsel %vm632, %v625, %v626
    %vm634 = vcmask 1043456
    %v635 = vsel %vm634, %v631, %v633
    %v636 = vsel %vm630, %v494, %v627
    %v637 = vsel %vm632, %v628, %v629
    %v638 = vsel %vm634, %v636, %v637
    %641 = vst [vmem:[#allocation2] sm:$0xff] %v635
    %642 = vst [vmem:[#allocation2 + $0x8] sm:$0xff] %v638
    // Predicated region
    $region14: #{structural_forward.3} parent=1 // pred_check
      _
    $region15: #{structural_forward.3} parent=1 // pred_check_branch
      %644 = sbr.rel (0) target = $region17
    $region16: #{structural_forward.3} parent=1 // pred_region
      %646 = vsyncadd [#allocation3], 0
      %s648 = sshll.u32 [#allocation2], 4
      %s649 = int_to_ptr.vmem [resolvable:$true] %s648
      %s650 = sshll.u32 %s3, 4
      %s651 = int_to_ptr.hbm [resolvable:$true] %s650
      %653 = dma.vmem_to_hbm [thread:$0]  %s649, 256, %s651, [#allocation3]
    $region17: #{structural_forward.3} parent=1 // pred_fallthru
      _
    // Predicated region
    $region18: #{structural_forward.3} parent=1 // pred_check
      _
    $region19: #{structural_forward.3} parent=1 // pred_check_branch
      %655 = sbr.rel (0) target = $region21
    $region20: #{structural_forward.3} parent=1 // pred_region
      %657 = dma.done [#allocation3], 256
    $region21: #{structural_forward.3} parent=1 // pred_fallthru
      _
    %658 = vsyncpa [#allocation3], 1

// kernel: structural_forward.2
$region0: #{structural_forward.2}
  #allocation0 [shape = 'u32[]', space=smem, size = 0x4, offset = 0x4, fixed_abs, tag = 'smem constant byte address 0x4 - core index']
  #allocation1 [shape = 'u32[72,128]{1,0:T(1,128)}', space=vmem, size = 0x9000, scoped, tag = 'internal scratch']
  %s0 = inlined_call_operand.vmem [shape: bf16[2,24,16,189], index: 0, kind: input, shape index: {}]
  %s1 = inlined_call_operand.vmem [shape: bf16[9,189,256], index: 1, kind: input, shape index: {}]
  %s2 = inlined_call_operand.vmem [shape: f32[1,256], index: 2, kind: input, shape index: {}]
  %s3 = inlined_call_operand.vmem [shape: f32[2,1,256], index: 3, kind: output, shape index: {}]
  %s4 = sld [smem:[#allocation0]]
  $region45: #{structural_forward.2} parent=0
    _
  %s6 = ssub.s32 1, %s4
  %s7 = scalar_select 0, %s6, %s4
  loop: start=0, step=1, limit=4
  $region2: #{structural_forward.2} parent=0 // loop_pre_header
    _
  $region3: #{structural_forward.2} parent=0 // loop_header
    %s9 = sphi 0, %s13
    %p10 = scmp.ge.s32.totalorder %s9, 4
    %s19 = sphi 0, %s21
    %s22 = sphi 0, %s19
    %s23 = sphi 0, %s22
    %s39 = sphi 0, %s23
    %s43 = sphi 0, %s43
    %s45 = sphi 0, %s43
    %s46 = sphi 0, %s45
    %s60 = sphi 0, %s46
    %s64 = sphi 0, %s64
    %s66 = sphi 0, %s64
    %s67 = sphi 0, %s66
    %s81 = sphi 0, %s67
    %s87 = sphi 0, %s89
    %s90 = sphi 0, %s87
    %s91 = sphi 0, %s90
    %s107 = sphi 0, %s91
  $region4: #{structural_forward.2} parent=0 // loop_header_branch
    %12 = sbr.rel (%p10) target = $region8
  $region5: #{structural_forward.2} parent=0 // loop_body
    %s14 = ssub.s32 %s9, 1
    %s15 = ssub.s32 %s9, 2
    %s16 = sadd.s32 %s9, 1
    %s17 = ssub.s32 %s9, %s16
    %p18 = scmp.eq.s32.totalorder %s17, 0
    %s20 = sadd.s32 %s19, 1
    %s21 = scalar_select %p18, %s19, %s20
    %p24 = pneg %p18
    %p25 = scmp.eq.s32.totalorder %s9, 1
    %p26 = por %p24, %p25
    %p27 = scmp.ne.s32.totalorder %s19, %s22
    %p28 = scmp.eq.s32.totalorder %s9, 0
    %p29 = por %p27, %p28
    %p30 = scmp.ne.s32.totalorder %s19, %s22
    %p31 = scmp.eq.s32.totalorder %s14, 1
    %p32 = por %p30, %p31
    %p33 = scmp.ne.s32.totalorder %s22, %s23
    %p34 = scmp.eq.s32.totalorder %s14, 0
    %p35 = por %p33, %p34
    %p36 = scmp.ne.s32.totalorder %s22, %s23
    %p37 = scmp.eq.s32.totalorder %s15, 1
    %p38 = por %p36, %p37
    %p40 = scmp.ne.s32.totalorder %s23, %s39
    %p41 = scmp.eq.s32.totalorder %s15, 0
    %p42 = por %p40, %p41
    %s44 = sadd.s32 %s43, 1
    %p47 = scmp.eq.s32.totalorder %s9, 1
    %p48 = scmp.ne.s32.totalorder %s43, %s45
    %p49 = scmp.eq.s32.totalorder %s9, 0
    %p50 = por %p48, %p49
    %p51 = scmp.ne.s32.totalorder %s43, %s45
    %p52 = scmp.eq.s32.totalorder %s14, 1
    %p53 = por %p51, %p52
    %p54 = scmp.ne.s32.totalorder %s45, %s46
    %p55 = scmp.eq.s32.totalorder %s14, 0
    %p56 = por %p54, %p55
    %p57 = scmp.ne.s32.totalorder %s45, %s46
    %p58 = scmp.eq.s32.totalorder %s15, 1
    %p59 = por %p57, %p58
    %p61 = scmp.ne.s32.totalorder %s46, %s60
    %p62 = scmp.eq.s32.totalorder %s15, 0
    %p63 = por %p61, %p62
    %s65 = sadd.s32 %s64, 1
    %p68 = scmp.eq.s32.totalorder %s9, 1
    %p69 = scmp.ne.s32.totalorder %s64, %s66
    %p70 = scmp.eq.s32.totalorder %s9, 0
    %p71 = por %p69, %p70
    %p72 = scmp.ne.s32.totalorder %s64, %s66
    %p73 = scmp.eq.s32.totalorder %s14, 1
    %p74 = por %p72, %p73
    %p75 = scmp.ne.s32.totalorder %s66, %s67
    %p76 = scmp.eq.s32.totalorder %s14, 0
    %p77 = por %p75, %p76
    %p78 = scmp.ne.s32.totalorder %s66, %s67
    %p79 = scmp.eq.s32.totalorder %s15, 1
    %p80 = por %p78, %p79
    %p82 = scmp.ne.s32.totalorder %s67, %s81
    %p83 = scmp.eq.s32.totalorder %s15, 0
    %p84 = por %p82, %p83
    %s85 = ssub.s32 %s9, %s16
    %p86 = scmp.eq.s32.totalorder %s85, 0
    %s88 = sadd.s32 %s87, 1
    %s89 = scalar_select %p86, %s87, %s88
    %p92 = pneg %p86
    %p93 = scmp.eq.s32.totalorder %s9, 1
    %p94 = por %p92, %p93
    %p95 = scmp.ne.s32.totalorder %s87, %s90
    %p96 = scmp.eq.s32.totalorder %s9, 0
    %p97 = por %p95, %p96
    %p98 = scmp.ne.s32.totalorder %s87, %s90
    %p99 = scmp.eq.s32.totalorder %s14, 1
    %p100 = por %p98, %p99
    %p101 = scmp.ne.s32.totalorder %s90, %s91
    %p102 = scmp.eq.s32.totalorder %s14, 0
    %p103 = por %p101, %p102
    %p104 = scmp.ne.s32.totalorder %s90, %s91
    %p105 = scmp.eq.s32.totalorder %s15, 1
    %p106 = por %p104, %p105
    %p108 = scmp.ne.s32.totalorder %s91, %s107
    %p109 = scmp.eq.s32.totalorder %s15, 0
    %p110 = por %p108, %p109
    %p111 = scmp.le.s32.totalorder 1, %s9
    %p112 = scmp.lt.s32.totalorder %s9, 3
    %p113 = pnand %p111, %p112
    %p114 = pneg %p113
    // Predicated region
    $region9: #{structural_forward.2} parent=5 // pred_check
      _
    $region10: #{structural_forward.2} parent=5 // pred_check_branch
      %116 = sbr.rel (%p113) target = $region12
    $region11: #{structural_forward.2} parent=5 // pred_region
      %s117 = ssub.s32 %s9, 1
      // Predicated region
      $region13: #{structural_forward.2} parent=11 // pred_check
        %p118 = pneg %p56
      $region14: #{structural_forward.2} parent=11 // pred_check_branch
        %120 = sbr.rel (%p118) target = $region16
      $region15: #{structural_forward.2} parent=11 // pred_region
        _
      $region16: #{structural_forward.2} parent=11 // pred_fallthru
        _
      // Predicated region
      $region17: #{structural_forward.2} parent=11 // pred_check
        %p121 = pneg %p77
      $region18: #{structural_forward.2} parent=11 // pred_check_branch
        %123 = sbr.rel (%p121) target = $region20
      $region19: #{structural_forward.2} parent=11 // pred_region
        _
      $region20: #{structural_forward.2} parent=11 // pred_fallthru
        _
    $region12: #{structural_forward.2} parent=5 // pred_fallthru
      _
    %p124 = scmp.lt.s32.totalorder %s9, 2
    // Predicated region
    $region21: #{structural_forward.2} parent=5 // pred_check
      %p125 = pneg %p124
    $region22: #{structural_forward.2} parent=5 // pred_check_branch
      %127 = sbr.rel (%p125) target = $region24
    $region23: #{structural_forward.2} parent=5 // pred_region
      // Predicated region
      $region25: #{structural_forward.2} parent=23 // pred_check
        %p128 = pneg %p29
      $region26: #{structural_forward.2} parent=23 // pred_check_branch
        %130 = sbr.rel (%p128) target = $region28
      $region27: #{structural_forward.2} parent=23 // pred_region
        %p131 = scmp.lt.s32.totalorder %s9, 1
        %s132 = scalar_select %p131, %s9, 1
        %s133 = smul.addr %s132, 96
        %s134 = smul.addr %s133, 4
        %s135 = scalar_lea.vmem %s0, %s134
      $region28: #{structural_forward.2} parent=23 // pred_fallthru
        _
    $region24: #{structural_forward.2} parent=5 // pred_fallthru
      _
    %p136 = scmp.le.s32.totalorder 1, %s9
    %p137 = scmp.lt.s32.totalorder %s9, 3
    %p138 = pnand %p136, %p137
    %p139 = pneg %p138
    // Predicated region
    $region29: #{structural_forward.2} parent=5 // pred_check
      _
    $region30: #{structural_forward.2} parent=5 // pred_check_branch
      %141 = sbr.rel (%p138) target = $region32
    $region31: #{structural_forward.2} parent=5 // pred_region
      %s142 = ssub.s32 %s9, 1
      %p143 = scmp.lt.s32.totalorder %s14, 1
      %s144 = scalar_select %p143, %s14, 1
      %s145 = smul.addr %s144, 96
      %s146 = smul.addr %s145, 4
      %s147 = scalar_lea.vmem %s0, %s146
      %p148 = pneg %p35
      %p149 = pneg %p32
      %p150 = pneg %p56
      %p151 = pneg %p53
      %p152 = pneg %p77
      %p153 = pneg %p74
      %p154 = pneg %p103
      %p155 = pneg %p100
      %p156 = scmp.lt.s32.totalorder %s14, 1
      %s157 = scalar_select %p156, %s14, 1
      %s158 = smul.addr %s157, 2
      %s159 = scalar_lea.vmem %s3, %s158
      %p160 = scmp.lt.s32.totalorder %s14, 1
      %s161 = scalar_select %p160, %s14, 1
      %s162 = smul.addr %s161, 96
      %s163 = smul.addr %s162, 4
      %s164 = scalar_lea.vmem %s0, %s163
      %p165 = scmp.lt.s32.totalorder %s14, 1
      %s166 = scalar_select %p165, %s14, 1
      %s167 = smul.addr %s166, 2
      %s168 = scalar_lea.vmem %s3, %s167
      %v170 = vld [vmem:[%s2] sm:$0x3]
      %v171 = vld [vmem:[%s164] sm:$0xff]
      %v172 = vld [vmem:[%s164 + $0x8] sm:$0xff]
      %v173 = vld [vmem:[%s164 + $0x10] sm:$0xff]
      %v174 = vld [vmem:[%s164 + $0x18] sm:$0xff]
      %v175 = vld [vmem:[%s164 + $0x20] sm:$0xff]
      %v176 = vld [vmem:[%s164 + $0x28] sm:$0xff]
      %v177 = vld [vmem:[%s164 + $0x30] sm:$0xff]
      %v178 = vld [vmem:[%s164 + $0x38] sm:$0xff]
      %v179 = vld [vmem:[%s1] sm:$0xff]
      %v180 = vld [vmem:[%s1 + $0x8] sm:$0xff]
      %v181 = vld [vmem:[%s1 + $0x10] sm:$0xff]
      %v182 = vld [vmem:[%s1 + $0x18] sm:$0xff]
      %v183 = vld [vmem:[%s1 + $0x20] sm:$0xff]
      %v184 = vld [vmem:[%s1 + $0x28] sm:$0xff]
      %v185 = vld [vmem:[%s1 + $0x30] sm:$0xff]
      %v186 = vld [vmem:[%s1 + $0x38] sm:$0xff]
      %v187 = vld [vmem:[%s1 + $0x40] sm:$0xff]
      %v188 = vld [vmem:[%s1 + $0x48] sm:$0xff]
      %v189 = vld [vmem:[%s1 + $0x50] sm:$0xff]
      %v190 = vld [vmem:[%s1 + $0x58] sm:$0xff]
      %v191 = vld [vmem:[%s1 + $0x60] sm:$0xff]
      %v192 = vld [vmem:[%s1 + $0x68] sm:$0xff]
      %v193 = vld [vmem:[%s1 + $0x70] sm:$0xff]
      %v194 = vld [vmem:[%s1 + $0x78] sm:$0xff]
      %v195 = vld [vmem:[%s1 + $0x80] sm:$0xff]
      %v196 = vld [vmem:[%s1 + $0x88] sm:$0xff]
      %v197 = vld [vmem:[%s1 + $0x90] sm:$0xff]
      %v198 = vld [vmem:[%s1 + $0x98] sm:$0xff]
      %v199 = vld [vmem:[%s1 + $0xa0] sm:$0xff]
      %v200 = vld [vmem:[%s1 + $0xa8] sm:$0xff]
      %v201 = vld [vmem:[%s1 + $0xb0] sm:$0xff]
      %v202 = vld [vmem:[%s1 + $0xb8] sm:$0x77]
      %s203 = scalar_lea.vmem %s164, 16
      %v204 = vld [vmem:[%s203] sm:$0xff]
      %v205 = vld [vmem:[%s203 + $0x8] sm:$0xff]
      %v206 = vld [vmem:[%s203 + $0x10] sm:$0xff]
      %v207 = vld [vmem:[%s203 + $0x18] sm:$0xff]
      %v208 = vld [vmem:[%s203 + $0x20] sm:$0xff]
      %v209 = vld [vmem:[%s203 + $0x28] sm:$0xff]
      %v210 = vld [vmem:[%s203 + $0x30] sm:$0xff]
      %v211 = vld [vmem:[%s203 + $0x38] sm:$0xff]
      %s212 = scalar_lea.vmem %s1, 192
      %v213 = vld [vmem:[%s212] sm:$0xff]
      %v214 = vld [vmem:[%s212 + $0x8] sm:$0xff]
      %v215 = vld [vmem:[%s212 + $0x10] sm:$0xff]
      %v216 = vld [vmem:[%s212 + $0x18] sm:$0xff]
      %v217 = vld [vmem:[%s212 + $0x20] sm:$0xff]
      %v218 = vld [vmem:[%s212 + $0x28] sm:$0xff]
      %v219 = vld [vmem:[%s212 + $0x30] sm:$0xff]
      %v220 = vld [vmem:[%s212 + $0x38] sm:$0xff]
      %v221 = vld [vmem:[%s212 + $0x40] sm:$0xff]
      %v222 = vld [vmem:[%s212 + $0x48] sm:$0xff]
      %v223 = vld [vmem:[%s212 + $0x50] sm:$0xff]
      %v224 = vld [vmem:[%s212 + $0x58] sm:$0xff]
      %v225 = vld [vmem:[%s212 + $0x60] sm:$0xff]
      %v226 = vld [vmem:[%s212 + $0x68] sm:$0xff]
      %v227 = vld [vmem:[%s212 + $0x70] sm:$0xff]
      %v228 = vld [vmem:[%s212 + $0x78] sm:$0xff]
      %v229 = vld [vmem:[%s212 + $0x80] sm:$0xff]
      %v230 = vld [vmem:[%s212 + $0x88] sm:$0xff]
      %v231 = vld [vmem:[%s212 + $0x90] sm:$0xff]
      %v232 = vld [vmem:[%s212 + $0x98] sm:$0xff]
      %v233 = vld [vmem:[%s212 + $0xa0] sm:$0xff]
      %v234 = vld [vmem:[%s212 + $0xa8] sm:$0xff]
      %v235 = vld [vmem:[%s212 + $0xb0] sm:$0xff]
      %v236 = vld [vmem:[%s212 + $0xb8] sm:$0x77]
      %v245 = vunpack.c.l.b16 %v204
      %v246 = vunpack.c.h.b16 %v204
      %v247 = vunpack.c.l.b16 %v205
      %v248 = vunpack.c.h.b16 %v205
      %v249 = vunpack.c.l.b16 %v206
      %v250 = vunpack.c.h.b16 %v206
      %v251 = vunpack.c.l.b16 %v207
      %v252 = vunpack.c.h.b16 %v207
      %v253 = vunpack.c.l.b16 %v208
      %v254 = vunpack.c.h.b16 %v208
      %v255 = vunpack.c.l.b16 %v209
      %v256 = vunpack.c.h.b16 %v209
      %v257 = vunpack.c.l.b16 %v210
      %v258 = vunpack.c.h.b16 %v210
      %v259 = vunpack.c.l.b16 %v211
      %v260 = vunpack.c.h.b16 %v211
      %v261 = vpack.c.b16 %v247, %v245
      %v262 = vpack.c.b16 %v248, %v246
      %v263 = vpack.c.b16 %v251, %v249
      %v264 = vpack.c.b16 %v252, %v250
      %v265 = vpack.c.b16 %v255, %v253
      %v266 = vpack.c.b16 %v256, %v254
      %v267 = vpack.c.b16 %v259, %v257
      %v268 = vpack.c.b16 %v260, %v258
      %v297 = vunpack.c.l.b16 %v213
      %v298 = vunpack.c.h.b16 %v213
      %v299 = vunpack.c.l.b16 %v214
      %v300 = vunpack.c.h.b16 %v214
      %v301 = vunpack.c.l.b16 %v215
      %v302 = vunpack.c.h.b16 %v215
      %v303 = vunpack.c.l.b16 %v216
      %v304 = vunpack.c.h.b16 %v216
      %v305 = vunpack.c.l.b16 %v217
      %v306 = vunpack.c.h.b16 %v217
      %v307 = vunpack.c.l.b16 %v218
      %v308 = vunpack.c.h.b16 %v218
      %v309 = vunpack.c.l.b16 %v219
      %v310 = vunpack.c.h.b16 %v219
      %v311 = vunpack.c.l.b16 %v220
      %v312 = vunpack.c.h.b16 %v220
      %v313 = vunpack.c.l.b16 %v221
      %v314 = vunpack.c.h.b16 %v221
      %v315 = vunpack.c.l.b16 %v222
      %v316 = vunpack.c.h.b16 %v222
      %v317 = vunpack.c.l.b16 %v223
      %v318 = vunpack.c.h.b16 %v223
      %v319 = vunpack.c.l.b16 %v224
      %v320 = vunpack.c.h.b16 %v224
      %v321 = vunpack.c.l.b16 %v225
      %v322 = vunpack.c.h.b16 %v225
      %v323 = vunpack.c.l.b16 %v226
      %v324 = vunpack.c.h.b16 %v226
      %v325 = vunpack.c.l.b16 %v227
      %v326 = vunpack.c.h.b16 %v227
      %v327 = vunpack.c.l.b16 %v228
      %v328 = vunpack.c.h.b16 %v228
      %v329 = vunpack.c.l.b16 %v229
      %v330 = vunpack.c.h.b16 %v229
      %v331 = vunpack.c.l.b16 %v230
      %v332 = vunpack.c.h.b16 %v230
      %v333 = vunpack.c.l.b16 %v231
      %v334 = vunpack.c.h.b16 %v231
      %v335 = vunpack.c.l.b16 %v232
      %v336 = vunpack.c.h.b16 %v232
      %v337 = vunpack.c.l.b16 %v233
      %v338 = vunpack.c.h.b16 %v233
      %v339 = vunpack.c.l.b16 %v234
      %v340 = vunpack.c.h.b16 %v234
      %v341 = vunpack.c.l.b16 %v235
      %v342 = vunpack.c.h.b16 %v235
      %v343 = vunpack.c.l.b16 %v236
      %v344 = vunpack.c.h.b16 %v236
      %v345 = vpack.c.b16 %v299, %v297
      %v346 = vpack.c.b16 %v300, %v298
      %v347 = vpack.c.b16 %v303, %v301
      %v348 = vpack.c.b16 %v304, %v302
      %v349 = vpack.c.b16 %v307, %v305
      %v350 = vpack.c.b16 %v308, %v306
      %v351 = vpack.c.b16 %v311, %v309
      %v352 = vpack.c.b16 %v312, %v310
      %v353 = vpack.c.b16 %v315, %v313
      %v354 = vpack.c.b16 %v316, %v314
      %v355 = vpack.c.b16 %v319, %v317
      %v356 = vpack.c.b16 %v320, %v318
      %v357 = vpack.c.b16 %v323, %v321
      %v358 = vpack.c.b16 %v324, %v322
      %v359 = vpack.c.b16 %v327, %v325
      %v360 = vpack.c.b16 %v328, %v326
      %v361 = vpack.c.b16 %v331, %v329
      %v362 = vpack.c.b16 %v332, %v330
      %v363 = vpack.c.b16 %v335, %v333
      %v364 = vpack.c.b16 %v336, %v334
      %v365 = vpack.c.b16 %v339, %v337
      %v366 = vpack.c.b16 %v340, %v338
      %v367 = vpack.c.b16 %v343, %v341
      %v368 = vpack.c.b16 %v344, %v342
      %vm391 = vcmask 498688
      %v393 = vsel %vm391, %v262, 0
      %v396 = vsel %vm391, %v264, 0
      %v399 = vsel %vm391, %v266, 0
      %v402 = vsel %vm391, %v268, 0
      %vm404 = vcmask 1045504
      %vm405 = vcmask 1046528
      %v406 = vsel %vm404, 4294967295, 65535
      %v407 = vsel %vm405, %v406, 0
      %v409 = vand.u32 %v367, %v407
      %v412 = vand.u32 %v368, %v407
      %414 = vmatpush.bf16.msra.mxu0 %v359
      %415 = vmatpush.bf16.msra.mxu0 %v357
      %416 = vmatpush.bf16.msra.mxu0 %v355
      %417 = vmatpush.bf16.msra.mxu0 %v353
      %418 = vmatpush.bf16.msra.mxu0 %v351
      %419 = vmatpush.bf16.msra.mxu0 %v349
      %420 = vmatpush.bf16.msra.mxu0 %v347
      %421 = vmatpush.bf16.msra.mxu0 %v345
      %422 = vmatmul.bf16.gmra.mxu0 %v261
      %v423 = vpop.f32.mrf.mxu0
      %v424 = vadd.f32 0.0, %v423
      %v425 = vpop.f32.mrf.mxu0
      %v426 = vadd.f32 0.0, %v425
      %427 = vmatmul.bf16.gmra.mxu0 %v263
      %v428 = vpop.f32.mrf.mxu0
      %v429 = vadd.f32 0.0, %v428
      %v430 = vpop.f32.mrf.mxu0
      %v431 = vadd.f32 0.0, %v430
      %432 = vmatmul.bf16.gmra.mxu0 %v265
      %v433 = vpop.f32.mrf.mxu0
      %v434 = vadd.f32 0.0, %v433
      %v435 = vpop.f32.mrf.mxu0
      %v436 = vadd.f32 0.0, %v435
      %437 = vmatmul.bf16.gmra.mxu0 %v267
      %v438 = vpop.f32.mrf.mxu0
      %v439 = vadd.f32 0.0, %v438
      %v440 = vpop.f32.mrf.mxu0
      %v441 = vadd.f32 0.0, %v440
      %442 = vdwg.mxu0
      %443 = vmatpush.bf16.msra.mxu0 0
      %444 = vmatpush.bf16.msra.mxu0 0
      %445 = vmatpush.bf16.msra.mxu0 0
      %446 = vmatpush.bf16.msra.mxu0 0
      %447 = vmatpush.bf16.msra.mxu0 %v409
      %448 = vmatpush.bf16.msra.mxu0 %v365
      %449 = vmatpush.bf16.msra.mxu0 %v363
      %450 = vmatpush.bf16.msra.mxu0 %v361
      %451 = vmatmul.bf16.gmra.mxu0 %v393
      %v452 = vpop.f32.mrf.mxu0
      %v453 = vadd.f32 %v424, %v452
      %v454 = vpop.f32.mrf.mxu0
      %v455 = vadd.f32 %v426, %v454
      %456 = vmatmul.bf16.gmra.mxu0 %v396
      %v457 = vpop.f32.mrf.mxu0
      %v458 = vadd.f32 %v429, %v457
      %v459 = vpop.f32.mrf.mxu0
      %v460 = vadd.f32 %v431, %v459
      %461 = vmatmul.bf16.gmra.mxu0 %v399
      %v462 = vpop.f32.mrf.mxu0
      %v463 = vadd.f32 %v434, %v462
      %v464 = vpop.f32.mrf.mxu0
      %v465 = vadd.f32 %v436, %v464
      %466 = vmatmul.bf16.gmra.mxu0 %v402
      %v467 = vpop.f32.mrf.mxu0
      %v468 = vadd.f32 %v439, %v467
      %v469 = vpop.f32.mrf.mxu0
      %v470 = vadd.f32 %v441, %v469
      %471 = vdwg.mxu0
      %472 = vmatpush.bf16.msra.mxu0 %v360
      %473 = vmatpush.bf16.msra.mxu0 %v358
      %474 = vmatpush.bf16.msra.mxu0 %v356
      %475 = vmatpush.bf16.msra.mxu0 %v354
      %476 = vmatpush.bf16.msra.mxu0 %v352
      %477 = vmatpush.bf16.msra.mxu0 %v350
      %478 = vmatpush.bf16.msra.mxu0 %v348
      %479 = vmatpush.bf16.msra.mxu0 %v346
      %480 = vmatmul.bf16.gmra.mxu0 %v261
      %v481 = vpop.f32.mrf.mxu0
      %v482 = vadd.f32 0.0, %v481
      %v483 = vpop.f32.mrf.mxu0
      %v484 = vadd.f32 0.0, %v483
      %485 = vmatmul.bf16.gmra.mxu0 %v263
      %v486 = vpop.f32.mrf.mxu0
      %v487 = vadd.f32 0.0, %v486
      %v488 = vpop.f32.mrf.mxu0
      %v489 = vadd.f32 0.0, %v488
      %490 = vmatmul.bf16.gmra.mxu0 %v265
      %v491 = vpop.f32.mrf.mxu0
      %v492 = vadd.f32 0.0, %v491
      %v493 = vpop.f32.mrf.mxu0
      %v494 = vadd.f32 0.0, %v493
      %495 = vmatmul.bf16.gmra.mxu0 %v267
      %v496 = vpop.f32.mrf.mxu0
      %v497 = vadd.f32 0.0, %v496
      %v498 = vpop.f32.mrf.mxu0
      %v499 = vadd.f32 0.0, %v498
      %500 = vdwg.mxu0
      %501 = vmatpush.bf16.msra.mxu0 0
      %502 = vmatpush.bf16.msra.mxu0 0
      %503 = vmatpush.bf16.msra.mxu0 0
      %504 = vmatpush.bf16.msra.mxu0 0
      %505 = vmatpush.bf16.msra.mxu0 %v412
      %506 = vmatpush.bf16.msra.mxu0 %v366
      %507 = vmatpush.bf16.msra.mxu0 %v364
      %508 = vmatpush.bf16.msra.mxu0 %v362
      %509 = vmatmul.bf16.gmra.mxu0 %v393
      %v510 = vpop.f32.mrf.mxu0
      %v511 = vadd.f32 %v482, %v510
      %v512 = vpop.f32.mrf.mxu0
      %v513 = vadd.f32 %v484, %v512
      %514 = vmatmul.bf16.gmra.mxu0 %v396
      %v515 = vpop.f32.mrf.mxu0
      %v516 = vadd.f32 %v487, %v515
      %v517 = vpop.f32.mrf.mxu0
      %v518 = vadd.f32 %v489, %v517
      %519 = vmatmul.bf16.gmra.mxu0 %v399
      %v520 = vpop.f32.mrf.mxu0
      %v521 = vadd.f32 %v492, %v520
      %v522 = vpop.f32.mrf.mxu0
      %v523 = vadd.f32 %v494, %v522
      %524 = vmatmul.bf16.gmra.mxu0 %v402
      %v525 = vpop.f32.mrf.mxu0
      %v526 = vadd.f32 %v497, %v525
      %v527 = vpop.f32.mrf.mxu0
      %v528 = vadd.f32 %v499, %v527
      %529 = vdwg.mxu0
      %v538 = vunpack.c.l.b16 %v171
      %v539 = vunpack.c.h.b16 %v171
      %v540 = vunpack.c.l.b16 %v172
      %v541 = vunpack.c.h.b16 %v172
      %v542 = vunpack.c.l.b16 %v173
      %v543 = vunpack.c.h.b16 %v173
      %v544 = vunpack.c.l.b16 %v174
      %v545 = vunpack.c.h.b16 %v174
      %v546 = vunpack.c.l.b16 %v175
      %v547 = vunpack.c.h.b16 %v175
      %v548 = vunpack.c.l.b16 %v176
      %v549 = vunpack.c.h.b16 %v176
      %v550 = vunpack.c.l.b16 %v177
      %v551 = vunpack.c.h.b16 %v177
      %v552 = vunpack.c.l.b16 %v178
      %v553 = vunpack.c.h.b16 %v178
      %v554 = vpack.c.b16 %v540, %v538
      %v555 = vpack.c.b16 %v541, %v539
      %v556 = vpack.c.b16 %v544, %v542
      %v557 = vpack.c.b16 %v545, %v543
      %v558 = vpack.c.b16 %v548, %v546
      %v559 = vpack.c.b16 %v549, %v547
      %v560 = vpack.c.b16 %v552, %v550
      %v561 = vpack.c.b16 %v553, %v551
      %v590 = vunpack.c.l.b16 %v179
      %v591 = vunpack.c.h.b16 %v179
      %v592 = vunpack.c.l.b16 %v180
      %v593 = vunpack.c.h.b16 %v180
      %v594 = vunpack.c.l.b16 %v181
      %v595 = vunpack.c.h.b16 %v181
      %v596 = vunpack.c.l.b16 %v182
      %v597 = vunpack.c.h.b16 %v182
      %v598 = vunpack.c.l.b16 %v183
      %v599 = vunpack.c.h.b16 %v183
      %v600 = vunpack.c.l.b16 %v184
      %v601 = vunpack.c.h.b16 %v184
      %v602 = vunpack.c.l.b16 %v185
      %v603 = vunpack.c.h.b16 %v185
      %v604 = vunpack.c.l.b16 %v186
      %v605 = vunpack.c.h.b16 %v186
      %v606 = vunpack.c.l.b16 %v187
      %v607 = vunpack.c.h.b16 %v187
      %v608 = vunpack.c.l.b16 %v188
      %v609 = vunpack.c.h.b16 %v188
      %v610 = vunpack.c.l.b16 %v189
      %v611 = vunpack.c.h.b16 %v189
      %v612 = vunpack.c.l.b16 %v190
      %v613 = vunpack.c.h.b16 %v190
      %v614 = vunpack.c.l.b16 %v191
      %v615 = vunpack.c.h.b16 %v191
      %v616 = vunpack.c.l.b16 %v192
      %v617 = vunpack.c.h.b16 %v192
      %v618 = vunpack.c.l.b16 %v193
      %v619 = vunpack.c.h.b16 %v193
      %v620 = vunpack.c.l.b16 %v194
      %v621 = vunpack.c.h.b16 %v194
      %v622 = vunpack.c.l.b16 %v195
      %v623 = vunpack.c.h.b16 %v195
      %v624 = vunpack.c.l.b16 %v196
      %v625 = vunpack.c.h.b16 %v196
      %v626 = vunpack.c.l.b16 %v197
      %v627 = vunpack.c.h.b16 %v197
      %v628 = vunpack.c.l.b16 %v198
      %v629 = vunpack.c.h.b16 %v198
      %v630 = vunpack.c.l.b16 %v199
      %v631 = vunpack.c.h.b16 %v199
      %v632 = vunpack.c.l.b16 %v200
      %v633 = vunpack.c.h.b16 %v200
      %v634 = vunpack.c.l.b16 %v201
      %v635 = vunpack.c.h.b16 %v201
      %v636 = vunpack.c.l.b16 %v202
      %v637 = vunpack.c.h.b16 %v202
      %v638 = vpack.c.b16 %v592, %v590
      %v639 = vpack.c.b16 %v593, %v591
      %v640 = vpack.c.b16 %v596, %v594
      %v641 = vpack.c.b16 %v597, %v595
      %v642 = vpack.c.b16 %v600, %v598
      %v643 = vpack.c.b16 %v601, %v599
      %v644 = vpack.c.b16 %v604, %v602
      %v645 = vpack.c.b16 %v605, %v603
      %v646 = vpack.c.b16 %v608, %v606
      %v647 = vpack.c.b16 %v609, %v607
      %v648 = vpack.c.b16 %v612, %v610
      %v649 = vpack.c.b16 %v613, %v611
      %v650 = vpack.c.b16 %v616, %v614
      %v651 = vpack.c.b16 %v617, %v615
      %v652 = vpack.c.b16 %v620, %v618
      %v653 = vpack.c.b16 %v621, %v619
      %v654 = vpack.c.b16 %v624, %v622
      %v655 = vpack.c.b16 %v625, %v623
      %v656 = vpack.c.b16 %v628, %v626
      %v657 = vpack.c.b16 %v629, %v627
      %v658 = vpack.c.b16 %v632, %v630
      %v659 = vpack.c.b16 %v633, %v631
      %v660 = vpack.c.b16 %v636, %v634
      %v661 = vpack.c.b16 %v637, %v635
      %v685 = vsel %vm391, %v555, 0
      %v688 = vsel %vm391, %v557, 0
      %v691 = vsel %vm391, %v559, 0
      %v694 = vsel %vm391, %v561, 0
      %v697 = vand.u32 %v660, %v407
      %v700 = vand.u32 %v661, %v407
      %702 = vmatpush.bf16.msra.mxu0 %v652
      %703 = vmatpush.bf16.msra.mxu0 %v650
      %704 = vmatpush.bf16.msra.mxu0 %v648
      %705 = vmatpush.bf16.msra.mxu0 %v646
      %706 = vmatpush.bf16.msra.mxu0 %v644
      %707 = vmatpush.bf16.msra.mxu0 %v642
      %708 = vmatpush.bf16.msra.mxu0 %v640
      %709 = vmatpush.bf16.msra.mxu0 %v638
      %710 = vmatmul.bf16.gmra.mxu0 %v554
      %v711 = vpop.f32.mrf.mxu0
      %v712 = vadd.f32 %v453, %v711
      %v713 = vpop.f32.mrf.mxu0
      %v714 = vadd.f32 %v455, %v713
      %715 = vmatmul.bf16.gmra.mxu0 %v556
      %v716 = vpop.f32.mrf.mxu0
      %v717 = vadd.f32 %v458, %v716
      %v718 = vpop.f32.mrf.mxu0
      %v719 = vadd.f32 %v460, %v718
      %720 = vmatmul.bf16.gmra.mxu0 %v558
      %v721 = vpop.f32.mrf.mxu0
      %v722 = vadd.f32 %v463, %v721
      %v723 = vpop.f32.mrf.mxu0
      %v724 = vadd.f32 %v465, %v723
      %725 = vmatmul.bf16.gmra.mxu0 %v560
      %v726 = vpop.f32.mrf.mxu0
      %v727 = vadd.f32 %v468, %v726
      %v728 = vpop.f32.mrf.mxu0
      %v729 = vadd.f32 %v470, %v728
      %730 = vdwg.mxu0
      %731 = vmatpush.bf16.msra.mxu0 0
      %732 = vmatpush.bf16.msra.mxu0 0
      %733 = vmatpush.bf16.msra.mxu0 0
      %734 = vmatpush.bf16.msra.mxu0 0
      %735 = vmatpush.bf16.msra.mxu0 %v697
      %736 = vmatpush.bf16.msra.mxu0 %v658
      %737 = vmatpush.bf16.msra.mxu0 %v656
      %738 = vmatpush.bf16.msra.mxu0 %v654
      %739 = vmatmul.bf16.gmra.mxu0 %v685
      %v740 = vpop.f32.mrf.mxu0
      %v741 = vadd.f32 %v712, %v740
      %v742 = vpop.f32.mrf.mxu0
      %v743 = vadd.f32 %v714, %v742
      %744 = vmatmul.bf16.gmra.mxu0 %v688
      %v745 = vpop.f32.mrf.mxu0
      %v746 = vadd.f32 %v717, %v745
      %v747 = vpop.f32.mrf.mxu0
      %v748 = vadd.f32 %v719, %v747
      %749 = vmatmul.bf16.gmra.mxu0 %v691
      %v750 = vpop.f32.mrf.mxu0
      %v751 = vadd.f32 %v722, %v750
      %v752 = vpop.f32.mrf.mxu0
      %v753 = vadd.f32 %v724, %v752
      %754 = vmatmul.bf16.gmra.mxu0 %v694
      %v755 = vpop.f32.mrf.mxu0
      %v756 = vadd.f32 %v727, %v755
      %v757 = vpop.f32.mrf.mxu0
      %v758 = vadd.f32 %v729, %v757
      %759 = vdwg.mxu0
      %760 = vmatpush.bf16.msra.mxu0 %v653
      %761 = vmatpush.bf16.msra.mxu0 %v651
      %762 = vmatpush.bf16.msra.mxu0 %v649
      %763 = vmatpush.bf16.msra.mxu0 %v647
      %764 = vmatpush.bf16.msra.mxu0 %v645
      %765 = vmatpush.bf16.msra.mxu0 %v643
      %766 = vmatpush.bf16.msra.mxu0 %v641
      %767 = vmatpush.bf16.msra.mxu0 %v639
      %768 = vmatmul.bf16.gmra.mxu0 %v554
      %v769 = vpop.f32.mrf.mxu0
      %v770 = vadd.f32 %v511, %v769
      %v771 = vpop.f32.mrf.mxu0
      %v772 = vadd.f32 %v513, %v771
      %773 = vmatmul.bf16.gmra.mxu0 %v556
      %v774 = vpop.f32.mrf.mxu0
      %v775 = vadd.f32 %v516, %v774
      %v776 = vpop.f32.mrf.mxu0
      %v777 = vadd.f32 %v518, %v776
      %778 = vmatmul.bf16.gmra.mxu0 %v558
      %v779 = vpop.f32.mrf.mxu0
      %v780 = vadd.f32 %v521, %v779
      %v781 = vpop.f32.mrf.mxu0
      %v782 = vadd.f32 %v523, %v781
      %783 = vmatmul.bf16.gmra.mxu0 %v560
      %v784 = vpop.f32.mrf.mxu0
      %v785 = vadd.f32 %v526, %v784
      %v786 = vpop.f32.mrf.mxu0
      %v787 = vadd.f32 %v528, %v786
      %788 = vdwg.mxu0
      %789 = vmatpush.bf16.msra.mxu0 0
      %790 = vmatpush.bf16.msra.mxu0 0
      %791 = vmatpush.bf16.msra.mxu0 0
      %792 = vmatpush.bf16.msra.mxu0 0
      %793 = vmatpush.bf16.msra.mxu0 %v700
      %794 = vmatpush.bf16.msra.mxu0 %v659
      %795 = vmatpush.bf16.msra.mxu0 %v657
      %796 = vmatpush.bf16.msra.mxu0 %v655
      %797 = vmatmul.bf16.gmra.mxu0 %v685
      %v798 = vpop.f32.mrf.mxu0
      %v799 = vadd.f32 %v770, %v798
      %v800 = vpop.f32.mrf.mxu0
      %v801 = vadd.f32 %v772, %v800
      %802 = vmatmul.bf16.gmra.mxu0 %v688
      %v803 = vpop.f32.mrf.mxu0
      %v804 = vadd.f32 %v775, %v803
      %v805 = vpop.f32.mrf.mxu0
      %v806 = vadd.f32 %v777, %v805
      %807 = vmatmul.bf16.gmra.mxu0 %v691
      %v808 = vpop.f32.mrf.mxu0
      %v809 = vadd.f32 %v780, %v808
      %v810 = vpop.f32.mrf.mxu0
      %v811 = vadd.f32 %v782, %v810
      %812 = vmatmul.bf16.gmra.mxu0 %v694
      %v813 = vpop.f32.mrf.mxu0
      %v814 = vadd.f32 %v785, %v813
      %v815 = vpop.f32.mrf.mxu0
      %v816 = vadd.f32 %v787, %v815
      %817 = vdwg.mxu0
      %s818 = scalar_lea.vmem %s164, 32
      %v819 = vld [vmem:[%s818] sm:$0xff]
      %v820 = vld [vmem:[%s818 + $0x8] sm:$0xff]
      %v821 = vld [vmem:[%s818 + $0x10] sm:$0xff]
      %v822 = vld [vmem:[%s818 + $0x18] sm:$0xff]
      %v823 = vld [vmem:[%s818 + $0x20] sm:$0xff]
      %v824 = vld [vmem:[%s818 + $0x28] sm:$0xff]
      %v825 = vld [vmem:[%s818 + $0x30] sm:$0xff]
      %v826 = vld [vmem:[%s818 + $0x38] sm:$0xff]
      %s827 = scalar_lea.vmem %s1, 384
      %v828 = vld [vmem:[%s827] sm:$0xff]
      %v829 = vld [vmem:[%s827 + $0x8] sm:$0xff]
      %v830 = vld [vmem:[%s827 + $0x10] sm:$0xff]
      %v831 = vld [vmem:[%s827 + $0x18] sm:$0xff]
      %v832 = vld [vmem:[%s827 + $0x20] sm:$0xff]
      %v833 = vld [vmem:[%s827 + $0x28] sm:$0xff]
      %v834 = vld [vmem:[%s827 + $0x30] sm:$0xff]
      %v835 = vld [vmem:[%s827 + $0x38] sm:$0xff]
      %v836 = vld [vmem:[%s827 + $0x40] sm:$0xff]
      %v837 = vld [vmem:[%s827 + $0x48] sm:$0xff]
      %v838 = vld [vmem:[%s827 + $0x50] sm:$0xff]
      %v839 = vld [vmem:[%s827 + $0x58] sm:$0xff]
      %v840 = vld [vmem:[%s827 + $0x60] sm:$0xff]
      %v841 = vld [vmem:[%s827 + $0x68] sm:$0xff]
      %v842 = vld [vmem:[%s827 + $0x70] sm:$0xff]
      %v843 = vld [vmem:[%s827 + $0x78] sm:$0xff]
      %v844 = vld [vmem:[%s827 + $0x80] sm:$0xff]
      %v845 = vld [vmem:[%s827 + $0x88] sm:$0xff]
      %v846 = vld [vmem:[%s827 + $0x90] sm:$0xff]
      %v847 = vld [vmem:[%s827 + $0x98] sm:$0xff]
      %v848 = vld [vmem:[%s827 + $0xa0] sm:$0xff]
      %v849 = vld [vmem:[%s827 + $0xa8] sm:$0xff]
      %v850 = vld [vmem:[%s827 + $0xb0] sm:$0xff]
      %v851 = vld [vmem:[%s827 + $0xb8] sm:$0x77]
      %v860 = vunpack.c.l.b16 %v819
      %v861 = vunpack.c.h.b16 %v819
      %v862 = vunpack.c.l.b16 %v820
      %v863 = vunpack.c.h.b16 %v820
      %v864 = vunpack.c.l.b16 %v821
      %v865 = vunpack.c.h.b16 %v821
      %v866 = vunpack.c.l.b16 %v822
      %v867 = vunpack.c.h.b16 %v822
      %v868 = vunpack.c.l.b16 %v823
      %v869 = vunpack.c.h.b16 %v823
      %v870 = vunpack.c.l.b16 %v824
      %v871 = vunpack.c.h.b16 %v824
      %v872 = vunpack.c.l.b16 %v825
      %v873 = vunpack.c.h.b16 %v825
      %v874 = vunpack.c.l.b16 %v826
      %v875 = vunpack.c.h.b16 %v826
      %v876 = vpack.c.b16 %v862, %v860
      %v877 = vpack.c.b16 %v863, %v861
      %v878 = vpack.c.b16 %v866, %v864
      %v879 = vpack.c.b16 %v867, %v865
      %v880 = vpack.c.b16 %v870, %v868
      %v881 = vpack.c.b16 %v871, %v869
      %v882 = vpack.c.b16 %v874, %v872
      %v883 = vpack.c.b16 %v875, %v873
      %v912 = vunpack.c.l.b16 %v828
      %v913 = vunpack.c.h.b16 %v828
      %v914 = vunpack.c.l.b16 %v829
      %v915 = vunpack.c.h.b16 %v829
      %v916 = vunpack.c.l.b16 %v830
      %v917 = vunpack.c.h.b16 %v830
      %v918 = vunpack.c.l.b16 %v831
      %v919 = vunpack.c.h.b16 %v831
      %v920 = vunpack.c.l.b16 %v832
      %v921 = vunpack.c.h.b16 %v832
      %v922 = vunpack.c.l.b16 %v833
      %v923 = vunpack.c.h.b16 %v833
      %v924 = vunpack.c.l.b16 %v834
      %v925 = vunpack.c.h.b16 %v834
      %v926 = vunpack.c.l.b16 %v835
      %v927 = vunpack.c.h.b16 %v835
      %v928 = vunpack.c.l.b16 %v836
      %v929 = vunpack.c.h.b16 %v836
      %v930 = vunpack.c.l.b16 %v837
      %v931 = vunpack.c.h.b16 %v837
      %v932 = vunpack.c.l.b16 %v838
      %v933 = vunpack.c.h.b16 %v838
      %v934 = vunpack.c.l.b16 %v839
      %v935 = vunpack.c.h.b16 %v839
      %v936 = vunpack.c.l.b16 %v840
      %v937 = vunpack.c.h.b16 %v840
      %v938 = vunpack.c.l.b16 %v841
      %v939 = vunpack.c.h.b16 %v841
      %v940 = vunpack.c.l.b16 %v842
      %v941 = vunpack.c.h.b16 %v842
      %v942 = vunpack.c.l.b16 %v843
      %v943 = vunpack.c.h.b16 %v843
      %v944 = vunpack.c.l.b16 %v844
      %v945 = vunpack.c.h.b16 %v844
      %v946 = vunpack.c.l.b16 %v845
      %v947 = vunpack.c.h.b16 %v845
      %v948 = vunpack.c.l.b16 %v846
      %v949 = vunpack.c.h.b16 %v846
      %v950 = vunpack.c.l.b16 %v847
      %v951 = vunpack.c.h.b16 %v847
      %v952 = vunpack.c.l.b16 %v848
      %v953 = vunpack.c.h.b16 %v848
      %v954 = vunpack.c.l.b16 %v849
      %v955 = vunpack.c.h.b16 %v849
      %v956 = vunpack.c.l.b16 %v850
      %v957 = vunpack.c.h.b16 %v850
      %v958 = vunpack.c.l.b16 %v851
      %v959 = vunpack.c.h.b16 %v851
      %v960 = vpack.c.b16 %v914, %v912
      %v961 = vpack.c.b16 %v915, %v913
      %v962 = vpack.c.b16 %v918, %v916
      %v963 = vpack.c.b16 %v919, %v917
      %v964 = vpack.c.b16 %v922, %v920
      %v965 = vpack.c.b16 %v923, %v921
      %v966 = vpack.c.b16 %v926, %v924
      %v967 = vpack.c.b16 %v927, %v925
      %v968 = vpack.c.b16 %v930, %v928
      %v969 = vpack.c.b16 %v931, %v929
      %v970 = vpack.c.b16 %v934, %v932
      %v971 = vpack.c.b16 %v935, %v933
      %v972 = vpack.c.b16 %v938, %v936
      %v973 = vpack.c.b16 %v939, %v937
      %v974 = vpack.c.b16 %v942, %v940
      %v975 = vpack.c.b16 %v943, %v941
      %v976 = vpack.c.b16 %v946, %v944
      %v977 = vpack.c.b16 %v947, %v945
      %v978 = vpack.c.b16 %v950, %v948
      %v979 = vpack.c.b16 %v951, %v949
      %v980 = vpack.c.b16 %v954, %v952
      %v981 = vpack.c.b16 %v955, %v953
      %v982 = vpack.c.b16 %v958, %v956
      %v983 = vpack.c.b16 %v959, %v957
      %v1007 = vsel %vm391, %v877, 0
      %v1010 = vsel %vm391, %v879, 0
      %v1013 = vsel %vm391, %v881, 0
      %v1016 = vsel %vm391, %v883, 0
      %v1019 = vand.u32 %v982, %v407
      %v1022 = vand.u32 %v983, %v407
      %1024 = vmatpush.bf16.msra.mxu0 %v974
      %1025 = vmatpush.bf16.msra.mxu0 %v972
      %1026 = vmatpush.bf16.msra.mxu0 %v970
      %1027 = vmatpush.bf16.msra.mxu0 %v968
      %1028 = vmatpush.bf16.msra.mxu0 %v966
      %1029 = vmatpush.bf16.msra.mxu0 %v964
      %1030 = vmatpush.bf16.msra.mxu0 %v962
      %1031 = vmatpush.bf16.msra.mxu0 %v960
      %1032 = vmatmul.bf16.gmra.mxu0 %v876
      %v1033 = vpop.f32.mrf.mxu0
      %v1034 = vadd.f32 0.0, %v1033
      %v1035 = vpop.f32.mrf.mxu0
      %v1036 = vadd.f32 0.0, %v1035
      %1037 = vmatmul.bf16.gmra.mxu0 %v878
      %v1038 = vpop.f32.mrf.mxu0
      %v1039 = vadd.f32 0.0, %v1038
      %v1040 = vpop.f32.mrf.mxu0
      %v1041 = vadd.f32 0.0, %v1040
      %1042 = vmatmul.bf16.gmra.mxu0 %v880
      %v1043 = vpop.f32.mrf.mxu0
      %v1044 = vadd.f32 0.0, %v1043
      %v1045 = vpop.f32.mrf.mxu0
      %v1046 = vadd.f32 0.0, %v1045
      %1047 = vmatmul.bf16.gmra.mxu0 %v882
      %v1048 = vpop.f32.mrf.mxu0
      %v1049 = vadd.f32 0.0, %v1048
      %v1050 = vpop.f32.mrf.mxu0
      %v1051 = vadd.f32 0.0, %v1050
      %1052 = vdwg.mxu0
      %1053 = vmatpush.bf16.msra.mxu0 0
      %1054 = vmatpush.bf16.msra.mxu0 0
      %1055 = vmatpush.bf16.msra.mxu0 0
      %1056 = vmatpush.bf16.msra.mxu0 0
      %1057 = vmatpush.bf16.msra.mxu0 %v1019
      %1058 = vmatpush.bf16.msra.mxu0 %v980
      %1059 = vmatpush.bf16.msra.mxu0 %v978
      %1060 = vmatpush.bf16.msra.mxu0 %v976
      %1061 = vmatmul.bf16.gmra.mxu0 %v1007
      %v1062 = vpop.f32.mrf.mxu0
      %v1063 = vadd.f32 %v1034, %v1062
      %v1064 = vpop.f32.mrf.mxu0
      %v1065 = vadd.f32 %v1036, %v1064
      %1066 = vmatmul.bf16.gmra.mxu0 %v1010
      %v1067 = vpop.f32.mrf.mxu0
      %v1068 = vadd.f32 %v1039, %v1067
      %v1069 = vpop.f32.mrf.mxu0
      %v1070 = vadd.f32 %v1041, %v1069
      %1071 = vmatmul.bf16.gmra.mxu0 %v1013
      %v1072 = vpop.f32.mrf.mxu0
      %v1073 = vadd.f32 %v1044, %v1072
      %v1074 = vpop.f32.mrf.mxu0
      %v1075 = vadd.f32 %v1046, %v1074
      %1076 = vmatmul.bf16.gmra.mxu0 %v1016
      %v1077 = vpop.f32.mrf.mxu0
      %v1078 = vadd.f32 %v1049, %v1077
      %v1079 = vpop.f32.mrf.mxu0
      %v1080 = vadd.f32 %v1051, %v1079
      %1081 = vdwg.mxu0
      %1082 = vmatpush.bf16.msra.mxu0 %v975
      %1083 = vmatpush.bf16.msra.mxu0 %v973
      %1084 = vmatpush.bf16.msra.mxu0 %v971
      %1085 = vmatpush.bf16.msra.mxu0 %v969
      %1086 = vmatpush.bf16.msra.mxu0 %v967
      %1087 = vmatpush.bf16.msra.mxu0 %v965
      %1088 = vmatpush.bf16.msra.mxu0 %v963
      %1089 = vmatpush.bf16.msra.mxu0 %v961
      %1090 = vmatmul.bf16.gmra.mxu0 %v876
      %v1091 = vpop.f32.mrf.mxu0
      %v1092 = vadd.f32 0.0, %v1091
      %v1093 = vpop.f32.mrf.mxu0
      %v1094 = vadd.f32 0.0, %v1093
      %1095 = vmatmul.bf16.gmra.mxu0 %v878
      %v1096 = vpop.f32.mrf.mxu0
      %v1097 = vadd.f32 0.0, %v1096
      %v1098 = vpop.f32.mrf.mxu0
      %v1099 = vadd.f32 0.0, %v1098
      %1100 = vmatmul.bf16.gmra.mxu0 %v880
      %v1101 = vpop.f32.mrf.mxu0
      %v1102 = vadd.f32 0.0, %v1101
      %v1103 = vpop.f32.mrf.mxu0
      %v1104 = vadd.f32 0.0, %v1103
      %1105 = vmatmul.bf16.gmra.mxu0 %v882
      %v1106 = vpop.f32.mrf.mxu0
      %v1107 = vadd.f32 0.0, %v1106
      %v1108 = vpop.f32.mrf.mxu0
      %v1109 = vadd.f32 0.0, %v1108
      %1110 = vdwg.mxu0
      %1111 = vmatpush.bf16.msra.mxu0 0
      %1112 = vmatpush.bf16.msra.mxu0 0
      %1113 = vmatpush.bf16.msra.mxu0 0
      %1114 = vmatpush.bf16.msra.mxu0 0
      %1115 = vmatpush.bf16.msra.mxu0 %v1022
      %1116 = vmatpush.bf16.msra.mxu0 %v981
      %1117 = vmatpush.bf16.msra.mxu0 %v979
      %1118 = vmatpush.bf16.msra.mxu0 %v977
      %1119 = vmatmul.bf16.gmra.mxu0 %v1007
      %v1120 = vpop.f32.mrf.mxu0
      %v1121 = vadd.f32 %v1092, %v1120
      %v1122 = vpop.f32.mrf.mxu0
      %v1123 = vadd.f32 %v1094, %v1122
      %1124 = vmatmul.bf16.gmra.mxu0 %v1010
      %v1125 = vpop.f32.mrf.mxu0
      %v1126 = vadd.f32 %v1097, %v1125
      %v1127 = vpop.f32.mrf.mxu0
      %v1128 = vadd.f32 %v1099, %v1127
      %1129 = vmatmul.bf16.gmra.mxu0 %v1013
      %v1130 = vpop.f32.mrf.mxu0
      %v1131 = vadd.f32 %v1102, %v1130
      %v1132 = vpop.f32.mrf.mxu0
      %v1133 = vadd.f32 %v1104, %v1132
      %1134 = vmatmul.bf16.gmra.mxu0 %v1016
      %v1135 = vpop.f32.mrf.mxu0
      %v1136 = vadd.f32 %v1107, %v1135
      %v1137 = vpop.f32.mrf.mxu0
      %v1138 = vadd.f32 %v1109, %v1137
      %1139 = vdwg.mxu0
      %v1140 = vadd.f32 %v741, %v1063
      %v1141 = vadd.f32 %v799, %v1121
      %v1142 = vadd.f32 %v743, %v1065
      %v1143 = vadd.f32 %v801, %v1123
      %v1144 = vadd.f32 %v746, %v1068
      %v1145 = vadd.f32 %v804, %v1126
      %v1146 = vadd.f32 %v748, %v1070
      %v1147 = vadd.f32 %v806, %v1128
      %v1148 = vadd.f32 %v751, %v1073
      %v1149 = vadd.f32 %v809, %v1131
      %v1150 = vadd.f32 %v753, %v1075
      %v1151 = vadd.f32 %v811, %v1133
      %v1152 = vadd.f32 %v756, %v1078
      %v1153 = vadd.f32 %v814, %v1136
      %v1154 = vadd.f32 %v758, %v1080
      %v1155 = vadd.f32 %v816, %v1138
      %s1156 = scalar_lea.vmem %s164, 48
      %v1157 = vld [vmem:[%s1156] sm:$0xff]
      %v1158 = vld [vmem:[%s1156 + $0x8] sm:$0xff]
      %v1159 = vld [vmem:[%s1156 + $0x10] sm:$0xff]
      %v1160 = vld [vmem:[%s1156 + $0x18] sm:$0xff]
      %v1161 = vld [vmem:[%s1156 + $0x20] sm:$0xff]
      %v1162 = vld [vmem:[%s1156 + $0x28] sm:$0xff]
      %v1163 = vld [vmem:[%s1156 + $0x30] sm:$0xff]
      %v1164 = vld [vmem:[%s1156 + $0x38] sm:$0xff]
      %s1165 = scalar_lea.vmem %s1, 576
      %v1166 = vld [vmem:[%s1165] sm:$0xff]
      %v1167 = vld [vmem:[%s1165 + $0x8] sm:$0xff]
      %v1168 = vld [vmem:[%s1165 + $0x10] sm:$0xff]
      %v1169 = vld [vmem:[%s1165 + $0x18] sm:$0xff]
      %v1170 = vld [vmem:[%s1165 + $0x20] sm:$0xff]
      %v1171 = vld [vmem:[%s1165 + $0x28] sm:$0xff]
      %v1172 = vld [vmem:[%s1165 + $0x30] sm:$0xff]
      %v1173 = vld [vmem:[%s1165 + $0x38] sm:$0xff]
      %v1174 = vld [vmem:[%s1165 + $0x40] sm:$0xff]
      %v1175 = vld [vmem:[%s1165 + $0x48] sm:$0xff]
      %v1176 = vld [vmem:[%s1165 + $0x50] sm:$0xff]
      %v1177 = vld [vmem:[%s1165 + $0x58] sm:$0xff]
      %v1178 = vld [vmem:[%s1165 + $0x60] sm:$0xff]
      %v1179 = vld [vmem:[%s1165 + $0x68] sm:$0xff]
      %v1180 = vld [vmem:[%s1165 + $0x70] sm:$0xff]
      %v1181 = vld [vmem:[%s1165 + $0x78] sm:$0xff]
      %v1182 = vld [vmem:[%s1165 + $0x80] sm:$0xff]
      %v1183 = vld [vmem:[%s1165 + $0x88] sm:$0xff]
      %v1184 = vld [vmem:[%s1165 + $0x90] sm:$0xff]
      %v1185 = vld [vmem:[%s1165 + $0x98] sm:$0xff]
      %v1186 = vld [vmem:[%s1165 + $0xa0] sm:$0xff]
      %v1187 = vld [vmem:[%s1165 + $0xa8] sm:$0xff]
      %v1188 = vld [vmem:[%s1165 + $0xb0] sm:$0xff]
      %v1189 = vld [vmem:[%s1165 + $0xb8] sm:$0x77]
      %v1198 = vunpack.c.l.b16 %v1157
      %v1199 = vunpack.c.h.b16 %v1157
      %v1200 = vunpack.c.l.b16 %v1158
      %v1201 = vunpack.c.h.b16 %v1158
      %v1202 = vunpack.c.l.b16 %v1159
      %v1203 = vunpack.c.h.b16 %v1159
      %v1204 = vunpack.c.l.b16 %v1160
      %v1205 = vunpack.c.h.b16 %v1160
      %v1206 = vunpack.c.l.b16 %v1161
      %v1207 = vunpack.c.h.b16 %v1161
      %v1208 = vunpack.c.l.b16 %v1162
      %v1209 = vunpack.c.h.b16 %v1162
      %v1210 = vunpack.c.l.b16 %v1163
      %v1211 = vunpack.c.h.b16 %v1163
      %v1212 = vunpack.c.l.b16 %v1164
      %v1213 = vunpack.c.h.b16 %v1164
      %v1214 = vpack.c.b16 %v1200, %v1198
      %v1215 = vpack.c.b16 %v1201, %v1199
      %v1216 = vpack.c.b16 %v1204, %v1202
      %v1217 = vpack.c.b16 %v1205, %v1203
      %v1218 = vpack.c.b16 %v1208, %v1206
      %v1219 = vpack.c.b16 %v1209, %v1207
      %v1220 = vpack.c.b16 %v1212, %v1210
      %v1221 = vpack.c.b16 %v1213, %v1211
      %v1250 = vunpack.c.l.b16 %v1166
      %v1251 = vunpack.c.h.b16 %v1166
      %v1252 = vunpack.c.l.b16 %v1167
      %v1253 = vunpack.c.h.b16 %v1167
      %v1254 = vunpack.c.l.b16 %v1168
      %v1255 = vunpack.c.h.b16 %v1168
      %v1256 = vunpack.c.l.b16 %v1169
      %v1257 = vunpack.c.h.b16 %v1169
      %v1258 = vunpack.c.l.b16 %v1170
      %v1259 = vunpack.c.h.b16 %v1170
      %v1260 = vunpack.c.l.b16 %v1171
      %v1261 = vunpack.c.h.b16 %v1171
      %v1262 = vunpack.c.l.b16 %v1172
      %v1263 = vunpack.c.h.b16 %v1172
      %v1264 = vunpack.c.l.b16 %v1173
      %v1265 = vunpack.c.h.b16 %v1173
      %v1266 = vunpack.c.l.b16 %v1174
      %v1267 = vunpack.c.h.b16 %v1174
      %v1268 = vunpack.c.l.b16 %v1175
      %v1269 = vunpack.c.h.b16 %v1175
      %v1270 = vunpack.c.l.b16 %v1176
      %v1271 = vunpack.c.h.b16 %v1176
      %v1272 = vunpack.c.l.b16 %v1177
      %v1273 = vunpack.c.h.b16 %v1177
      %v1274 = vunpack.c.l.b16 %v1178
      %v1275 = vunpack.c.h.b16 %v1178
      %v1276 = vunpack.c.l.b16 %v1179
      %v1277 = vunpack.c.h.b16 %v1179
      %v1278 = vunpack.c.l.b16 %v1180
      %v1279 = vunpack.c.h.b16 %v1180
      %v1280 = vunpack.c.l.b16 %v1181
      %v1281 = vunpack.c.h.b16 %v1181
      %v1282 = vunpack.c.l.b16 %v1182
      %v1283 = vunpack.c.h.b16 %v1182
      %v1284 = vunpack.c.l.b16 %v1183
      %v1285 = vunpack.c.h.b16 %v1183
      %v1286 = vunpack.c.l.b16 %v1184
      %v1287 = vunpack.c.h.b16 %v1184
      %v1288 = vunpack.c.l.b16 %v1185
      %v1289 = vunpack.c.h.b16 %v1185
      %v1290 = vunpack.c.l.b16 %v1186
      %v1291 = vunpack.c.h.b16 %v1186
      %v1292 = vunpack.c.l.b16 %v1187
      %v1293 = vunpack.c.h.b16 %v1187
      %v1294 = vunpack.c.l.b16 %v1188
      %v1295 = vunpack.c.h.b16 %v1188
      %v1296 = vunpack.c.l.b16 %v1189
      %v1297 = vunpack.c.h.b16 %v1189
      %v1298 = vpack.c.b16 %v1252, %v1250
      %v1299 = vpack.c.b16 %v1253, %v1251
      %v1300 = vpack.c.b16 %v1256, %v1254
      %v1301 = vpack.c.b16 %v1257, %v1255
      %v1302 = vpack.c.b16 %v1260, %v1258
      %v1303 = vpack.c.b16 %v1261, %v1259
      %v1304 = vpack.c.b16 %v1264, %v1262
      %v1305 = vpack.c.b16 %v1265, %v1263
      %v1306 = vpack.c.b16 %v1268, %v1266
      %v1307 = vpack.c.b16 %v1269, %v1267
      %v1308 = vpack.c.b16 %v1272, %v1270
      %v1309 = vpack.c.b16 %v1273, %v1271
      %v1310 = vpack.c.b16 %v1276, %v1274
      %v1311 = vpack.c.b16 %v1277, %v1275
      %v1312 = vpack.c.b16 %v1280, %v1278
      %v1313 = vpack.c.b16 %v1281, %v1279
      %v1314 = vpack.c.b16 %v1284, %v1282
      %v1315 = vpack.c.b16 %v1285, %v1283
      %v1316 = vpack.c.b16 %v1288, %v1286
      %v1317 = vpack.c.b16 %v1289, %v1287
      %v1318 = vpack.c.b16 %v1292, %v1290
      %v1319 = vpack.c.b16 %v1293, %v1291
      %v1320 = vpack.c.b16 %v1296, %v1294
      %v1321 = vpack.c.b16 %v1297, %v1295
      %v1345 = vsel %vm391, %v1215, 0
      %v1348 = vsel %vm391, %v1217, 0
      %v1351 = vsel %vm391, %v1219, 0
      %v1354 = vsel %vm391, %v1221, 0
      %v1357 = vand.u32 %v1320, %v407
      %v1360 = vand.u32 %v1321, %v407
      %1362 = vmatpush.bf16.msra.mxu0 %v1312
      %1363 = vmatpush.bf16.msra.mxu0 %v1310
      %1364 = vmatpush.bf16.msra.mxu0 %v1308
      %1365 = vmatpush.bf16.msra.mxu0 %v1306
      %1366 = vmatpush.bf16.msra.mxu0 %v1304
      %1367 = vmatpush.bf16.msra.mxu0 %v1302
      %1368 = vmatpush.bf16.msra.mxu0 %v1300
      %1369 = vmatpush.bf16.msra.mxu0 %v1298
      %1370 = vmatmul.bf16.gmra.mxu0 %v1214
      %v1371 = vpop.f32.mrf.mxu0
      %v1372 = vadd.f32 0.0, %v1371
      %v1373 = vpop.f32.mrf.mxu0
      %v1374 = vadd.f32 0.0, %v1373
      %1375 = vmatmul.bf16.gmra.mxu0 %v1216
      %v1376 = vpop.f32.mrf.mxu0
      %v1377 = vadd.f32 0.0, %v1376
      %v1378 = vpop.f32.mrf.mxu0
      %v1379 = vadd.f32 0.0, %v1378
      %1380 = vmatmul.bf16.gmra.mxu0 %v1218
      %v1381 = vpop.f32.mrf.mxu0
      %v1382 = vadd.f32 0.0, %v1381
      %v1383 = vpop.f32.mrf.mxu0
      %v1384 = vadd.f32 0.0, %v1383
      %1385 = vmatmul.bf16.gmra.mxu0 %v1220
      %v1386 = vpop.f32.mrf.mxu0
      %v1387 = vadd.f32 0.0, %v1386
      %v1388 = vpop.f32.mrf.mxu0
      %v1389 = vadd.f32 0.0, %v1388
      %1390 = vdwg.mxu0
      %1391 = vmatpush.bf16.msra.mxu0 0
      %1392 = vmatpush.bf16.msra.mxu0 0
      %1393 = vmatpush.bf16.msra.mxu0 0
      %1394 = vmatpush.bf16.msra.mxu0 0
      %1395 = vmatpush.bf16.msra.mxu0 %v1357
      %1396 = vmatpush.bf16.msra.mxu0 %v1318
      %1397 = vmatpush.bf16.msra.mxu0 %v1316
      %1398 = vmatpush.bf16.msra.mxu0 %v1314
      %1399 = vmatmul.bf16.gmra.mxu0 %v1345
      %v1400 = vpop.f32.mrf.mxu0
      %v1401 = vadd.f32 %v1372, %v1400
      %v1402 = vpop.f32.mrf.mxu0
      %v1403 = vadd.f32 %v1374, %v1402
      %1404 = vmatmul.bf16.gmra.mxu0 %v1348
      %v1405 = vpop.f32.mrf.mxu0
      %v1406 = vadd.f32 %v1377, %v1405
      %v1407 = vpop.f32.mrf.mxu0
      %v1408 = vadd.f32 %v1379, %v1407
      %1409 = vmatmul.bf16.gmra.mxu0 %v1351
      %v1410 = vpop.f32.mrf.mxu0
      %v1411 = vadd.f32 %v1382, %v1410
      %v1412 = vpop.f32.mrf.mxu0
      %v1413 = vadd.f32 %v1384, %v1412
      %1414 = vmatmul.bf16.gmra.mxu0 %v1354
      %v1415 = vpop.f32.mrf.mxu0
      %v1416 = vadd.f32 %v1387, %v1415
      %v1417 = vpop.f32.mrf.mxu0
      %v1418 = vadd.f32 %v1389, %v1417
      %1419 = vdwg.mxu0
      %1420 = vmatpush.bf16.msra.mxu0 %v1313
      %1421 = vmatpush.bf16.msra.mxu0 %v1311
      %1422 = vmatpush.bf16.msra.mxu0 %v1309
      %1423 = vmatpush.bf16.msra.mxu0 %v1307
      %1424 = vmatpush.bf16.msra.mxu0 %v1305
      %1425 = vmatpush.bf16.msra.mxu0 %v1303
      %1426 = vmatpush.bf16.msra.mxu0 %v1301
      %1427 = vmatpush.bf16.msra.mxu0 %v1299
      %1428 = vmatmul.bf16.gmra.mxu0 %v1214
      %v1429 = vpop.f32.mrf.mxu0
      %v1430 = vadd.f32 0.0, %v1429
      %v1431 = vpop.f32.mrf.mxu0
      %v1432 = vadd.f32 0.0, %v1431
      %1433 = vmatmul.bf16.gmra.mxu0 %v1216
      %v1434 = vpop.f32.mrf.mxu0
      %v1435 = vadd.f32 0.0, %v1434
      %v1436 = vpop.f32.mrf.mxu0
      %v1437 = vadd.f32 0.0, %v1436
      %1438 = vmatmul.bf16.gmra.mxu0 %v1218
      %v1439 = vpop.f32.mrf.mxu0
      %v1440 = vadd.f32 0.0, %v1439
      %v1441 = vpop.f32.mrf.mxu0
      %v1442 = vadd.f32 0.0, %v1441
      %1443 = vmatmul.bf16.gmra.mxu0 %v1220
      %v1444 = vpop.f32.mrf.mxu0
      %v1445 = vadd.f32 0.0, %v1444
      %v1446 = vpop.f32.mrf.mxu0
      %v1447 = vadd.f32 0.0, %v1446
      %1448 = vdwg.mxu0
      %1449 = vmatpush.bf16.msra.mxu0 0
      %1450 = vmatpush.bf16.msra.mxu0 0
      %1451 = vmatpush.bf16.msra.mxu0 0
      %1452 = vmatpush.bf16.msra.mxu0 0
      %1453 = vmatpush.bf16.msra.mxu0 %v1360
      %1454 = vmatpush.bf16.msra.mxu0 %v1319
      %1455 = vmatpush.bf16.msra.mxu0 %v1317
      %1456 = vmatpush.bf16.msra.mxu0 %v1315
      %1457 = vmatmul.bf16.gmra.mxu0 %v1345
      %v1458 = vpop.f32.mrf.mxu0
      %v1459 = vadd.f32 %v1430, %v1458
      %v1460 = vpop.f32.mrf.mxu0
      %v1461 = vadd.f32 %v1432, %v1460
      %1462 = vmatmul.bf16.gmra.mxu0 %v1348
      %v1463 = vpop.f32.mrf.mxu0
      %v1464 = vadd.f32 %v1435, %v1463
      %v1465 = vpop.f32.mrf.mxu0
      %v1466 = vadd.f32 %v1437, %v1465
      %1467 = vmatmul.bf16.gmra.mxu0 %v1351
      %v1468 = vpop.f32.mrf.mxu0
      %v1469 = vadd.f32 %v1440, %v1468
      %v1470 = vpop.f32.mrf.mxu0
      %v1471 = vadd.f32 %v1442, %v1470
      %1472 = vmatmul.bf16.gmra.mxu0 %v1354
      %v1473 = vpop.f32.mrf.mxu0
      %v1474 = vadd.f32 %v1445, %v1473
      %v1475 = vpop.f32.mrf.mxu0
      %v1476 = vadd.f32 %v1447, %v1475
      %1477 = vdwg.mxu0
      %v1478 = vadd.f32 %v1140, %v1401
      %v1479 = vadd.f32 %v1141, %v1459
      %v1480 = vadd.f32 %v1142, %v1403
      %v1481 = vadd.f32 %v1143, %v1461
      %v1482 = vadd.f32 %v1144, %v1406
      %v1483 = vadd.f32 %v1145, %v1464
      %v1484 = vadd.f32 %v1146, %v1408
      %v1485 = vadd.f32 %v1147, %v1466
      %v1486 = vadd.f32 %v1148, %v1411
      %v1487 = vadd.f32 %v1149, %v1469
      %v1488 = vadd.f32 %v1150, %v1413
      %v1489 = vadd.f32 %v1151, %v1471
      %v1490 = vadd.f32 %v1152, %v1416
      %v1491 = vadd.f32 %v1153, %v1474
      %v1492 = vadd.f32 %v1154, %v1418
      %v1493 = vadd.f32 %v1155, %v1476
      %s1494 = scalar_lea.vmem %s164, 64
      %v1495 = vld [vmem:[%s1494] sm:$0xff]
      %v1496 = vld [vmem:[%s1494 + $0x8] sm:$0xff]
      %v1497 = vld [vmem:[%s1494 + $0x10] sm:$0xff]
      %v1498 = vld [vmem:[%s1494 + $0x18] sm:$0xff]
      %v1499 = vld [vmem:[%s1494 + $0x20] sm:$0xff]
      %v1500 = vld [vmem:[%s1494 + $0x28] sm:$0xff]
      %v1501 = vld [vmem:[%s1494 + $0x30] sm:$0xff]
      %v1502 = vld [vmem:[%s1494 + $0x38] sm:$0xff]
      %s1503 = scalar_lea.vmem %s1, 768
      %v1504 = vld [vmem:[%s1503] sm:$0xff]
      %v1505 = vld [vmem:[%s1503 + $0x8] sm:$0xff]
      %v1506 = vld [vmem:[%s1503 + $0x10] sm:$0xff]
      %v1507 = vld [vmem:[%s1503 + $0x18] sm:$0xff]
      %v1508 = vld [vmem:[%s1503 + $0x20] sm:$0xff]
      %v1509 = vld [vmem:[%s1503 + $0x28] sm:$0xff]
      %v1510 = vld [vmem:[%s1503 + $0x30] sm:$0xff]
      %v1511 = vld [vmem:[%s1503 + $0x38] sm:$0xff]
      %v1512 = vld [vmem:[%s1503 + $0x40] sm:$0xff]
      %v1513 = vld [vmem:[%s1503 + $0x48] sm:$0xff]
      %v1514 = vld [vmem:[%s1503 + $0x50] sm:$0xff]
      %v1515 = vld [vmem:[%s1503 + $0x58] sm:$0xff]
      %v1516 = vld [vmem:[%s1503 + $0x60] sm:$0xff]
      %v1517 = vld [vmem:[%s1503 + $0x68] sm:$0xff]
      %v1518 = vld [vmem:[%s1503 + $0x70] sm:$0xff]
      %v1519 = vld [vmem:[%s1503 + $0x78] sm:$0xff]
      %v1520 = vld [vmem:[%s1503 + $0x80] sm:$0xff]
      %v1521 = vld [vmem:[%s1503 + $0x88] sm:$0xff]
      %v1522 = vld [vmem:[%s1503 + $0x90] sm:$0xff]
      %v1523 = vld [vmem:[%s1503 + $0x98] sm:$0xff]
      %v1524 = vld [vmem:[%s1503 + $0xa0] sm:$0xff]
      %v1525 = vld [vmem:[%s1503 + $0xa8] sm:$0xff]
      %v1526 = vld [vmem:[%s1503 + $0xb0] sm:$0xff]
      %v1527 = vld [vmem:[%s1503 + $0xb8] sm:$0x77]
      %v1536 = vunpack.c.l.b16 %v1495
      %v1537 = vunpack.c.h.b16 %v1495
      %v1538 = vunpack.c.l.b16 %v1496
      %v1539 = vunpack.c.h.b16 %v1496
      %v1540 = vunpack.c.l.b16 %v1497
      %v1541 = vunpack.c.h.b16 %v1497
      %v1542 = vunpack.c.l.b16 %v1498
      %v1543 = vunpack.c.h.b16 %v1498
      %v1544 = vunpack.c.l.b16 %v1499
      %v1545 = vunpack.c.h.b16 %v1499
      %v1546 = vunpack.c.l.b16 %v1500
      %v1547 = vunpack.c.h.b16 %v1500
      %v1548 = vunpack.c.l.b16 %v1501
      %v1549 = vunpack.c.h.b16 %v1501
      %v1550 = vunpack.c.l.b16 %v1502
      %v1551 = vunpack.c.h.b16 %v1502
      %v1552 = vpack.c.b16 %v1538, %v1536
      %v1553 = vpack.c.b16 %v1539, %v1537
      %v1554 = vpack.c.b16 %v1542, %v1540
      %v1555 = vpack.c.b16 %v1543, %v1541
      %v1556 = vpack.c.b16 %v1546, %v1544
      %v1557 = vpack.c.b16 %v1547, %v1545
      %v1558 = vpack.c.b16 %v1550, %v1548
      %v1559 = vpack.c.b16 %v1551, %v1549
      %v1588 = vunpack.c.l.b16 %v1504
      %v1589 = vunpack.c.h.b16 %v1504
      %v1590 = vunpack.c.l.b16 %v1505
      %v1591 = vunpack.c.h.b16 %v1505
      %v1592 = vunpack.c.l.b16 %v1506
      %v1593 = vunpack.c.h.b16 %v1506
      %v1594 = vunpack.c.l.b16 %v1507
      %v1595 = vunpack.c.h.b16 %v1507
      %v1596 = vunpack.c.l.b16 %v1508
      %v1597 = vunpack.c.h.b16 %v1508
      %v1598 = vunpack.c.l.b16 %v1509
      %v1599 = vunpack.c.h.b16 %v1509
      %v1600 = vunpack.c.l.b16 %v1510
      %v1601 = vunpack.c.h.b16 %v1510
      %v1602 = vunpack.c.l.b16 %v1511
      %v1603 = vunpack.c.h.b16 %v1511
      %v1604 = vunpack.c.l.b16 %v1512
      %v1605 = vunpack.c.h.b16 %v1512
      %v1606 = vunpack.c.l.b16 %v1513
      %v1607 = vunpack.c.h.b16 %v1513
      %v1608 = vunpack.c.l.b16 %v1514
      %v1609 = vunpack.c.h.b16 %v1514
      %v1610 = vunpack.c.l.b16 %v1515
      %v1611 = vunpack.c.h.b16 %v1515
      %v1612 = vunpack.c.l.b16 %v1516
      %v1613 = vunpack.c.h.b16 %v1516
      %v1614 = vunpack.c.l.b16 %v1517
      %v1615 = vunpack.c.h.b16 %v1517
      %v1616 = vunpack.c.l.b16 %v1518
      %v1617 = vunpack.c.h.b16 %v1518
      %v1618 = vunpack.c.l.b16 %v1519
      %v1619 = vunpack.c.h.b16 %v1519
      %v1620 = vunpack.c.l.b16 %v1520
      %v1621 = vunpack.c.h.b16 %v1520
      %v1622 = vunpack.c.l.b16 %v1521
      %v1623 = vunpack.c.h.b16 %v1521
      %v1624 = vunpack.c.l.b16 %v1522
      %v1625 = vunpack.c.h.b16 %v1522
      %v1626 = vunpack.c.l.b16 %v1523
      %v1627 = vunpack.c.h.b16 %v1523
      %v1628 = vunpack.c.l.b16 %v1524
      %v1629 = vunpack.c.h.b16 %v1524
      %v1630 = vunpack.c.l.b16 %v1525
      %v1631 = vunpack.c.h.b16 %v1525
      %v1632 = vunpack.c.l.b16 %v1526
      %v1633 = vunpack.c.h.b16 %v1526
      %v1634 = vunpack.c.l.b16 %v1527
      %v1635 = vunpack.c.h.b16 %v1527
      %v1636 = vpack.c.b16 %v1590, %v1588
      %v1637 = vpack.c.b16 %v1591, %v1589
      %v1638 = vpack.c.b16 %v1594, %v1592
      %v1639 = vpack.c.b16 %v1595, %v1593
      %v1640 = vpack.c.b16 %v1598, %v1596
      %v1641 = vpack.c.b16 %v1599, %v1597
      %v1642 = vpack.c.b16 %v1602, %v1600
      %v1643 = vpack.c.b16 %v1603, %v1601
      %v1644 = vpack.c.b16 %v1606, %v1604
      %v1645 = vpack.c.b16 %v1607, %v1605
      %v1646 = vpack.c.b16 %v1610, %v1608
      %v1647 = vpack.c.b16 %v1611, %v1609
      %v1648 = vpack.c.b16 %v1614, %v1612
      %v1649 = vpack.c.b16 %v1615, %v1613
      %v1650 = vpack.c.b16 %v1618, %v1616
      %v1651 = vpack.c.b16 %v1619, %v1617
      %v1652 = vpack.c.b16 %v1622, %v1620
      %v1653 = vpack.c.b16 %v1623, %v1621
      %v1654 = vpack.c.b16 %v1626, %v1624
      %v1655 = vpack.c.b16 %v1627, %v1625
      %v1656 = vpack.c.b16 %v1630, %v1628
      %v1657 = vpack.c.b16 %v1631, %v1629
      %v1658 = vpack.c.b16 %v1634, %v1632
      %v1659 = vpack.c.b16 %v1635, %v1633
      %v1683 = vsel %vm391, %v1553, 0
      %v1686 = vsel %vm391, %v1555, 0
      %v1689 = vsel %vm391, %v1557, 0
      %v1692 = vsel %vm391, %v1559, 0
      %v1695 = vand.u32 %v1658, %v407
      %v1698 = vand.u32 %v1659, %v407
      %1700 = vmatpush.bf16.msra.mxu0 %v1650
      %1701 = vmatpush.bf16.msra.mxu0 %v1648
      %1702 = vmatpush.bf16.msra.mxu0 %v1646
      %1703 = vmatpush.bf16.msra.mxu0 %v1644
      %1704 = vmatpush.bf16.msra.mxu0 %v1642
      %1705 = vmatpush.bf16.msra.mxu0 %v1640
      %1706 = vmatpush.bf16.msra.mxu0 %v1638
      %1707 = vmatpush.bf16.msra.mxu0 %v1636
      %1708 = vmatmul.bf16.gmra.mxu0 %v1552
      %v1709 = vpop.f32.mrf.mxu0
      %v1710 = vadd.f32 0.0, %v1709
      %v1711 = vpop.f32.mrf.mxu0
      %v1712 = vadd.f32 0.0, %v1711
      %1713 = vmatmul.bf16.gmra.mxu0 %v1554
      %v1714 = vpop.f32.mrf.mxu0
      %v1715 = vadd.f32 0.0, %v1714
      %v1716 = vpop.f32.mrf.mxu0
      %v1717 = vadd.f32 0.0, %v1716
      %1718 = vmatmul.bf16.gmra.mxu0 %v1556
      %v1719 = vpop.f32.mrf.mxu0
      %v1720 = vadd.f32 0.0, %v1719
      %v1721 = vpop.f32.mrf.mxu0
      %v1722 = vadd.f32 0.0, %v1721
      %1723 = vmatmul.bf16.gmra.mxu0 %v1558
      %v1724 = vpop.f32.mrf.mxu0
      %v1725 = vadd.f32 0.0, %v1724
      %v1726 = vpop.f32.mrf.mxu0
      %v1727 = vadd.f32 0.0, %v1726
      %1728 = vdwg.mxu0
      %1729 = vmatpush.bf16.msra.mxu0 0
      %1730 = vmatpush.bf16.msra.mxu0 0
      %1731 = vmatpush.bf16.msra.mxu0 0
      %1732 = vmatpush.bf16.msra.mxu0 0
      %1733 = vmatpush.bf16.msra.mxu0 %v1695
      %1734 = vmatpush.bf16.msra.mxu0 %v1656
      %1735 = vmatpush.bf16.msra.mxu0 %v1654
      %1736 = vmatpush.bf16.msra.mxu0 %v1652
      %1737 = vmatmul.bf16.gmra.mxu0 %v1683
      %v1738 = vpop.f32.mrf.mxu0
      %v1739 = vadd.f32 %v1710, %v1738
      %v1740 = vpop.f32.mrf.mxu0
      %v1741 = vadd.f32 %v1712, %v1740
      %1742 = vmatmul.bf16.gmra.mxu0 %v1686
      %v1743 = vpop.f32.mrf.mxu0
      %v1744 = vadd.f32 %v1715, %v1743
      %v1745 = vpop.f32.mrf.mxu0
      %v1746 = vadd.f32 %v1717, %v1745
      %1747 = vmatmul.bf16.gmra.mxu0 %v1689
      %v1748 = vpop.f32.mrf.mxu0
      %v1749 = vadd.f32 %v1720, %v1748
      %v1750 = vpop.f32.mrf.mxu0
      %v1751 = vadd.f32 %v1722, %v1750
      %1752 = vmatmul.bf16.gmra.mxu0 %v1692
      %v1753 = vpop.f32.mrf.mxu0
      %v1754 = vadd.f32 %v1725, %v1753
      %v1755 = vpop.f32.mrf.mxu0
      %v1756 = vadd.f32 %v1727, %v1755
      %1757 = vdwg.mxu0
      %1758 = vmatpush.bf16.msra.mxu0 %v1651
      %1759 = vmatpush.bf16.msra.mxu0 %v1649
      %1760 = vmatpush.bf16.msra.mxu0 %v1647
      %1761 = vmatpush.bf16.msra.mxu0 %v1645
      %1762 = vmatpush.bf16.msra.mxu0 %v1643
      %1763 = vmatpush.bf16.msra.mxu0 %v1641
      %1764 = vmatpush.bf16.msra.mxu0 %v1639
      %1765 = vmatpush.bf16.msra.mxu0 %v1637
      %1766 = vmatmul.bf16.gmra.mxu0 %v1552
      %v1767 = vpop.f32.mrf.mxu0
      %v1768 = vadd.f32 0.0, %v1767
      %v1769 = vpop.f32.mrf.mxu0
      %v1770 = vadd.f32 0.0, %v1769
      %1771 = vmatmul.bf16.gmra.mxu0 %v1554
      %v1772 = vpop.f32.mrf.mxu0
      %v1773 = vadd.f32 0.0, %v1772
      %v1774 = vpop.f32.mrf.mxu0
      %v1775 = vadd.f32 0.0, %v1774
      %1776 = vmatmul.bf16.gmra.mxu0 %v1556
      %v1777 = vpop.f32.mrf.mxu0
      %v1778 = vadd.f32 0.0, %v1777
      %v1779 = vpop.f32.mrf.mxu0
      %v1780 = vadd.f32 0.0, %v1779
      %1781 = vmatmul.bf16.gmra.mxu0 %v1558
      %v1782 = vpop.f32.mrf.mxu0
      %v1783 = vadd.f32 0.0, %v1782
      %v1784 = vpop.f32.mrf.mxu0
      %v1785 = vadd.f32 0.0, %v1784
      %1786 = vdwg.mxu0
      %1787 = vmatpush.bf16.msra.mxu0 0
      %1788 = vmatpush.bf16.msra.mxu0 0
      %1789 = vmatpush.bf16.msra.mxu0 0
      %1790 = vmatpush.bf16.msra.mxu0 0
      %1791 = vmatpush.bf16.msra.mxu0 %v1698
      %1792 = vmatpush.bf16.msra.mxu0 %v1657
      %1793 = vmatpush.bf16.msra.mxu0 %v1655
      %1794 = vmatpush.bf16.msra.mxu0 %v1653
      %1795 = vmatmul.bf16.gmra.mxu0 %v1683
      %v1796 = vpop.f32.mrf.mxu0
      %v1797 = vadd.f32 %v1768, %v1796
      %v1798 = vpop.f32.mrf.mxu0
      %v1799 = vadd.f32 %v1770, %v1798
      %1800 = vmatmul.bf16.gmra.mxu0 %v1686
      %v1801 = vpop.f32.mrf.mxu0
      %v1802 = vadd.f32 %v1773, %v1801
      %v1803 = vpop.f32.mrf.mxu0
      %v1804 = vadd.f32 %v1775, %v1803
      %1805 = vmatmul.bf16.gmra.mxu0 %v1689
      %v1806 = vpop.f32.mrf.mxu0
      %v1807 = vadd.f32 %v1778, %v1806
      %v1808 = vpop.f32.mrf.mxu0
      %v1809 = vadd.f32 %v1780, %v1808
      %1810 = vmatmul.bf16.gmra.mxu0 %v1692
      %v1811 = vpop.f32.mrf.mxu0
      %v1812 = vadd.f32 %v1783, %v1811
      %v1813 = vpop.f32.mrf.mxu0
      %v1814 = vadd.f32 %v1785, %v1813
      %1815 = vdwg.mxu0
      %v1816 = vadd.f32 %v1478, %v1739
      %v1817 = vadd.f32 %v1479, %v1797
      %v1818 = vadd.f32 %v1480, %v1741
      %v1819 = vadd.f32 %v1481, %v1799
      %v1820 = vadd.f32 %v1482, %v1744
      %v1821 = vadd.f32 %v1483, %v1802
      %v1822 = vadd.f32 %v1484, %v1746
      %v1823 = vadd.f32 %v1485, %v1804
      %v1824 = vadd.f32 %v1486, %v1749
      %v1825 = vadd.f32 %v1487, %v1807
      %v1826 = vadd.f32 %v1488, %v1751
      %v1827 = vadd.f32 %v1489, %v1809
      %v1828 = vadd.f32 %v1490, %v1754
      %v1829 = vadd.f32 %v1491, %v1812
      %v1830 = vadd.f32 %v1492, %v1756
      %v1831 = vadd.f32 %v1493, %v1814
      %s1832 = scalar_lea.vmem %s164, 80
      %v1833 = vld [vmem:[%s1832] sm:$0xff]
      %v1834 = vld [vmem:[%s1832 + $0x8] sm:$0xff]
      %v1835 = vld [vmem:[%s1832 + $0x10] sm:$0xff]
      %v1836 = vld [vmem:[%s1832 + $0x18] sm:$0xff]
      %v1837 = vld [vmem:[%s1832 + $0x20] sm:$0xff]
      %v1838 = vld [vmem:[%s1832 + $0x28] sm:$0xff]
      %v1839 = vld [vmem:[%s1832 + $0x30] sm:$0xff]
      %v1840 = vld [vmem:[%s1832 + $0x38] sm:$0xff]
      %s1841 = scalar_lea.vmem %s1, 960
      %v1842 = vld [vmem:[%s1841] sm:$0xff]
      %v1843 = vld [vmem:[%s1841 + $0x8] sm:$0xff]
      %v1844 = vld [vmem:[%s1841 + $0x10] sm:$0xff]
      %v1845 = vld [vmem:[%s1841 + $0x18] sm:$0xff]
      %v1846 = vld [vmem:[%s1841 + $0x20] sm:$0xff]
      %v1847 = vld [vmem:[%s1841 + $0x28] sm:$0xff]
      %v1848 = vld [vmem:[%s1841 + $0x30] sm:$0xff]
      %v1849 = vld [vmem:[%s1841 + $0x38] sm:$0xff]
      %v1850 = vld [vmem:[%s1841 + $0x40] sm:$0xff]
      %v1851 = vld [vmem:[%s1841 + $0x48] sm:$0xff]
      %v1852 = vld [vmem:[%s1841 + $0x50] sm:$0xff]
      %v1853 = vld [vmem:[%s1841 + $0x58] sm:$0xff]
      %v1854 = vld [vmem:[%s1841 + $0x60] sm:$0xff]
      %v1855 = vld [vmem:[%s1841 + $0x68] sm:$0xff]
      %v1856 = vld [vmem:[%s1841 + $0x70] sm:$0xff]
      %v1857 = vld [vmem:[%s1841 + $0x78] sm:$0xff]
      %v1858 = vld [vmem:[%s1841 + $0x80] sm:$0xff]
      %v1859 = vld [vmem:[%s1841 + $0x88] sm:$0xff]
      %v1860 = vld [vmem:[%s1841 + $0x90] sm:$0xff]
      %v1861 = vld [vmem:[%s1841 + $0x98] sm:$0xff]
      %v1862 = vld [vmem:[%s1841 + $0xa0] sm:$0xff]
      %v1863 = vld [vmem:[%s1841 + $0xa8] sm:$0xff]
      %v1864 = vld [vmem:[%s1841 + $0xb0] sm:$0xff]
      %v1865 = vld [vmem:[%s1841 + $0xb8] sm:$0x77]
      %v1874 = vunpack.c.l.b16 %v1833
      %v1875 = vunpack.c.h.b16 %v1833
      %v1876 = vunpack.c.l.b16 %v1834
      %v1877 = vunpack.c.h.b16 %v1834
      %v1878 = vunpack.c.l.b16 %v1835
      %v1879 = vunpack.c.h.b16 %v1835
      %v1880 = vunpack.c.l.b16 %v1836
      %v1881 = vunpack.c.h.b16 %v1836
      %v1882 = vunpack.c.l.b16 %v1837
      %v1883 = vunpack.c.h.b16 %v1837
      %v1884 = vunpack.c.l.b16 %v1838
      %v1885 = vunpack.c.h.b16 %v1838
      %v1886 = vunpack.c.l.b16 %v1839
      %v1887 = vunpack.c.h.b16 %v1839
      %v1888 = vunpack.c.l.b16 %v1840
      %v1889 = vunpack.c.h.b16 %v1840
      %v1890 = vpack.c.b16 %v1876, %v1874
      %v1891 = vpack.c.b16 %v1877, %v1875
      %v1892 = vpack.c.b16 %v1880, %v1878
      %v1893 = vpack.c.b16 %v1881, %v1879
      %v1894 = vpack.c.b16 %v1884, %v1882
      %v1895 = vpack.c.b16 %v1885, %v1883
      %v1896 = vpack.c.b16 %v1888, %v1886
      %v1897 = vpack.c.b16 %v1889, %v1887
      %v1926 = vunpack.c.l.b16 %v1842
      %v1927 = vunpack.c.h.b16 %v1842
      %v1928 = vunpack.c.l.b16 %v1843
      %v1929 = vunpack.c.h.b16 %v1843
      %v1930 = vunpack.c.l.b16 %v1844
      %v1931 = vunpack.c.h.b16 %v1844
      %v1932 = vunpack.c.l.b16 %v1845
      %v1933 = vunpack.c.h.b16 %v1845
      %v1934 = vunpack.c.l.b16 %v1846
      %v1935 = vunpack.c.h.b16 %v1846
      %v1936 = vunpack.c.l.b16 %v1847
      %v1937 = vunpack.c.h.b16 %v1847
      %v1938 = vunpack.c.l.b16 %v1848
      %v1939 = vunpack.c.h.b16 %v1848
      %v1940 = vunpack.c.l.b16 %v1849
      %v1941 = vunpack.c.h.b16 %v1849
      %v1942 = vunpack.c.l.b16 %v1850
      %v1943 = vunpack.c.h.b16 %v1850
      %v1944 = vunpack.c.l.b16 %v1851
      %v1945 = vunpack.c.h.b16 %v1851
      %v1946 = vunpack.c.l.b16 %v1852
      %v1947 = vunpack.c.h.b16 %v1852
      %v1948 = vunpack.c.l.b16 %v1853
      %v1949 = vunpack.c.h.b16 %v1853
      %v1950 = vunpack.c.l.b16 %v1854
      %v1951 = vunpack.c.h.b16 %v1854
      %v1952 = vunpack.c.l.b16 %v1855
      %v1953 = vunpack.c.h.b16 %v1855
      %v1954 = vunpack.c.l.b16 %v1856
      %v1955 = vunpack.c.h.b16 %v1856
      %v1956 = vunpack.c.l.b16 %v1857
      %v1957 = vunpack.c.h.b16 %v1857
      %v1958 = vunpack.c.l.b16 %v1858
      %v1959 = vunpack.c.h.b16 %v1858
      %v1960 = vunpack.c.l.b16 %v1859
      %v1961 = vunpack.c.h.b16 %v1859
      %v1962 = vunpack.c.l.b16 %v1860
      %v1963 = vunpack.c.h.b16 %v1860
      %v1964 = vunpack.c.l.b16 %v1861
      %v1965 = vunpack.c.h.b16 %v1861
      %v1966 = vunpack.c.l.b16 %v1862
      %v1967 = vunpack.c.h.b16 %v1862
      %v1968 = vunpack.c.l.b16 %v1863
      %v1969 = vunpack.c.h.b16 %v1863
      %v1970 = vunpack.c.l.b16 %v1864
      %v1971 = vunpack.c.h.b16 %v1864
      %v1972 = vunpack.c.l.b16 %v1865
      %v1973 = vunpack.c.h.b16 %v1865
      %v1974 = vpack.c.b16 %v1928, %v1926
      %v1975 = vpack.c.b16 %v1929, %v1927
      %v1976 = vpack.c.b16 %v1932, %v1930
      %v1977 = vpack.c.b16 %v1933, %v1931
      %v1978 = vpack.c.b16 %v1936, %v1934
      %v1979 = vpack.c.b16 %v1937, %v1935
      %v1980 = vpack.c.b16 %v1940, %v1938
      %v1981 = vpack.c.b16 %v1941, %v1939
      %v1982 = vpack.c.b16 %v1944, %v1942
      %v1983 = vpack.c.b16 %v1945, %v1943
      %v1984 = vpack.c.b16 %v1948, %v1946
      %v1985 = vpack.c.b16 %v1949, %v1947
      %v1986 = vpack.c.b16 %v1952, %v1950
      %v1987 = vpack.c.b16 %v1953, %v1951
      %v1988 = vpack.c.b16 %v1956, %v1954
      %v1989 = vpack.c.b16 %v1957, %v1955
      %v1990 = vpack.c.b16 %v1960, %v1958
      %v1991 = vpack.c.b16 %v1961, %v1959
      %v1992 = vpack.c.b16 %v1964, %v1962
      %v1993 = vpack.c.b16 %v1965, %v1963
      %v1994 = vpack.c.b16 %v1968, %v1966
      %v1995 = vpack.c.b16 %v1969, %v1967
      %v1996 = vpack.c.b16 %v1972, %v1970
      %v1997 = vpack.c.b16 %v1973, %v1971
      %v2021 = vsel %vm391, %v1891, 0
      %v2024 = vsel %vm391, %v1893, 0
      %v2027 = vsel %vm391, %v1895, 0
      %v2030 = vsel %vm391, %v1897, 0
      %v2033 = vand.u32 %v1996, %v407
      %v2036 = vand.u32 %v1997, %v407
      %2038 = vmatpush.bf16.msra.mxu0 %v1988
      %2039 = vmatpush.bf16.msra.mxu0 %v1986
      %2040 = vmatpush.bf16.msra.mxu0 %v1984
      %2041 = vmatpush.bf16.msra.mxu0 %v1982
      %2042 = vmatpush.bf16.msra.mxu0 %v1980
      %2043 = vmatpush.bf16.msra.mxu0 %v1978
      %2044 = vmatpush.bf16.msra.mxu0 %v1976
      %2045 = vmatpush.bf16.msra.mxu0 %v1974
      %2046 = vmatmul.bf16.gmra.mxu0 %v1890
      %v2047 = vpop.f32.mrf.mxu0
      %v2048 = vadd.f32 0.0, %v2047
      %v2049 = vpop.f32.mrf.mxu0
      %v2050 = vadd.f32 0.0, %v2049
      %2051 = vmatmul.bf16.gmra.mxu0 %v1892
      %v2052 = vpop.f32.mrf.mxu0
      %v2053 = vadd.f32 0.0, %v2052
      %v2054 = vpop.f32.mrf.mxu0
      %v2055 = vadd.f32 0.0, %v2054
      %2056 = vmatmul.bf16.gmra.mxu0 %v1894
      %v2057 = vpop.f32.mrf.mxu0
      %v2058 = vadd.f32 0.0, %v2057
      %v2059 = vpop.f32.mrf.mxu0
      %v2060 = vadd.f32 0.0, %v2059
      %2061 = vmatmul.bf16.gmra.mxu0 %v1896
      %v2062 = vpop.f32.mrf.mxu0
      %v2063 = vadd.f32 0.0, %v2062
      %v2064 = vpop.f32.mrf.mxu0
      %v2065 = vadd.f32 0.0, %v2064
      %2066 = vdwg.mxu0
      %2067 = vmatpush.bf16.msra.mxu0 0
      %2068 = vmatpush.bf16.msra.mxu0 0
      %2069 = vmatpush.bf16.msra.mxu0 0
      %2070 = vmatpush.bf16.msra.mxu0 0
      %2071 = vmatpush.bf16.msra.mxu0 %v2033
      %2072 = vmatpush.bf16.msra.mxu0 %v1994
      %2073 = vmatpush.bf16.msra.mxu0 %v1992
      %2074 = vmatpush.bf16.msra.mxu0 %v1990
      %2075 = vmatmul.bf16.gmra.mxu0 %v2021
      %v2076 = vpop.f32.mrf.mxu0
      %v2077 = vadd.f32 %v2048, %v2076
      %v2078 = vpop.f32.mrf.mxu0
      %v2079 = vadd.f32 %v2050, %v2078
      %2080 = vmatmul.bf16.gmra.mxu0 %v2024
      %v2081 = vpop.f32.mrf.mxu0
      %v2082 = vadd.f32 %v2053, %v2081
      %v2083 = vpop.f32.mrf.mxu0
      %v2084 = vadd.f32 %v2055, %v2083
      %2085 = vmatmul.bf16.gmra.mxu0 %v2027
      %v2086 = vpop.f32.mrf.mxu0
      %v2087 = vadd.f32 %v2058, %v2086
      %v2088 = vpop.f32.mrf.mxu0
      %v2089 = vadd.f32 %v2060, %v2088
      %2090 = vmatmul.bf16.gmra.mxu0 %v2030
      %v2091 = vpop.f32.mrf.mxu0
      %v2092 = vadd.f32 %v2063, %v2091
      %v2093 = vpop.f32.mrf.mxu0
      %v2094 = vadd.f32 %v2065, %v2093
      %2095 = vdwg.mxu0
      %2096 = vmatpush.bf16.msra.mxu0 %v1989
      %2097 = vmatpush.bf16.msra.mxu0 %v1987
      %2098 = vmatpush.bf16.msra.mxu0 %v1985
      %2099 = vmatpush.bf16.msra.mxu0 %v1983
      %2100 = vmatpush.bf16.msra.mxu0 %v1981
      %2101 = vmatpush.bf16.msra.mxu0 %v1979
      %2102 = vmatpush.bf16.msra.mxu0 %v1977
      %2103 = vmatpush.bf16.msra.mxu0 %v1975
      %2104 = vmatmul.bf16.gmra.mxu0 %v1890
      %v2105 = vpop.f32.mrf.mxu0
      %v2106 = vadd.f32 0.0, %v2105
      %v2107 = vpop.f32.mrf.mxu0
      %v2108 = vadd.f32 0.0, %v2107
      %2109 = vmatmul.bf16.gmra.mxu0 %v1892
      %v2110 = vpop.f32.mrf.mxu0
      %v2111 = vadd.f32 0.0, %v2110
      %v2112 = vpop.f32.mrf.mxu0
      %v2113 = vadd.f32 0.0, %v2112
      %2114 = vmatmul.bf16.gmra.mxu0 %v1894
      %v2115 = vpop.f32.mrf.mxu0
      %v2116 = vadd.f32 0.0, %v2115
      %v2117 = vpop.f32.mrf.mxu0
      %v2118 = vadd.f32 0.0, %v2117
      %2119 = vmatmul.bf16.gmra.mxu0 %v1896
      %v2120 = vpop.f32.mrf.mxu0
      %v2121 = vadd.f32 0.0, %v2120
      %v2122 = vpop.f32.mrf.mxu0
      %v2123 = vadd.f32 0.0, %v2122
      %2124 = vdwg.mxu0
      %2125 = vmatpush.bf16.msra.mxu0 0
      %2126 = vmatpush.bf16.msra.mxu0 0
      %2127 = vmatpush.bf16.msra.mxu0 0
      %2128 = vmatpush.bf16.msra.mxu0 0
      %2129 = vmatpush.bf16.msra.mxu0 %v2036
      %2130 = vmatpush.bf16.msra.mxu0 %v1995
      %2131 = vmatpush.bf16.msra.mxu0 %v1993
      %2132 = vmatpush.bf16.msra.mxu0 %v1991
      %2133 = vmatmul.bf16.gmra.mxu0 %v2021
      %v2134 = vpop.f32.mrf.mxu0
      %v2135 = vadd.f32 %v2106, %v2134
      %v2136 = vpop.f32.mrf.mxu0
      %v2137 = vadd.f32 %v2108, %v2136
      %2138 = vmatmul.bf16.gmra.mxu0 %v2024
      %v2139 = vpop.f32.mrf.mxu0
      %v2140 = vadd.f32 %v2111, %v2139
      %v2141 = vpop.f32.mrf.mxu0
      %v2142 = vadd.f32 %v2113, %v2141
      %2143 = vmatmul.bf16.gmra.mxu0 %v2027
      %v2144 = vpop.f32.mrf.mxu0
      %v2145 = vadd.f32 %v2116, %v2144
      %v2146 = vpop.f32.mrf.mxu0
      %v2147 = vadd.f32 %v2118, %v2146
      %2148 = vmatmul.bf16.gmra.mxu0 %v2030
      %v2149 = vpop.f32.mrf.mxu0
      %v2150 = vadd.f32 %v2121, %v2149
      %v2151 = vpop.f32.mrf.mxu0
      %v2152 = vadd.f32 %v2123, %v2151
      %2153 = vdwg.mxu0
      %v2154 = vadd.f32 %v1816, %v2077
      %v2155 = vadd.f32 %v1817, %v2135
      %v2156 = vadd.f32 %v1818, %v2079
      %v2157 = vadd.f32 %v1819, %v2137
      %v2158 = vadd.f32 %v1820, %v2082
      %v2159 = vadd.f32 %v1821, %v2140
      %v2160 = vadd.f32 %v1822, %v2084
      %v2161 = vadd.f32 %v1823, %v2142
      %v2162 = vadd.f32 %v1824, %v2087
      %v2163 = vadd.f32 %v1825, %v2145
      %v2164 = vadd.f32 %v1826, %v2089
      %v2165 = vadd.f32 %v1827, %v2147
      %v2166 = vadd.f32 %v1828, %v2092
      %v2167 = vadd.f32 %v1829, %v2150
      %v2168 = vadd.f32 %v1830, %v2094
      %v2169 = vadd.f32 %v1831, %v2152
      %s2170 = scalar_lea.vmem %s164, 96
      %v2171 = vld [vmem:[%s2170] sm:$0xff]
      %v2172 = vld [vmem:[%s2170 + $0x8] sm:$0xff]
      %v2173 = vld [vmem:[%s2170 + $0x10] sm:$0xff]
      %v2174 = vld [vmem:[%s2170 + $0x18] sm:$0xff]
      %v2175 = vld [vmem:[%s2170 + $0x20] sm:$0xff]
      %v2176 = vld [vmem:[%s2170 + $0x28] sm:$0xff]
      %v2177 = vld [vmem:[%s2170 + $0x30] sm:$0xff]
      %v2178 = vld [vmem:[%s2170 + $0x38] sm:$0xff]
      %s2179 = scalar_lea.vmem %s1, 1152
      %v2180 = vld [vmem:[%s2179] sm:$0xff]
      %v2181 = vld [vmem:[%s2179 + $0x8] sm:$0xff]
      %v2182 = vld [vmem:[%s2179 + $0x10] sm:$0xff]
      %v2183 = vld [vmem:[%s2179 + $0x18] sm:$0xff]
      %v2184 = vld [vmem:[%s2179 + $0x20] sm:$0xff]
      %v2185 = vld [vmem:[%s2179 + $0x28] sm:$0xff]
      %v2186 = vld [vmem:[%s2179 + $0x30] sm:$0xff]
      %v2187 = vld [vmem:[%s2179 + $0x38] sm:$0xff]
      %v2188 = vld [vmem:[%s2179 + $0x40] sm:$0xff]
      %v2189 = vld [vmem:[%s2179 + $0x48] sm:$0xff]
      %v2190 = vld [vmem:[%s2179 + $0x50] sm:$0xff]
      %v2191 = vld [vmem:[%s2179 + $0x58] sm:$0xff]
      %v2192 = vld [vmem:[%s2179 + $0x60] sm:$0xff]
      %v2193 = vld [vmem:[%s2179 + $0x68] sm:$0xff]
      %v2194 = vld [vmem:[%s2179 + $0x70] sm:$0xff]
      %v2195 = vld [vmem:[%s2179 + $0x78] sm:$0xff]
      %v2196 = vld [vmem:[%s2179 + $0x80] sm:$0xff]
      %v2197 = vld [vmem:[%s2179 + $0x88] sm:$0xff]
      %v2198 = vld [vmem:[%s2179 + $0x90] sm:$0xff]
      %v2199 = vld [vmem:[%s2179 + $0x98] sm:$0xff]
      %v2200 = vld [vmem:[%s2179 + $0xa0] sm:$0xff]
      %v2201 = vld [vmem:[%s2179 + $0xa8] sm:$0xff]
      %v2202 = vld [vmem:[%s2179 + $0xb0] sm:$0xff]
      %v2203 = vld [vmem:[%s2179 + $0xb8] sm:$0x77]
      %v2212 = vunpack.c.l.b16 %v2171
      %v2213 = vunpack.c.h.b16 %v2171
      %v2214 = vunpack.c.l.b16 %v2172
      %v2215 = vunpack.c.h.b16 %v2172
      %v2216 = vunpack.c.l.b16 %v2173
      %v2217 = vunpack.c.h.b16 %v2173
      %v2218 = vunpack.c.l.b16 %v2174
      %v2219 = vunpack.c.h.b16 %v2174
      %v2220 = vunpack.c.l.b16 %v2175
      %v2221 = vunpack.c.h.b16 %v2175
      %v2222 = vunpack.c.l.b16 %v2176
      %v2223 = vunpack.c.h.b16 %v2176
      %v2224 = vunpack.c.l.b16 %v2177
      %v2225 = vunpack.c.h.b16 %v2177
      %v2226 = vunpack.c.l.b16 %v2178
      %v2227 = vunpack.c.h.b16 %v2178
      %v2228 = vpack.c.b16 %v2214, %v2212
      %v2229 = vpack.c.b16 %v2215, %v2213
      %v2230 = vpack.c.b16 %v2218, %v2216
      %v2231 = vpack.c.b16 %v2219, %v2217
      %v2232 = vpack.c.b16 %v2222, %v2220
      %v2233 = vpack.c.b16 %v2223, %v2221
      %v2234 = vpack.c.b16 %v2226, %v2224
      %v2235 = vpack.c.b16 %v2227, %v2225
      %v2264 = vunpack.c.l.b16 %v2180
      %v2265 = vunpack.c.h.b16 %v2180
      %v2266 = vunpack.c.l.b16 %v2181
      %v2267 = vunpack.c.h.b16 %v2181
      %v2268 = vunpack.c.l.b16 %v2182
      %v2269 = vunpack.c.h.b16 %v2182
      %v2270 = vunpack.c.l.b16 %v2183
      %v2271 = vunpack.c.h.b16 %v2183
      %v2272 = vunpack.c.l.b16 %v2184
      %v2273 = vunpack.c.h.b16 %v2184
      %v2274 = vunpack.c.l.b16 %v2185
      %v2275 = vunpack.c.h.b16 %v2185
      %v2276 = vunpack.c.l.b16 %v2186
      %v2277 = vunpack.c.h.b16 %v2186
      %v2278 = vunpack.c.l.b16 %v2187
      %v2279 = vunpack.c.h.b16 %v2187
      %v2280 = vunpack.c.l.b16 %v2188
      %v2281 = vunpack.c.h.b16 %v2188
      %v2282 = vunpack.c.l.b16 %v2189
      %v2283 = vunpack.c.h.b16 %v2189
      %v2284 = vunpack.c.l.b16 %v2190
      %v2285 = vunpack.c.h.b16 %v2190
      %v2286 = vunpack.c.l.b16 %v2191
      %v2287 = vunpack.c.h.b16 %v2191
      %v2288 = vunpack.c.l.b16 %v2192
      %v2289 = vunpack.c.h.b16 %v2192
      %v2290 = vunpack.c.l.b16 %v2193
      %v2291 = vunpack.c.h.b16 %v2193
      %v2292 = vunpack.c.l.b16 %v2194
      %v2293 = vunpack.c.h.b16 %v2194
      %v2294 = vunpack.c.l.b16 %v2195
      %v2295 = vunpack.c.h.b16 %v2195
      %v2296 = vunpack.c.l.b16 %v2196
      %v2297 = vunpack.c.h.b16 %v2196
      %v2298 = vunpack.c.l.b16 %v2197
      %v2299 = vunpack.c.h.b16 %v2197
      %v2300 = vunpack.c.l.b16 %v2198
      %v2301 = vunpack.c.h.b16 %v2198
      %v2302 = vunpack.c.l.b16 %v2199
      %v2303 = vunpack.c.h.b16 %v2199
      %v2304 = vunpack.c.l.b16 %v2200
      %v2305 = vunpack.c.h.b16 %v2200
      %v2306 = vunpack.c.l.b16 %v2201
      %v2307 = vunpack.c.h.b16 %v2201
      %v2308 = vunpack.c.l.b16 %v2202
      %v2309 = vunpack.c.h.b16 %v2202
      %v2310 = vunpack.c.l.b16 %v2203
      %v2311 = vunpack.c.h.b16 %v2203
      %v2312 = vpack.c.b16 %v2266, %v2264
      %v2313 = vpack.c.b16 %v2267, %v2265
      %v2314 = vpack.c.b16 %v2270, %v2268
      %v2315 = vpack.c.b16 %v2271, %v2269
      %v2316 = vpack.c.b16 %v2274, %v2272
      %v2317 = vpack.c.b16 %v2275, %v2273
      %v2318 = vpack.c.b16 %v2278, %v2276
      %v2319 = vpack.c.b16 %v2279, %v2277
      %v2320 = vpack.c.b16 %v2282, %v2280
      %v2321 = vpack.c.b16 %v2283, %v2281
      %v2322 = vpack.c.b16 %v2286, %v2284
      %v2323 = vpack.c.b16 %v2287, %v2285
      %v2324 = vpack.c.b16 %v2290, %v2288
      %v2325 = vpack.c.b16 %v2291, %v2289
      %v2326 = vpack.c.b16 %v2294, %v2292
      %v2327 = vpack.c.b16 %v2295, %v2293
      %v2328 = vpack.c.b16 %v2298, %v2296
      %v2329 = vpack.c.b16 %v2299, %v2297
      %v2330 = vpack.c.b16 %v2302, %v2300
      %v2331 = vpack.c.b16 %v2303, %v2301
      %v2332 = vpack.c.b16 %v2306, %v2304
      %v2333 = vpack.c.b16 %v2307, %v2305
      %v2334 = vpack.c.b16 %v2310, %v2308
      %v2335 = vpack.c.b16 %v2311, %v2309
      %v2359 = vsel %vm391, %v2229, 0
      %v2362 = vsel %vm391, %v2231, 0
      %v2365 = vsel %vm391, %v2233, 0
      %v2368 = vsel %vm391, %v2235, 0
      %v2371 = vand.u32 %v2334, %v407
      %v2374 = vand.u32 %v2335, %v407
      %2376 = vmatpush.bf16.msra.mxu0 %v2326
      %2377 = vmatpush.bf16.msra.mxu0 %v2324
      %2378 = vmatpush.bf16.msra.mxu0 %v2322
      %2379 = vmatpush.bf16.msra.mxu0 %v2320
      %2380 = vmatpush.bf16.msra.mxu0 %v2318
      %2381 = vmatpush.bf16.msra.mxu0 %v2316
      %2382 = vmatpush.bf16.msra.mxu0 %v2314
      %2383 = vmatpush.bf16.msra.mxu0 %v2312
      %2384 = vmatmul.bf16.gmra.mxu0 %v2228
      %v2385 = vpop.f32.mrf.mxu0
      %v2386 = vadd.f32 0.0, %v2385
      %v2387 = vpop.f32.mrf.mxu0
      %v2388 = vadd.f32 0.0, %v2387
      %2389 = vmatmul.bf16.gmra.mxu0 %v2230
      %v2390 = vpop.f32.mrf.mxu0
      %v2391 = vadd.f32 0.0, %v2390
      %v2392 = vpop.f32.mrf.mxu0
      %v2393 = vadd.f32 0.0, %v2392
      %2394 = vmatmul.bf16.gmra.mxu0 %v2232
      %v2395 = vpop.f32.mrf.mxu0
      %v2396 = vadd.f32 0.0, %v2395
      %v2397 = vpop.f32.mrf.mxu0
      %v2398 = vadd.f32 0.0, %v2397
      %2399 = vmatmul.bf16.gmra.mxu0 %v2234
      %v2400 = vpop.f32.mrf.mxu0
      %v2401 = vadd.f32 0.0, %v2400
      %v2402 = vpop.f32.mrf.mxu0
      %v2403 = vadd.f32 0.0, %v2402
      %2404 = vdwg.mxu0
      %2405 = vmatpush.bf16.msra.mxu0 0
      %2406 = vmatpush.bf16.msra.mxu0 0
      %2407 = vmatpush.bf16.msra.mxu0 0
      %2408 = vmatpush.bf16.msra.mxu0 0
      %2409 = vmatpush.bf16.msra.mxu0 %v2371
      %2410 = vmatpush.bf16.msra.mxu0 %v2332
      %2411 = vmatpush.bf16.msra.mxu0 %v2330
      %2412 = vmatpush.bf16.msra.mxu0 %v2328
      %2413 = vmatmul.bf16.gmra.mxu0 %v2359
      %v2414 = vpop.f32.mrf.mxu0
      %v2415 = vadd.f32 %v2386, %v2414
      %v2416 = vpop.f32.mrf.mxu0
      %v2417 = vadd.f32 %v2388, %v2416
      %2418 = vmatmul.bf16.gmra.mxu0 %v2362
      %v2419 = vpop.f32.mrf.mxu0
      %v2420 = vadd.f32 %v2391, %v2419
      %v2421 = vpop.f32.mrf.mxu0
      %v2422 = vadd.f32 %v2393, %v2421
      %2423 = vmatmul.bf16.gmra.mxu0 %v2365
      %v2424 = vpop.f32.mrf.mxu0
      %v2425 = vadd.f32 %v2396, %v2424
      %v2426 = vpop.f32.mrf.mxu0
      %v2427 = vadd.f32 %v2398, %v2426
      %2428 = vmatmul.bf16.gmra.mxu0 %v2368
      %v2429 = vpop.f32.mrf.mxu0
      %v2430 = vadd.f32 %v2401, %v2429
      %v2431 = vpop.f32.mrf.mxu0
      %v2432 = vadd.f32 %v2403, %v2431
      %2433 = vdwg.mxu0
      %2434 = vmatpush.bf16.msra.mxu0 %v2327
      %2435 = vmatpush.bf16.msra.mxu0 %v2325
      %2436 = vmatpush.bf16.msra.mxu0 %v2323
      %2437 = vmatpush.bf16.msra.mxu0 %v2321
      %2438 = vmatpush.bf16.msra.mxu0 %v2319
      %2439 = vmatpush.bf16.msra.mxu0 %v2317
      %2440 = vmatpush.bf16.msra.mxu0 %v2315
      %2441 = vmatpush.bf16.msra.mxu0 %v2313
      %2442 = vmatmul.bf16.gmra.mxu0 %v2228
      %v2443 = vpop.f32.mrf.mxu0
      %v2444 = vadd.f32 0.0, %v2443
      %v2445 = vpop.f32.mrf.mxu0
      %v2446 = vadd.f32 0.0, %v2445
      %2447 = vmatmul.bf16.gmra.mxu0 %v2230
      %v2448 = vpop.f32.mrf.mxu0
      %v2449 = vadd.f32 0.0, %v2448
      %v2450 = vpop.f32.mrf.mxu0
      %v2451 = vadd.f32 0.0, %v2450
      %2452 = vmatmul.bf16.gmra.mxu0 %v2232
      %v2453 = vpop.f32.mrf.mxu0
      %v2454 = vadd.f32 0.0, %v2453
      %v2455 = vpop.f32.mrf.mxu0
      %v2456 = vadd.f32 0.0, %v2455
      %2457 = vmatmul.bf16.gmra.mxu0 %v2234
      %v2458 = vpop.f32.mrf.mxu0
      %v2459 = vadd.f32 0.0, %v2458
      %v2460 = vpop.f32.mrf.mxu0
      %v2461 = vadd.f32 0.0, %v2460
      %2462 = vdwg.mxu0
      %2463 = vmatpush.bf16.msra.mxu0 0
      %2464 = vmatpush.bf16.msra.mxu0 0
      %2465 = vmatpush.bf16.msra.mxu0 0
      %2466 = vmatpush.bf16.msra.mxu0 0
      %2467 = vmatpush.bf16.msra.mxu0 %v2374
      %2468 = vmatpush.bf16.msra.mxu0 %v2333
      %2469 = vmatpush.bf16.msra.mxu0 %v2331
      %2470 = vmatpush.bf16.msra.mxu0 %v2329
      %2471 = vmatmul.bf16.gmra.mxu0 %v2359
      %v2472 = vpop.f32.mrf.mxu0
      %v2473 = vadd.f32 %v2444, %v2472
      %v2474 = vpop.f32.mrf.mxu0
      %v2475 = vadd.f32 %v2446, %v2474
      %2476 = vmatmul.bf16.gmra.mxu0 %v2362
      %v2477 = vpop.f32.mrf.mxu0
      %v2478 = vadd.f32 %v2449, %v2477
      %v2479 = vpop.f32.mrf.mxu0
      %v2480 = vadd.f32 %v2451, %v2479
      %2481 = vmatmul.bf16.gmra.mxu0 %v2365
      %v2482 = vpop.f32.mrf.mxu0
      %v2483 = vadd.f32 %v2454, %v2482
      %v2484 = vpop.f32.mrf.mxu0
      %v2485 = vadd.f32 %v2456, %v2484
      %2486 = vmatmul.bf16.gmra.mxu0 %v2368
      %v2487 = vpop.f32.mrf.mxu0
      %v2488 = vadd.f32 %v2459, %v2487
      %v2489 = vpop.f32.mrf.mxu0
      %v2490 = vadd.f32 %v2461, %v2489
      %2491 = vdwg.mxu0
      %v2492 = vadd.f32 %v2154, %v2415
      %v2493 = vadd.f32 %v2155, %v2473
      %v2494 = vadd.f32 %v2156, %v2417
      %v2495 = vadd.f32 %v2157, %v2475
      %v2496 = vadd.f32 %v2158, %v2420
      %v2497 = vadd.f32 %v2159, %v2478
      %v2498 = vadd.f32 %v2160, %v2422
      %v2499 = vadd.f32 %v2161, %v2480
      %v2500 = vadd.f32 %v2162, %v2425
      %v2501 = vadd.f32 %v2163, %v2483
      %v2502 = vadd.f32 %v2164, %v2427
      %v2503 = vadd.f32 %v2165, %v2485
      %v2504 = vadd.f32 %v2166, %v2430
      %v2505 = vadd.f32 %v2167, %v2488
      %v2506 = vadd.f32 %v2168, %v2432
      %v2507 = vadd.f32 %v2169, %v2490
      %s2508 = scalar_lea.vmem %s164, 112
      %v2509 = vld [vmem:[%s2508] sm:$0xff]
      %v2510 = vld [vmem:[%s2508 + $0x8] sm:$0xff]
      %v2511 = vld [vmem:[%s2508 + $0x10] sm:$0xff]
      %v2512 = vld [vmem:[%s2508 + $0x18] sm:$0xff]
      %v2513 = vld [vmem:[%s2508 + $0x20] sm:$0xff]
      %v2514 = vld [vmem:[%s2508 + $0x28] sm:$0xff]
      %v2515 = vld [vmem:[%s2508 + $0x30] sm:$0xff]
      %v2516 = vld [vmem:[%s2508 + $0x38] sm:$0xff]
      %s2517 = scalar_lea.vmem %s1, 1344
      %v2518 = vld [vmem:[%s2517] sm:$0xff]
      %v2519 = vld [vmem:[%s2517 + $0x8] sm:$0xff]
      %v2520 = vld [vmem:[%s2517 + $0x10] sm:$0xff]
      %v2521 = vld [vmem:[%s2517 + $0x18] sm:$0xff]
      %v2522 = vld [vmem:[%s2517 + $0x20] sm:$0xff]
      %v2523 = vld [vmem:[%s2517 + $0x28] sm:$0xff]
      %v2524 = vld [vmem:[%s2517 + $0x30] sm:$0xff]
      %v2525 = vld [vmem:[%s2517 + $0x38] sm:$0xff]
      %v2526 = vld [vmem:[%s2517 + $0x40] sm:$0xff]
      %v2527 = vld [vmem:[%s2517 + $0x48] sm:$0xff]
      %v2528 = vld [vmem:[%s2517 + $0x50] sm:$0xff]
      %v2529 = vld [vmem:[%s2517 + $0x58] sm:$0xff]
      %v2530 = vld [vmem:[%s2517 + $0x60] sm:$0xff]
      %v2531 = vld [vmem:[%s2517 + $0x68] sm:$0xff]
      %v2532 = vld [vmem:[%s2517 + $0x70] sm:$0xff]
      %v2533 = vld [vmem:[%s2517 + $0x78] sm:$0xff]
      %v2534 = vld [vmem:[%s2517 + $0x80] sm:$0xff]
      %v2535 = vld [vmem:[%s2517 + $0x88] sm:$0xff]
      %v2536 = vld [vmem:[%s2517 + $0x90] sm:$0xff]
      %v2537 = vld [vmem:[%s2517 + $0x98] sm:$0xff]
      %v2538 = vld [vmem:[%s2517 + $0xa0] sm:$0xff]
      %v2539 = vld [vmem:[%s2517 + $0xa8] sm:$0xff]
      %v2540 = vld [vmem:[%s2517 + $0xb0] sm:$0xff]
      %v2541 = vld [vmem:[%s2517 + $0xb8] sm:$0x77]
      %v2550 = vunpack.c.l.b16 %v2509
      %v2551 = vunpack.c.h.b16 %v2509
      %v2552 = vunpack.c.l.b16 %v2510
      %v2553 = vunpack.c.h.b16 %v2510
      %v2554 = vunpack.c.l.b16 %v2511
      %v2555 = vunpack.c.h.b16 %v2511
      %v2556 = vunpack.c.l.b16 %v2512
      %v2557 = vunpack.c.h.b16 %v2512
      %v2558 = vunpack.c.l.b16 %v2513
      %v2559 = vunpack.c.h.b16 %v2513
      %v2560 = vunpack.c.l.b16 %v2514
      %v2561 = vunpack.c.h.b16 %v2514
      %v2562 = vunpack.c.l.b16 %v2515
      %v2563 = vunpack.c.h.b16 %v2515
      %v2564 = vunpack.c.l.b16 %v2516
      %v2565 = vunpack.c.h.b16 %v2516
      %v2566 = vpack.c.b16 %v2552, %v2550
      %v2567 = vpack.c.b16 %v2553, %v2551
      %v2568 = vpack.c.b16 %v2556, %v2554
      %v2569 = vpack.c.b16 %v2557, %v2555
      %v2570 = vpack.c.b16 %v2560, %v2558
      %v2571 = vpack.c.b16 %v2561, %v2559
      %v2572 = vpack.c.b16 %v2564, %v2562
      %v2573 = vpack.c.b16 %v2565, %v2563
      %v2602 = vunpack.c.l.b16 %v2518
      %v2603 = vunpack.c.h.b16 %v2518
      %v2604 = vunpack.c.l.b16 %v2519
      %v2605 = vunpack.c.h.b16 %v2519
      %v2606 = vunpack.c.l.b16 %v2520
      %v2607 = vunpack.c.h.b16 %v2520
      %v2608 = vunpack.c.l.b16 %v2521
      %v2609 = vunpack.c.h.b16 %v2521
      %v2610 = vunpack.c.l.b16 %v2522
      %v2611 = vunpack.c.h.b16 %v2522
      %v2612 = vunpack.c.l.b16 %v2523
      %v2613 = vunpack.c.h.b16 %v2523
      %v2614 = vunpack.c.l.b16 %v2524
      %v2615 = vunpack.c.h.b16 %v2524
      %v2616 = vunpack.c.l.b16 %v2525
      %v2617 = vunpack.c.h.b16 %v2525
      %v2618 = vunpack.c.l.b16 %v2526
      %v2619 = vunpack.c.h.b16 %v2526
      %v2620 = vunpack.c.l.b16 %v2527
      %v2621 = vunpack.c.h.b16 %v2527
      %v2622 = vunpack.c.l.b16 %v2528
      %v2623 = vunpack.c.h.b16 %v2528
      %v2624 = vunpack.c.l.b16 %v2529
      %v2625 = vunpack.c.h.b16 %v2529
      %v2626 = vunpack.c.l.b16 %v2530
      %v2627 = vunpack.c.h.b16 %v2530
      %v2628 = vunpack.c.l.b16 %v2531
      %v2629 = vunpack.c.h.b16 %v2531
      %v2630 = vunpack.c.l.b16 %v2532
      %v2631 = vunpack.c.h.b16 %v2532
      %v2632 = vunpack.c.l.b16 %v2533
      %v2633 = vunpack.c.h.b16 %v2533
      %v2634 = vunpack.c.l.b16 %v2534
      %v2635 = vunpack.c.h.b16 %v2534
      %v2636 = vunpack.c.l.b16 %v2535
      %v2637 = vunpack.c.h.b16 %v2535
      %v2638 = vunpack.c.l.b16 %v2536
      %v2639 = vunpack.c.h.b16 %v2536
      %v2640 = vunpack.c.l.b16 %v2537
      %v2641 = vunpack.c.h.b16 %v2537
      %v2642 = vunpack.c.l.b16 %v2538
      %v2643 = vunpack.c.h.b16 %v2538
      %v2644 = vunpack.c.l.b16 %v2539
      %v2645 = vunpack.c.h.b16 %v2539
      %v2646 = vunpack.c.l.b16 %v2540
      %v2647 = vunpack.c.h.b16 %v2540
      %v2648 = vunpack.c.l.b16 %v2541
      %v2649 = vunpack.c.h.b16 %v2541
      %v2650 = vpack.c.b16 %v2604, %v2602
      %v2651 = vpack.c.b16 %v2605, %v2603
      %v2652 = vpack.c.b16 %v2608, %v2606
      %v2653 = vpack.c.b16 %v2609, %v2607
      %v2654 = vpack.c.b16 %v2612, %v2610
      %v2655 = vpack.c.b16 %v2613, %v2611
      %v2656 = vpack.c.b16 %v2616, %v2614
      %v2657 = vpack.c.b16 %v2617, %v2615
      %v2658 = vpack.c.b16 %v2620, %v2618
      %v2659 = vpack.c.b16 %v2621, %v2619
      %v2660 = vpack.c.b16 %v2624, %v2622
      %v2661 = vpack.c.b16 %v2625, %v2623
      %v2662 = vpack.c.b16 %v2628, %v2626
      %v2663 = vpack.c.b16 %v2629, %v2627
      %v2664 = vpack.c.b16 %v2632, %v2630
      %v2665 = vpack.c.b16 %v2633, %v2631
      %v2666 = vpack.c.b16 %v2636, %v2634
      %v2667 = vpack.c.b16 %v2637, %v2635
      %v2668 = vpack.c.b16 %v2640, %v2638
      %v2669 = vpack.c.b16 %v2641, %v2639
      %v2670 = vpack.c.b16 %v2644, %v2642
      %v2671 = vpack.c.b16 %v2645, %v2643
      %v2672 = vpack.c.b16 %v2648, %v2646
      %v2673 = vpack.c.b16 %v2649, %v2647
      %v2697 = vsel %vm391, %v2567, 0
      %v2700 = vsel %vm391, %v2569, 0
      %v2703 = vsel %vm391, %v2571, 0
      %v2706 = vsel %vm391, %v2573, 0
      %v2709 = vand.u32 %v2672, %v407
      %v2712 = vand.u32 %v2673, %v407
      %2714 = vmatpush.bf16.msra.mxu0 %v2664
      %2715 = vmatpush.bf16.msra.mxu0 %v2662
      %2716 = vmatpush.bf16.msra.mxu0 %v2660
      %2717 = vmatpush.bf16.msra.mxu0 %v2658
      %2718 = vmatpush.bf16.msra.mxu0 %v2656
      %2719 = vmatpush.bf16.msra.mxu0 %v2654
      %2720 = vmatpush.bf16.msra.mxu0 %v2652
      %2721 = vmatpush.bf16.msra.mxu0 %v2650
      %2722 = vmatmul.bf16.gmra.mxu0 %v2566
      %v2723 = vpop.f32.mrf.mxu0
      %v2724 = vadd.f32 0.0, %v2723
      %v2725 = vpop.f32.mrf.mxu0
      %v2726 = vadd.f32 0.0, %v2725
      %2727 = vmatmul.bf16.gmra.mxu0 %v2568
      %v2728 = vpop.f32.mrf.mxu0
      %v2729 = vadd.f32 0.0, %v2728
      %v2730 = vpop.f32.mrf.mxu0
      %v2731 = vadd.f32 0.0, %v2730
      %2732 = vmatmul.bf16.gmra.mxu0 %v2570
      %v2733 = vpop.f32.mrf.mxu0
      %v2734 = vadd.f32 0.0, %v2733
      %v2735 = vpop.f32.mrf.mxu0
      %v2736 = vadd.f32 0.0, %v2735
      %2737 = vmatmul.bf16.gmra.mxu0 %v2572
      %v2738 = vpop.f32.mrf.mxu0
      %v2739 = vadd.f32 0.0, %v2738
      %v2740 = vpop.f32.mrf.mxu0
      %v2741 = vadd.f32 0.0, %v2740
      %2742 = vdwg.mxu0
      %2743 = vmatpush.bf16.msra.mxu0 0
      %2744 = vmatpush.bf16.msra.mxu0 0
      %2745 = vmatpush.bf16.msra.mxu0 0
      %2746 = vmatpush.bf16.msra.mxu0 0
      %2747 = vmatpush.bf16.msra.mxu0 %v2709
      %2748 = vmatpush.bf16.msra.mxu0 %v2670
      %2749 = vmatpush.bf16.msra.mxu0 %v2668
      %2750 = vmatpush.bf16.msra.mxu0 %v2666
      %2751 = vmatmul.bf16.gmra.mxu0 %v2697
      %v2752 = vpop.f32.mrf.mxu0
      %v2753 = vadd.f32 %v2724, %v2752
      %v2754 = vpop.f32.mrf.mxu0
      %v2755 = vadd.f32 %v2726, %v2754
      %2756 = vmatmul.bf16.gmra.mxu0 %v2700
      %v2757 = vpop.f32.mrf.mxu0
      %v2758 = vadd.f32 %v2729, %v2757
      %v2759 = vpop.f32.mrf.mxu0
      %v2760 = vadd.f32 %v2731, %v2759
      %2761 = vmatmul.bf16.gmra.mxu0 %v2703
      %v2762 = vpop.f32.mrf.mxu0
      %v2763 = vadd.f32 %v2734, %v2762
      %v2764 = vpop.f32.mrf.mxu0
      %v2765 = vadd.f32 %v2736, %v2764
      %2766 = vmatmul.bf16.gmra.mxu0 %v2706
      %v2767 = vpop.f32.mrf.mxu0
      %v2768 = vadd.f32 %v2739, %v2767
      %v2769 = vpop.f32.mrf.mxu0
      %v2770 = vadd.f32 %v2741, %v2769
      %2771 = vdwg.mxu0
      %2772 = vmatpush.bf16.msra.mxu0 %v2665
      %2773 = vmatpush.bf16.msra.mxu0 %v2663
      %2774 = vmatpush.bf16.msra.mxu0 %v2661
      %2775 = vmatpush.bf16.msra.mxu0 %v2659
      %2776 = vmatpush.bf16.msra.mxu0 %v2657
      %2777 = vmatpush.bf16.msra.mxu0 %v2655
      %2778 = vmatpush.bf16.msra.mxu0 %v2653
      %2779 = vmatpush.bf16.msra.mxu0 %v2651
      %2780 = vmatmul.bf16.gmra.mxu0 %v2566
      %v2781 = vpop.f32.mrf.mxu0
      %v2782 = vadd.f32 0.0, %v2781
      %v2783 = vpop.f32.mrf.mxu0
      %v2784 = vadd.f32 0.0, %v2783
      %2785 = vmatmul.bf16.gmra.mxu0 %v2568
      %v2786 = vpop.f32.mrf.mxu0
      %v2787 = vadd.f32 0.0, %v2786
      %v2788 = vpop.f32.mrf.mxu0
      %v2789 = vadd.f32 0.0, %v2788
      %2790 = vmatmul.bf16.gmra.mxu0 %v2570
      %v2791 = vpop.f32.mrf.mxu0
      %v2792 = vadd.f32 0.0, %v2791
      %v2793 = vpop.f32.mrf.mxu0
      %v2794 = vadd.f32 0.0, %v2793
      %2795 = vmatmul.bf16.gmra.mxu0 %v2572
      %v2796 = vpop.f32.mrf.mxu0
      %v2797 = vadd.f32 0.0, %v2796
      %v2798 = vpop.f32.mrf.mxu0
      %v2799 = vadd.f32 0.0, %v2798
      %2800 = vdwg.mxu0
      %2801 = vmatpush.bf16.msra.mxu0 0
      %2802 = vmatpush.bf16.msra.mxu0 0
      %2803 = vmatpush.bf16.msra.mxu0 0
      %2804 = vmatpush.bf16.msra.mxu0 0
      %2805 = vmatpush.bf16.msra.mxu0 %v2712
      %2806 = vmatpush.bf16.msra.mxu0 %v2671
      %2807 = vmatpush.bf16.msra.mxu0 %v2669
      %2808 = vmatpush.bf16.msra.mxu0 %v2667
      %2809 = vmatmul.bf16.gmra.mxu0 %v2697
      %v2810 = vpop.f32.mrf.mxu0
      %v2811 = vadd.f32 %v2782, %v2810
      %v2812 = vpop.f32.mrf.mxu0
      %v2813 = vadd.f32 %v2784, %v2812
      %2814 = vmatmul.bf16.gmra.mxu0 %v2700
      %v2815 = vpop.f32.mrf.mxu0
      %v2816 = vadd.f32 %v2787, %v2815
      %v2817 = vpop.f32.mrf.mxu0
      %v2818 = vadd.f32 %v2789, %v2817
      %2819 = vmatmul.bf16.gmra.mxu0 %v2703
      %v2820 = vpop.f32.mrf.mxu0
      %v2821 = vadd.f32 %v2792, %v2820
      %v2822 = vpop.f32.mrf.mxu0
      %v2823 = vadd.f32 %v2794, %v2822
      %2824 = vmatmul.bf16.gmra.mxu0 %v2706
      %v2825 = vpop.f32.mrf.mxu0
      %v2826 = vadd.f32 %v2797, %v2825
      %v2827 = vpop.f32.mrf.mxu0
      %v2828 = vadd.f32 %v2799, %v2827
      %2829 = vdwg.mxu0
      %v2830 = vadd.f32 %v2492, %v2753
      %v2831 = vadd.f32 %v2493, %v2811
      %v2832 = vadd.f32 %v2494, %v2755
      %v2833 = vadd.f32 %v2495, %v2813
      %v2834 = vadd.f32 %v2496, %v2758
      %v2835 = vadd.f32 %v2497, %v2816
      %v2836 = vadd.f32 %v2498, %v2760
      %v2837 = vadd.f32 %v2499, %v2818
      %v2838 = vadd.f32 %v2500, %v2763
      %v2839 = vadd.f32 %v2501, %v2821
      %v2840 = vadd.f32 %v2502, %v2765
      %v2841 = vadd.f32 %v2503, %v2823
      %v2842 = vadd.f32 %v2504, %v2768
      %v2843 = vadd.f32 %v2505, %v2826
      %v2844 = vadd.f32 %v2506, %v2770
      %v2845 = vadd.f32 %v2507, %v2828
      %s2846 = scalar_lea.vmem %s164, 128
      %v2847 = vld [vmem:[%s2846] sm:$0xff]
      %v2848 = vld [vmem:[%s2846 + $0x8] sm:$0xff]
      %v2849 = vld [vmem:[%s2846 + $0x10] sm:$0xff]
      %v2850 = vld [vmem:[%s2846 + $0x18] sm:$0xff]
      %v2851 = vld [vmem:[%s2846 + $0x20] sm:$0xff]
      %v2852 = vld [vmem:[%s2846 + $0x28] sm:$0xff]
      %v2853 = vld [vmem:[%s2846 + $0x30] sm:$0xff]
      %v2854 = vld [vmem:[%s2846 + $0x38] sm:$0xff]
      %s2855 = scalar_lea.vmem %s1, 1536
      %v2856 = vld [vmem:[%s2855] sm:$0xff]
      %v2857 = vld [vmem:[%s2855 + $0x8] sm:$0xff]
      %v2858 = vld [vmem:[%s2855 + $0x10] sm:$0xff]
      %v2859 = vld [vmem:[%s2855 + $0x18] sm:$0xff]
      %v2860 = vld [vmem:[%s2855 + $0x20] sm:$0xff]
      %v2861 = vld [vmem:[%s2855 + $0x28] sm:$0xff]
      %v2862 = vld [vmem:[%s2855 + $0x30] sm:$0xff]
      %v2863 = vld [vmem:[%s2855 + $0x38] sm:$0xff]
      %v2864 = vld [vmem:[%s2855 + $0x40] sm:$0xff]
      %v2865 = vld [vmem:[%s2855 + $0x48] sm:$0xff]
      %v2866 = vld [vmem:[%s2855 + $0x50] sm:$0xff]
      %v2867 = vld [vmem:[%s2855 + $0x58] sm:$0xff]
      %v2868 = vld [vmem:[%s2855 + $0x60] sm:$0xff]
      %v2869 = vld [vmem:[%s2855 + $0x68] sm:$0xff]
      %v2870 = vld [vmem:[%s2855 + $0x70] sm:$0xff]
      %v2871 = vld [vmem:[%s2855 + $0x78] sm:$0xff]
      %v2872 = vld [vmem:[%s2855 + $0x80] sm:$0xff]
      %v2873 = vld [vmem:[%s2855 + $0x88] sm:$0xff]
      %v2874 = vld [vmem:[%s2855 + $0x90] sm:$0xff]
      %v2875 = vld [vmem:[%s2855 + $0x98] sm:$0xff]
      %v2876 = vld [vmem:[%s2855 + $0xa0] sm:$0xff]
      %v2877 = vld [vmem:[%s2855 + $0xa8] sm:$0xff]
      %v2878 = vld [vmem:[%s2855 + $0xb0] sm:$0xff]
      %v2879 = vld [vmem:[%s2855 + $0xb8] sm:$0x77]
      %v2888 = vunpack.c.l.b16 %v2847
      %v2889 = vunpack.c.h.b16 %v2847
      %v2890 = vunpack.c.l.b16 %v2848
      %v2891 = vunpack.c.h.b16 %v2848
      %v2892 = vunpack.c.l.b16 %v2849
      %v2893 = vunpack.c.h.b16 %v2849
      %v2894 = vunpack.c.l.b16 %v2850
      %v2895 = vunpack.c.h.b16 %v2850
      %v2896 = vunpack.c.l.b16 %v2851
      %v2897 = vunpack.c.h.b16 %v2851
      %v2898 = vunpack.c.l.b16 %v2852
      %v2899 = vunpack.c.h.b16 %v2852
      %v2900 = vunpack.c.l.b16 %v2853
      %v2901 = vunpack.c.h.b16 %v2853
      %v2902 = vunpack.c.l.b16 %v2854
      %v2903 = vunpack.c.h.b16 %v2854
      %v2904 = vpack.c.b16 %v2890, %v2888
      %v2905 = vpack.c.b16 %v2891, %v2889
      %v2906 = vpack.c.b16 %v2894, %v2892
      %v2907 = vpack.c.b16 %v2895, %v2893
      %v2908 = vpack.c.b16 %v2898, %v2896
      %v2909 = vpack.c.b16 %v2899, %v2897
      %v2910 = vpack.c.b16 %v2902, %v2900
      %v2911 = vpack.c.b16 %v2903, %v2901
      %v2940 = vunpack.c.l.b16 %v2856
      %v2941 = vunpack.c.h.b16 %v2856
      %v2942 = vunpack.c.l.b16 %v2857
      %v2943 = vunpack.c.h.b16 %v2857
      %v2944 = vunpack.c.l.b16 %v2858
      %v2945 = vunpack.c.h.b16 %v2858
      %v2946 = vunpack.c.l.b16 %v2859
      %v2947 = vunpack.c.h.b16 %v2859
      %v2948 = vunpack.c.l.b16 %v2860
      %v2949 = vunpack.c.h.b16 %v2860
      %v2950 = vunpack.c.l.b16 %v2861
      %v2951 = vunpack.c.h.b16 %v2861
      %v2952 = vunpack.c.l.b16 %v2862
      %v2953 = vunpack.c.h.b16 %v2862
      %v2954 = vunpack.c.l.b16 %v2863
      %v2955 = vunpack.c.h.b16 %v2863
      %v2956 = vunpack.c.l.b16 %v2864
      %v2957 = vunpack.c.h.b16 %v2864
      %v2958 = vunpack.c.l.b16 %v2865
      %v2959 = vunpack.c.h.b16 %v2865
      %v2960 = vunpack.c.l.b16 %v2866
      %v2961 = vunpack.c.h.b16 %v2866
      %v2962 = vunpack.c.l.b16 %v2867
      %v2963 = vunpack.c.h.b16 %v2867
      %v2964 = vunpack.c.l.b16 %v2868
      %v2965 = vunpack.c.h.b16 %v2868
      %v2966 = vunpack.c.l.b16 %v2869
      %v2967 = vunpack.c.h.b16 %v2869
      %v2968 = vunpack.c.l.b16 %v2870
      %v2969 = vunpack.c.h.b16 %v2870
      %v2970 = vunpack.c.l.b16 %v2871
      %v2971 = vunpack.c.h.b16 %v2871
      %v2972 = vunpack.c.l.b16 %v2872
      %v2973 = vunpack.c.h.b16 %v2872
      %v2974 = vunpack.c.l.b16 %v2873
      %v2975 = vunpack.c.h.b16 %v2873
      %v2976 = vunpack.c.l.b16 %v2874
      %v2977 = vunpack.c.h.b16 %v2874
      %v2978 = vunpack.c.l.b16 %v2875
      %v2979 = vunpack.c.h.b16 %v2875
      %v2980 = vunpack.c.l.b16 %v2876
      %v2981 = vunpack.c.h.b16 %v2876
      %v2982 = vunpack.c.l.b16 %v2877
      %v2983 = vunpack.c.h.b16 %v2877
      %v2984 = vunpack.c.l.b16 %v2878
      %v2985 = vunpack.c.h.b16 %v2878
      %v2986 = vunpack.c.l.b16 %v2879
      %v2987 = vunpack.c.h.b16 %v2879
      %v2988 = vpack.c.b16 %v2942, %v2940
      %v2989 = vpack.c.b16 %v2943, %v2941
      %v2990 = vpack.c.b16 %v2946, %v2944
      %v2991 = vpack.c.b16 %v2947, %v2945
      %v2992 = vpack.c.b16 %v2950, %v2948
      %v2993 = vpack.c.b16 %v2951, %v2949
      %v2994 = vpack.c.b16 %v2954, %v2952
      %v2995 = vpack.c.b16 %v2955, %v2953
      %v2996 = vpack.c.b16 %v2958, %v2956
      %v2997 = vpack.c.b16 %v2959, %v2957
      %v2998 = vpack.c.b16 %v2962, %v2960
      %v2999 = vpack.c.b16 %v2963, %v2961
      %v3000 = vpack.c.b16 %v2966, %v2964
      %v3001 = vpack.c.b16 %v2967, %v2965
      %v3002 = vpack.c.b16 %v2970, %v2968
      %v3003 = vpack.c.b16 %v2971, %v2969
      %v3004 = vpack.c.b16 %v2974, %v2972
      %v3005 = vpack.c.b16 %v2975, %v2973
      %v3006 = vpack.c.b16 %v2978, %v2976
      %v3007 = vpack.c.b16 %v2979, %v2977
      %v3008 = vpack.c.b16 %v2982, %v2980
      %v3009 = vpack.c.b16 %v2983, %v2981
      %v3010 = vpack.c.b16 %v2986, %v2984
      %v3011 = vpack.c.b16 %v2987, %v2985
      %v3035 = vsel %vm391, %v2905, 0
      %v3038 = vsel %vm391, %v2907, 0
      %v3041 = vsel %vm391, %v2909, 0
      %v3044 = vsel %vm391, %v2911, 0
      %v3047 = vand.u32 %v3010, %v407
      %v3050 = vand.u32 %v3011, %v407
      %3052 = vmatpush.bf16.msra.mxu0 %v3002
      %3053 = vmatpush.bf16.msra.mxu0 %v3000
      %3054 = vmatpush.bf16.msra.mxu0 %v2998
      %3055 = vmatpush.bf16.msra.mxu0 %v2996
      %3056 = vmatpush.bf16.msra.mxu0 %v2994
      %3057 = vmatpush.bf16.msra.mxu0 %v2992
      %3058 = vmatpush.bf16.msra.mxu0 %v2990
      %3059 = vmatpush.bf16.msra.mxu0 %v2988
      %3060 = vmatmul.bf16.gmra.mxu0 %v2904
      %v3061 = vpop.f32.mrf.mxu0
      %v3062 = vadd.f32 0.0, %v3061
      %v3063 = vpop.f32.mrf.mxu0
      %v3064 = vadd.f32 0.0, %v3063
      %3065 = vmatmul.bf16.gmra.mxu0 %v2906
      %v3066 = vpop.f32.mrf.mxu0
      %v3067 = vadd.f32 0.0, %v3066
      %v3068 = vpop.f32.mrf.mxu0
      %v3069 = vadd.f32 0.0, %v3068
      %3070 = vmatmul.bf16.gmra.mxu0 %v2908
      %v3071 = vpop.f32.mrf.mxu0
      %v3072 = vadd.f32 0.0, %v3071
      %v3073 = vpop.f32.mrf.mxu0
      %v3074 = vadd.f32 0.0, %v3073
      %3075 = vmatmul.bf16.gmra.mxu0 %v2910
      %v3076 = vpop.f32.mrf.mxu0
      %v3077 = vadd.f32 0.0, %v3076
      %v3078 = vpop.f32.mrf.mxu0
      %v3079 = vadd.f32 0.0, %v3078
      %3080 = vdwg.mxu0
      %3081 = vmatpush.bf16.msra.mxu0 0
      %3082 = vmatpush.bf16.msra.mxu0 0
      %3083 = vmatpush.bf16.msra.mxu0 0
      %3084 = vmatpush.bf16.msra.mxu0 0
      %3085 = vmatpush.bf16.msra.mxu0 %v3047
      %3086 = vmatpush.bf16.msra.mxu0 %v3008
      %3087 = vmatpush.bf16.msra.mxu0 %v3006
      %3088 = vmatpush.bf16.msra.mxu0 %v3004
      %3089 = vmatmul.bf16.gmra.mxu0 %v3035
      %v3090 = vpop.f32.mrf.mxu0
      %v3091 = vadd.f32 %v3062, %v3090
      %v3092 = vpop.f32.mrf.mxu0
      %v3093 = vadd.f32 %v3064, %v3092
      %3094 = vmatmul.bf16.gmra.mxu0 %v3038
      %v3095 = vpop.f32.mrf.mxu0
      %v3096 = vadd.f32 %v3067, %v3095
      %v3097 = vpop.f32.mrf.mxu0
      %v3098 = vadd.f32 %v3069, %v3097
      %3099 = vmatmul.bf16.gmra.mxu0 %v3041
      %v3100 = vpop.f32.mrf.mxu0
      %v3101 = vadd.f32 %v3072, %v3100
      %v3102 = vpop.f32.mrf.mxu0
      %v3103 = vadd.f32 %v3074, %v3102
      %3104 = vmatmul.bf16.gmra.mxu0 %v3044
      %v3105 = vpop.f32.mrf.mxu0
      %v3106 = vadd.f32 %v3077, %v3105
      %v3107 = vpop.f32.mrf.mxu0
      %v3108 = vadd.f32 %v3079, %v3107
      %3109 = vdwg.mxu0
      %3110 = vmatpush.bf16.msra.mxu0 %v3003
      %3111 = vmatpush.bf16.msra.mxu0 %v3001
      %3112 = vmatpush.bf16.msra.mxu0 %v2999
      %3113 = vmatpush.bf16.msra.mxu0 %v2997
      %3114 = vmatpush.bf16.msra.mxu0 %v2995
      %3115 = vmatpush.bf16.msra.mxu0 %v2993
      %3116 = vmatpush.bf16.msra.mxu0 %v2991
      %3117 = vmatpush.bf16.msra.mxu0 %v2989
      %3118 = vmatmul.bf16.gmra.mxu0 %v2904
      %v3119 = vpop.f32.mrf.mxu0
      %v3120 = vadd.f32 0.0, %v3119
      %v3121 = vpop.f32.mrf.mxu0
      %v3122 = vadd.f32 0.0, %v3121
      %3123 = vmatmul.bf16.gmra.mxu0 %v2906
      %v3124 = vpop.f32.mrf.mxu0
      %v3125 = vadd.f32 0.0, %v3124
      %v3126 = vpop.f32.mrf.mxu0
      %v3127 = vadd.f32 0.0, %v3126
      %3128 = vmatmul.bf16.gmra.mxu0 %v2908
      %v3129 = vpop.f32.mrf.mxu0
      %v3130 = vadd.f32 0.0, %v3129
      %v3131 = vpop.f32.mrf.mxu0
      %v3132 = vadd.f32 0.0, %v3131
      %3133 = vmatmul.bf16.gmra.mxu0 %v2910
      %v3134 = vpop.f32.mrf.mxu0
      %v3135 = vadd.f32 0.0, %v3134
      %v3136 = vpop.f32.mrf.mxu0
      %v3137 = vadd.f32 0.0, %v3136
      %3138 = vdwg.mxu0
      %3139 = vmatpush.bf16.msra.mxu0 0
      %3140 = vmatpush.bf16.msra.mxu0 0
      %3141 = vmatpush.bf16.msra.mxu0 0
      %3142 = vmatpush.bf16.msra.mxu0 0
      %3143 = vmatpush.bf16.msra.mxu0 %v3050
      %3144 = vmatpush.bf16.msra.mxu0 %v3009
      %3145 = vmatpush.bf16.msra.mxu0 %v3007
      %3146 = vmatpush.bf16.msra.mxu0 %v3005
      %3147 = vmatmul.bf16.gmra.mxu0 %v3035
      %v3148 = vpop.f32.mrf.mxu0
      %v3149 = vadd.f32 %v3120, %v3148
      %v3150 = vpop.f32.mrf.mxu0
      %v3151 = vadd.f32 %v3122, %v3150
      %3152 = vmatmul.bf16.gmra.mxu0 %v3038
      %v3153 = vpop.f32.mrf.mxu0
      %v3154 = vadd.f32 %v3125, %v3153
      %v3155 = vpop.f32.mrf.mxu0
      %v3156 = vadd.f32 %v3127, %v3155
      %3157 = vmatmul.bf16.gmra.mxu0 %v3041
      %v3158 = vpop.f32.mrf.mxu0
      %v3159 = vadd.f32 %v3130, %v3158
      %v3160 = vpop.f32.mrf.mxu0
      %v3161 = vadd.f32 %v3132, %v3160
      %3162 = vmatmul.bf16.gmra.mxu0 %v3044
      %v3163 = vpop.f32.mrf.mxu0
      %v3164 = vadd.f32 %v3135, %v3163
      %v3165 = vpop.f32.mrf.mxu0
      %v3166 = vadd.f32 %v3137, %v3165
      %3167 = vdwg.mxu0
      %v3168 = vadd.f32 %v2830, %v3091
      %v3169 = vadd.f32 %v2831, %v3149
      %v3170 = vadd.f32 %v2832, %v3093
      %v3171 = vadd.f32 %v2833, %v3151
      %v3172 = vadd.f32 %v2834, %v3096
      %v3173 = vadd.f32 %v2835, %v3154
      %v3174 = vadd.f32 %v2836, %v3098
      %v3175 = vadd.f32 %v2837, %v3156
      %v3176 = vadd.f32 %v2838, %v3101
      %v3177 = vadd.f32 %v2839, %v3159
      %v3178 = vadd.f32 %v2840, %v3103
      %v3179 = vadd.f32 %v2841, %v3161
      %v3180 = vadd.f32 %v2842, %v3106
      %v3181 = vadd.f32 %v2843, %v3164
      %v3182 = vadd.f32 %v2844, %v3108
      %v3183 = vadd.f32 %v2845, %v3166
      %v3185 = vperm.slane %v170, 0
      %v3186 = vperm.slane %v170, 1
      %v3189 = vadd.f32 %v3168, %v3185
      %v3190 = vadd.f32 %v3169, %v3186
      %v3191 = vadd.f32 %v3170, %v3185
      %v3192 = vadd.f32 %v3171, %v3186
      %v3193 = vadd.f32 %v3172, %v3185
      %v3194 = vadd.f32 %v3173, %v3186
      %v3195 = vadd.f32 %v3174, %v3185
      %v3196 = vadd.f32 %v3175, %v3186
      %v3197 = vadd.f32 %v3176, %v3185
      %v3198 = vadd.f32 %v3177, %v3186
      %v3199 = vadd.f32 %v3178, %v3185
      %v3200 = vadd.f32 %v3179, %v3186
      %v3201 = vadd.f32 %v3180, %v3185
      %v3202 = vadd.f32 %v3181, %v3186
      %v3203 = vadd.f32 %v3182, %v3185
      %v3204 = vadd.f32 %v3183, %v3186
      %v3205 = vmax.f32 %v3189, 0.0
      %v3206 = vmax.f32 %v3190, 0.0
      %v3207 = vmax.f32 %v3191, 0.0
      %v3208 = vmax.f32 %v3192, 0.0
      %v3209 = vmax.f32 %v3193, 0.0
      %v3210 = vmax.f32 %v3194, 0.0
      %v3211 = vmax.f32 %v3195, 0.0
      %v3212 = vmax.f32 %v3196, 0.0
      %v3213 = vmax.f32 %v3197, 0.0
      %v3214 = vmax.f32 %v3198, 0.0
      %v3215 = vmax.f32 %v3199, 0.0
      %v3216 = vmax.f32 %v3200, 0.0
      %v3217 = vmax.f32 %v3201, 0.0
      %v3218 = vmax.f32 %v3202, 0.0
      %v3219 = vmax.f32 %v3203, 0.0
      %v3220 = vmax.f32 %v3204, 0.0
      %v3221 = vadd.f32 %v3205, %v3207
      %v3222 = vadd.f32 %v3221, %v3209
      %v3223 = vadd.f32 %v3222, %v3211
      %v3224 = vadd.f32 %v3223, %v3213
      %v3225 = vadd.f32 %v3224, %v3215
      %v3226 = vadd.f32 %v3225, %v3217
      %v3227 = vadd.f32 %v3226, %v3219
      %v3228 = vrot.slane %v3227, 4
      %v3229 = vadd.f32 %v3227, %v3228
      %v3230 = vrot.slane %v3229, 2
      %v3231 = vadd.f32 %v3229, %v3230
      %v3232 = vrot.slane %v3231, 1
      %v3233 = vadd.f32 %v3231, %v3232
      %v3234 = vadd.f32 %v3206, %v3208
      %v3235 = vadd.f32 %v3234, %v3210
      %v3236 = vadd.f32 %v3235, %v3212
      %v3237 = vadd.f32 %v3236, %v3214
      %v3238 = vadd.f32 %v3237, %v3216
      %v3239 = vadd.f32 %v3238, %v3218
      %v3240 = vadd.f32 %v3239, %v3220
      %v3241 = vrot.slane %v3240, 4
      %v3242 = vadd.f32 %v3240, %v3241
      %v3243 = vrot.slane %v3242, 2
      %v3244 = vadd.f32 %v3242, %v3243
      %v3245 = vrot.slane %v3244, 1
      %v3246 = vadd.f32 %v3244, %v3245
      %v3247 = vadd.f32 %v3233, 0.0
      %v3248 = vadd.f32 %v3246, 0.0
      %3249 = vmatpush.bf16.msra.mxu0 %v359
      %3250 = vmatpush.bf16.msra.mxu0 %v357
      %3251 = vmatpush.bf16.msra.mxu0 %v355
      %3252 = vmatpush.bf16.msra.mxu0 %v353
      %3253 = vmatpush.bf16.msra.mxu0 %v351
      %3254 = vmatpush.bf16.msra.mxu0 %v349
      %3255 = vmatpush.bf16.msra.mxu0 %v347
      %3256 = vmatpush.bf16.msra.mxu0 %v345
      %3257 = vmatmul.bf16.gmra.mxu0 %v1890
      %v3258 = vpop.f32.mrf.mxu0
      %v3259 = vadd.f32 0.0, %v3258
      %v3260 = vpop.f32.mrf.mxu0
      %v3261 = vadd.f32 0.0, %v3260
      %3262 = vmatmul.bf16.gmra.mxu0 %v1892
      %v3263 = vpop.f32.mrf.mxu0
      %v3264 = vadd.f32 0.0, %v3263
      %v3265 = vpop.f32.mrf.mxu0
      %v3266 = vadd.f32 0.0, %v3265
      %3267 = vmatmul.bf16.gmra.mxu0 %v1894
      %v3268 = vpop.f32.mrf.mxu0
      %v3269 = vadd.f32 0.0, %v3268
      %v3270 = vpop.f32.mrf.mxu0
      %v3271 = vadd.f32 0.0, %v3270
      %3272 = vmatmul.bf16.gmra.mxu0 %v1896
      %v3273 = vpop.f32.mrf.mxu0
      %v3274 = vadd.f32 0.0, %v3273
      %v3275 = vpop.f32.mrf.mxu0
      %v3276 = vadd.f32 0.0, %v3275
      %3277 = vdwg.mxu0
      %3278 = vmatpush.bf16.msra.mxu0 0
      %3279 = vmatpush.bf16.msra.mxu0 0
      %3280 = vmatpush.bf16.msra.mxu0 0
      %3281 = vmatpush.bf16.msra.mxu0 0
      %3282 = vmatpush.bf16.msra.mxu0 %v409
      %3283 = vmatpush.bf16.msra.mxu0 %v365
      %3284 = vmatpush.bf16.msra.mxu0 %v363
      %3285 = vmatpush.bf16.msra.mxu0 %v361
      %3286 = vmatmul.bf16.gmra.mxu0 %v2021
      %v3287 = vpop.f32.mrf.mxu0
      %v3288 = vadd.f32 %v3259, %v3287
      %v3289 = vpop.f32.mrf.mxu0
      %v3290 = vadd.f32 %v3261, %v3289
      %3291 = vmatmul.bf16.gmra.mxu0 %v2024
      %v3292 = vpop.f32.mrf.mxu0
      %v3293 = vadd.f32 %v3264, %v3292
      %v3294 = vpop.f32.mrf.mxu0
      %v3295 = vadd.f32 %v3266, %v3294
      %3296 = vmatmul.bf16.gmra.mxu0 %v2027
      %v3297 = vpop.f32.mrf.mxu0
      %v3298 = vadd.f32 %v3269, %v3297
      %v3299 = vpop.f32.mrf.mxu0
      %v3300 = vadd.f32 %v3271, %v3299
      %3301 = vmatmul.bf16.gmra.mxu0 %v2030
      %v3302 = vpop.f32.mrf.mxu0
      %v3303 = vadd.f32 %v3274, %v3302
      %v3304 = vpop.f32.mrf.mxu0
      %v3305 = vadd.f32 %v3276, %v3304
      %3306 = vdwg.mxu0
      %3307 = vmatpush.bf16.msra.mxu0 %v360
      %3308 = vmatpush.bf16.msra.mxu0 %v358
      %3309 = vmatpush.bf16.msra.mxu0 %v356
      %3310 = vmatpush.bf16.msra.mxu0 %v354
      %3311 = vmatpush.bf16.msra.mxu0 %v352
      %3312 = vmatpush.bf16.msra.mxu0 %v350
      %3313 = vmatpush.bf16.msra.mxu0 %v348
      %3314 = vmatpush.bf16.msra.mxu0 %v346
      %3315 = vmatmul.bf16.gmra.mxu0 %v1890
      %v3316 = vpop.f32.mrf.mxu0
      %v3317 = vadd.f32 0.0, %v3316
      %v3318 = vpop.f32.mrf.mxu0
      %v3319 = vadd.f32 0.0, %v3318
      %3320 = vmatmul.bf16.gmra.mxu0 %v1892
      %v3321 = vpop.f32.mrf.mxu0
      %v3322 = vadd.f32 0.0, %v3321
      %v3323 = vpop.f32.mrf.mxu0
      %v3324 = vadd.f32 0.0, %v3323
      %3325 = vmatmul.bf16.gmra.mxu0 %v1894
      %v3326 = vpop.f32.mrf.mxu0
      %v3327 = vadd.f32 0.0, %v3326
      %v3328 = vpop.f32.mrf.mxu0
      %v3329 = vadd.f32 0.0, %v3328
      %3330 = vmatmul.bf16.gmra.mxu0 %v1896
      %v3331 = vpop.f32.mrf.mxu0
      %v3332 = vadd.f32 0.0, %v3331
      %v3333 = vpop.f32.mrf.mxu0
      %v3334 = vadd.f32 0.0, %v3333
      %3335 = vdwg.mxu0
      %3336 = vmatpush.bf16.msra.mxu0 0
      %3337 = vmatpush.bf16.msra.mxu0 0
      %3338 = vmatpush.bf16.msra.mxu0 0
      %3339 = vmatpush.bf16.msra.mxu0 0
      %3340 = vmatpush.bf16.msra.mxu0 %v412
      %3341 = vmatpush.bf16.msra.mxu0 %v366
      %3342 = vmatpush.bf16.msra.mxu0 %v364
      %3343 = vmatpush.bf16.msra.mxu0 %v362
      %3344 = vmatmul.bf16.gmra.mxu0 %v2021
      %v3345 = vpop.f32.mrf.mxu0
      %v3346 = vadd.f32 %v3317, %v3345
      %v3347 = vpop.f32.mrf.mxu0
      %v3348 = vadd.f32 %v3319, %v3347
      %3349 = vmatmul.bf16.gmra.mxu0 %v2024
      %v3350 = vpop.f32.mrf.mxu0
      %v3351 = vadd.f32 %v3322, %v3350
      %v3352 = vpop.f32.mrf.mxu0
      %v3353 = vadd.f32 %v3324, %v3352
      %3354 = vmatmul.bf16.gmra.mxu0 %v2027
      %v3355 = vpop.f32.mrf.mxu0
      %v3356 = vadd.f32 %v3327, %v3355
      %v3357 = vpop.f32.mrf.mxu0
      %v3358 = vadd.f32 %v3329, %v3357
      %3359 = vmatmul.bf16.gmra.mxu0 %v2030
      %v3360 = vpop.f32.mrf.mxu0
      %v3361 = vadd.f32 %v3332, %v3360
      %v3362 = vpop.f32.mrf.mxu0
      %v3363 = vadd.f32 %v3334, %v3362
      %3364 = vdwg.mxu0
      %3365 = vmatpush.bf16.msra.mxu0 %v652
      %3366 = vmatpush.bf16.msra.mxu0 %v650
      %3367 = vmatpush.bf16.msra.mxu0 %v648
      %3368 = vmatpush.bf16.msra.mxu0 %v646
      %3369 = vmatpush.bf16.msra.mxu0 %v644
      %3370 = vmatpush.bf16.msra.mxu0 %v642
      %3371 = vmatpush.bf16.msra.mxu0 %v640
      %3372 = vmatpush.bf16.msra.mxu0 %v638
      %3373 = vmatmul.bf16.gmra.mxu0 %v1552
      %v3374 = vpop.f32.mrf.mxu0
      %v3375 = vadd.f32 %v3288, %v3374
      %v3376 = vpop.f32.mrf.mxu0
      %v3377 = vadd.f32 %v3290, %v3376
      %3378 = vmatmul.bf16.gmra.mxu0 %v1554
      %v3379 = vpop.f32.mrf.mxu0
      %v3380 = vadd.f32 %v3293, %v3379
      %v3381 = vpop.f32.mrf.mxu0
      %v3382 = vadd.f32 %v3295, %v3381
      %3383 = vmatmul.bf16.gmra.mxu0 %v1556
      %v3384 = vpop.f32.mrf.mxu0
      %v3385 = vadd.f32 %v3298, %v3384
      %v3386 = vpop.f32.mrf.mxu0
      %v3387 = vadd.f32 %v3300, %v3386
      %3388 = vmatmul.bf16.gmra.mxu0 %v1558
      %v3389 = vpop.f32.mrf.mxu0
      %v3390 = vadd.f32 %v3303, %v3389
      %v3391 = vpop.f32.mrf.mxu0
      %v3392 = vadd.f32 %v3305, %v3391
      %3393 = vdwg.mxu0
      %3394 = vmatpush.bf16.msra.mxu0 0
      %3395 = vmatpush.bf16.msra.mxu0 0
      %3396 = vmatpush.bf16.msra.mxu0 0
      %3397 = vmatpush.bf16.msra.mxu0 0
      %3398 = vmatpush.bf16.msra.mxu0 %v697
      %3399 = vmatpush.bf16.msra.mxu0 %v658
      %3400 = vmatpush.bf16.msra.mxu0 %v656
      %3401 = vmatpush.bf16.msra.mxu0 %v654
      %3402 = vmatmul.bf16.gmra.mxu0 %v1683
      %v3403 = vpop.f32.mrf.mxu0
      %v3404 = vadd.f32 %v3375, %v3403
      %v3405 = vpop.f32.mrf.mxu0
      %v3406 = vadd.f32 %v3377, %v3405
      %3407 = vmatmul.bf16.gmra.mxu0 %v1686
      %v3408 = vpop.f32.mrf.mxu0
      %v3409 = vadd.f32 %v3380, %v3408
      %v3410 = vpop.f32.mrf.mxu0
      %v3411 = vadd.f32 %v3382, %v3410
      %3412 = vmatmul.bf16.gmra.mxu0 %v1689
      %v3413 = vpop.f32.mrf.mxu0
      %v3414 = vadd.f32 %v3385, %v3413
      %v3415 = vpop.f32.mrf.mxu0
      %v3416 = vadd.f32 %v3387, %v3415
      %3417 = vmatmul.bf16.gmra.mxu0 %v1692
      %v3418 = vpop.f32.mrf.mxu0
      %v3419 = vadd.f32 %v3390, %v3418
      %v3420 = vpop.f32.mrf.mxu0
      %v3421 = vadd.f32 %v3392, %v3420
      %3422 = vdwg.mxu0
      %3423 = vmatpush.bf16.msra.mxu0 %v653
      %3424 = vmatpush.bf16.msra.mxu0 %v651
      %3425 = vmatpush.bf16.msra.mxu0 %v649
      %3426 = vmatpush.bf16.msra.mxu0 %v647
      %3427 = vmatpush.bf16.msra.mxu0 %v645
      %3428 = vmatpush.bf16.msra.mxu0 %v643
      %3429 = vmatpush.bf16.msra.mxu0 %v641
      %3430 = vmatpush.bf16.msra.mxu0 %v639
      %3431 = vmatmul.bf16.gmra.mxu0 %v1552
      %v3432 = vpop.f32.mrf.mxu0
      %v3433 = vadd.f32 %v3346, %v3432
      %v3434 = vpop.f32.mrf.mxu0
      %v3435 = vadd.f32 %v3348, %v3434
      %3436 = vmatmul.bf16.gmra.mxu0 %v1554
      %v3437 = vpop.f32.mrf.mxu0
      %v3438 = vadd.f32 %v3351, %v3437
      %v3439 = vpop.f32.mrf.mxu0
      %v3440 = vadd.f32 %v3353, %v3439
      %3441 = vmatmul.bf16.gmra.mxu0 %v1556
      %v3442 = vpop.f32.mrf.mxu0
      %v3443 = vadd.f32 %v3356, %v3442
      %v3444 = vpop.f32.mrf.mxu0
      %v3445 = vadd.f32 %v3358, %v3444
      %3446 = vmatmul.bf16.gmra.mxu0 %v1558
      %v3447 = vpop.f32.mrf.mxu0
      %v3448 = vadd.f32 %v3361, %v3447
      %v3449 = vpop.f32.mrf.mxu0
      %v3450 = vadd.f32 %v3363, %v3449
      %3451 = vdwg.mxu0
      %3452 = vmatpush.bf16.msra.mxu0 0
      %3453 = vmatpush.bf16.msra.mxu0 0
      %3454 = vmatpush.bf16.msra.mxu0 0
      %3455 = vmatpush.bf16.msra.mxu0 0
      %3456 = vmatpush.bf16.msra.mxu0 %v700
      %3457 = vmatpush.bf16.msra.mxu0 %v659
      %3458 = vmatpush.bf16.msra.mxu0 %v657
      %3459 = vmatpush.bf16.msra.mxu0 %v655
      %3460 = vmatmul.bf16.gmra.mxu0 %v1683
      %v3461 = vpop.f32.mrf.mxu0
      %v3462 = vadd.f32 %v3433, %v3461
      %v3463 = vpop.f32.mrf.mxu0
      %v3464 = vadd.f32 %v3435, %v3463
      %3465 = vmatmul.bf16.gmra.mxu0 %v1686
      %v3466 = vpop.f32.mrf.mxu0
      %v3467 = vadd.f32 %v3438, %v3466
      %v3468 = vpop.f32.mrf.mxu0
      %v3469 = vadd.f32 %v3440, %v3468
      %3470 = vmatmul.bf16.gmra.mxu0 %v1689
      %v3471 = vpop.f32.mrf.mxu0
      %v3472 = vadd.f32 %v3443, %v3471
      %v3473 = vpop.f32.mrf.mxu0
      %v3474 = vadd.f32 %v3445, %v3473
      %3475 = vmatmul.bf16.gmra.mxu0 %v1692
      %v3476 = vpop.f32.mrf.mxu0
      %v3477 = vadd.f32 %v3448, %v3476
      %v3478 = vpop.f32.mrf.mxu0
      %v3479 = vadd.f32 %v3450, %v3478
      %3480 = vdwg.mxu0
      %3481 = vmatpush.bf16.msra.mxu0 %v974
      %3482 = vmatpush.bf16.msra.mxu0 %v972
      %3483 = vmatpush.bf16.msra.mxu0 %v970
      %3484 = vmatpush.bf16.msra.mxu0 %v968
      %3485 = vmatpush.bf16.msra.mxu0 %v966
      %3486 = vmatpush.bf16.msra.mxu0 %v964
      %3487 = vmatpush.bf16.msra.mxu0 %v962
      %3488 = vmatpush.bf16.msra.mxu0 %v960
      %3489 = vmatmul.bf16.gmra.mxu0 %v2228
      %v3490 = vpop.f32.mrf.mxu0
      %v3491 = vadd.f32 0.0, %v3490
      %v3492 = vpop.f32.mrf.mxu0
      %v3493 = vadd.f32 0.0, %v3492
      %3494 = vmatmul.bf16.gmra.mxu0 %v2230
      %v3495 = vpop.f32.mrf.mxu0
      %v3496 = vadd.f32 0.0, %v3495
      %v3497 = vpop.f32.mrf.mxu0
      %v3498 = vadd.f32 0.0, %v3497
      %3499 = vmatmul.bf16.gmra.mxu0 %v2232
      %v3500 = vpop.f32.mrf.mxu0
      %v3501 = vadd.f32 0.0, %v3500
      %v3502 = vpop.f32.mrf.mxu0
      %v3503 = vadd.f32 0.0, %v3502
      %3504 = vmatmul.bf16.gmra.mxu0 %v2234
      %v3505 = vpop.f32.mrf.mxu0
      %v3506 = vadd.f32 0.0, %v3505
      %v3507 = vpop.f32.mrf.mxu0
      %v3508 = vadd.f32 0.0, %v3507
      %3509 = vdwg.mxu0
      %3510 = vmatpush.bf16.msra.mxu0 0
      %3511 = vmatpush.bf16.msra.mxu0 0
      %3512 = vmatpush.bf16.msra.mxu0 0
      %3513 = vmatpush.bf16.msra.mxu0 0
      %3514 = vmatpush.bf16.msra.mxu0 %v1019
      %3515 = vmatpush.bf16.msra.mxu0 %v980
      %3516 = vmatpush.bf16.msra.mxu0 %v978
      %3517 = vmatpush.bf16.msra.mxu0 %v976
      %3518 = vmatmul.bf16.gmra.mxu0 %v2359
      %v3519 = vpop.f32.mrf.mxu0
      %v3520 = vadd.f32 %v3491, %v3519
      %v3521 = vpop.f32.mrf.mxu0
      %v3522 = vadd.f32 %v3493, %v3521
      %3523 = vmatmul.bf16.gmra.mxu0 %v2362
      %v3524 = vpop.f32.mrf.mxu0
      %v3525 = vadd.f32 %v3496, %v3524
      %v3526 = vpop.f32.mrf.mxu0
      %v3527 = vadd.f32 %v3498, %v3526
      %3528 = vmatmul.bf16.gmra.mxu0 %v2365
      %v3529 = vpop.f32.mrf.mxu0
      %v3530 = vadd.f32 %v3501, %v3529
      %v3531 = vpop.f32.mrf.mxu0
      %v3532 = vadd.f32 %v3503, %v3531
      %3533 = vmatmul.bf16.gmra.mxu0 %v2368
      %v3534 = vpop.f32.mrf.mxu0
      %v3535 = vadd.f32 %v3506, %v3534
      %v3536 = vpop.f32.mrf.mxu0
      %v3537 = vadd.f32 %v3508, %v3536
      %3538 = vdwg.mxu0
      %3539 = vmatpush.bf16.msra.mxu0 %v975
      %3540 = vmatpush.bf16.msra.mxu0 %v973
      %3541 = vmatpush.bf16.msra.mxu0 %v971
      %3542 = vmatpush.bf16.msra.mxu0 %v969
      %3543 = vmatpush.bf16.msra.mxu0 %v967
      %3544 = vmatpush.bf16.msra.mxu0 %v965
      %3545 = vmatpush.bf16.msra.mxu0 %v963
      %3546 = vmatpush.bf16.msra.mxu0 %v961
      %3547 = vmatmul.bf16.gmra.mxu0 %v2228
      %v3548 = vpop.f32.mrf.mxu0
      %v3549 = vadd.f32 0.0, %v3548
      %v3550 = vpop.f32.mrf.mxu0
      %v3551 = vadd.f32 0.0, %v3550
      %3552 = vmatmul.bf16.gmra.mxu0 %v2230
      %v3553 = vpop.f32.mrf.mxu0
      %v3554 = vadd.f32 0.0, %v3553
      %v3555 = vpop.f32.mrf.mxu0
      %v3556 = vadd.f32 0.0, %v3555
      %3557 = vmatmul.bf16.gmra.mxu0 %v2232
      %v3558 = vpop.f32.mrf.mxu0
      %v3559 = vadd.f32 0.0, %v3558
      %v3560 = vpop.f32.mrf.mxu0
      %v3561 = vadd.f32 0.0, %v3560
      %3562 = vmatmul.bf16.gmra.mxu0 %v2234
      %v3563 = vpop.f32.mrf.mxu0
      %v3564 = vadd.f32 0.0, %v3563
      %v3565 = vpop.f32.mrf.mxu0
      %v3566 = vadd.f32 0.0, %v3565
      %3567 = vdwg.mxu0
      %3568 = vmatpush.bf16.msra.mxu0 0
      %3569 = vmatpush.bf16.msra.mxu0 0
      %3570 = vmatpush.bf16.msra.mxu0 0
      %3571 = vmatpush.bf16.msra.mxu0 0
      %3572 = vmatpush.bf16.msra.mxu0 %v1022
      %3573 = vmatpush.bf16.msra.mxu0 %v981
      %3574 = vmatpush.bf16.msra.mxu0 %v979
      %3575 = vmatpush.bf16.msra.mxu0 %v977
      %3576 = vmatmul.bf16.gmra.mxu0 %v2359
      %v3577 = vpop.f32.mrf.mxu0
      %v3578 = vadd.f32 %v3549, %v3577
      %v3579 = vpop.f32.mrf.mxu0
      %v3580 = vadd.f32 %v3551, %v3579
      %3581 = vmatmul.bf16.gmra.mxu0 %v2362
      %v3582 = vpop.f32.mrf.mxu0
      %v3583 = vadd.f32 %v3554, %v3582
      %v3584 = vpop.f32.mrf.mxu0
      %v3585 = vadd.f32 %v3556, %v3584
      %3586 = vmatmul.bf16.gmra.mxu0 %v2365
      %v3587 = vpop.f32.mrf.mxu0
      %v3588 = vadd.f32 %v3559, %v3587
      %v3589 = vpop.f32.mrf.mxu0
      %v3590 = vadd.f32 %v3561, %v3589
      %3591 = vmatmul.bf16.gmra.mxu0 %v2368
      %v3592 = vpop.f32.mrf.mxu0
      %v3593 = vadd.f32 %v3564, %v3592
      %v3594 = vpop.f32.mrf.mxu0
      %v3595 = vadd.f32 %v3566, %v3594
      %3596 = vdwg.mxu0
      %v3597 = vadd.f32 %v3404, %v3520
      %v3598 = vadd.f32 %v3462, %v3578
      %v3599 = vadd.f32 %v3406, %v3522
      %v3600 = vadd.f32 %v3464, %v3580
      %v3601 = vadd.f32 %v3409, %v3525
      %v3602 = vadd.f32 %v3467, %v3583
      %v3603 = vadd.f32 %v3411, %v3527
      %v3604 = vadd.f32 %v3469, %v3585
      %v3605 = vadd.f32 %v3414, %v3530
      %v3606 = vadd.f32 %v3472, %v3588
      %v3607 = vadd.f32 %v3416, %v3532
      %v3608 = vadd.f32 %v3474, %v3590
      %v3609 = vadd.f32 %v3419, %v3535
      %v3610 = vadd.f32 %v3477, %v3593
      %v3611 = vadd.f32 %v3421, %v3537
      %v3612 = vadd.f32 %v3479, %v3595
      %3613 = vmatpush.bf16.msra.mxu0 %v1312
      %3614 = vmatpush.bf16.msra.mxu0 %v1310
      %3615 = vmatpush.bf16.msra.mxu0 %v1308
      %3616 = vmatpush.bf16.msra.mxu0 %v1306
      %3617 = vmatpush.bf16.msra.mxu0 %v1304
      %3618 = vmatpush.bf16.msra.mxu0 %v1302
      %3619 = vmatpush.bf16.msra.mxu0 %v1300
      %3620 = vmatpush.bf16.msra.mxu0 %v1298
      %3621 = vmatmul.bf16.gmra.mxu0 %v2566
      %v3622 = vpop.f32.mrf.mxu0
      %v3623 = vadd.f32 0.0, %v3622
      %v3624 = vpop.f32.mrf.mxu0
      %v3625 = vadd.f32 0.0, %v3624
      %3626 = vmatmul.bf16.gmra.mxu0 %v2568
      %v3627 = vpop.f32.mrf.mxu0
      %v3628 = vadd.f32 0.0, %v3627
      %v3629 = vpop.f32.mrf.mxu0
      %v3630 = vadd.f32 0.0, %v3629
      %3631 = vmatmul.bf16.gmra.mxu0 %v2570
      %v3632 = vpop.f32.mrf.mxu0
      %v3633 = vadd.f32 0.0, %v3632
      %v3634 = vpop.f32.mrf.mxu0
      %v3635 = vadd.f32 0.0, %v3634
      %3636 = vmatmul.bf16.gmra.mxu0 %v2572
      %v3637 = vpop.f32.mrf.mxu0
      %v3638 = vadd.f32 0.0, %v3637
      %v3639 = vpop.f32.mrf.mxu0
      %v3640 = vadd.f32 0.0, %v3639
      %3641 = vdwg.mxu0
      %3642 = vmatpush.bf16.msra.mxu0 0
      %3643 = vmatpush.bf16.msra.mxu0 0
      %3644 = vmatpush.bf16.msra.mxu0 0
      %3645 = vmatpush.bf16.msra.mxu0 0
      %3646 = vmatpush.bf16.msra.mxu0 %v1357
      %3647 = vmatpush.bf16.msra.mxu0 %v1318
      %3648 = vmatpush.bf16.msra.mxu0 %v1316
      %3649 = vmatpush.bf16.msra.mxu0 %v1314
      %3650 = vmatmul.bf16.gmra.mxu0 %v2697
      %v3651 = vpop.f32.mrf.mxu0
      %v3652 = vadd.f32 %v3623, %v3651
      %v3653 = vpop.f32.mrf.mxu0
      %v3654 = vadd.f32 %v3625, %v3653
      %3655 = vmatmul.bf16.gmra.mxu0 %v2700
      %v3656 = vpop.f32.mrf.mxu0
      %v3657 = vadd.f32 %v3628, %v3656
      %v3658 = vpop.f32.mrf.mxu0
      %v3659 = vadd.f32 %v3630, %v3658
      %3660 = vmatmul.bf16.gmra.mxu0 %v2703
      %v3661 = vpop.f32.mrf.mxu0
      %v3662 = vadd.f32 %v3633, %v3661
      %v3663 = vpop.f32.mrf.mxu0
      %v3664 = vadd.f32 %v3635, %v3663
      %3665 = vmatmul.bf16.gmra.mxu0 %v2706
      %v3666 = vpop.f32.mrf.mxu0
      %v3667 = vadd.f32 %v3638, %v3666
      %v3668 = vpop.f32.mrf.mxu0
      %v3669 = vadd.f32 %v3640, %v3668
      %3670 = vdwg.mxu0
      %3671 = vmatpush.bf16.msra.mxu0 %v1313
      %3672 = vmatpush.bf16.msra.mxu0 %v1311
      %3673 = vmatpush.bf16.msra.mxu0 %v1309
      %3674 = vmatpush.bf16.msra.mxu0 %v1307
      %3675 = vmatpush.bf16.msra.mxu0 %v1305
      %3676 = vmatpush.bf16.msra.mxu0 %v1303
      %3677 = vmatpush.bf16.msra.mxu0 %v1301
      %3678 = vmatpush.bf16.msra.mxu0 %v1299
      %3679 = vmatmul.bf16.gmra.mxu0 %v2566
      %v3680 = vpop.f32.mrf.mxu0
      %v3681 = vadd.f32 0.0, %v3680
      %v3682 = vpop.f32.mrf.mxu0
      %v3683 = vadd.f32 0.0, %v3682
      %3684 = vmatmul.bf16.gmra.mxu0 %v2568
      %v3685 = vpop.f32.mrf.mxu0
      %v3686 = vadd.f32 0.0, %v3685
      %v3687 = vpop.f32.mrf.mxu0
      %v3688 = vadd.f32 0.0, %v3687
      %3689 = vmatmul.bf16.gmra.mxu0 %v2570
      %v3690 = vpop.f32.mrf.mxu0
      %v3691 = vadd.f32 0.0, %v3690
      %v3692 = vpop.f32.mrf.mxu0
      %v3693 = vadd.f32 0.0, %v3692
      %3694 = vmatmul.bf16.gmra.mxu0 %v2572
      %v3695 = vpop.f32.mrf.mxu0
      %v3696 = vadd.f32 0.0, %v3695
      %v3697 = vpop.f32.mrf.mxu0
      %v3698 = vadd.f32 0.0, %v3697
      %3699 = vdwg.mxu0
      %3700 = vmatpush.bf16.msra.mxu0 0
      %3701 = vmatpush.bf16.msra.mxu0 0
      %3702 = vmatpush.bf16.msra.mxu0 0
      %3703 = vmatpush.bf16.msra.mxu0 0
      %3704 = vmatpush.bf16.msra.mxu0 %v1360
      %3705 = vmatpush.bf16.msra.mxu0 %v1319
      %3706 = vmatpush.bf16.msra.mxu0 %v1317
      %3707 = vmatpush.bf16.msra.mxu0 %v1315
      %3708 = vmatmul.bf16.gmra.mxu0 %v2697
      %v3709 = vpop.f32.mrf.mxu0
      %v3710 = vadd.f32 %v3681, %v3709
      %v3711 = vpop.f32.mrf.mxu0
      %v3712 = vadd.f32 %v3683, %v3711
      %3713 = vmatmul.bf16.gmra.mxu0 %v2700
      %v3714 = vpop.f32.mrf.mxu0
      %v3715 = vadd.f32 %v3686, %v3714
      %v3716 = vpop.f32.mrf.mxu0
      %v3717 = vadd.f32 %v3688, %v3716
      %3718 = vmatmul.bf16.gmra.mxu0 %v2703
      %v3719 = vpop.f32.mrf.mxu0
      %v3720 = vadd.f32 %v3691, %v3719
      %v3721 = vpop.f32.mrf.mxu0
      %v3722 = vadd.f32 %v3693, %v3721
      %3723 = vmatmul.bf16.gmra.mxu0 %v2706
      %v3724 = vpop.f32.mrf.mxu0
      %v3725 = vadd.f32 %v3696, %v3724
      %v3726 = vpop.f32.mrf.mxu0
      %v3727 = vadd.f32 %v3698, %v3726
      %3728 = vdwg.mxu0
      %v3729 = vadd.f32 %v3597, %v3652
      %v3730 = vadd.f32 %v3598, %v3710
      %v3731 = vadd.f32 %v3599, %v3654
      %v3732 = vadd.f32 %v3600, %v3712
      %v3733 = vadd.f32 %v3601, %v3657
      %v3734 = vadd.f32 %v3602, %v3715
      %v3735 = vadd.f32 %v3603, %v3659
      %v3736 = vadd.f32 %v3604, %v3717
      %v3737 = vadd.f32 %v3605, %v3662
      %v3738 = vadd.f32 %v3606, %v3720
      %v3739 = vadd.f32 %v3607, %v3664
      %v3740 = vadd.f32 %v3608, %v3722
      %v3741 = vadd.f32 %v3609, %v3667
      %v3742 = vadd.f32 %v3610, %v3725
      %v3743 = vadd.f32 %v3611, %v3669
      %v3744 = vadd.f32 %v3612, %v3727
      %3745 = vmatpush.bf16.msra.mxu0 %v1650
      %3746 = vmatpush.bf16.msra.mxu0 %v1648
      %3747 = vmatpush.bf16.msra.mxu0 %v1646
      %3748 = vmatpush.bf16.msra.mxu0 %v1644
      %3749 = vmatpush.bf16.msra.mxu0 %v1642
      %3750 = vmatpush.bf16.msra.mxu0 %v1640
      %3751 = vmatpush.bf16.msra.mxu0 %v1638
      %3752 = vmatpush.bf16.msra.mxu0 %v1636
      %3753 = vmatmul.bf16.gmra.mxu0 %v2904
      %v3754 = vpop.f32.mrf.mxu0
      %v3755 = vadd.f32 0.0, %v3754
      %v3756 = vpop.f32.mrf.mxu0
      %v3757 = vadd.f32 0.0, %v3756
      %3758 = vmatmul.bf16.gmra.mxu0 %v2906
      %v3759 = vpop.f32.mrf.mxu0
      %v3760 = vadd.f32 0.0, %v3759
      %v3761 = vpop.f32.mrf.mxu0
      %v3762 = vadd.f32 0.0, %v3761
      %3763 = vmatmul.bf16.gmra.mxu0 %v2908
      %v3764 = vpop.f32.mrf.mxu0
      %v3765 = vadd.f32 0.0, %v3764
      %v3766 = vpop.f32.mrf.mxu0
      %v3767 = vadd.f32 0.0, %v3766
      %3768 = vmatmul.bf16.gmra.mxu0 %v2910
      %v3769 = vpop.f32.mrf.mxu0
      %v3770 = vadd.f32 0.0, %v3769
      %v3771 = vpop.f32.mrf.mxu0
      %v3772 = vadd.f32 0.0, %v3771
      %3773 = vdwg.mxu0
      %3774 = vmatpush.bf16.msra.mxu0 0
      %3775 = vmatpush.bf16.msra.mxu0 0
      %3776 = vmatpush.bf16.msra.mxu0 0
      %3777 = vmatpush.bf16.msra.mxu0 0
      %3778 = vmatpush.bf16.msra.mxu0 %v1695
      %3779 = vmatpush.bf16.msra.mxu0 %v1656
      %3780 = vmatpush.bf16.msra.mxu0 %v1654
      %3781 = vmatpush.bf16.msra.mxu0 %v1652
      %3782 = vmatmul.bf16.gmra.mxu0 %v3035
      %v3783 = vpop.f32.mrf.mxu0
      %v3784 = vadd.f32 %v3755, %v3783
      %v3785 = vpop.f32.mrf.mxu0
      %v3786 = vadd.f32 %v3757, %v3785
      %3787 = vmatmul.bf16.gmra.mxu0 %v3038
      %v3788 = vpop.f32.mrf.mxu0
      %v3789 = vadd.f32 %v3760, %v3788
      %v3790 = vpop.f32.mrf.mxu0
      %v3791 = vadd.f32 %v3762, %v3790
      %3792 = vmatmul.bf16.gmra.mxu0 %v3041
      %v3793 = vpop.f32.mrf.mxu0
      %v3794 = vadd.f32 %v3765, %v3793
      %v3795 = vpop.f32.mrf.mxu0
      %v3796 = vadd.f32 %v3767, %v3795
      %3797 = vmatmul.bf16.gmra.mxu0 %v3044
      %v3798 = vpop.f32.mrf.mxu0
      %v3799 = vadd.f32 %v3770, %v3798
      %v3800 = vpop.f32.mrf.mxu0
      %v3801 = vadd.f32 %v3772, %v3800
      %3802 = vdwg.mxu0
      %3803 = vmatpush.bf16.msra.mxu0 %v1651
      %3804 = vmatpush.bf16.msra.mxu0 %v1649
      %3805 = vmatpush.bf16.msra.mxu0 %v1647
      %3806 = vmatpush.bf16.msra.mxu0 %v1645
      %3807 = vmatpush.bf16.msra.mxu0 %v1643
      %3808 = vmatpush.bf16.msra.mxu0 %v1641
      %3809 = vmatpush.bf16.msra.mxu0 %v1639
      %3810 = vmatpush.bf16.msra.mxu0 %v1637
      %3811 = vmatmul.bf16.gmra.mxu0 %v2904
      %v3812 = vpop.f32.mrf.mxu0
      %v3813 = vadd.f32 0.0, %v3812
      %v3814 = vpop.f32.mrf.mxu0
      %v3815 = vadd.f32 0.0, %v3814
      %3816 = vmatmul.bf16.gmra.mxu0 %v2906
      %v3817 = vpop.f32.mrf.mxu0
      %v3818 = vadd.f32 0.0, %v3817
      %v3819 = vpop.f32.mrf.mxu0
      %v3820 = vadd.f32 0.0, %v3819
      %3821 = vmatmul.bf16.gmra.mxu0 %v2908
      %v3822 = vpop.f32.mrf.mxu0
      %v3823 = vadd.f32 0.0, %v3822
      %v3824 = vpop.f32.mrf.mxu0
      %v3825 = vadd.f32 0.0, %v3824
      %3826 = vmatmul.bf16.gmra.mxu0 %v2910
      %v3827 = vpop.f32.mrf.mxu0
      %v3828 = vadd.f32 0.0, %v3827
      %v3829 = vpop.f32.mrf.mxu0
      %v3830 = vadd.f32 0.0, %v3829
      %3831 = vdwg.mxu0
      %3832 = vmatpush.bf16.msra.mxu0 0
      %3833 = vmatpush.bf16.msra.mxu0 0
      %3834 = vmatpush.bf16.msra.mxu0 0
      %3835 = vmatpush.bf16.msra.mxu0 0
      %3836 = vmatpush.bf16.msra.mxu0 %v1698
      %3837 = vmatpush.bf16.msra.mxu0 %v1657
      %3838 = vmatpush.bf16.msra.mxu0 %v1655
      %3839 = vmatpush.bf16.msra.mxu0 %v1653
      %3840 = vmatmul.bf16.gmra.mxu0 %v3035
      %v3841 = vpop.f32.mrf.mxu0
      %v3842 = vadd.f32 %v3813, %v3841
      %v3843 = vpop.f32.mrf.mxu0
      %v3844 = vadd.f32 %v3815, %v3843
      %3845 = vmatmul.bf16.gmra.mxu0 %v3038
      %v3846 = vpop.f32.mrf.mxu0
      %v3847 = vadd.f32 %v3818, %v3846
      %v3848 = vpop.f32.mrf.mxu0
      %v3849 = vadd.f32 %v3820, %v3848
      %3850 = vmatmul.bf16.gmra.mxu0 %v3041
      %v3851 = vpop.f32.mrf.mxu0
      %v3852 = vadd.f32 %v3823, %v3851
      %v3853 = vpop.f32.mrf.mxu0
      %v3854 = vadd.f32 %v3825, %v3853
      %3855 = vmatmul.bf16.gmra.mxu0 %v3044
      %v3856 = vpop.f32.mrf.mxu0
      %v3857 = vadd.f32 %v3828, %v3856
      %v3858 = vpop.f32.mrf.mxu0
      %v3859 = vadd.f32 %v3830, %v3858
      %3860 = vdwg.mxu0
      %v3861 = vadd.f32 %v3729, %v3784
      %v3862 = vadd.f32 %v3730, %v3842
      %v3863 = vadd.f32 %v3731, %v3786
      %v3864 = vadd.f32 %v3732, %v3844
      %v3865 = vadd.f32 %v3733, %v3789
      %v3866 = vadd.f32 %v3734, %v3847
      %v3867 = vadd.f32 %v3735, %v3791
      %v3868 = vadd.f32 %v3736, %v3849
      %v3869 = vadd.f32 %v3737, %v3794
      %v3870 = vadd.f32 %v3738, %v3852
      %v3871 = vadd.f32 %v3739, %v3796
      %v3872 = vadd.f32 %v3740, %v3854
      %v3873 = vadd.f32 %v3741, %v3799
      %v3874 = vadd.f32 %v3742, %v3857
      %v3875 = vadd.f32 %v3743, %v3801
      %v3876 = vadd.f32 %v3744, %v3859
      %s3877 = scalar_lea.vmem %s164, 144
      %v3878 = vld [vmem:[%s3877] sm:$0xff]
      %v3879 = vld [vmem:[%s3877 + $0x8] sm:$0xff]
      %v3880 = vld [vmem:[%s3877 + $0x10] sm:$0xff]
      %v3881 = vld [vmem:[%s3877 + $0x18] sm:$0xff]
      %v3882 = vld [vmem:[%s3877 + $0x20] sm:$0xff]
      %v3883 = vld [vmem:[%s3877 + $0x28] sm:$0xff]
      %v3884 = vld [vmem:[%s3877 + $0x30] sm:$0xff]
      %v3885 = vld [vmem:[%s3877 + $0x38] sm:$0xff]
      %v3894 = vunpack.c.l.b16 %v3878
      %v3895 = vunpack.c.h.b16 %v3878
      %v3896 = vunpack.c.l.b16 %v3879
      %v3897 = vunpack.c.h.b16 %v3879
      %v3898 = vunpack.c.l.b16 %v3880
      %v3899 = vunpack.c.h.b16 %v3880
      %v3900 = vunpack.c.l.b16 %v3881
      %v3901 = vunpack.c.h.b16 %v3881
      %v3902 = vunpack.c.l.b16 %v3882
      %v3903 = vunpack.c.h.b16 %v3882
      %v3904 = vunpack.c.l.b16 %v3883
      %v3905 = vunpack.c.h.b16 %v3883
      %v3906 = vunpack.c.l.b16 %v3884
      %v3907 = vunpack.c.h.b16 %v3884
      %v3908 = vunpack.c.l.b16 %v3885
      %v3909 = vunpack.c.h.b16 %v3885
      %v3910 = vpack.c.b16 %v3896, %v3894
      %v3911 = vpack.c.b16 %v3897, %v3895
      %v3912 = vpack.c.b16 %v3900, %v3898
      %v3913 = vpack.c.b16 %v3901, %v3899
      %v3914 = vpack.c.b16 %v3904, %v3902
      %v3915 = vpack.c.b16 %v3905, %v3903
      %v3916 = vpack.c.b16 %v3908, %v3906
      %v3917 = vpack.c.b16 %v3909, %v3907
      %v3923 = vsel %vm391, %v3911, 0
      %v3926 = vsel %vm391, %v3913, 0
      %v3929 = vsel %vm391, %v3915, 0
      %v3932 = vsel %vm391, %v3917, 0
      %3934 = vmatpush.bf16.msra.mxu0 %v1988
      %3935 = vmatpush.bf16.msra.mxu0 %v1986
      %3936 = vmatpush.bf16.msra.mxu0 %v1984
      %3937 = vmatpush.bf16.msra.mxu0 %v1982
      %3938 = vmatpush.bf16.msra.mxu0 %v1980
      %3939 = vmatpush.bf16.msra.mxu0 %v1978
      %3940 = vmatpush.bf16.msra.mxu0 %v1976
      %3941 = vmatpush.bf16.msra.mxu0 %v1974
      %3942 = vmatmul.bf16.gmra.mxu0 %v3910
      %v3943 = vpop.f32.mrf.mxu0
      %v3944 = vadd.f32 0.0, %v3943
      %v3945 = vpop.f32.mrf.mxu0
      %v3946 = vadd.f32 0.0, %v3945
      %3947 = vmatmul.bf16.gmra.mxu0 %v3912
      %v3948 = vpop.f32.mrf.mxu0
      %v3949 = vadd.f32 0.0, %v3948
      %v3950 = vpop.f32.mrf.mxu0
      %v3951 = vadd.f32 0.0, %v3950
      %3952 = vmatmul.bf16.gmra.mxu0 %v3914
      %v3953 = vpop.f32.mrf.mxu0
      %v3954 = vadd.f32 0.0, %v3953
      %v3955 = vpop.f32.mrf.mxu0
      %v3956 = vadd.f32 0.0, %v3955
      %3957 = vmatmul.bf16.gmra.mxu0 %v3916
      %v3958 = vpop.f32.mrf.mxu0
      %v3959 = vadd.f32 0.0, %v3958
      %v3960 = vpop.f32.mrf.mxu0
      %v3961 = vadd.f32 0.0, %v3960
      %3962 = vdwg.mxu0
      %3963 = vmatpush.bf16.msra.mxu0 0
      %3964 = vmatpush.bf16.msra.mxu0 0
      %3965 = vmatpush.bf16.msra.mxu0 0
      %3966 = vmatpush.bf16.msra.mxu0 0
      %3967 = vmatpush.bf16.msra.mxu0 %v2033
      %3968 = vmatpush.bf16.msra.mxu0 %v1994
      %3969 = vmatpush.bf16.msra.mxu0 %v1992
      %3970 = vmatpush.bf16.msra.mxu0 %v1990
      %3971 = vmatmul.bf16.gmra.mxu0 %v3923
      %v3972 = vpop.f32.mrf.mxu0
      %v3973 = vadd.f32 %v3944, %v3972
      %v3974 = vpop.f32.mrf.mxu0
      %v3975 = vadd.f32 %v3946, %v3974
      %3976 = vmatmul.bf16.gmra.mxu0 %v3926
      %v3977 = vpop.f32.mrf.mxu0
      %v3978 = vadd.f32 %v3949, %v3977
      %v3979 = vpop.f32.mrf.mxu0
      %v3980 = vadd.f32 %v3951, %v3979
      %3981 = vmatmul.bf16.gmra.mxu0 %v3929
      %v3982 = vpop.f32.mrf.mxu0
      %v3983 = vadd.f32 %v3954, %v3982
      %v3984 = vpop.f32.mrf.mxu0
      %v3985 = vadd.f32 %v3956, %v3984
      %3986 = vmatmul.bf16.gmra.mxu0 %v3932
      %v3987 = vpop.f32.mrf.mxu0
      %v3988 = vadd.f32 %v3959, %v3987
      %v3989 = vpop.f32.mrf.mxu0
      %v3990 = vadd.f32 %v3961, %v3989
      %3991 = vdwg.mxu0
      %3992 = vmatpush.bf16.msra.mxu0 %v1989
      %3993 = vmatpush.bf16.msra.mxu0 %v1987
      %3994 = vmatpush.bf16.msra.mxu0 %v1985
      %3995 = vmatpush.bf16.msra.mxu0 %v1983
      %3996 = vmatpush.bf16.msra.mxu0 %v1981
      %3997 = vmatpush.bf16.msra.mxu0 %v1979
      %3998 = vmatpush.bf16.msra.mxu0 %v1977
      %3999 = vmatpush.bf16.msra.mxu0 %v1975
      %4000 = vmatmul.bf16.gmra.mxu0 %v3910
      %v4001 = vpop.f32.mrf.mxu0
      %v4002 = vadd.f32 0.0, %v4001
      %v4003 = vpop.f32.mrf.mxu0
      %v4004 = vadd.f32 0.0, %v4003
      %4005 = vmatmul.bf16.gmra.mxu0 %v3912
      %v4006 = vpop.f32.mrf.mxu0
      %v4007 = vadd.f32 0.0, %v4006
      %v4008 = vpop.f32.mrf.mxu0
      %v4009 = vadd.f32 0.0, %v4008
      %4010 = vmatmul.bf16.gmra.mxu0 %v3914
      %v4011 = vpop.f32.mrf.mxu0
      %v4012 = vadd.f32 0.0, %v4011
      %v4013 = vpop.f32.mrf.mxu0
      %v4014 = vadd.f32 0.0, %v4013
      %4015 = vmatmul.bf16.gmra.mxu0 %v3916
      %v4016 = vpop.f32.mrf.mxu0
      %v4017 = vadd.f32 0.0, %v4016
      %v4018 = vpop.f32.mrf.mxu0
      %v4019 = vadd.f32 0.0, %v4018
      %4020 = vdwg.mxu0
      %4021 = vmatpush.bf16.msra.mxu0 0
      %4022 = vmatpush.bf16.msra.mxu0 0
      %4023 = vmatpush.bf16.msra.mxu0 0
      %4024 = vmatpush.bf16.msra.mxu0 0
      %4025 = vmatpush.bf16.msra.mxu0 %v2036
      %4026 = vmatpush.bf16.msra.mxu0 %v1995
      %4027 = vmatpush.bf16.msra.mxu0 %v1993
      %4028 = vmatpush.bf16.msra.mxu0 %v1991
      %4029 = vmatmul.bf16.gmra.mxu0 %v3923
      %v4030 = vpop.f32.mrf.mxu0
      %v4031 = vadd.f32 %v4002, %v4030
      %v4032 = vpop.f32.mrf.mxu0
      %v4033 = vadd.f32 %v4004, %v4032
      %4034 = vmatmul.bf16.gmra.mxu0 %v3926
      %v4035 = vpop.f32.mrf.mxu0
      %v4036 = vadd.f32 %v4007, %v4035
      %v4037 = vpop.f32.mrf.mxu0
      %v4038 = vadd.f32 %v4009, %v4037
      %4039 = vmatmul.bf16.gmra.mxu0 %v3929
      %v4040 = vpop.f32.mrf.mxu0
      %v4041 = vadd.f32 %v4012, %v4040
      %v4042 = vpop.f32.mrf.mxu0
      %v4043 = vadd.f32 %v4014, %v4042
      %4044 = vmatmul.bf16.gmra.mxu0 %v3932
      %v4045 = vpop.f32.mrf.mxu0
      %v4046 = vadd.f32 %v4017, %v4045
      %v4047 = vpop.f32.mrf.mxu0
      %v4048 = vadd.f32 %v4019, %v4047
      %4049 = vdwg.mxu0
      %v4050 = vadd.f32 %v3861, %v3973
      %v4051 = vadd.f32 %v3862, %v4031
      %v4052 = vadd.f32 %v3863, %v3975
      %v4053 = vadd.f32 %v3864, %v4033
      %v4054 = vadd.f32 %v3865, %v3978
      %v4055 = vadd.f32 %v3866, %v4036
      %v4056 = vadd.f32 %v3867, %v3980
      %v4057 = vadd.f32 %v3868, %v4038
      %v4058 = vadd.f32 %v3869, %v3983
      %v4059 = vadd.f32 %v3870, %v4041
      %v4060 = vadd.f32 %v3871, %v3985
      %v4061 = vadd.f32 %v3872, %v4043
      %v4062 = vadd.f32 %v3873, %v3988
      %v4063 = vadd.f32 %v3874, %v4046
      %v4064 = vadd.f32 %v3875, %v3990
      %v4065 = vadd.f32 %v3876, %v4048
      %s4066 = scalar_lea.vmem %s164, 160
      %v4067 = vld [vmem:[%s4066] sm:$0xff]
      %v4068 = vld [vmem:[%s4066 + $0x8] sm:$0xff]
      %v4069 = vld [vmem:[%s4066 + $0x10] sm:$0xff]
      %v4070 = vld [vmem:[%s4066 + $0x18] sm:$0xff]
      %v4071 = vld [vmem:[%s4066 + $0x20] sm:$0xff]
      %v4072 = vld [vmem:[%s4066 + $0x28] sm:$0xff]
      %v4073 = vld [vmem:[%s4066 + $0x30] sm:$0xff]
      %v4074 = vld [vmem:[%s4066 + $0x38] sm:$0xff]
      %v4083 = vunpack.c.l.b16 %v4067
      %v4084 = vunpack.c.h.b16 %v4067
      %v4085 = vunpack.c.l.b16 %v4068
      %v4086 = vunpack.c.h.b16 %v4068
      %v4087 = vunpack.c.l.b16 %v4069
      %v4088 = vunpack.c.h.b16 %v4069
      %v4089 = vunpack.c.l.b16 %v4070
      %v4090 = vunpack.c.h.b16 %v4070
      %v4091 = vunpack.c.l.b16 %v4071
      %v4092 = vunpack.c.h.b16 %v4071
      %v4093 = vunpack.c.l.b16 %v4072
      %v4094 = vunpack.c.h.b16 %v4072
      %v4095 = vunpack.c.l.b16 %v4073
      %v4096 = vunpack.c.h.b16 %v4073
      %v4097 = vunpack.c.l.b16 %v4074
      %v4098 = vunpack.c.h.b16 %v4074
      %v4099 = vpack.c.b16 %v4085, %v4083
      %v4100 = vpack.c.b16 %v4086, %v4084
      %v4101 = vpack.c.b16 %v4089, %v4087
      %v4102 = vpack.c.b16 %v4090, %v4088
      %v4103 = vpack.c.b16 %v4093, %v4091
      %v4104 = vpack.c.b16 %v4094, %v4092
      %v4105 = vpack.c.b16 %v4097, %v4095
      %v4106 = vpack.c.b16 %v4098, %v4096
      %v4112 = vsel %vm391, %v4100, 0
      %v4115 = vsel %vm391, %v4102, 0
      %v4118 = vsel %vm391, %v4104, 0
      %v4121 = vsel %vm391, %v4106, 0
      %4123 = vmatpush.bf16.msra.mxu0 %v2326
      %4124 = vmatpush.bf16.msra.mxu0 %v2324
      %4125 = vmatpush.bf16.msra.mxu0 %v2322
      %4126 = vmatpush.bf16.msra.mxu0 %v2320
      %4127 = vmatpush.bf16.msra.mxu0 %v2318
      %4128 = vmatpush.bf16.msra.mxu0 %v2316
      %4129 = vmatpush.bf16.msra.mxu0 %v2314
      %4130 = vmatpush.bf16.msra.mxu0 %v2312
      %4131 = vmatmul.bf16.gmra.mxu0 %v4099
      %v4132 = vpop.f32.mrf.mxu0
      %v4133 = vadd.f32 0.0, %v4132
      %v4134 = vpop.f32.mrf.mxu0
      %v4135 = vadd.f32 0.0, %v4134
      %4136 = vmatmul.bf16.gmra.mxu0 %v4101
      %v4137 = vpop.f32.mrf.mxu0
      %v4138 = vadd.f32 0.0, %v4137
      %v4139 = vpop.f32.mrf.mxu0
      %v4140 = vadd.f32 0.0, %v4139
      %4141 = vmatmul.bf16.gmra.mxu0 %v4103
      %v4142 = vpop.f32.mrf.mxu0
      %v4143 = vadd.f32 0.0, %v4142
      %v4144 = vpop.f32.mrf.mxu0
      %v4145 = vadd.f32 0.0, %v4144
      %4146 = vmatmul.bf16.gmra.mxu0 %v4105
      %v4147 = vpop.f32.mrf.mxu0
      %v4148 = vadd.f32 0.0, %v4147
      %v4149 = vpop.f32.mrf.mxu0
      %v4150 = vadd.f32 0.0, %v4149
      %4151 = vdwg.mxu0
      %4152 = vmatpush.bf16.msra.mxu0 0
      %4153 = vmatpush.bf16.msra.mxu0 0
      %4154 = vmatpush.bf16.msra.mxu0 0
      %4155 = vmatpush.bf16.msra.mxu0 0
      %4156 = vmatpush.bf16.msra.mxu0 %v2371
      %4157 = vmatpush.bf16.msra.mxu0 %v2332
      %4158 = vmatpush.bf16.msra.mxu0 %v2330
      %4159 = vmatpush.bf16.msra.mxu0 %v2328
      %4160 = vmatmul.bf16.gmra.mxu0 %v4112
      %v4161 = vpop.f32.mrf.mxu0
      %v4162 = vadd.f32 %v4133, %v4161
      %v4163 = vpop.f32.mrf.mxu0
      %v4164 = vadd.f32 %v4135, %v4163
      %4165 = vmatmul.bf16.gmra.mxu0 %v4115
      %v4166 = vpop.f32.mrf.mxu0
      %v4167 = vadd.f32 %v4138, %v4166
      %v4168 = vpop.f32.mrf.mxu0
      %v4169 = vadd.f32 %v4140, %v4168
      %4170 = vmatmul.bf16.gmra.mxu0 %v4118
      %v4171 = vpop.f32.mrf.mxu0
      %v4172 = vadd.f32 %v4143, %v4171
      %v4173 = vpop.f32.mrf.mxu0
      %v4174 = vadd.f32 %v4145, %v4173
      %4175 = vmatmul.bf16.gmra.mxu0 %v4121
      %v4176 = vpop.f32.mrf.mxu0
      %v4177 = vadd.f32 %v4148, %v4176
      %v4178 = vpop.f32.mrf.mxu0
      %v4179 = vadd.f32 %v4150, %v4178
      %4180 = vdwg.mxu0
      %4181 = vmatpush.bf16.msra.mxu0 %v2327
      %4182 = vmatpush.bf16.msra.mxu0 %v2325
      %4183 = vmatpush.bf16.msra.mxu0 %v2323
      %4184 = vmatpush.bf16.msra.mxu0 %v2321
      %4185 = vmatpush.bf16.msra.mxu0 %v2319
      %4186 = vmatpush.bf16.msra.mxu0 %v2317
      %4187 = vmatpush.bf16.msra.mxu0 %v2315
      %4188 = vmatpush.bf16.msra.mxu0 %v2313
      %4189 = vmatmul.bf16.gmra.mxu0 %v4099
      %v4190 = vpop.f32.mrf.mxu0
      %v4191 = vadd.f32 0.0, %v4190
      %v4192 = vpop.f32.mrf.mxu0
      %v4193 = vadd.f32 0.0, %v4192
      %4194 = vmatmul.bf16.gmra.mxu0 %v4101
      %v4195 = vpop.f32.mrf.mxu0
      %v4196 = vadd.f32 0.0, %v4195
      %v4197 = vpop.f32.mrf.mxu0
      %v4198 = vadd.f32 0.0, %v4197
      %4199 = vmatmul.bf16.gmra.mxu0 %v4103
      %v4200 = vpop.f32.mrf.mxu0
      %v4201 = vadd.f32 0.0, %v4200
      %v4202 = vpop.f32.mrf.mxu0
      %v4203 = vadd.f32 0.0, %v4202
      %4204 = vmatmul.bf16.gmra.mxu0 %v4105
      %v4205 = vpop.f32.mrf.mxu0
      %v4206 = vadd.f32 0.0, %v4205
      %v4207 = vpop.f32.mrf.mxu0
      %v4208 = vadd.f32 0.0, %v4207
      %4209 = vdwg.mxu0
      %4210 = vmatpush.bf16.msra.mxu0 0
      %4211 = vmatpush.bf16.msra.mxu0 0
      %4212 = vmatpush.bf16.msra.mxu0 0
      %4213 = vmatpush.bf16.msra.mxu0 0
      %4214 = vmatpush.bf16.msra.mxu0 %v2374
      %4215 = vmatpush.bf16.msra.mxu0 %v2333
      %4216 = vmatpush.bf16.msra.mxu0 %v2331
      %4217 = vmatpush.bf16.msra.mxu0 %v2329
      %4218 = vmatmul.bf16.gmra.mxu0 %v4112
      %v4219 = vpop.f32.mrf.mxu0
      %v4220 = vadd.f32 %v4191, %v4219
      %v4221 = vpop.f32.mrf.mxu0
      %v4222 = vadd.f32 %v4193, %v4221
      %4223 = vmatmul.bf16.gmra.mxu0 %v4115
      %v4224 = vpop.f32.mrf.mxu0
      %v4225 = vadd.f32 %v4196, %v4224
      %v4226 = vpop.f32.mrf.mxu0
      %v4227 = vadd.f32 %v4198, %v4226
      %4228 = vmatmul.bf16.gmra.mxu0 %v4118
      %v4229 = vpop.f32.mrf.mxu0
      %v4230 = vadd.f32 %v4201, %v4229
      %v4231 = vpop.f32.mrf.mxu0
      %v4232 = vadd.f32 %v4203, %v4231
      %4233 = vmatmul.bf16.gmra.mxu0 %v4121
      %v4234 = vpop.f32.mrf.mxu0
      %v4235 = vadd.f32 %v4206, %v4234
      %v4236 = vpop.f32.mrf.mxu0
      %v4237 = vadd.f32 %v4208, %v4236
      %4238 = vdwg.mxu0
      %v4239 = vadd.f32 %v4050, %v4162
      %v4240 = vadd.f32 %v4051, %v4220
      %v4241 = vadd.f32 %v4052, %v4164
      %v4242 = vadd.f32 %v4053, %v4222
      %v4243 = vadd.f32 %v4054, %v4167
      %v4244 = vadd.f32 %v4055, %v4225
      %v4245 = vadd.f32 %v4056, %v4169
      %v4246 = vadd.f32 %v4057, %v4227
      %v4247 = vadd.f32 %v4058, %v4172
      %v4248 = vadd.f32 %v4059, %v4230
      %v4249 = vadd.f32 %v4060, %v4174
      %v4250 = vadd.f32 %v4061, %v4232
      %v4251 = vadd.f32 %v4062, %v4177
      %v4252 = vadd.f32 %v4063, %v4235
      %v4253 = vadd.f32 %v4064, %v4179
      %v4254 = vadd.f32 %v4065, %v4237
      %s4255 = scalar_lea.vmem %s164, 176
      %v4256 = vld [vmem:[%s4255] sm:$0xff]
      %v4257 = vld [vmem:[%s4255 + $0x8] sm:$0xff]
      %v4258 = vld [vmem:[%s4255 + $0x10] sm:$0xff]
      %v4259 = vld [vmem:[%s4255 + $0x18] sm:$0xff]
      %v4260 = vld [vmem:[%s4255 + $0x20] sm:$0xff]
      %v4261 = vld [vmem:[%s4255 + $0x28] sm:$0xff]
      %v4262 = vld [vmem:[%s4255 + $0x30] sm:$0xff]
      %v4263 = vld [vmem:[%s4255 + $0x38] sm:$0xff]
      %v4272 = vunpack.c.l.b16 %v4256
      %v4273 = vunpack.c.h.b16 %v4256
      %v4274 = vunpack.c.l.b16 %v4257
      %v4275 = vunpack.c.h.b16 %v4257
      %v4276 = vunpack.c.l.b16 %v4258
      %v4277 = vunpack.c.h.b16 %v4258
      %v4278 = vunpack.c.l.b16 %v4259
      %v4279 = vunpack.c.h.b16 %v4259
      %v4280 = vunpack.c.l.b16 %v4260
      %v4281 = vunpack.c.h.b16 %v4260
      %v4282 = vunpack.c.l.b16 %v4261
      %v4283 = vunpack.c.h.b16 %v4261
      %v4284 = vunpack.c.l.b16 %v4262
      %v4285 = vunpack.c.h.b16 %v4262
      %v4286 = vunpack.c.l.b16 %v4263
      %v4287 = vunpack.c.h.b16 %v4263
      %v4288 = vpack.c.b16 %v4274, %v4272
      %v4289 = vpack.c.b16 %v4275, %v4273
      %v4290 = vpack.c.b16 %v4278, %v4276
      %v4291 = vpack.c.b16 %v4279, %v4277
      %v4292 = vpack.c.b16 %v4282, %v4280
      %v4293 = vpack.c.b16 %v4283, %v4281
      %v4294 = vpack.c.b16 %v4286, %v4284
      %v4295 = vpack.c.b16 %v4287, %v4285
      %v4301 = vsel %vm391, %v4289, 0
      %v4304 = vsel %vm391, %v4291, 0
      %v4307 = vsel %vm391, %v4293, 0
      %v4310 = vsel %vm391, %v4295, 0
      %4312 = vmatpush.bf16.msra.mxu0 %v2664
      %4313 = vmatpush.bf16.msra.mxu0 %v2662
      %4314 = vmatpush.bf16.msra.mxu0 %v2660
      %4315 = vmatpush.bf16.msra.mxu0 %v2658
      %4316 = vmatpush.bf16.msra.mxu0 %v2656
      %4317 = vmatpush.bf16.msra.mxu0 %v2654
      %4318 = vmatpush.bf16.msra.mxu0 %v2652
      %4319 = vmatpush.bf16.msra.mxu0 %v2650
      %4320 = vmatmul.bf16.gmra.mxu0 %v4288
      %v4321 = vpop.f32.mrf.mxu0
      %v4322 = vadd.f32 0.0, %v4321
      %v4323 = vpop.f32.mrf.mxu0
      %v4324 = vadd.f32 0.0, %v4323
      %4325 = vmatmul.bf16.gmra.mxu0 %v4290
      %v4326 = vpop.f32.mrf.mxu0
      %v4327 = vadd.f32 0.0, %v4326
      %v4328 = vpop.f32.mrf.mxu0
      %v4329 = vadd.f32 0.0, %v4328
      %4330 = vmatmul.bf16.gmra.mxu0 %v4292
      %v4331 = vpop.f32.mrf.mxu0
      %v4332 = vadd.f32 0.0, %v4331
      %v4333 = vpop.f32.mrf.mxu0
      %v4334 = vadd.f32 0.0, %v4333
      %4335 = vmatmul.bf16.gmra.mxu0 %v4294
      %v4336 = vpop.f32.mrf.mxu0
      %v4337 = vadd.f32 0.0, %v4336
      %v4338 = vpop.f32.mrf.mxu0
      %v4339 = vadd.f32 0.0, %v4338
      %4340 = vdwg.mxu0
      %4341 = vmatpush.bf16.msra.mxu0 0
      %4342 = vmatpush.bf16.msra.mxu0 0
      %4343 = vmatpush.bf16.msra.mxu0 0
      %4344 = vmatpush.bf16.msra.mxu0 0
      %4345 = vmatpush.bf16.msra.mxu0 %v2709
      %4346 = vmatpush.bf16.msra.mxu0 %v2670
      %4347 = vmatpush.bf16.msra.mxu0 %v2668
      %4348 = vmatpush.bf16.msra.mxu0 %v2666
      %4349 = vmatmul.bf16.gmra.mxu0 %v4301
      %v4350 = vpop.f32.mrf.mxu0
      %v4351 = vadd.f32 %v4322, %v4350
      %v4352 = vpop.f32.mrf.mxu0
      %v4353 = vadd.f32 %v4324, %v4352
      %4354 = vmatmul.bf16.gmra.mxu0 %v4304
      %v4355 = vpop.f32.mrf.mxu0
      %v4356 = vadd.f32 %v4327, %v4355
      %v4357 = vpop.f32.mrf.mxu0
      %v4358 = vadd.f32 %v4329, %v4357
      %4359 = vmatmul.bf16.gmra.mxu0 %v4307
      %v4360 = vpop.f32.mrf.mxu0
      %v4361 = vadd.f32 %v4332, %v4360
      %v4362 = vpop.f32.mrf.mxu0
      %v4363 = vadd.f32 %v4334, %v4362
      %4364 = vmatmul.bf16.gmra.mxu0 %v4310
      %v4365 = vpop.f32.mrf.mxu0
      %v4366 = vadd.f32 %v4337, %v4365
      %v4367 = vpop.f32.mrf.mxu0
      %v4368 = vadd.f32 %v4339, %v4367
      %4369 = vdwg.mxu0
      %4370 = vmatpush.bf16.msra.mxu0 %v2665
      %4371 = vmatpush.bf16.msra.mxu0 %v2663
      %4372 = vmatpush.bf16.msra.mxu0 %v2661
      %4373 = vmatpush.bf16.msra.mxu0 %v2659
      %4374 = vmatpush.bf16.msra.mxu0 %v2657
      %4375 = vmatpush.bf16.msra.mxu0 %v2655
      %4376 = vmatpush.bf16.msra.mxu0 %v2653
      %4377 = vmatpush.bf16.msra.mxu0 %v2651
      %4378 = vmatmul.bf16.gmra.mxu0 %v4288
      %v4379 = vpop.f32.mrf.mxu0
      %v4380 = vadd.f32 0.0, %v4379
      %v4381 = vpop.f32.mrf.mxu0
      %v4382 = vadd.f32 0.0, %v4381
      %4383 = vmatmul.bf16.gmra.mxu0 %v4290
      %v4384 = vpop.f32.mrf.mxu0
      %v4385 = vadd.f32 0.0, %v4384
      %v4386 = vpop.f32.mrf.mxu0
      %v4387 = vadd.f32 0.0, %v4386
      %4388 = vmatmul.bf16.gmra.mxu0 %v4292
      %v4389 = vpop.f32.mrf.mxu0
      %v4390 = vadd.f32 0.0, %v4389
      %v4391 = vpop.f32.mrf.mxu0
      %v4392 = vadd.f32 0.0, %v4391
      %4393 = vmatmul.bf16.gmra.mxu0 %v4294
      %v4394 = vpop.f32.mrf.mxu0
      %v4395 = vadd.f32 0.0, %v4394
      %v4396 = vpop.f32.mrf.mxu0
      %v4397 = vadd.f32 0.0, %v4396
      %4398 = vdwg.mxu0
      %4399 = vmatpush.bf16.msra.mxu0 0
      %4400 = vmatpush.bf16.msra.mxu0 0
      %4401 = vmatpush.bf16.msra.mxu0 0
      %4402 = vmatpush.bf16.msra.mxu0 0
      %4403 = vmatpush.bf16.msra.mxu0 %v2712
      %4404 = vmatpush.bf16.msra.mxu0 %v2671
      %4405 = vmatpush.bf16.msra.mxu0 %v2669
      %4406 = vmatpush.bf16.msra.mxu0 %v2667
      %4407 = vmatmul.bf16.gmra.mxu0 %v4301
      %v4408 = vpop.f32.mrf.mxu0
      %v4409 = vadd.f32 %v4380, %v4408
      %v4410 = vpop.f32.mrf.mxu0
      %v4411 = vadd.f32 %v4382, %v4410
      %4412 = vmatmul.bf16.gmra.mxu0 %v4304
      %v4413 = vpop.f32.mrf.mxu0
      %v4414 = vadd.f32 %v4385, %v4413
      %v4415 = vpop.f32.mrf.mxu0
      %v4416 = vadd.f32 %v4387, %v4415
      %4417 = vmatmul.bf16.gmra.mxu0 %v4307
      %v4418 = vpop.f32.mrf.mxu0
      %v4419 = vadd.f32 %v4390, %v4418
      %v4420 = vpop.f32.mrf.mxu0
      %v4421 = vadd.f32 %v4392, %v4420
      %4422 = vmatmul.bf16.gmra.mxu0 %v4310
      %v4423 = vpop.f32.mrf.mxu0
      %v4424 = vadd.f32 %v4395, %v4423
      %v4425 = vpop.f32.mrf.mxu0
      %v4426 = vadd.f32 %v4397, %v4425
      %4427 = vdwg.mxu0
      %v4428 = vadd.f32 %v4239, %v4351
      %v4429 = vadd.f32 %v4240, %v4409
      %v4430 = vadd.f32 %v4241, %v4353
      %v4431 = vadd.f32 %v4242, %v4411
      %v4432 = vadd.f32 %v4243, %v4356
      %v4433 = vadd.f32 %v4244, %v4414
      %v4434 = vadd.f32 %v4245, %v4358
      %v4435 = vadd.f32 %v4246, %v4416
      %v4436 = vadd.f32 %v4247, %v4361
      %v4437 = vadd.f32 %v4248, %v4419
      %v4438 = vadd.f32 %v4249, %v4363
      %v4439 = vadd.f32 %v4250, %v4421
      %v4440 = vadd.f32 %v4251, %v4366
      %v4441 = vadd.f32 %v4252, %v4424
      %v4442 = vadd.f32 %v4253, %v4368
      %v4443 = vadd.f32 %v4254, %v4426
      %s4444 = scalar_lea.vmem %s164, 192
      %v4445 = vld [vmem:[%s4444] sm:$0xff]
      %v4446 = vld [vmem:[%s4444 + $0x8] sm:$0xff]
      %v4447 = vld [vmem:[%s4444 + $0x10] sm:$0xff]
      %v4448 = vld [vmem:[%s4444 + $0x18] sm:$0xff]
      %v4449 = vld [vmem:[%s4444 + $0x20] sm:$0xff]
      %v4450 = vld [vmem:[%s4444 + $0x28] sm:$0xff]
      %v4451 = vld [vmem:[%s4444 + $0x30] sm:$0xff]
      %v4452 = vld [vmem:[%s4444 + $0x38] sm:$0xff]
      %v4461 = vunpack.c.l.b16 %v4445
      %v4462 = vunpack.c.h.b16 %v4445
      %v4463 = vunpack.c.l.b16 %v4446
      %v4464 = vunpack.c.h.b16 %v4446
      %v4465 = vunpack.c.l.b16 %v4447
      %v4466 = vunpack.c.h.b16 %v4447
      %v4467 = vunpack.c.l.b16 %v4448
      %v4468 = vunpack.c.h.b16 %v4448
      %v4469 = vunpack.c.l.b16 %v4449
      %v4470 = vunpack.c.h.b16 %v4449
      %v4471 = vunpack.c.l.b16 %v4450
      %v4472 = vunpack.c.h.b16 %v4450
      %v4473 = vunpack.c.l.b16 %v4451
      %v4474 = vunpack.c.h.b16 %v4451
      %v4475 = vunpack.c.l.b16 %v4452
      %v4476 = vunpack.c.h.b16 %v4452
      %v4477 = vpack.c.b16 %v4463, %v4461
      %v4478 = vpack.c.b16 %v4464, %v4462
      %v4479 = vpack.c.b16 %v4467, %v4465
      %v4480 = vpack.c.b16 %v4468, %v4466
      %v4481 = vpack.c.b16 %v4471, %v4469
      %v4482 = vpack.c.b16 %v4472, %v4470
      %v4483 = vpack.c.b16 %v4475, %v4473
      %v4484 = vpack.c.b16 %v4476, %v4474
      %v4490 = vsel %vm391, %v4478, 0
      %v4493 = vsel %vm391, %v4480, 0
      %v4496 = vsel %vm391, %v4482, 0
      %v4499 = vsel %vm391, %v4484, 0
      %4501 = vmatpush.bf16.msra.mxu0 %v3002
      %4502 = vmatpush.bf16.msra.mxu0 %v3000
      %4503 = vmatpush.bf16.msra.mxu0 %v2998
      %4504 = vmatpush.bf16.msra.mxu0 %v2996
      %4505 = vmatpush.bf16.msra.mxu0 %v2994
      %4506 = vmatpush.bf16.msra.mxu0 %v2992
      %4507 = vmatpush.bf16.msra.mxu0 %v2990
      %4508 = vmatpush.bf16.msra.mxu0 %v2988
      %4509 = vmatmul.bf16.gmra.mxu0 %v4477
      %v4510 = vpop.f32.mrf.mxu0
      %v4511 = vadd.f32 0.0, %v4510
      %v4512 = vpop.f32.mrf.mxu0
      %v4513 = vadd.f32 0.0, %v4512
      %4514 = vmatmul.bf16.gmra.mxu0 %v4479
      %v4515 = vpop.f32.mrf.mxu0
      %v4516 = vadd.f32 0.0, %v4515
      %v4517 = vpop.f32.mrf.mxu0
      %v4518 = vadd.f32 0.0, %v4517
      %4519 = vmatmul.bf16.gmra.mxu0 %v4481
      %v4520 = vpop.f32.mrf.mxu0
      %v4521 = vadd.f32 0.0, %v4520
      %v4522 = vpop.f32.mrf.mxu0
      %v4523 = vadd.f32 0.0, %v4522
      %4524 = vmatmul.bf16.gmra.mxu0 %v4483
      %v4525 = vpop.f32.mrf.mxu0
      %v4526 = vadd.f32 0.0, %v4525
      %v4527 = vpop.f32.mrf.mxu0
      %v4528 = vadd.f32 0.0, %v4527
      %4529 = vdwg.mxu0
      %4530 = vmatpush.bf16.msra.mxu0 0
      %4531 = vmatpush.bf16.msra.mxu0 0
      %4532 = vmatpush.bf16.msra.mxu0 0
      %4533 = vmatpush.bf16.msra.mxu0 0
      %4534 = vmatpush.bf16.msra.mxu0 %v3047
      %4535 = vmatpush.bf16.msra.mxu0 %v3008
      %4536 = vmatpush.bf16.msra.mxu0 %v3006
      %4537 = vmatpush.bf16.msra.mxu0 %v3004
      %4538 = vmatmul.bf16.gmra.mxu0 %v4490
      %v4539 = vpop.f32.mrf.mxu0
      %v4540 = vadd.f32 %v4511, %v4539
      %v4541 = vpop.f32.mrf.mxu0
      %v4542 = vadd.f32 %v4513, %v4541
      %4543 = vmatmul.bf16.gmra.mxu0 %v4493
      %v4544 = vpop.f32.mrf.mxu0
      %v4545 = vadd.f32 %v4516, %v4544
      %v4546 = vpop.f32.mrf.mxu0
      %v4547 = vadd.f32 %v4518, %v4546
      %4548 = vmatmul.bf16.gmra.mxu0 %v4496
      %v4549 = vpop.f32.mrf.mxu0
      %v4550 = vadd.f32 %v4521, %v4549
      %v4551 = vpop.f32.mrf.mxu0
      %v4552 = vadd.f32 %v4523, %v4551
      %4553 = vmatmul.bf16.gmra.mxu0 %v4499
      %v4554 = vpop.f32.mrf.mxu0
      %v4555 = vadd.f32 %v4526, %v4554
      %v4556 = vpop.f32.mrf.mxu0
      %v4557 = vadd.f32 %v4528, %v4556
      %4558 = vdwg.mxu0
      %4559 = vmatpush.bf16.msra.mxu0 %v3003
      %4560 = vmatpush.bf16.msra.mxu0 %v3001
      %4561 = vmatpush.bf16.msra.mxu0 %v2999
      %4562 = vmatpush.bf16.msra.mxu0 %v2997
      %4563 = vmatpush.bf16.msra.mxu0 %v2995
      %4564 = vmatpush.bf16.msra.mxu0 %v2993
      %4565 = vmatpush.bf16.msra.mxu0 %v2991
      %4566 = vmatpush.bf16.msra.mxu0 %v2989
      %4567 = vmatmul.bf16.gmra.mxu0 %v4477
      %v4568 = vpop.f32.mrf.mxu0
      %v4569 = vadd.f32 0.0, %v4568
      %v4570 = vpop.f32.mrf.mxu0
      %v4571 = vadd.f32 0.0, %v4570
      %4572 = vmatmul.bf16.gmra.mxu0 %v4479
      %v4573 = vpop.f32.mrf.mxu0
      %v4574 = vadd.f32 0.0, %v4573
      %v4575 = vpop.f32.mrf.mxu0
      %v4576 = vadd.f32 0.0, %v4575
      %4577 = vmatmul.bf16.gmra.mxu0 %v4481
      %v4578 = vpop.f32.mrf.mxu0
      %v4579 = vadd.f32 0.0, %v4578
      %v4580 = vpop.f32.mrf.mxu0
      %v4581 = vadd.f32 0.0, %v4580
      %4582 = vmatmul.bf16.gmra.mxu0 %v4483
      %v4583 = vpop.f32.mrf.mxu0
      %v4584 = vadd.f32 0.0, %v4583
      %v4585 = vpop.f32.mrf.mxu0
      %v4586 = vadd.f32 0.0, %v4585
      %4587 = vdwg.mxu0
      %4588 = vmatpush.bf16.msra.mxu0 0
      %4589 = vmatpush.bf16.msra.mxu0 0
      %4590 = vmatpush.bf16.msra.mxu0 0
      %4591 = vmatpush.bf16.msra.mxu0 0
      %4592 = vmatpush.bf16.msra.mxu0 %v3050
      %4593 = vmatpush.bf16.msra.mxu0 %v3009
      %4594 = vmatpush.bf16.msra.mxu0 %v3007
      %4595 = vmatpush.bf16.msra.mxu0 %v3005
      %4596 = vmatmul.bf16.gmra.mxu0 %v4490
      %v4597 = vpop.f32.mrf.mxu0
      %v4598 = vadd.f32 %v4569, %v4597
      %v4599 = vpop.f32.mrf.mxu0
      %v4600 = vadd.f32 %v4571, %v4599
      %4601 = vmatmul.bf16.gmra.mxu0 %v4493
      %v4602 = vpop.f32.mrf.mxu0
      %v4603 = vadd.f32 %v4574, %v4602
      %v4604 = vpop.f32.mrf.mxu0
      %v4605 = vadd.f32 %v4576, %v4604
      %4606 = vmatmul.bf16.gmra.mxu0 %v4496
      %v4607 = vpop.f32.mrf.mxu0
      %v4608 = vadd.f32 %v4579, %v4607
      %v4609 = vpop.f32.mrf.mxu0
      %v4610 = vadd.f32 %v4581, %v4609
      %4611 = vmatmul.bf16.gmra.mxu0 %v4499
      %v4612 = vpop.f32.mrf.mxu0
      %v4613 = vadd.f32 %v4584, %v4612
      %v4614 = vpop.f32.mrf.mxu0
      %v4615 = vadd.f32 %v4586, %v4614
      %4616 = vdwg.mxu0
      %v4617 = vadd.f32 %v4428, %v4540
      %v4618 = vadd.f32 %v4429, %v4598
      %v4619 = vadd.f32 %v4430, %v4542
      %v4620 = vadd.f32 %v4431, %v4600
      %v4621 = vadd.f32 %v4432, %v4545
      %v4622 = vadd.f32 %v4433, %v4603
      %v4623 = vadd.f32 %v4434, %v4547
      %v4624 = vadd.f32 %v4435, %v4605
      %v4625 = vadd.f32 %v4436, %v4550
      %v4626 = vadd.f32 %v4437, %v4608
      %v4627 = vadd.f32 %v4438, %v4552
      %v4628 = vadd.f32 %v4439, %v4610
      %v4629 = vadd.f32 %v4440, %v4555
      %v4630 = vadd.f32 %v4441, %v4613
      %v4631 = vadd.f32 %v4442, %v4557
      %v4632 = vadd.f32 %v4443, %v4615
      %v4633 = vadd.f32 %v4617, %v3185
      %v4634 = vadd.f32 %v4618, %v3186
      %v4635 = vadd.f32 %v4619, %v3185
      %v4636 = vadd.f32 %v4620, %v3186
      %v4637 = vadd.f32 %v4621, %v3185
      %v4638 = vadd.f32 %v4622, %v3186
      %v4639 = vadd.f32 %v4623, %v3185
      %v4640 = vadd.f32 %v4624, %v3186
      %v4641 = vadd.f32 %v4625, %v3185
      %v4642 = vadd.f32 %v4626, %v3186
      %v4643 = vadd.f32 %v4627, %v3185
      %v4644 = vadd.f32 %v4628, %v3186
      %v4645 = vadd.f32 %v4629, %v3185
      %v4646 = vadd.f32 %v4630, %v3186
      %v4647 = vadd.f32 %v4631, %v3185
      %v4648 = vadd.f32 %v4632, %v3186
      %v4649 = vmax.f32 %v4633, 0.0
      %v4650 = vmax.f32 %v4634, 0.0
      %v4651 = vmax.f32 %v4635, 0.0
      %v4652 = vmax.f32 %v4636, 0.0
      %v4653 = vmax.f32 %v4637, 0.0
      %v4654 = vmax.f32 %v4638, 0.0
      %v4655 = vmax.f32 %v4639, 0.0
      %v4656 = vmax.f32 %v4640, 0.0
      %v4657 = vmax.f32 %v4641, 0.0
      %v4658 = vmax.f32 %v4642, 0.0
      %v4659 = vmax.f32 %v4643, 0.0
      %v4660 = vmax.f32 %v4644, 0.0
      %v4661 = vmax.f32 %v4645, 0.0
      %v4662 = vmax.f32 %v4646, 0.0
      %v4663 = vmax.f32 %v4647, 0.0
      %v4664 = vmax.f32 %v4648, 0.0
      %v4665 = vadd.f32 %v4649, %v4651
      %v4666 = vadd.f32 %v4665, %v4653
      %v4667 = vadd.f32 %v4666, %v4655
      %v4668 = vadd.f32 %v4667, %v4657
      %v4669 = vadd.f32 %v4668, %v4659
      %v4670 = vadd.f32 %v4669, %v4661
      %v4671 = vadd.f32 %v4670, %v4663
      %v4672 = vrot.slane %v4671, 4
      %v4673 = vadd.f32 %v4671, %v4672
      %v4674 = vrot.slane %v4673, 2
      %v4675 = vadd.f32 %v4673, %v4674
      %v4676 = vrot.slane %v4675, 1
      %v4677 = vadd.f32 %v4675, %v4676
      %v4678 = vadd.f32 %v4650, %v4652
      %v4679 = vadd.f32 %v4678, %v4654
      %v4680 = vadd.f32 %v4679, %v4656
      %v4681 = vadd.f32 %v4680, %v4658
      %v4682 = vadd.f32 %v4681, %v4660
      %v4683 = vadd.f32 %v4682, %v4662
      %v4684 = vadd.f32 %v4683, %v4664
      %v4685 = vrot.slane %v4684, 4
      %v4686 = vadd.f32 %v4684, %v4685
      %v4687 = vrot.slane %v4686, 2
      %v4688 = vadd.f32 %v4686, %v4687
      %v4689 = vrot.slane %v4688, 1
      %v4690 = vadd.f32 %v4688, %v4689
      %v4691 = vadd.f32 %v3247, %v4677
      %v4692 = vadd.f32 %v3248, %v4690
      %4693 = vmatpush.bf16.msra.mxu0 %v359
      %4694 = vmatpush.bf16.msra.mxu0 %v357
      %4695 = vmatpush.bf16.msra.mxu0 %v355
      %4696 = vmatpush.bf16.msra.mxu0 %v353
      %4697 = vmatpush.bf16.msra.mxu0 %v351
      %4698 = vmatpush.bf16.msra.mxu0 %v349
      %4699 = vmatpush.bf16.msra.mxu0 %v347
      %4700 = vmatpush.bf16.msra.mxu0 %v345
      %4701 = vmatmul.bf16.gmra.mxu0 %v3910
      %v4702 = vpop.f32.mrf.mxu0
      %v4703 = vadd.f32 0.0, %v4702
      %v4704 = vpop.f32.mrf.mxu0
      %v4705 = vadd.f32 0.0, %v4704
      %4706 = vmatmul.bf16.gmra.mxu0 %v3912
      %v4707 = vpop.f32.mrf.mxu0
      %v4708 = vadd.f32 0.0, %v4707
      %v4709 = vpop.f32.mrf.mxu0
      %v4710 = vadd.f32 0.0, %v4709
      %4711 = vmatmul.bf16.gmra.mxu0 %v3914
      %v4712 = vpop.f32.mrf.mxu0
      %v4713 = vadd.f32 0.0, %v4712
      %v4714 = vpop.f32.mrf.mxu0
      %v4715 = vadd.f32 0.0, %v4714
      %4716 = vmatmul.bf16.gmra.mxu0 %v3916
      %v4717 = vpop.f32.mrf.mxu0
      %v4718 = vadd.f32 0.0, %v4717
      %v4719 = vpop.f32.mrf.mxu0
      %v4720 = vadd.f32 0.0, %v4719
      %4721 = vdwg.mxu0
      %4722 = vmatpush.bf16.msra.mxu0 0
      %4723 = vmatpush.bf16.msra.mxu0 0
      %4724 = vmatpush.bf16.msra.mxu0 0
      %4725 = vmatpush.bf16.msra.mxu0 0
      %4726 = vmatpush.bf16.msra.mxu0 %v409
      %4727 = vmatpush.bf16.msra.mxu0 %v365
      %4728 = vmatpush.bf16.msra.mxu0 %v363
      %4729 = vmatpush.bf16.msra.mxu0 %v361
      %4730 = vmatmul.bf16.gmra.mxu0 %v3923
      %v4731 = vpop.f32.mrf.mxu0
      %v4732 = vadd.f32 %v4703, %v4731
      %v4733 = vpop.f32.mrf.mxu0
      %v4734 = vadd.f32 %v4705, %v4733
      %4735 = vmatmul.bf16.gmra.mxu0 %v3926
      %v4736 = vpop.f32.mrf.mxu0
      %v4737 = vadd.f32 %v4708, %v4736
      %v4738 = vpop.f32.mrf.mxu0
      %v4739 = vadd.f32 %v4710, %v4738
      %4740 = vmatmul.bf16.gmra.mxu0 %v3929
      %v4741 = vpop.f32.mrf.mxu0
      %v4742 = vadd.f32 %v4713, %v4741
      %v4743 = vpop.f32.mrf.mxu0
      %v4744 = vadd.f32 %v4715, %v4743
      %4745 = vmatmul.bf16.gmra.mxu0 %v3932
      %v4746 = vpop.f32.mrf.mxu0
      %v4747 = vadd.f32 %v4718, %v4746
      %v4748 = vpop.f32.mrf.mxu0
      %v4749 = vadd.f32 %v4720, %v4748
      %4750 = vdwg.mxu0
      %4751 = vmatpush.bf16.msra.mxu0 %v360
      %4752 = vmatpush.bf16.msra.mxu0 %v358
      %4753 = vmatpush.bf16.msra.mxu0 %v356
      %4754 = vmatpush.bf16.msra.mxu0 %v354
      %4755 = vmatpush.bf16.msra.mxu0 %v352
      %4756 = vmatpush.bf16.msra.mxu0 %v350
      %4757 = vmatpush.bf16.msra.mxu0 %v348
      %4758 = vmatpush.bf16.msra.mxu0 %v346
      %4759 = vmatmul.bf16.gmra.mxu0 %v3910
      %v4760 = vpop.f32.mrf.mxu0
      %v4761 = vadd.f32 0.0, %v4760
      %v4762 = vpop.f32.mrf.mxu0
      %v4763 = vadd.f32 0.0, %v4762
      %4764 = vmatmul.bf16.gmra.mxu0 %v3912
      %v4765 = vpop.f32.mrf.mxu0
      %v4766 = vadd.f32 0.0, %v4765
      %v4767 = vpop.f32.mrf.mxu0
      %v4768 = vadd.f32 0.0, %v4767
      %4769 = vmatmul.bf16.gmra.mxu0 %v3914
      %v4770 = vpop.f32.mrf.mxu0
      %v4771 = vadd.f32 0.0, %v4770
      %v4772 = vpop.f32.mrf.mxu0
      %v4773 = vadd.f32 0.0, %v4772
      %4774 = vmatmul.bf16.gmra.mxu0 %v3916
      %v4775 = vpop.f32.mrf.mxu0
      %v4776 = vadd.f32 0.0, %v4775
      %v4777 = vpop.f32.mrf.mxu0
      %v4778 = vadd.f32 0.0, %v4777
      %4779 = vdwg.mxu0
      %4780 = vmatpush.bf16.msra.mxu0 0
      %4781 = vmatpush.bf16.msra.mxu0 0
      %4782 = vmatpush.bf16.msra.mxu0 0
      %4783 = vmatpush.bf16.msra.mxu0 0
      %4784 = vmatpush.bf16.msra.mxu0 %v412
      %4785 = vmatpush.bf16.msra.mxu0 %v366
      %4786 = vmatpush.bf16.msra.mxu0 %v364
      %4787 = vmatpush.bf16.msra.mxu0 %v362
      %4788 = vmatmul.bf16.gmra.mxu0 %v3923
      %v4789 = vpop.f32.mrf.mxu0
      %v4790 = vadd.f32 %v4761, %v4789
      %v4791 = vpop.f32.mrf.mxu0
      %v4792 = vadd.f32 %v4763, %v4791
      %4793 = vmatmul.bf16.gmra.mxu0 %v3926
      %v4794 = vpop.f32.mrf.mxu0
      %v4795 = vadd.f32 %v4766, %v4794
      %v4796 = vpop.f32.mrf.mxu0
      %v4797 = vadd.f32 %v4768, %v4796
      %4798 = vmatmul.bf16.gmra.mxu0 %v3929
      %v4799 = vpop.f32.mrf.mxu0
      %v4800 = vadd.f32 %v4771, %v4799
      %v4801 = vpop.f32.mrf.mxu0
      %v4802 = vadd.f32 %v4773, %v4801
      %4803 = vmatmul.bf16.gmra.mxu0 %v3932
      %v4804 = vpop.f32.mrf.mxu0
      %v4805 = vadd.f32 %v4776, %v4804
      %v4806 = vpop.f32.mrf.mxu0
      %v4807 = vadd.f32 %v4778, %v4806
      %4808 = vdwg.mxu0
      %4809 = vmatpush.bf16.msra.mxu0 %v652
      %4810 = vmatpush.bf16.msra.mxu0 %v650
      %4811 = vmatpush.bf16.msra.mxu0 %v648
      %4812 = vmatpush.bf16.msra.mxu0 %v646
      %4813 = vmatpush.bf16.msra.mxu0 %v644
      %4814 = vmatpush.bf16.msra.mxu0 %v642
      %4815 = vmatpush.bf16.msra.mxu0 %v640
      %4816 = vmatpush.bf16.msra.mxu0 %v638
      %4817 = vmatmul.bf16.gmra.mxu0 %v2904
      %v4818 = vpop.f32.mrf.mxu0
      %v4819 = vadd.f32 %v4732, %v4818
      %v4820 = vpop.f32.mrf.mxu0
      %v4821 = vadd.f32 %v4734, %v4820
      %4822 = vmatmul.bf16.gmra.mxu0 %v2906
      %v4823 = vpop.f32.mrf.mxu0
      %v4824 = vadd.f32 %v4737, %v4823
      %v4825 = vpop.f32.mrf.mxu0
      %v4826 = vadd.f32 %v4739, %v4825
      %4827 = vmatmul.bf16.gmra.mxu0 %v2908
      %v4828 = vpop.f32.mrf.mxu0
      %v4829 = vadd.f32 %v4742, %v4828
      %v4830 = vpop.f32.mrf.mxu0
      %v4831 = vadd.f32 %v4744, %v4830
      %4832 = vmatmul.bf16.gmra.mxu0 %v2910
      %v4833 = vpop.f32.mrf.mxu0
      %v4834 = vadd.f32 %v4747, %v4833
      %v4835 = vpop.f32.mrf.mxu0
      %v4836 = vadd.f32 %v4749, %v4835
      %4837 = vdwg.mxu0
      %4838 = vmatpush.bf16.msra.mxu0 0
      %4839 = vmatpush.bf16.msra.mxu0 0
      %4840 = vmatpush.bf16.msra.mxu0 0
      %4841 = vmatpush.bf16.msra.mxu0 0
      %4842 = vmatpush.bf16.msra.mxu0 %v697
      %4843 = vmatpush.bf16.msra.mxu0 %v658
      %4844 = vmatpush.bf16.msra.mxu0 %v656
      %4845 = vmatpush.bf16.msra.mxu0 %v654
      %4846 = vmatmul.bf16.gmra.mxu0 %v3035
      %v4847 = vpop.f32.mrf.mxu0
      %v4848 = vadd.f32 %v4819, %v4847
      %v4849 = vpop.f32.mrf.mxu0
      %v4850 = vadd.f32 %v4821, %v4849
      %4851 = vmatmul.bf16.gmra.mxu0 %v3038
      %v4852 = vpop.f32.mrf.mxu0
      %v4853 = vadd.f32 %v4824, %v4852
      %v4854 = vpop.f32.mrf.mxu0
      %v4855 = vadd.f32 %v4826, %v4854
      %4856 = vmatmul.bf16.gmra.mxu0 %v3041
      %v4857 = vpop.f32.mrf.mxu0
      %v4858 = vadd.f32 %v4829, %v4857
      %v4859 = vpop.f32.mrf.mxu0
      %v4860 = vadd.f32 %v4831, %v4859
      %4861 = vmatmul.bf16.gmra.mxu0 %v3044
      %v4862 = vpop.f32.mrf.mxu0
      %v4863 = vadd.f32 %v4834, %v4862
      %v4864 = vpop.f32.mrf.mxu0
      %v4865 = vadd.f32 %v4836, %v4864
      %4866 = vdwg.mxu0
      %4867 = vmatpush.bf16.msra.mxu0 %v653
      %4868 = vmatpush.bf16.msra.mxu0 %v651
      %4869 = vmatpush.bf16.msra.mxu0 %v649
      %4870 = vmatpush.bf16.msra.mxu0 %v647
      %4871 = vmatpush.bf16.msra.mxu0 %v645
      %4872 = vmatpush.bf16.msra.mxu0 %v643
      %4873 = vmatpush.bf16.msra.mxu0 %v641
      %4874 = vmatpush.bf16.msra.mxu0 %v639
      %4875 = vmatmul.bf16.gmra.mxu0 %v2904
      %v4876 = vpop.f32.mrf.mxu0
      %v4877 = vadd.f32 %v4790, %v4876
      %v4878 = vpop.f32.mrf.mxu0
      %v4879 = vadd.f32 %v4792, %v4878
      %4880 = vmatmul.bf16.gmra.mxu0 %v2906
      %v4881 = vpop.f32.mrf.mxu0
      %v4882 = vadd.f32 %v4795, %v4881
      %v4883 = vpop.f32.mrf.mxu0
      %v4884 = vadd.f32 %v4797, %v4883
      %4885 = vmatmul.bf16.gmra.mxu0 %v2908
      %v4886 = vpop.f32.mrf.mxu0
      %v4887 = vadd.f32 %v4800, %v4886
      %v4888 = vpop.f32.mrf.mxu0
      %v4889 = vadd.f32 %v4802, %v4888
      %4890 = vmatmul.bf16.gmra.mxu0 %v2910
      %v4891 = vpop.f32.mrf.mxu0
      %v4892 = vadd.f32 %v4805, %v4891
      %v4893 = vpop.f32.mrf.mxu0
      %v4894 = vadd.f32 %v4807, %v4893
      %4895 = vdwg.mxu0
      %4896 = vmatpush.bf16.msra.mxu0 0
      %4897 = vmatpush.bf16.msra.mxu0 0
      %4898 = vmatpush.bf16.msra.mxu0 0
      %4899 = vmatpush.bf16.msra.mxu0 0
      %4900 = vmatpush.bf16.msra.mxu0 %v700
      %4901 = vmatpush.bf16.msra.mxu0 %v659
      %4902 = vmatpush.bf16.msra.mxu0 %v657
      %4903 = vmatpush.bf16.msra.mxu0 %v655
      %4904 = vmatmul.bf16.gmra.mxu0 %v3035
      %v4905 = vpop.f32.mrf.mxu0
      %v4906 = vadd.f32 %v4877, %v4905
      %v4907 = vpop.f32.mrf.mxu0
      %v4908 = vadd.f32 %v4879, %v4907
      %4909 = vmatmul.bf16.gmra.mxu0 %v3038
      %v4910 = vpop.f32.mrf.mxu0
      %v4911 = vadd.f32 %v4882, %v4910
      %v4912 = vpop.f32.mrf.mxu0
      %v4913 = vadd.f32 %v4884, %v4912
      %4914 = vmatmul.bf16.gmra.mxu0 %v3041
      %v4915 = vpop.f32.mrf.mxu0
      %v4916 = vadd.f32 %v4887, %v4915
      %v4917 = vpop.f32.mrf.mxu0
      %v4918 = vadd.f32 %v4889, %v4917
      %4919 = vmatmul.bf16.gmra.mxu0 %v3044
      %v4920 = vpop.f32.mrf.mxu0
      %v4921 = vadd.f32 %v4892, %v4920
      %v4922 = vpop.f32.mrf.mxu0
      %v4923 = vadd.f32 %v4894, %v4922
      %4924 = vdwg.mxu0
      %4925 = vmatpush.bf16.msra.mxu0 %v974
      %4926 = vmatpush.bf16.msra.mxu0 %v972
      %4927 = vmatpush.bf16.msra.mxu0 %v970
      %4928 = vmatpush.bf16.msra.mxu0 %v968
      %4929 = vmatpush.bf16.msra.mxu0 %v966
      %4930 = vmatpush.bf16.msra.mxu0 %v964
      %4931 = vmatpush.bf16.msra.mxu0 %v962
      %4932 = vmatpush.bf16.msra.mxu0 %v960
      %4933 = vmatmul.bf16.gmra.mxu0 %v4099
      %v4934 = vpop.f32.mrf.mxu0
      %v4935 = vadd.f32 0.0, %v4934
      %v4936 = vpop.f32.mrf.mxu0
      %v4937 = vadd.f32 0.0, %v4936
      %4938 = vmatmul.bf16.gmra.mxu0 %v4101
      %v4939 = vpop.f32.mrf.mxu0
      %v4940 = vadd.f32 0.0, %v4939
      %v4941 = vpop.f32.mrf.mxu0
      %v4942 = vadd.f32 0.0, %v4941
      %4943 = vmatmul.bf16.gmra.mxu0 %v4103
      %v4944 = vpop.f32.mrf.mxu0
      %v4945 = vadd.f32 0.0, %v4944
      %v4946 = vpop.f32.mrf.mxu0
      %v4947 = vadd.f32 0.0, %v4946
      %4948 = vmatmul.bf16.gmra.mxu0 %v4105
      %v4949 = vpop.f32.mrf.mxu0
      %v4950 = vadd.f32 0.0, %v4949
      %v4951 = vpop.f32.mrf.mxu0
      %v4952 = vadd.f32 0.0, %v4951
      %4953 = vdwg.mxu0
      %4954 = vmatpush.bf16.msra.mxu0 0
      %4955 = vmatpush.bf16.msra.mxu0 0
      %4956 = vmatpush.bf16.msra.mxu0 0
      %4957 = vmatpush.bf16.msra.mxu0 0
      %4958 = vmatpush.bf16.msra.mxu0 %v1019
      %4959 = vmatpush.bf16.msra.mxu0 %v980
      %4960 = vmatpush.bf16.msra.mxu0 %v978
      %4961 = vmatpush.bf16.msra.mxu0 %v976
      %4962 = vmatmul.bf16.gmra.mxu0 %v4112
      %v4963 = vpop.f32.mrf.mxu0
      %v4964 = vadd.f32 %v4935, %v4963
      %v4965 = vpop.f32.mrf.mxu0
      %v4966 = vadd.f32 %v4937, %v4965
      %4967 = vmatmul.bf16.gmra.mxu0 %v4115
      %v4968 = vpop.f32.mrf.mxu0
      %v4969 = vadd.f32 %v4940, %v4968
      %v4970 = vpop.f32.mrf.mxu0
      %v4971 = vadd.f32 %v4942, %v4970
      %4972 = vmatmul.bf16.gmra.mxu0 %v4118
      %v4973 = vpop.f32.mrf.mxu0
      %v4974 = vadd.f32 %v4945, %v4973
      %v4975 = vpop.f32.mrf.mxu0
      %v4976 = vadd.f32 %v4947, %v4975
      %4977 = vmatmul.bf16.gmra.mxu0 %v4121
      %v4978 = vpop.f32.mrf.mxu0
      %v4979 = vadd.f32 %v4950, %v4978
      %v4980 = vpop.f32.mrf.mxu0
      %v4981 = vadd.f32 %v4952, %v4980
      %4982 = vdwg.mxu0
      %4983 = vmatpush.bf16.msra.mxu0 %v975
      %4984 = vmatpush.bf16.msra.mxu0 %v973
      %4985 = vmatpush.bf16.msra.mxu0 %v971
      %4986 = vmatpush.bf16.msra.mxu0 %v969
      %4987 = vmatpush.bf16.msra.mxu0 %v967
      %4988 = vmatpush.bf16.msra.mxu0 %v965
      %4989 = vmatpush.bf16.msra.mxu0 %v963
      %4990 = vmatpush.bf16.msra.mxu0 %v961
      %4991 = vmatmul.bf16.gmra.mxu0 %v4099
      %v4992 = vpop.f32.mrf.mxu0
      %v4993 = vadd.f32 0.0, %v4992
      %v4994 = vpop.f32.mrf.mxu0
      %v4995 = vadd.f32 0.0, %v4994
      %4996 = vmatmul.bf16.gmra.mxu0 %v4101
      %v4997 = vpop.f32.mrf.mxu0
      %v4998 = vadd.f32 0.0, %v4997
      %v4999 = vpop.f32.mrf.mxu0
      %v5000 = vadd.f32 0.0, %v4999
      %5001 = vmatmul.bf16.gmra.mxu0 %v4103
      %v5002 = vpop.f32.mrf.mxu0
      %v5003 = vadd.f32 0.0, %v5002
      %v5004 = vpop.f32.mrf.mxu0
      %v5005 = vadd.f32 0.0, %v5004
      %5006 = vmatmul.bf16.gmra.mxu0 %v4105
      %v5007 = vpop.f32.mrf.mxu0
      %v5008 = vadd.f32 0.0, %v5007
      %v5009 = vpop.f32.mrf.mxu0
      %v5010 = vadd.f32 0.0, %v5009
      %5011 = vdwg.mxu0
      %5012 = vmatpush.bf16.msra.mxu0 0
      %5013 = vmatpush.bf16.msra.mxu0 0
      %5014 = vmatpush.bf16.msra.mxu0 0
      %5015 = vmatpush.bf16.msra.mxu0 0
      %5016 = vmatpush.bf16.msra.mxu0 %v1022
      %5017 = vmatpush.bf16.msra.mxu0 %v981
      %5018 = vmatpush.bf16.msra.mxu0 %v979
      %5019 = vmatpush.bf16.msra.mxu0 %v977
      %5020 = vmatmul.bf16.gmra.mxu0 %v4112
      %v5021 = vpop.f32.mrf.mxu0
      %v5022 = vadd.f32 %v4993, %v5021
      %v5023 = vpop.f32.mrf.mxu0
      %v5024 = vadd.f32 %v4995, %v5023
      %5025 = vmatmul.bf16.gmra.mxu0 %v4115
      %v5026 = vpop.f32.mrf.mxu0
      %v5027 = vadd.f32 %v4998, %v5026
      %v5028 = vpop.f32.mrf.mxu0
      %v5029 = vadd.f32 %v5000, %v5028
      %5030 = vmatmul.bf16.gmra.mxu0 %v4118
      %v5031 = vpop.f32.mrf.mxu0
      %v5032 = vadd.f32 %v5003, %v5031
      %v5033 = vpop.f32.mrf.mxu0
      %v5034 = vadd.f32 %v5005, %v5033
      %5035 = vmatmul.bf16.gmra.mxu0 %v4121
      %v5036 = vpop.f32.mrf.mxu0
      %v5037 = vadd.f32 %v5008, %v5036
      %v5038 = vpop.f32.mrf.mxu0
      %v5039 = vadd.f32 %v5010, %v5038
      %5040 = vdwg.mxu0
      %v5041 = vadd.f32 %v4848, %v4964
      %v5042 = vadd.f32 %v4906, %v5022
      %v5043 = vadd.f32 %v4850, %v4966
      %v5044 = vadd.f32 %v4908, %v5024
      %v5045 = vadd.f32 %v4853, %v4969
      %v5046 = vadd.f32 %v4911, %v5027
      %v5047 = vadd.f32 %v4855, %v4971
      %v5048 = vadd.f32 %v4913, %v5029
      %v5049 = vadd.f32 %v4858, %v4974
      %v5050 = vadd.f32 %v4916, %v5032
      %v5051 = vadd.f32 %v4860, %v4976
      %v5052 = vadd.f32 %v4918, %v5034
      %v5053 = vadd.f32 %v4863, %v4979
      %v5054 = vadd.f32 %v4921, %v5037
      %v5055 = vadd.f32 %v4865, %v4981
      %v5056 = vadd.f32 %v4923, %v5039
      %5057 = vmatpush.bf16.msra.mxu0 %v1312
      %5058 = vmatpush.bf16.msra.mxu0 %v1310
      %5059 = vmatpush.bf16.msra.mxu0 %v1308
      %5060 = vmatpush.bf16.msra.mxu0 %v1306
      %5061 = vmatpush.bf16.msra.mxu0 %v1304
      %5062 = vmatpush.bf16.msra.mxu0 %v1302
      %5063 = vmatpush.bf16.msra.mxu0 %v1300
      %5064 = vmatpush.bf16.msra.mxu0 %v1298
      %5065 = vmatmul.bf16.gmra.mxu0 %v4288
      %v5066 = vpop.f32.mrf.mxu0
      %v5067 = vadd.f32 0.0, %v5066
      %v5068 = vpop.f32.mrf.mxu0
      %v5069 = vadd.f32 0.0, %v5068
      %5070 = vmatmul.bf16.gmra.mxu0 %v4290
      %v5071 = vpop.f32.mrf.mxu0
      %v5072 = vadd.f32 0.0, %v5071
      %v5073 = vpop.f32.mrf.mxu0
      %v5074 = vadd.f32 0.0, %v5073
      %5075 = vmatmul.bf16.gmra.mxu0 %v4292
      %v5076 = vpop.f32.mrf.mxu0
      %v5077 = vadd.f32 0.0, %v5076
      %v5078 = vpop.f32.mrf.mxu0
      %v5079 = vadd.f32 0.0, %v5078
      %5080 = vmatmul.bf16.gmra.mxu0 %v4294
      %v5081 = vpop.f32.mrf.mxu0
      %v5082 = vadd.f32 0.0, %v5081
      %v5083 = vpop.f32.mrf.mxu0
      %v5084 = vadd.f32 0.0, %v5083
      %5085 = vdwg.mxu0
      %5086 = vmatpush.bf16.msra.mxu0 0
      %5087 = vmatpush.bf16.msra.mxu0 0
      %5088 = vmatpush.bf16.msra.mxu0 0
      %5089 = vmatpush.bf16.msra.mxu0 0
      %5090 = vmatpush.bf16.msra.mxu0 %v1357
      %5091 = vmatpush.bf16.msra.mxu0 %v1318
      %5092 = vmatpush.bf16.msra.mxu0 %v1316
      %5093 = vmatpush.bf16.msra.mxu0 %v1314
      %5094 = vmatmul.bf16.gmra.mxu0 %v4301
      %v5095 = vpop.f32.mrf.mxu0
      %v5096 = vadd.f32 %v5067, %v5095
      %v5097 = vpop.f32.mrf.mxu0
      %v5098 = vadd.f32 %v5069, %v5097
      %5099 = vmatmul.bf16.gmra.mxu0 %v4304
      %v5100 = vpop.f32.mrf.mxu0
      %v5101 = vadd.f32 %v5072, %v5100
      %v5102 = vpop.f32.mrf.mxu0
      %v5103 = vadd.f32 %v5074, %v5102
      %5104 = vmatmul.bf16.gmra.mxu0 %v4307
      %v5105 = vpop.f32.mrf.mxu0
      %v5106 = vadd.f32 %v5077, %v5105
      %v5107 = vpop.f32.mrf.mxu0
      %v5108 = vadd.f32 %v5079, %v5107
      %5109 = vmatmul.bf16.gmra.mxu0 %v4310
      %v5110 = vpop.f32.mrf.mxu0
      %v5111 = vadd.f32 %v5082, %v5110
      %v5112 = vpop.f32.mrf.mxu0
      %v5113 = vadd.f32 %v5084, %v5112
      %5114 = vdwg.mxu0
      %5115 = vmatpush.bf16.msra.mxu0 %v1313
      %5116 = vmatpush.bf16.msra.mxu0 %v1311
      %5117 = vmatpush.bf16.msra.mxu0 %v1309
      %5118 = vmatpush.bf16.msra.mxu0 %v1307
      %5119 = vmatpush.bf16.msra.mxu0 %v1305
      %5120 = vmatpush.bf16.msra.mxu0 %v1303
      %5121 = vmatpush.bf16.msra.mxu0 %v1301
      %5122 = vmatpush.bf16.msra.mxu0 %v1299
      %5123 = vmatmul.bf16.gmra.mxu0 %v4288
      %v5124 = vpop.f32.mrf.mxu0
      %v5125 = vadd.f32 0.0, %v5124
      %v5126 = vpop.f32.mrf.mxu0
      %v5127 = vadd.f32 0.0, %v5126
      %5128 = vmatmul.bf16.gmra.mxu0 %v4290
      %v5129 = vpop.f32.mrf.mxu0
      %v5130 = vadd.f32 0.0, %v5129
      %v5131 = vpop.f32.mrf.mxu0
      %v5132 = vadd.f32 0.0, %v5131
      %5133 = vmatmul.bf16.gmra.mxu0 %v4292
      %v5134 = vpop.f32.mrf.mxu0
      %v5135 = vadd.f32 0.0, %v5134
      %v5136 = vpop.f32.mrf.mxu0
      %v5137 = vadd.f32 0.0, %v5136
      %5138 = vmatmul.bf16.gmra.mxu0 %v4294
      %v5139 = vpop.f32.mrf.mxu0
      %v5140 = vadd.f32 0.0, %v5139
      %v5141 = vpop.f32.mrf.mxu0
      %v5142 = vadd.f32 0.0, %v5141
      %5143 = vdwg.mxu0
      %5144 = vmatpush.bf16.msra.mxu0 0
      %5145 = vmatpush.bf16.msra.mxu0 0
      %5146 = vmatpush.bf16.msra.mxu0 0
      %5147 = vmatpush.bf16.msra.mxu0 0
      %5148 = vmatpush.bf16.msra.mxu0 %v1360
      %5149 = vmatpush.bf16.msra.mxu0 %v1319
      %5150 = vmatpush.bf16.msra.mxu0 %v1317
      %5151 = vmatpush.bf16.msra.mxu0 %v1315
      %5152 = vmatmul.bf16.gmra.mxu0 %v4301
      %v5153 = vpop.f32.mrf.mxu0
      %v5154 = vadd.f32 %v5125, %v5153
      %v5155 = vpop.f32.mrf.mxu0
      %v5156 = vadd.f32 %v5127, %v5155
      %5157 = vmatmul.bf16.gmra.mxu0 %v4304
      %v5158 = vpop.f32.mrf.mxu0
      %v5159 = vadd.f32 %v5130, %v5158
      %v5160 = vpop.f32.mrf.mxu0
      %v5161 = vadd.f32 %v5132, %v5160
      %5162 = vmatmul.bf16.gmra.mxu0 %v4307
      %v5163 = vpop.f32.mrf.mxu0
      %v5164 = vadd.f32 %v5135, %v5163
      %v5165 = vpop.f32.mrf.mxu0
      %v5166 = vadd.f32 %v5137, %v5165
      %5167 = vmatmul.bf16.gmra.mxu0 %v4310
      %v5168 = vpop.f32.mrf.mxu0
      %v5169 = vadd.f32 %v5140, %v5168
      %v5170 = vpop.f32.mrf.mxu0
      %v5171 = vadd.f32 %v5142, %v5170
      %5172 = vdwg.mxu0
      %v5173 = vadd.f32 %v5041, %v5096
      %v5174 = vadd.f32 %v5042, %v5154
      %v5175 = vadd.f32 %v5043, %v5098
      %v5176 = vadd.f32 %v5044, %v5156
      %v5177 = vadd.f32 %v5045, %v5101
      %v5178 = vadd.f32 %v5046, %v5159
      %v5179 = vadd.f32 %v5047, %v5103
      %v5180 = vadd.f32 %v5048, %v5161
      %v5181 = vadd.f32 %v5049, %v5106
      %v5182 = vadd.f32 %v5050, %v5164
      %v5183 = vadd.f32 %v5051, %v5108
      %v5184 = vadd.f32 %v5052, %v5166
      %v5185 = vadd.f32 %v5053, %v5111
      %v5186 = vadd.f32 %v5054, %v5169
      %v5187 = vadd.f32 %v5055, %v5113
      %v5188 = vadd.f32 %v5056, %v5171
      %5189 = vmatpush.bf16.msra.mxu0 %v1650
      %5190 = vmatpush.bf16.msra.mxu0 %v1648
      %5191 = vmatpush.bf16.msra.mxu0 %v1646
      %5192 = vmatpush.bf16.msra.mxu0 %v1644
      %5193 = vmatpush.bf16.msra.mxu0 %v1642
      %5194 = vmatpush.bf16.msra.mxu0 %v1640
      %5195 = vmatpush.bf16.msra.mxu0 %v1638
      %5196 = vmatpush.bf16.msra.mxu0 %v1636
      %5197 = vmatmul.bf16.gmra.mxu0 %v4477
      %v5198 = vpop.f32.mrf.mxu0
      %v5199 = vadd.f32 0.0, %v5198
      %v5200 = vpop.f32.mrf.mxu0
      %v5201 = vadd.f32 0.0, %v5200
      %5202 = vmatmul.bf16.gmra.mxu0 %v4479
      %v5203 = vpop.f32.mrf.mxu0
      %v5204 = vadd.f32 0.0, %v5203
      %v5205 = vpop.f32.mrf.mxu0
      %v5206 = vadd.f32 0.0, %v5205
      %5207 = vmatmul.bf16.gmra.mxu0 %v4481
      %v5208 = vpop.f32.mrf.mxu0
      %v5209 = vadd.f32 0.0, %v5208
      %v5210 = vpop.f32.mrf.mxu0
      %v5211 = vadd.f32 0.0, %v5210
      %5212 = vmatmul.bf16.gmra.mxu0 %v4483
      %v5213 = vpop.f32.mrf.mxu0
      %v5214 = vadd.f32 0.0, %v5213
      %v5215 = vpop.f32.mrf.mxu0
      %v5216 = vadd.f32 0.0, %v5215
      %5217 = vdwg.mxu0
      %5218 = vmatpush.bf16.msra.mxu0 0
      %5219 = vmatpush.bf16.msra.mxu0 0
      %5220 = vmatpush.bf16.msra.mxu0 0
      %5221 = vmatpush.bf16.msra.mxu0 0
      %5222 = vmatpush.bf16.msra.mxu0 %v1695
      %5223 = vmatpush.bf16.msra.mxu0 %v1656
      %5224 = vmatpush.bf16.msra.mxu0 %v1654
      %5225 = vmatpush.bf16.msra.mxu0 %v1652
      %5226 = vmatmul.bf16.gmra.mxu0 %v4490
      %v5227 = vpop.f32.mrf.mxu0
      %v5228 = vadd.f32 %v5199, %v5227
      %v5229 = vpop.f32.mrf.mxu0
      %v5230 = vadd.f32 %v5201, %v5229
      %5231 = vmatmul.bf16.gmra.mxu0 %v4493
      %v5232 = vpop.f32.mrf.mxu0
      %v5233 = vadd.f32 %v5204, %v5232
      %v5234 = vpop.f32.mrf.mxu0
      %v5235 = vadd.f32 %v5206, %v5234
      %5236 = vmatmul.bf16.gmra.mxu0 %v4496
      %v5237 = vpop.f32.mrf.mxu0
      %v5238 = vadd.f32 %v5209, %v5237
      %v5239 = vpop.f32.mrf.mxu0
      %v5240 = vadd.f32 %v5211, %v5239
      %5241 = vmatmul.bf16.gmra.mxu0 %v4499
      %v5242 = vpop.f32.mrf.mxu0
      %v5243 = vadd.f32 %v5214, %v5242
      %v5244 = vpop.f32.mrf.mxu0
      %v5245 = vadd.f32 %v5216, %v5244
      %5246 = vdwg.mxu0
      %5247 = vmatpush.bf16.msra.mxu0 %v1651
      %5248 = vmatpush.bf16.msra.mxu0 %v1649
      %5249 = vmatpush.bf16.msra.mxu0 %v1647
      %5250 = vmatpush.bf16.msra.mxu0 %v1645
      %5251 = vmatpush.bf16.msra.mxu0 %v1643
      %5252 = vmatpush.bf16.msra.mxu0 %v1641
      %5253 = vmatpush.bf16.msra.mxu0 %v1639
      %5254 = vmatpush.bf16.msra.mxu0 %v1637
      %5255 = vmatmul.bf16.gmra.mxu0 %v4477
      %v5256 = vpop.f32.mrf.mxu0
      %v5257 = vadd.f32 0.0, %v5256
      %v5258 = vpop.f32.mrf.mxu0
      %v5259 = vadd.f32 0.0, %v5258
      %5260 = vmatmul.bf16.gmra.mxu0 %v4479
      %v5261 = vpop.f32.mrf.mxu0
      %v5262 = vadd.f32 0.0, %v5261
      %v5263 = vpop.f32.mrf.mxu0
      %v5264 = vadd.f32 0.0, %v5263
      %5265 = vmatmul.bf16.gmra.mxu0 %v4481
      %v5266 = vpop.f32.mrf.mxu0
      %v5267 = vadd.f32 0.0, %v5266
      %v5268 = vpop.f32.mrf.mxu0
      %v5269 = vadd.f32 0.0, %v5268
      %5270 = vmatmul.bf16.gmra.mxu0 %v4483
      %v5271 = vpop.f32.mrf.mxu0
      %v5272 = vadd.f32 0.0, %v5271
      %v5273 = vpop.f32.mrf.mxu0
      %v5274 = vadd.f32 0.0, %v5273
      %5275 = vdwg.mxu0
      %5276 = vmatpush.bf16.msra.mxu0 0
      %5277 = vmatpush.bf16.msra.mxu0 0
      %5278 = vmatpush.bf16.msra.mxu0 0
      %5279 = vmatpush.bf16.msra.mxu0 0
      %5280 = vmatpush.bf16.msra.mxu0 %v1698
      %5281 = vmatpush.bf16.msra.mxu0 %v1657
      %5282 = vmatpush.bf16.msra.mxu0 %v1655
      %5283 = vmatpush.bf16.msra.mxu0 %v1653
      %5284 = vmatmul.bf16.gmra.mxu0 %v4490
      %v5285 = vpop.f32.mrf.mxu0
      %v5286 = vadd.f32 %v5257, %v5285
      %v5287 = vpop.f32.mrf.mxu0
      %v5288 = vadd.f32 %v5259, %v5287
      %5289 = vmatmul.bf16.gmra.mxu0 %v4493
      %v5290 = vpop.f32.mrf.mxu0
      %v5291 = vadd.f32 %v5262, %v5290
      %v5292 = vpop.f32.mrf.mxu0
      %v5293 = vadd.f32 %v5264, %v5292
      %5294 = vmatmul.bf16.gmra.mxu0 %v4496
      %v5295 = vpop.f32.mrf.mxu0
      %v5296 = vadd.f32 %v5267, %v5295
      %v5297 = vpop.f32.mrf.mxu0
      %v5298 = vadd.f32 %v5269, %v5297
      %5299 = vmatmul.bf16.gmra.mxu0 %v4499
      %v5300 = vpop.f32.mrf.mxu0
      %v5301 = vadd.f32 %v5272, %v5300
      %v5302 = vpop.f32.mrf.mxu0
      %v5303 = vadd.f32 %v5274, %v5302
      %5304 = vdwg.mxu0
      %v5305 = vadd.f32 %v5173, %v5228
      %v5306 = vadd.f32 %v5174, %v5286
      %v5307 = vadd.f32 %v5175, %v5230
      %v5308 = vadd.f32 %v5176, %v5288
      %v5309 = vadd.f32 %v5177, %v5233
      %v5310 = vadd.f32 %v5178, %v5291
      %v5311 = vadd.f32 %v5179, %v5235
      %v5312 = vadd.f32 %v5180, %v5293
      %v5313 = vadd.f32 %v5181, %v5238
      %v5314 = vadd.f32 %v5182, %v5296
      %v5315 = vadd.f32 %v5183, %v5240
      %v5316 = vadd.f32 %v5184, %v5298
      %v5317 = vadd.f32 %v5185, %v5243
      %v5318 = vadd.f32 %v5186, %v5301
      %v5319 = vadd.f32 %v5187, %v5245
      %v5320 = vadd.f32 %v5188, %v5303
      %s5321 = scalar_lea.vmem %s164, 208
      %v5322 = vld [vmem:[%s5321] sm:$0xff]
      %v5323 = vld [vmem:[%s5321 + $0x8] sm:$0xff]
      %v5324 = vld [vmem:[%s5321 + $0x10] sm:$0xff]
      %v5325 = vld [vmem:[%s5321 + $0x18] sm:$0xff]
      %v5326 = vld [vmem:[%s5321 + $0x20] sm:$0xff]
      %v5327 = vld [vmem:[%s5321 + $0x28] sm:$0xff]
      %v5328 = vld [vmem:[%s5321 + $0x30] sm:$0xff]
      %v5329 = vld [vmem:[%s5321 + $0x38] sm:$0xff]
      %v5338 = vunpack.c.l.b16 %v5322
      %v5339 = vunpack.c.h.b16 %v5322
      %v5340 = vunpack.c.l.b16 %v5323
      %v5341 = vunpack.c.h.b16 %v5323
      %v5342 = vunpack.c.l.b16 %v5324
      %v5343 = vunpack.c.h.b16 %v5324
      %v5344 = vunpack.c.l.b16 %v5325
      %v5345 = vunpack.c.h.b16 %v5325
      %v5346 = vunpack.c.l.b16 %v5326
      %v5347 = vunpack.c.h.b16 %v5326
      %v5348 = vunpack.c.l.b16 %v5327
      %v5349 = vunpack.c.h.b16 %v5327
      %v5350 = vunpack.c.l.b16 %v5328
      %v5351 = vunpack.c.h.b16 %v5328
      %v5352 = vunpack.c.l.b16 %v5329
      %v5353 = vunpack.c.h.b16 %v5329
      %v5354 = vpack.c.b16 %v5340, %v5338
      %v5355 = vpack.c.b16 %v5341, %v5339
      %v5356 = vpack.c.b16 %v5344, %v5342
      %v5357 = vpack.c.b16 %v5345, %v5343
      %v5358 = vpack.c.b16 %v5348, %v5346
      %v5359 = vpack.c.b16 %v5349, %v5347
      %v5360 = vpack.c.b16 %v5352, %v5350
      %v5361 = vpack.c.b16 %v5353, %v5351
      %v5367 = vsel %vm391, %v5355, 0
      %v5370 = vsel %vm391, %v5357, 0
      %v5373 = vsel %vm391, %v5359, 0
      %v5376 = vsel %vm391, %v5361, 0
      %5378 = vmatpush.bf16.msra.mxu0 %v1988
      %5379 = vmatpush.bf16.msra.mxu0 %v1986
      %5380 = vmatpush.bf16.msra.mxu0 %v1984
      %5381 = vmatpush.bf16.msra.mxu0 %v1982
      %5382 = vmatpush.bf16.msra.mxu0 %v1980
      %5383 = vmatpush.bf16.msra.mxu0 %v1978
      %5384 = vmatpush.bf16.msra.mxu0 %v1976
      %5385 = vmatpush.bf16.msra.mxu0 %v1974
      %5386 = vmatmul.bf16.gmra.mxu0 %v5354
      %v5387 = vpop.f32.mrf.mxu0
      %v5388 = vadd.f32 0.0, %v5387
      %v5389 = vpop.f32.mrf.mxu0
      %v5390 = vadd.f32 0.0, %v5389
      %5391 = vmatmul.bf16.gmra.mxu0 %v5356
      %v5392 = vpop.f32.mrf.mxu0
      %v5393 = vadd.f32 0.0, %v5392
      %v5394 = vpop.f32.mrf.mxu0
      %v5395 = vadd.f32 0.0, %v5394
      %5396 = vmatmul.bf16.gmra.mxu0 %v5358
      %v5397 = vpop.f32.mrf.mxu0
      %v5398 = vadd.f32 0.0, %v5397
      %v5399 = vpop.f32.mrf.mxu0
      %v5400 = vadd.f32 0.0, %v5399
      %5401 = vmatmul.bf16.gmra.mxu0 %v5360
      %v5402 = vpop.f32.mrf.mxu0
      %v5403 = vadd.f32 0.0, %v5402
      %v5404 = vpop.f32.mrf.mxu0
      %v5405 = vadd.f32 0.0, %v5404
      %5406 = vdwg.mxu0
      %5407 = vmatpush.bf16.msra.mxu0 0
      %5408 = vmatpush.bf16.msra.mxu0 0
      %5409 = vmatpush.bf16.msra.mxu0 0
      %5410 = vmatpush.bf16.msra.mxu0 0
      %5411 = vmatpush.bf16.msra.mxu0 %v2033
      %5412 = vmatpush.bf16.msra.mxu0 %v1994
      %5413 = vmatpush.bf16.msra.mxu0 %v1992
      %5414 = vmatpush.bf16.msra.mxu0 %v1990
      %5415 = vmatmul.bf16.gmra.mxu0 %v5367
      %v5416 = vpop.f32.mrf.mxu0
      %v5417 = vadd.f32 %v5388, %v5416
      %v5418 = vpop.f32.mrf.mxu0
      %v5419 = vadd.f32 %v5390, %v5418
      %5420 = vmatmul.bf16.gmra.mxu0 %v5370
      %v5421 = vpop.f32.mrf.mxu0
      %v5422 = vadd.f32 %v5393, %v5421
      %v5423 = vpop.f32.mrf.mxu0
      %v5424 = vadd.f32 %v5395, %v5423
      %5425 = vmatmul.bf16.gmra.mxu0 %v5373
      %v5426 = vpop.f32.mrf.mxu0
      %v5427 = vadd.f32 %v5398, %v5426
      %v5428 = vpop.f32.mrf.mxu0
      %v5429 = vadd.f32 %v5400, %v5428
      %5430 = vmatmul.bf16.gmra.mxu0 %v5376
      %v5431 = vpop.f32.mrf.mxu0
      %v5432 = vadd.f32 %v5403, %v5431
      %v5433 = vpop.f32.mrf.mxu0
      %v5434 = vadd.f32 %v5405, %v5433
      %5435 = vdwg.mxu0
      %5436 = vmatpush.bf16.msra.mxu0 %v1989
      %5437 = vmatpush.bf16.msra.mxu0 %v1987
      %5438 = vmatpush.bf16.msra.mxu0 %v1985
      %5439 = vmatpush.bf16.msra.mxu0 %v1983
      %5440 = vmatpush.bf16.msra.mxu0 %v1981
      %5441 = vmatpush.bf16.msra.mxu0 %v1979
      %5442 = vmatpush.bf16.msra.mxu0 %v1977
      %5443 = vmatpush.bf16.msra.mxu0 %v1975
      %5444 = vmatmul.bf16.gmra.mxu0 %v5354
      %v5445 = vpop.f32.mrf.mxu0
      %v5446 = vadd.f32 0.0, %v5445
      %v5447 = vpop.f32.mrf.mxu0
      %v5448 = vadd.f32 0.0, %v5447
      %5449 = vmatmul.bf16.gmra.mxu0 %v5356
      %v5450 = vpop.f32.mrf.mxu0
      %v5451 = vadd.f32 0.0, %v5450
      %v5452 = vpop.f32.mrf.mxu0
      %v5453 = vadd.f32 0.0, %v5452
      %5454 = vmatmul.bf16.gmra.mxu0 %v5358
      %v5455 = vpop.f32.mrf.mxu0
      %v5456 = vadd.f32 0.0, %v5455
      %v5457 = vpop.f32.mrf.mxu0
      %v5458 = vadd.f32 0.0, %v5457
      %5459 = vmatmul.bf16.gmra.mxu0 %v5360
      %v5460 = vpop.f32.mrf.mxu0
      %v5461 = vadd.f32 0.0, %v5460
      %v5462 = vpop.f32.mrf.mxu0
      %v5463 = vadd.f32 0.0, %v5462
      %5464 = vdwg.mxu0
      %5465 = vmatpush.bf16.msra.mxu0 0
      %5466 = vmatpush.bf16.msra.mxu0 0
      %5467 = vmatpush.bf16.msra.mxu0 0
      %5468 = vmatpush.bf16.msra.mxu0 0
      %5469 = vmatpush.bf16.msra.mxu0 %v2036
      %5470 = vmatpush.bf16.msra.mxu0 %v1995
      %5471 = vmatpush.bf16.msra.mxu0 %v1993
      %5472 = vmatpush.bf16.msra.mxu0 %v1991
      %5473 = vmatmul.bf16.gmra.mxu0 %v5367
      %v5474 = vpop.f32.mrf.mxu0
      %v5475 = vadd.f32 %v5446, %v5474
      %v5476 = vpop.f32.mrf.mxu0
      %v5477 = vadd.f32 %v5448, %v5476
      %5478 = vmatmul.bf16.gmra.mxu0 %v5370
      %v5479 = vpop.f32.mrf.mxu0
      %v5480 = vadd.f32 %v5451, %v5479
      %v5481 = vpop.f32.mrf.mxu0
      %v5482 = vadd.f32 %v5453, %v5481
      %5483 = vmatmul.bf16.gmra.mxu0 %v5373
      %v5484 = vpop.f32.mrf.mxu0
      %v5485 = vadd.f32 %v5456, %v5484
      %v5486 = vpop.f32.mrf.mxu0
      %v5487 = vadd.f32 %v5458, %v5486
      %5488 = vmatmul.bf16.gmra.mxu0 %v5376
      %v5489 = vpop.f32.mrf.mxu0
      %v5490 = vadd.f32 %v5461, %v5489
      %v5491 = vpop.f32.mrf.mxu0
      %v5492 = vadd.f32 %v5463, %v5491
      %5493 = vdwg.mxu0
      %v5494 = vadd.f32 %v5305, %v5417
      %v5495 = vadd.f32 %v5306, %v5475
      %v5496 = vadd.f32 %v5307, %v5419
      %v5497 = vadd.f32 %v5308, %v5477
      %v5498 = vadd.f32 %v5309, %v5422
      %v5499 = vadd.f32 %v5310, %v5480
      %v5500 = vadd.f32 %v5311, %v5424
      %v5501 = vadd.f32 %v5312, %v5482
      %v5502 = vadd.f32 %v5313, %v5427
      %v5503 = vadd.f32 %v5314, %v5485
      %v5504 = vadd.f32 %v5315, %v5429
      %v5505 = vadd.f32 %v5316, %v5487
      %v5506 = vadd.f32 %v5317, %v5432
      %v5507 = vadd.f32 %v5318, %v5490
      %v5508 = vadd.f32 %v5319, %v5434
      %v5509 = vadd.f32 %v5320, %v5492
      %s5510 = scalar_lea.vmem %s164, 224
      %v5511 = vld [vmem:[%s5510] sm:$0xff]
      %v5512 = vld [vmem:[%s5510 + $0x8] sm:$0xff]
      %v5513 = vld [vmem:[%s5510 + $0x10] sm:$0xff]
      %v5514 = vld [vmem:[%s5510 + $0x18] sm:$0xff]
      %v5515 = vld [vmem:[%s5510 + $0x20] sm:$0xff]
      %v5516 = vld [vmem:[%s5510 + $0x28] sm:$0xff]
      %v5517 = vld [vmem:[%s5510 + $0x30] sm:$0xff]
      %v5518 = vld [vmem:[%s5510 + $0x38] sm:$0xff]
      %v5527 = vunpack.c.l.b16 %v5511
      %v5528 = vunpack.c.h.b16 %v5511
      %v5529 = vunpack.c.l.b16 %v5512
      %v5530 = vunpack.c.h.b16 %v5512
      %v5531 = vunpack.c.l.b16 %v5513
      %v5532 = vunpack.c.h.b16 %v5513
      %v5533 = vunpack.c.l.b16 %v5514
      %v5534 = vunpack.c.h.b16 %v5514
      %v5535 = vunpack.c.l.b16 %v5515
      %v5536 = vunpack.c.h.b16 %v5515
      %v5537 = vunpack.c.l.b16 %v5516
      %v5538 = vunpack.c.h.b16 %v5516
      %v5539 = vunpack.c.l.b16 %v5517
      %v5540 = vunpack.c.h.b16 %v5517
      %v5541 = vunpack.c.l.b16 %v5518
      %v5542 = vunpack.c.h.b16 %v5518
      %v5543 = vpack.c.b16 %v5529, %v5527
      %v5544 = vpack.c.b16 %v5530, %v5528
      %v5545 = vpack.c.b16 %v5533, %v5531
      %v5546 = vpack.c.b16 %v5534, %v5532
      %v5547 = vpack.c.b16 %v5537, %v5535
      %v5548 = vpack.c.b16 %v5538, %v5536
      %v5549 = vpack.c.b16 %v5541, %v5539
      %v5550 = vpack.c.b16 %v5542, %v5540
      %v5556 = vsel %vm391, %v5544, 0
      %v5559 = vsel %vm391, %v5546, 0
      %v5562 = vsel %vm391, %v5548, 0
      %v5565 = vsel %vm391, %v5550, 0
      %5567 = vmatpush.bf16.msra.mxu0 %v2326
      %5568 = vmatpush.bf16.msra.mxu0 %v2324
      %5569 = vmatpush.bf16.msra.mxu0 %v2322
      %5570 = vmatpush.bf16.msra.mxu0 %v2320
      %5571 = vmatpush.bf16.msra.mxu0 %v2318
      %5572 = vmatpush.bf16.msra.mxu0 %v2316
      %5573 = vmatpush.bf16.msra.mxu0 %v2314
      %5574 = vmatpush.bf16.msra.mxu0 %v2312
      %5575 = vmatmul.bf16.gmra.mxu0 %v5543
      %v5576 = vpop.f32.mrf.mxu0
      %v5577 = vadd.f32 0.0, %v5576
      %v5578 = vpop.f32.mrf.mxu0
      %v5579 = vadd.f32 0.0, %v5578
      %5580 = vmatmul.bf16.gmra.mxu0 %v5545
      %v5581 = vpop.f32.mrf.mxu0
      %v5582 = vadd.f32 0.0, %v5581
      %v5583 = vpop.f32.mrf.mxu0
      %v5584 = vadd.f32 0.0, %v5583
      %5585 = vmatmul.bf16.gmra.mxu0 %v5547
      %v5586 = vpop.f32.mrf.mxu0
      %v5587 = vadd.f32 0.0, %v5586
      %v5588 = vpop.f32.mrf.mxu0
      %v5589 = vadd.f32 0.0, %v5588
      %5590 = vmatmul.bf16.gmra.mxu0 %v5549
      %v5591 = vpop.f32.mrf.mxu0
      %v5592 = vadd.f32 0.0, %v5591
      %v5593 = vpop.f32.mrf.mxu0
      %v5594 = vadd.f32 0.0, %v5593
      %5595 = vdwg.mxu0
      %5596 = vmatpush.bf16.msra.mxu0 0
      %5597 = vmatpush.bf16.msra.mxu0 0
      %5598 = vmatpush.bf16.msra.mxu0 0
      %5599 = vmatpush.bf16.msra.mxu0 0
      %5600 = vmatpush.bf16.msra.mxu0 %v2371
      %5601 = vmatpush.bf16.msra.mxu0 %v2332
      %5602 = vmatpush.bf16.msra.mxu0 %v2330
      %5603 = vmatpush.bf16.msra.mxu0 %v2328
      %5604 = vmatmul.bf16.gmra.mxu0 %v5556
      %v5605 = vpop.f32.mrf.mxu0
      %v5606 = vadd.f32 %v5577, %v5605
      %v5607 = vpop.f32.mrf.mxu0
      %v5608 = vadd.f32 %v5579, %v5607
      %5609 = vmatmul.bf16.gmra.mxu0 %v5559
      %v5610 = vpop.f32.mrf.mxu0
      %v5611 = vadd.f32 %v5582, %v5610
      %v5612 = vpop.f32.mrf.mxu0
      %v5613 = vadd.f32 %v5584, %v5612
      %5614 = vmatmul.bf16.gmra.mxu0 %v5562
      %v5615 = vpop.f32.mrf.mxu0
      %v5616 = vadd.f32 %v5587, %v5615
      %v5617 = vpop.f32.mrf.mxu0
      %v5618 = vadd.f32 %v5589, %v5617
      %5619 = vmatmul.bf16.gmra.mxu0 %v5565
      %v5620 = vpop.f32.mrf.mxu0
      %v5621 = vadd.f32 %v5592, %v5620
      %v5622 = vpop.f32.mrf.mxu0
      %v5623 = vadd.f32 %v5594, %v5622
      %5624 = vdwg.mxu0
      %5625 = vmatpush.bf16.msra.mxu0 %v2327
      %5626 = vmatpush.bf16.msra.mxu0 %v2325
      %5627 = vmatpush.bf16.msra.mxu0 %v2323
      %5628 = vmatpush.bf16.msra.mxu0 %v2321
      %5629 = vmatpush.bf16.msra.mxu0 %v2319
      %5630 = vmatpush.bf16.msra.mxu0 %v2317
      %5631 = vmatpush.bf16.msra.mxu0 %v2315
      %5632 = vmatpush.bf16.msra.mxu0 %v2313
      %5633 = vmatmul.bf16.gmra.mxu0 %v5543
      %v5634 = vpop.f32.mrf.mxu0
      %v5635 = vadd.f32 0.0, %v5634
      %v5636 = vpop.f32.mrf.mxu0
      %v5637 = vadd.f32 0.0, %v5636
      %5638 = vmatmul.bf16.gmra.mxu0 %v5545
      %v5639 = vpop.f32.mrf.mxu0
      %v5640 = vadd.f32 0.0, %v5639
      %v5641 = vpop.f32.mrf.mxu0
      %v5642 = vadd.f32 0.0, %v5641
      %5643 = vmatmul.bf16.gmra.mxu0 %v5547
      %v5644 = vpop.f32.mrf.mxu0
      %v5645 = vadd.f32 0.0, %v5644
      %v5646 = vpop.f32.mrf.mxu0
      %v5647 = vadd.f32 0.0, %v5646
      %5648 = vmatmul.bf16.gmra.mxu0 %v5549
      %v5649 = vpop.f32.mrf.mxu0
      %v5650 = vadd.f32 0.0, %v5649
      %v5651 = vpop.f32.mrf.mxu0
      %v5652 = vadd.f32 0.0, %v5651
      %5653 = vdwg.mxu0
      %5654 = vmatpush.bf16.msra.mxu0 0
      %5655 = vmatpush.bf16.msra.mxu0 0
      %5656 = vmatpush.bf16.msra.mxu0 0
      %5657 = vmatpush.bf16.msra.mxu0 0
      %5658 = vmatpush.bf16.msra.mxu0 %v2374
      %5659 = vmatpush.bf16.msra.mxu0 %v2333
      %5660 = vmatpush.bf16.msra.mxu0 %v2331
      %5661 = vmatpush.bf16.msra.mxu0 %v2329
      %5662 = vmatmul.bf16.gmra.mxu0 %v5556
      %v5663 = vpop.f32.mrf.mxu0
      %v5664 = vadd.f32 %v5635, %v5663
      %v5665 = vpop.f32.mrf.mxu0
      %v5666 = vadd.f32 %v5637, %v5665
      %5667 = vmatmul.bf16.gmra.mxu0 %v5559
      %v5668 = vpop.f32.mrf.mxu0
      %v5669 = vadd.f32 %v5640, %v5668
      %v5670 = vpop.f32.mrf.mxu0
      %v5671 = vadd.f32 %v5642, %v5670
      %5672 = vmatmul.bf16.gmra.mxu0 %v5562
      %v5673 = vpop.f32.mrf.mxu0
      %v5674 = vadd.f32 %v5645, %v5673
      %v5675 = vpop.f32.mrf.mxu0
      %v5676 = vadd.f32 %v5647, %v5675
      %5677 = vmatmul.bf16.gmra.mxu0 %v5565
      %v5678 = vpop.f32.mrf.mxu0
      %v5679 = vadd.f32 %v5650, %v5678
      %v5680 = vpop.f32.mrf.mxu0
      %v5681 = vadd.f32 %v5652, %v5680
      %5682 = vdwg.mxu0
      %v5683 = vadd.f32 %v5494, %v5606
      %v5684 = vadd.f32 %v5495, %v5664
      %v5685 = vadd.f32 %v5496, %v5608
      %v5686 = vadd.f32 %v5497, %v5666
      %v5687 = vadd.f32 %v5498, %v5611
      %v5688 = vadd.f32 %v5499, %v5669
      %v5689 = vadd.f32 %v5500, %v5613
      %v5690 = vadd.f32 %v5501, %v5671
      %v5691 = vadd.f32 %v5502, %v5616
      %v5692 = vadd.f32 %v5503, %v5674
      %v5693 = vadd.f32 %v5504, %v5618
      %v5694 = vadd.f32 %v5505, %v5676
      %v5695 = vadd.f32 %v5506, %v5621
      %v5696 = vadd.f32 %v5507, %v5679
      %v5697 = vadd.f32 %v5508, %v5623
      %v5698 = vadd.f32 %v5509, %v5681
      %s5699 = scalar_lea.vmem %s164, 240
      %v5700 = vld [vmem:[%s5699] sm:$0xff]
      %v5701 = vld [vmem:[%s5699 + $0x8] sm:$0xff]
      %v5702 = vld [vmem:[%s5699 + $0x10] sm:$0xff]
      %v5703 = vld [vmem:[%s5699 + $0x18] sm:$0xff]
      %v5704 = vld [vmem:[%s5699 + $0x20] sm:$0xff]
      %v5705 = vld [vmem:[%s5699 + $0x28] sm:$0xff]
      %v5706 = vld [vmem:[%s5699 + $0x30] sm:$0xff]
      %v5707 = vld [vmem:[%s5699 + $0x38] sm:$0xff]
      %v5716 = vunpack.c.l.b16 %v5700
      %v5717 = vunpack.c.h.b16 %v5700
      %v5718 = vunpack.c.l.b16 %v5701
      %v5719 = vunpack.c.h.b16 %v5701
      %v5720 = vunpack.c.l.b16 %v5702
      %v5721 = vunpack.c.h.b16 %v5702
      %v5722 = vunpack.c.l.b16 %v5703
      %v5723 = vunpack.c.h.b16 %v5703
      %v5724 = vunpack.c.l.b16 %v5704
      %v5725 = vunpack.c.h.b16 %v5704
      %v5726 = vunpack.c.l.b16 %v5705
      %v5727 = vunpack.c.h.b16 %v5705
      %v5728 = vunpack.c.l.b16 %v5706
      %v5729 = vunpack.c.h.b16 %v5706
      %v5730 = vunpack.c.l.b16 %v5707
      %v5731 = vunpack.c.h.b16 %v5707
      %v5732 = vpack.c.b16 %v5718, %v5716
      %v5733 = vpack.c.b16 %v5719, %v5717
      %v5734 = vpack.c.b16 %v5722, %v5720
      %v5735 = vpack.c.b16 %v5723, %v5721
      %v5736 = vpack.c.b16 %v5726, %v5724
      %v5737 = vpack.c.b16 %v5727, %v5725
      %v5738 = vpack.c.b16 %v5730, %v5728
      %v5739 = vpack.c.b16 %v5731, %v5729
      %v5745 = vsel %vm391, %v5733, 0
      %v5748 = vsel %vm391, %v5735, 0
      %v5751 = vsel %vm391, %v5737, 0
      %v5754 = vsel %vm391, %v5739, 0
      %5756 = vmatpush.bf16.msra.mxu0 %v2664
      %5757 = vmatpush.bf16.msra.mxu0 %v2662
      %5758 = vmatpush.bf16.msra.mxu0 %v2660
      %5759 = vmatpush.bf16.msra.mxu0 %v2658
      %5760 = vmatpush.bf16.msra.mxu0 %v2656
      %5761 = vmatpush.bf16.msra.mxu0 %v2654
      %5762 = vmatpush.bf16.msra.mxu0 %v2652
      %5763 = vmatpush.bf16.msra.mxu0 %v2650
      %5764 = vmatmul.bf16.gmra.mxu0 %v5732
      %v5765 = vpop.f32.mrf.mxu0
      %v5766 = vadd.f32 0.0, %v5765
      %v5767 = vpop.f32.mrf.mxu0
      %v5768 = vadd.f32 0.0, %v5767
      %5769 = vmatmul.bf16.gmra.mxu0 %v5734
      %v5770 = vpop.f32.mrf.mxu0
      %v5771 = vadd.f32 0.0, %v5770
      %v5772 = vpop.f32.mrf.mxu0
      %v5773 = vadd.f32 0.0, %v5772
      %5774 = vmatmul.bf16.gmra.mxu0 %v5736
      %v5775 = vpop.f32.mrf.mxu0
      %v5776 = vadd.f32 0.0, %v5775
      %v5777 = vpop.f32.mrf.mxu0
      %v5778 = vadd.f32 0.0, %v5777
      %5779 = vmatmul.bf16.gmra.mxu0 %v5738
      %v5780 = vpop.f32.mrf.mxu0
      %v5781 = vadd.f32 0.0, %v5780
      %v5782 = vpop.f32.mrf.mxu0
      %v5783 = vadd.f32 0.0, %v5782
      %5784 = vdwg.mxu0
      %5785 = vmatpush.bf16.msra.mxu0 0
      %5786 = vmatpush.bf16.msra.mxu0 0
      %5787 = vmatpush.bf16.msra.mxu0 0
      %5788 = vmatpush.bf16.msra.mxu0 0
      %5789 = vmatpush.bf16.msra.mxu0 %v2709
      %5790 = vmatpush.bf16.msra.mxu0 %v2670
      %5791 = vmatpush.bf16.msra.mxu0 %v2668
      %5792 = vmatpush.bf16.msra.mxu0 %v2666
      %5793 = vmatmul.bf16.gmra.mxu0 %v5745
      %v5794 = vpop.f32.mrf.mxu0
      %v5795 = vadd.f32 %v5766, %v5794
      %v5796 = vpop.f32.mrf.mxu0
      %v5797 = vadd.f32 %v5768, %v5796
      %5798 = vmatmul.bf16.gmra.mxu0 %v5748
      %v5799 = vpop.f32.mrf.mxu0
      %v5800 = vadd.f32 %v5771, %v5799
      %v5801 = vpop.f32.mrf.mxu0
      %v5802 = vadd.f32 %v5773, %v5801
      %5803 = vmatmul.bf16.gmra.mxu0 %v5751
      %v5804 = vpop.f32.mrf.mxu0
      %v5805 = vadd.f32 %v5776, %v5804
      %v5806 = vpop.f32.mrf.mxu0
      %v5807 = vadd.f32 %v5778, %v5806
      %5808 = vmatmul.bf16.gmra.mxu0 %v5754
      %v5809 = vpop.f32.mrf.mxu0
      %v5810 = vadd.f32 %v5781, %v5809
      %v5811 = vpop.f32.mrf.mxu0
      %v5812 = vadd.f32 %v5783, %v5811
      %5813 = vdwg.mxu0
      %5814 = vmatpush.bf16.msra.mxu0 %v2665
      %5815 = vmatpush.bf16.msra.mxu0 %v2663
      %5816 = vmatpush.bf16.msra.mxu0 %v2661
      %5817 = vmatpush.bf16.msra.mxu0 %v2659
      %5818 = vmatpush.bf16.msra.mxu0 %v2657
      %5819 = vmatpush.bf16.msra.mxu0 %v2655
      %5820 = vmatpush.bf16.msra.mxu0 %v2653
      %5821 = vmatpush.bf16.msra.mxu0 %v2651
      %5822 = vmatmul.bf16.gmra.mxu0 %v5732
      %v5823 = vpop.f32.mrf.mxu0
      %v5824 = vadd.f32 0.0, %v5823
      %v5825 = vpop.f32.mrf.mxu0
      %v5826 = vadd.f32 0.0, %v5825
      %5827 = vmatmul.bf16.gmra.mxu0 %v5734
      %v5828 = vpop.f32.mrf.mxu0
      %v5829 = vadd.f32 0.0, %v5828
      %v5830 = vpop.f32.mrf.mxu0
      %v5831 = vadd.f32 0.0, %v5830
      %5832 = vmatmul.bf16.gmra.mxu0 %v5736
      %v5833 = vpop.f32.mrf.mxu0
      %v5834 = vadd.f32 0.0, %v5833
      %v5835 = vpop.f32.mrf.mxu0
      %v5836 = vadd.f32 0.0, %v5835
      %5837 = vmatmul.bf16.gmra.mxu0 %v5738
      %v5838 = vpop.f32.mrf.mxu0
      %v5839 = vadd.f32 0.0, %v5838
      %v5840 = vpop.f32.mrf.mxu0
      %v5841 = vadd.f32 0.0, %v5840
      %5842 = vdwg.mxu0
      %5843 = vmatpush.bf16.msra.mxu0 0
      %5844 = vmatpush.bf16.msra.mxu0 0
      %5845 = vmatpush.bf16.msra.mxu0 0
      %5846 = vmatpush.bf16.msra.mxu0 0
      %5847 = vmatpush.bf16.msra.mxu0 %v2712
      %5848 = vmatpush.bf16.msra.mxu0 %v2671
      %5849 = vmatpush.bf16.msra.mxu0 %v2669
      %5850 = vmatpush.bf16.msra.mxu0 %v2667
      %5851 = vmatmul.bf16.gmra.mxu0 %v5745
      %v5852 = vpop.f32.mrf.mxu0
      %v5853 = vadd.f32 %v5824, %v5852
      %v5854 = vpop.f32.mrf.mxu0
      %v5855 = vadd.f32 %v5826, %v5854
      %5856 = vmatmul.bf16.gmra.mxu0 %v5748
      %v5857 = vpop.f32.mrf.mxu0
      %v5858 = vadd.f32 %v5829, %v5857
      %v5859 = vpop.f32.mrf.mxu0
      %v5860 = vadd.f32 %v5831, %v5859
      %5861 = vmatmul.bf16.gmra.mxu0 %v5751
      %v5862 = vpop.f32.mrf.mxu0
      %v5863 = vadd.f32 %v5834, %v5862
      %v5864 = vpop.f32.mrf.mxu0
      %v5865 = vadd.f32 %v5836, %v5864
      %5866 = vmatmul.bf16.gmra.mxu0 %v5754
      %v5867 = vpop.f32.mrf.mxu0
      %v5868 = vadd.f32 %v5839, %v5867
      %v5869 = vpop.f32.mrf.mxu0
      %v5870 = vadd.f32 %v5841, %v5869
      %5871 = vdwg.mxu0
      %v5872 = vadd.f32 %v5683, %v5795
      %v5873 = vadd.f32 %v5684, %v5853
      %v5874 = vadd.f32 %v5685, %v5797
      %v5875 = vadd.f32 %v5686, %v5855
      %v5876 = vadd.f32 %v5687, %v5800
      %v5877 = vadd.f32 %v5688, %v5858
      %v5878 = vadd.f32 %v5689, %v5802
      %v5879 = vadd.f32 %v5690, %v5860
      %v5880 = vadd.f32 %v5691, %v5805
      %v5881 = vadd.f32 %v5692, %v5863
      %v5882 = vadd.f32 %v5693, %v5807
      %v5883 = vadd.f32 %v5694, %v5865
      %v5884 = vadd.f32 %v5695, %v5810
      %v5885 = vadd.f32 %v5696, %v5868
      %v5886 = vadd.f32 %v5697, %v5812
      %v5887 = vadd.f32 %v5698, %v5870
      %s5888 = scalar_lea.vmem %s164, 256
      %v5889 = vld [vmem:[%s5888] sm:$0xff]
      %v5890 = vld [vmem:[%s5888 + $0x8] sm:$0xff]
      %v5891 = vld [vmem:[%s5888 + $0x10] sm:$0xff]
      %v5892 = vld [vmem:[%s5888 + $0x18] sm:$0xff]
      %v5893 = vld [vmem:[%s5888 + $0x20] sm:$0xff]
      %v5894 = vld [vmem:[%s5888 + $0x28] sm:$0xff]
      %v5895 = vld [vmem:[%s5888 + $0x30] sm:$0xff]
      %v5896 = vld [vmem:[%s5888 + $0x38] sm:$0xff]
      %v5905 = vunpack.c.l.b16 %v5889
      %v5906 = vunpack.c.h.b16 %v5889
      %v5907 = vunpack.c.l.b16 %v5890
      %v5908 = vunpack.c.h.b16 %v5890
      %v5909 = vunpack.c.l.b16 %v5891
      %v5910 = vunpack.c.h.b16 %v5891
      %v5911 = vunpack.c.l.b16 %v5892
      %v5912 = vunpack.c.h.b16 %v5892
      %v5913 = vunpack.c.l.b16 %v5893
      %v5914 = vunpack.c.h.b16 %v5893
      %v5915 = vunpack.c.l.b16 %v5894
      %v5916 = vunpack.c.h.b16 %v5894
      %v5917 = vunpack.c.l.b16 %v5895
      %v5918 = vunpack.c.h.b16 %v5895
      %v5919 = vunpack.c.l.b16 %v5896
      %v5920 = vunpack.c.h.b16 %v5896
      %v5921 = vpack.c.b16 %v5907, %v5905
      %v5922 = vpack.c.b16 %v5908, %v5906
      %v5923 = vpack.c.b16 %v5911, %v5909
      %v5924 = vpack.c.b16 %v5912, %v5910
      %v5925 = vpack.c.b16 %v5915, %v5913
      %v5926 = vpack.c.b16 %v5916, %v5914
      %v5927 = vpack.c.b16 %v5919, %v5917
      %v5928 = vpack.c.b16 %v5920, %v5918
      %v5934 = vsel %vm391, %v5922, 0
      %v5937 = vsel %vm391, %v5924, 0
      %v5940 = vsel %vm391, %v5926, 0
      %v5943 = vsel %vm391, %v5928, 0
      %5945 = vmatpush.bf16.msra.mxu0 %v3002
      %5946 = vmatpush.bf16.msra.mxu0 %v3000
      %5947 = vmatpush.bf16.msra.mxu0 %v2998
      %5948 = vmatpush.bf16.msra.mxu0 %v2996
      %5949 = vmatpush.bf16.msra.mxu0 %v2994
      %5950 = vmatpush.bf16.msra.mxu0 %v2992
      %5951 = vmatpush.bf16.msra.mxu0 %v2990
      %5952 = vmatpush.bf16.msra.mxu0 %v2988
      %5953 = vmatmul.bf16.gmra.mxu0 %v5921
      %v5954 = vpop.f32.mrf.mxu0
      %v5955 = vadd.f32 0.0, %v5954
      %v5956 = vpop.f32.mrf.mxu0
      %v5957 = vadd.f32 0.0, %v5956
      %5958 = vmatmul.bf16.gmra.mxu0 %v5923
      %v5959 = vpop.f32.mrf.mxu0
      %v5960 = vadd.f32 0.0, %v5959
      %v5961 = vpop.f32.mrf.mxu0
      %v5962 = vadd.f32 0.0, %v5961
      %5963 = vmatmul.bf16.gmra.mxu0 %v5925
      %v5964 = vpop.f32.mrf.mxu0
      %v5965 = vadd.f32 0.0, %v5964
      %v5966 = vpop.f32.mrf.mxu0
      %v5967 = vadd.f32 0.0, %v5966
      %5968 = vmatmul.bf16.gmra.mxu0 %v5927
      %v5969 = vpop.f32.mrf.mxu0
      %v5970 = vadd.f32 0.0, %v5969
      %v5971 = vpop.f32.mrf.mxu0
      %v5972 = vadd.f32 0.0, %v5971
      %5973 = vdwg.mxu0
      %5974 = vmatpush.bf16.msra.mxu0 0
      %5975 = vmatpush.bf16.msra.mxu0 0
      %5976 = vmatpush.bf16.msra.mxu0 0
      %5977 = vmatpush.bf16.msra.mxu0 0
      %5978 = vmatpush.bf16.msra.mxu0 %v3047
      %5979 = vmatpush.bf16.msra.mxu0 %v3008
      %5980 = vmatpush.bf16.msra.mxu0 %v3006
      %5981 = vmatpush.bf16.msra.mxu0 %v3004
      %5982 = vmatmul.bf16.gmra.mxu0 %v5934
      %v5983 = vpop.f32.mrf.mxu0
      %v5984 = vadd.f32 %v5955, %v5983
      %v5985 = vpop.f32.mrf.mxu0
      %v5986 = vadd.f32 %v5957, %v5985
      %5987 = vmatmul.bf16.gmra.mxu0 %v5937
      %v5988 = vpop.f32.mrf.mxu0
      %v5989 = vadd.f32 %v5960, %v5988
      %v5990 = vpop.f32.mrf.mxu0
      %v5991 = vadd.f32 %v5962, %v5990
      %5992 = vmatmul.bf16.gmra.mxu0 %v5940
      %v5993 = vpop.f32.mrf.mxu0
      %v5994 = vadd.f32 %v5965, %v5993
      %v5995 = vpop.f32.mrf.mxu0
      %v5996 = vadd.f32 %v5967, %v5995
      %5997 = vmatmul.bf16.gmra.mxu0 %v5943
      %v5998 = vpop.f32.mrf.mxu0
      %v5999 = vadd.f32 %v5970, %v5998
      %v6000 = vpop.f32.mrf.mxu0
      %v6001 = vadd.f32 %v5972, %v6000
      %6002 = vdwg.mxu0
      %6003 = vmatpush.bf16.msra.mxu0 %v3003
      %6004 = vmatpush.bf16.msra.mxu0 %v3001
      %6005 = vmatpush.bf16.msra.mxu0 %v2999
      %6006 = vmatpush.bf16.msra.mxu0 %v2997
      %6007 = vmatpush.bf16.msra.mxu0 %v2995
      %6008 = vmatpush.bf16.msra.mxu0 %v2993
      %6009 = vmatpush.bf16.msra.mxu0 %v2991
      %6010 = vmatpush.bf16.msra.mxu0 %v2989
      %6011 = vmatmul.bf16.gmra.mxu0 %v5921
      %v6012 = vpop.f32.mrf.mxu0
      %v6013 = vadd.f32 0.0, %v6012
      %v6014 = vpop.f32.mrf.mxu0
      %v6015 = vadd.f32 0.0, %v6014
      %6016 = vmatmul.bf16.gmra.mxu0 %v5923
      %v6017 = vpop.f32.mrf.mxu0
      %v6018 = vadd.f32 0.0, %v6017
      %v6019 = vpop.f32.mrf.mxu0
      %v6020 = vadd.f32 0.0, %v6019
      %6021 = vmatmul.bf16.gmra.mxu0 %v5925
      %v6022 = vpop.f32.mrf.mxu0
      %v6023 = vadd.f32 0.0, %v6022
      %v6024 = vpop.f32.mrf.mxu0
      %v6025 = vadd.f32 0.0, %v6024
      %6026 = vmatmul.bf16.gmra.mxu0 %v5927
      %v6027 = vpop.f32.mrf.mxu0
      %v6028 = vadd.f32 0.0, %v6027
      %v6029 = vpop.f32.mrf.mxu0
      %v6030 = vadd.f32 0.0, %v6029
      %6031 = vdwg.mxu0
      %6032 = vmatpush.bf16.msra.mxu0 0
      %6033 = vmatpush.bf16.msra.mxu0 0
      %6034 = vmatpush.bf16.msra.mxu0 0
      %6035 = vmatpush.bf16.msra.mxu0 0
      %6036 = vmatpush.bf16.msra.mxu0 %v3050
      %6037 = vmatpush.bf16.msra.mxu0 %v3009
      %6038 = vmatpush.bf16.msra.mxu0 %v3007
      %6039 = vmatpush.bf16.msra.mxu0 %v3005
      %6040 = vmatmul.bf16.gmra.mxu0 %v5934
      %v6041 = vpop.f32.mrf.mxu0
      %v6042 = vadd.f32 %v6013, %v6041
      %v6043 = vpop.f32.mrf.mxu0
      %v6044 = vadd.f32 %v6015, %v6043
      %6045 = vmatmul.bf16.gmra.mxu0 %v5937
      %v6046 = vpop.f32.mrf.mxu0
      %v6047 = vadd.f32 %v6018, %v6046
      %v6048 = vpop.f32.mrf.mxu0
      %v6049 = vadd.f32 %v6020, %v6048
      %6050 = vmatmul.bf16.gmra.mxu0 %v5940
      %v6051 = vpop.f32.mrf.mxu0
      %v6052 = vadd.f32 %v6023, %v6051
      %v6053 = vpop.f32.mrf.mxu0
      %v6054 = vadd.f32 %v6025, %v6053
      %6055 = vmatmul.bf16.gmra.mxu0 %v5943
      %v6056 = vpop.f32.mrf.mxu0
      %v6057 = vadd.f32 %v6028, %v6056
      %v6058 = vpop.f32.mrf.mxu0
      %v6059 = vadd.f32 %v6030, %v6058
      %6060 = vdwg.mxu0
      %v6061 = vadd.f32 %v5872, %v5984
      %v6062 = vadd.f32 %v5873, %v6042
      %v6063 = vadd.f32 %v5874, %v5986
      %v6064 = vadd.f32 %v5875, %v6044
      %v6065 = vadd.f32 %v5876, %v5989
      %v6066 = vadd.f32 %v5877, %v6047
      %v6067 = vadd.f32 %v5878, %v5991
      %v6068 = vadd.f32 %v5879, %v6049
      %v6069 = vadd.f32 %v5880, %v5994
      %v6070 = vadd.f32 %v5881, %v6052
      %v6071 = vadd.f32 %v5882, %v5996
      %v6072 = vadd.f32 %v5883, %v6054
      %v6073 = vadd.f32 %v5884, %v5999
      %v6074 = vadd.f32 %v5885, %v6057
      %v6075 = vadd.f32 %v5886, %v6001
      %v6076 = vadd.f32 %v5887, %v6059
      %v6077 = vadd.f32 %v6061, %v3185
      %v6078 = vadd.f32 %v6062, %v3186
      %v6079 = vadd.f32 %v6063, %v3185
      %v6080 = vadd.f32 %v6064, %v3186
      %v6081 = vadd.f32 %v6065, %v3185
      %v6082 = vadd.f32 %v6066, %v3186
      %v6083 = vadd.f32 %v6067, %v3185
      %v6084 = vadd.f32 %v6068, %v3186
      %v6085 = vadd.f32 %v6069, %v3185
      %v6086 = vadd.f32 %v6070, %v3186
      %v6087 = vadd.f32 %v6071, %v3185
      %v6088 = vadd.f32 %v6072, %v3186
      %v6089 = vadd.f32 %v6073, %v3185
      %v6090 = vadd.f32 %v6074, %v3186
      %v6091 = vadd.f32 %v6075, %v3185
      %v6092 = vadd.f32 %v6076, %v3186
      %v6093 = vmax.f32 %v6077, 0.0
      %v6094 = vmax.f32 %v6078, 0.0
      %v6095 = vmax.f32 %v6079, 0.0
      %v6096 = vmax.f32 %v6080, 0.0
      %v6097 = vmax.f32 %v6081, 0.0
      %v6098 = vmax.f32 %v6082, 0.0
      %v6099 = vmax.f32 %v6083, 0.0
      %v6100 = vmax.f32 %v6084, 0.0
      %v6101 = vmax.f32 %v6085, 0.0
      %v6102 = vmax.f32 %v6086, 0.0
      %v6103 = vmax.f32 %v6087, 0.0
      %v6104 = vmax.f32 %v6088, 0.0
      %v6105 = vmax.f32 %v6089, 0.0
      %v6106 = vmax.f32 %v6090, 0.0
      %v6107 = vmax.f32 %v6091, 0.0
      %v6108 = vmax.f32 %v6092, 0.0
      %v6109 = vadd.f32 %v6093, %v6095
      %v6110 = vadd.f32 %v6109, %v6097
      %v6111 = vadd.f32 %v6110, %v6099
      %v6112 = vadd.f32 %v6111, %v6101
      %v6113 = vadd.f32 %v6112, %v6103
      %v6114 = vadd.f32 %v6113, %v6105
      %v6115 = vadd.f32 %v6114, %v6107
      %v6116 = vrot.slane %v6115, 4
      %v6117 = vadd.f32 %v6115, %v6116
      %v6118 = vrot.slane %v6117, 2
      %v6119 = vadd.f32 %v6117, %v6118
      %v6120 = vrot.slane %v6119, 1
      %v6121 = vadd.f32 %v6119, %v6120
      %v6122 = vadd.f32 %v6094, %v6096
      %v6123 = vadd.f32 %v6122, %v6098
      %v6124 = vadd.f32 %v6123, %v6100
      %v6125 = vadd.f32 %v6124, %v6102
      %v6126 = vadd.f32 %v6125, %v6104
      %v6127 = vadd.f32 %v6126, %v6106
      %v6128 = vadd.f32 %v6127, %v6108
      %v6129 = vrot.slane %v6128, 4
      %v6130 = vadd.f32 %v6128, %v6129
      %v6131 = vrot.slane %v6130, 2
      %v6132 = vadd.f32 %v6130, %v6131
      %v6133 = vrot.slane %v6132, 1
      %v6134 = vadd.f32 %v6132, %v6133
      %v6135 = vadd.f32 %v4691, %v6121
      %v6136 = vadd.f32 %v4692, %v6134
      %6137 = vmatpush.bf16.msra.mxu0 %v359
      %6138 = vmatpush.bf16.msra.mxu0 %v357
      %6139 = vmatpush.bf16.msra.mxu0 %v355
      %6140 = vmatpush.bf16.msra.mxu0 %v353
      %6141 = vmatpush.bf16.msra.mxu0 %v351
      %6142 = vmatpush.bf16.msra.mxu0 %v349
      %6143 = vmatpush.bf16.msra.mxu0 %v347
      %6144 = vmatpush.bf16.msra.mxu0 %v345
      %6145 = vmatmul.bf16.gmra.mxu0 %v5354
      %v6146 = vpop.f32.mrf.mxu0
      %v6147 = vadd.f32 0.0, %v6146
      %v6148 = vpop.f32.mrf.mxu0
      %v6149 = vadd.f32 0.0, %v6148
      %6150 = vmatmul.bf16.gmra.mxu0 %v5356
      %v6151 = vpop.f32.mrf.mxu0
      %v6152 = vadd.f32 0.0, %v6151
      %v6153 = vpop.f32.mrf.mxu0
      %v6154 = vadd.f32 0.0, %v6153
      %6155 = vmatmul.bf16.gmra.mxu0 %v5358
      %v6156 = vpop.f32.mrf.mxu0
      %v6157 = vadd.f32 0.0, %v6156
      %v6158 = vpop.f32.mrf.mxu0
      %v6159 = vadd.f32 0.0, %v6158
      %6160 = vmatmul.bf16.gmra.mxu0 %v5360
      %v6161 = vpop.f32.mrf.mxu0
      %v6162 = vadd.f32 0.0, %v6161
      %v6163 = vpop.f32.mrf.mxu0
      %v6164 = vadd.f32 0.0, %v6163
      %6165 = vdwg.mxu0
      %6166 = vmatpush.bf16.msra.mxu0 0
      %6167 = vmatpush.bf16.msra.mxu0 0
      %6168 = vmatpush.bf16.msra.mxu0 0
      %6169 = vmatpush.bf16.msra.mxu0 0
      %6170 = vmatpush.bf16.msra.mxu0 %v409
      %6171 = vmatpush.bf16.msra.mxu0 %v365
      %6172 = vmatpush.bf16.msra.mxu0 %v363
      %6173 = vmatpush.bf16.msra.mxu0 %v361
      %6174 = vmatmul.bf16.gmra.mxu0 %v5367
      %v6175 = vpop.f32.mrf.mxu0
      %v6176 = vadd.f32 %v6147, %v6175
      %v6177 = vpop.f32.mrf.mxu0
      %v6178 = vadd.f32 %v6149, %v6177
      %6179 = vmatmul.bf16.gmra.mxu0 %v5370
      %v6180 = vpop.f32.mrf.mxu0
      %v6181 = vadd.f32 %v6152, %v6180
      %v6182 = vpop.f32.mrf.mxu0
      %v6183 = vadd.f32 %v6154, %v6182
      %6184 = vmatmul.bf16.gmra.mxu0 %v5373
      %v6185 = vpop.f32.mrf.mxu0
      %v6186 = vadd.f32 %v6157, %v6185
      %v6187 = vpop.f32.mrf.mxu0
      %v6188 = vadd.f32 %v6159, %v6187
      %6189 = vmatmul.bf16.gmra.mxu0 %v5376
      %v6190 = vpop.f32.mrf.mxu0
      %v6191 = vadd.f32 %v6162, %v6190
      %v6192 = vpop.f32.mrf.mxu0
      %v6193 = vadd.f32 %v6164, %v6192
      %6194 = vdwg.mxu0
      %6195 = vmatpush.bf16.msra.mxu0 %v360
      %6196 = vmatpush.bf16.msra.mxu0 %v358
      %6197 = vmatpush.bf16.msra.mxu0 %v356
      %6198 = vmatpush.bf16.msra.mxu0 %v354
      %6199 = vmatpush.bf16.msra.mxu0 %v352
      %6200 = vmatpush.bf16.msra.mxu0 %v350
      %6201 = vmatpush.bf16.msra.mxu0 %v348
      %6202 = vmatpush.bf16.msra.mxu0 %v346
      %6203 = vmatmul.bf16.gmra.mxu0 %v5354
      %v6204 = vpop.f32.mrf.mxu0
      %v6205 = vadd.f32 0.0, %v6204
      %v6206 = vpop.f32.mrf.mxu0
      %v6207 = vadd.f32 0.0, %v6206
      %6208 = vmatmul.bf16.gmra.mxu0 %v5356
      %v6209 = vpop.f32.mrf.mxu0
      %v6210 = vadd.f32 0.0, %v6209
      %v6211 = vpop.f32.mrf.mxu0
      %v6212 = vadd.f32 0.0, %v6211
      %6213 = vmatmul.bf16.gmra.mxu0 %v5358
      %v6214 = vpop.f32.mrf.mxu0
      %v6215 = vadd.f32 0.0, %v6214
      %v6216 = vpop.f32.mrf.mxu0
      %v6217 = vadd.f32 0.0, %v6216
      %6218 = vmatmul.bf16.gmra.mxu0 %v5360
      %v6219 = vpop.f32.mrf.mxu0
      %v6220 = vadd.f32 0.0, %v6219
      %v6221 = vpop.f32.mrf.mxu0
      %v6222 = vadd.f32 0.0, %v6221
      %6223 = vdwg.mxu0
      %6224 = vmatpush.bf16.msra.mxu0 0
      %6225 = vmatpush.bf16.msra.mxu0 0
      %6226 = vmatpush.bf16.msra.mxu0 0
      %6227 = vmatpush.bf16.msra.mxu0 0
      %6228 = vmatpush.bf16.msra.mxu0 %v412
      %6229 = vmatpush.bf16.msra.mxu0 %v366
      %6230 = vmatpush.bf16.msra.mxu0 %v364
      %6231 = vmatpush.bf16.msra.mxu0 %v362
      %6232 = vmatmul.bf16.gmra.mxu0 %v5367
      %v6233 = vpop.f32.mrf.mxu0
      %v6234 = vadd.f32 %v6205, %v6233
      %v6235 = vpop.f32.mrf.mxu0
      %v6236 = vadd.f32 %v6207, %v6235
      %6237 = vmatmul.bf16.gmra.mxu0 %v5370
      %v6238 = vpop.f32.mrf.mxu0
      %v6239 = vadd.f32 %v6210, %v6238
      %v6240 = vpop.f32.mrf.mxu0
      %v6241 = vadd.f32 %v6212, %v6240
      %6242 = vmatmul.bf16.gmra.mxu0 %v5373
      %v6243 = vpop.f32.mrf.mxu0
      %v6244 = vadd.f32 %v6215, %v6243
      %v6245 = vpop.f32.mrf.mxu0
      %v6246 = vadd.f32 %v6217, %v6245
      %6247 = vmatmul.bf16.gmra.mxu0 %v5376
      %v6248 = vpop.f32.mrf.mxu0
      %v6249 = vadd.f32 %v6220, %v6248
      %v6250 = vpop.f32.mrf.mxu0
      %v6251 = vadd.f32 %v6222, %v6250
      %6252 = vdwg.mxu0
      %6253 = vmatpush.bf16.msra.mxu0 %v652
      %6254 = vmatpush.bf16.msra.mxu0 %v650
      %6255 = vmatpush.bf16.msra.mxu0 %v648
      %6256 = vmatpush.bf16.msra.mxu0 %v646
      %6257 = vmatpush.bf16.msra.mxu0 %v644
      %6258 = vmatpush.bf16.msra.mxu0 %v642
      %6259 = vmatpush.bf16.msra.mxu0 %v640
      %6260 = vmatpush.bf16.msra.mxu0 %v638
      %6261 = vmatmul.bf16.gmra.mxu0 %v4477
      %v6262 = vpop.f32.mrf.mxu0
      %v6263 = vadd.f32 %v6176, %v6262
      %v6264 = vpop.f32.mrf.mxu0
      %v6265 = vadd.f32 %v6178, %v6264
      %6266 = vmatmul.bf16.gmra.mxu0 %v4479
      %v6267 = vpop.f32.mrf.mxu0
      %v6268 = vadd.f32 %v6181, %v6267
      %v6269 = vpop.f32.mrf.mxu0
      %v6270 = vadd.f32 %v6183, %v6269
      %6271 = vmatmul.bf16.gmra.mxu0 %v4481
      %v6272 = vpop.f32.mrf.mxu0
      %v6273 = vadd.f32 %v6186, %v6272
      %v6274 = vpop.f32.mrf.mxu0
      %v6275 = vadd.f32 %v6188, %v6274
      %6276 = vmatmul.bf16.gmra.mxu0 %v4483
      %v6277 = vpop.f32.mrf.mxu0
      %v6278 = vadd.f32 %v6191, %v6277
      %v6279 = vpop.f32.mrf.mxu0
      %v6280 = vadd.f32 %v6193, %v6279
      %6281 = vdwg.mxu0
      %6282 = vmatpush.bf16.msra.mxu0 0
      %6283 = vmatpush.bf16.msra.mxu0 0
      %6284 = vmatpush.bf16.msra.mxu0 0
      %6285 = vmatpush.bf16.msra.mxu0 0
      %6286 = vmatpush.bf16.msra.mxu0 %v697
      %6287 = vmatpush.bf16.msra.mxu0 %v658
      %6288 = vmatpush.bf16.msra.mxu0 %v656
      %6289 = vmatpush.bf16.msra.mxu0 %v654
      %6290 = vmatmul.bf16.gmra.mxu0 %v4490
      %v6291 = vpop.f32.mrf.mxu0
      %v6292 = vadd.f32 %v6263, %v6291
      %v6293 = vpop.f32.mrf.mxu0
      %v6294 = vadd.f32 %v6265, %v6293
      %6295 = vmatmul.bf16.gmra.mxu0 %v4493
      %v6296 = vpop.f32.mrf.mxu0
      %v6297 = vadd.f32 %v6268, %v6296
      %v6298 = vpop.f32.mrf.mxu0
      %v6299 = vadd.f32 %v6270, %v6298
      %6300 = vmatmul.bf16.gmra.mxu0 %v4496
      %v6301 = vpop.f32.mrf.mxu0
      %v6302 = vadd.f32 %v6273, %v6301
      %v6303 = vpop.f32.mrf.mxu0
      %v6304 = vadd.f32 %v6275, %v6303
      %6305 = vmatmul.bf16.gmra.mxu0 %v4499
      %v6306 = vpop.f32.mrf.mxu0
      %v6307 = vadd.f32 %v6278, %v6306
      %v6308 = vpop.f32.mrf.mxu0
      %v6309 = vadd.f32 %v6280, %v6308
      %6310 = vdwg.mxu0
      %6311 = vmatpush.bf16.msra.mxu0 %v653
      %6312 = vmatpush.bf16.msra.mxu0 %v651
      %6313 = vmatpush.bf16.msra.mxu0 %v649
      %6314 = vmatpush.bf16.msra.mxu0 %v647
      %6315 = vmatpush.bf16.msra.mxu0 %v645
      %6316 = vmatpush.bf16.msra.mxu0 %v643
      %6317 = vmatpush.bf16.msra.mxu0 %v641
      %6318 = vmatpush.bf16.msra.mxu0 %v639
      %6319 = vmatmul.bf16.gmra.mxu0 %v4477
      %v6320 = vpop.f32.mrf.mxu0
      %v6321 = vadd.f32 %v6234, %v6320
      %v6322 = vpop.f32.mrf.mxu0
      %v6323 = vadd.f32 %v6236, %v6322
      %6324 = vmatmul.bf16.gmra.mxu0 %v4479
      %v6325 = vpop.f32.mrf.mxu0
      %v6326 = vadd.f32 %v6239, %v6325
      %v6327 = vpop.f32.mrf.mxu0
      %v6328 = vadd.f32 %v6241, %v6327
      %6329 = vmatmul.bf16.gmra.mxu0 %v4481
      %v6330 = vpop.f32.mrf.mxu0
      %v6331 = vadd.f32 %v6244, %v6330
      %v6332 = vpop.f32.mrf.mxu0
      %v6333 = vadd.f32 %v6246, %v6332
      %6334 = vmatmul.bf16.gmra.mxu0 %v4483
      %v6335 = vpop.f32.mrf.mxu0
      %v6336 = vadd.f32 %v6249, %v6335
      %v6337 = vpop.f32.mrf.mxu0
      %v6338 = vadd.f32 %v6251, %v6337
      %6339 = vdwg.mxu0
      %6340 = vmatpush.bf16.msra.mxu0 0
      %6341 = vmatpush.bf16.msra.mxu0 0
      %6342 = vmatpush.bf16.msra.mxu0 0
      %6343 = vmatpush.bf16.msra.mxu0 0
      %6344 = vmatpush.bf16.msra.mxu0 %v700
      %6345 = vmatpush.bf16.msra.mxu0 %v659
      %6346 = vmatpush.bf16.msra.mxu0 %v657
      %6347 = vmatpush.bf16.msra.mxu0 %v655
      %6348 = vmatmul.bf16.gmra.mxu0 %v4490
      %v6349 = vpop.f32.mrf.mxu0
      %v6350 = vadd.f32 %v6321, %v6349
      %v6351 = vpop.f32.mrf.mxu0
      %v6352 = vadd.f32 %v6323, %v6351
      %6353 = vmatmul.bf16.gmra.mxu0 %v4493
      %v6354 = vpop.f32.mrf.mxu0
      %v6355 = vadd.f32 %v6326, %v6354
      %v6356 = vpop.f32.mrf.mxu0
      %v6357 = vadd.f32 %v6328, %v6356
      %6358 = vmatmul.bf16.gmra.mxu0 %v4496
      %v6359 = vpop.f32.mrf.mxu0
      %v6360 = vadd.f32 %v6331, %v6359
      %v6361 = vpop.f32.mrf.mxu0
      %v6362 = vadd.f32 %v6333, %v6361
      %6363 = vmatmul.bf16.gmra.mxu0 %v4499
      %v6364 = vpop.f32.mrf.mxu0
      %v6365 = vadd.f32 %v6336, %v6364
      %v6366 = vpop.f32.mrf.mxu0
      %v6367 = vadd.f32 %v6338, %v6366
      %6368 = vdwg.mxu0
      %6369 = vmatpush.bf16.msra.mxu0 %v974
      %6370 = vmatpush.bf16.msra.mxu0 %v972
      %6371 = vmatpush.bf16.msra.mxu0 %v970
      %6372 = vmatpush.bf16.msra.mxu0 %v968
      %6373 = vmatpush.bf16.msra.mxu0 %v966
      %6374 = vmatpush.bf16.msra.mxu0 %v964
      %6375 = vmatpush.bf16.msra.mxu0 %v962
      %6376 = vmatpush.bf16.msra.mxu0 %v960
      %6377 = vmatmul.bf16.gmra.mxu0 %v5543
      %v6378 = vpop.f32.mrf.mxu0
      %v6379 = vadd.f32 0.0, %v6378
      %v6380 = vpop.f32.mrf.mxu0
      %v6381 = vadd.f32 0.0, %v6380
      %6382 = vmatmul.bf16.gmra.mxu0 %v5545
      %v6383 = vpop.f32.mrf.mxu0
      %v6384 = vadd.f32 0.0, %v6383
      %v6385 = vpop.f32.mrf.mxu0
      %v6386 = vadd.f32 0.0, %v6385
      %6387 = vmatmul.bf16.gmra.mxu0 %v5547
      %v6388 = vpop.f32.mrf.mxu0
      %v6389 = vadd.f32 0.0, %v6388
      %v6390 = vpop.f32.mrf.mxu0
      %v6391 = vadd.f32 0.0, %v6390
      %6392 = vmatmul.bf16.gmra.mxu0 %v5549
      %v6393 = vpop.f32.mrf.mxu0
      %v6394 = vadd.f32 0.0, %v6393
      %v6395 = vpop.f32.mrf.mxu0
      %v6396 = vadd.f32 0.0, %v6395
      %6397 = vdwg.mxu0
      %6398 = vmatpush.bf16.msra.mxu0 0
      %6399 = vmatpush.bf16.msra.mxu0 0
      %6400 = vmatpush.bf16.msra.mxu0 0
      %6401 = vmatpush.bf16.msra.mxu0 0
      %6402 = vmatpush.bf16.msra.mxu0 %v1019
      %6403 = vmatpush.bf16.msra.mxu0 %v980
      %6404 = vmatpush.bf16.msra.mxu0 %v978
      %6405 = vmatpush.bf16.msra.mxu0 %v976
      %6406 = vmatmul.bf16.gmra.mxu0 %v5556
      %v6407 = vpop.f32.mrf.mxu0
      %v6408 = vadd.f32 %v6379, %v6407
      %v6409 = vpop.f32.mrf.mxu0
      %v6410 = vadd.f32 %v6381, %v6409
      %6411 = vmatmul.bf16.gmra.mxu0 %v5559
      %v6412 = vpop.f32.mrf.mxu0
      %v6413 = vadd.f32 %v6384, %v6412
      %v6414 = vpop.f32.mrf.mxu0
      %v6415 = vadd.f32 %v6386, %v6414
      %6416 = vmatmul.bf16.gmra.mxu0 %v5562
      %v6417 = vpop.f32.mrf.mxu0
      %v6418 = vadd.f32 %v6389, %v6417
      %v6419 = vpop.f32.mrf.mxu0
      %v6420 = vadd.f32 %v6391, %v6419
      %6421 = vmatmul.bf16.gmra.mxu0 %v5565
      %v6422 = vpop.f32.mrf.mxu0
      %v6423 = vadd.f32 %v6394, %v6422
      %v6424 = vpop.f32.mrf.mxu0
      %v6425 = vadd.f32 %v6396, %v6424
      %6426 = vdwg.mxu0
      %6427 = vmatpush.bf16.msra.mxu0 %v975
      %6428 = vmatpush.bf16.msra.mxu0 %v973
      %6429 = vmatpush.bf16.msra.mxu0 %v971
      %6430 = vmatpush.bf16.msra.mxu0 %v969
      %6431 = vmatpush.bf16.msra.mxu0 %v967
      %6432 = vmatpush.bf16.msra.mxu0 %v965
      %6433 = vmatpush.bf16.msra.mxu0 %v963
      %6434 = vmatpush.bf16.msra.mxu0 %v961
      %6435 = vmatmul.bf16.gmra.mxu0 %v5543
      %v6436 = vpop.f32.mrf.mxu0
      %v6437 = vadd.f32 0.0, %v6436
      %v6438 = vpop.f32.mrf.mxu0
      %v6439 = vadd.f32 0.0, %v6438
      %6440 = vmatmul.bf16.gmra.mxu0 %v5545
      %v6441 = vpop.f32.mrf.mxu0
      %v6442 = vadd.f32 0.0, %v6441
      %v6443 = vpop.f32.mrf.mxu0
      %v6444 = vadd.f32 0.0, %v6443
      %6445 = vmatmul.bf16.gmra.mxu0 %v5547
      %v6446 = vpop.f32.mrf.mxu0
      %v6447 = vadd.f32 0.0, %v6446
      %v6448 = vpop.f32.mrf.mxu0
      %v6449 = vadd.f32 0.0, %v6448
      %6450 = vmatmul.bf16.gmra.mxu0 %v5549
      %v6451 = vpop.f32.mrf.mxu0
      %v6452 = vadd.f32 0.0, %v6451
      %v6453 = vpop.f32.mrf.mxu0
      %v6454 = vadd.f32 0.0, %v6453
      %6455 = vdwg.mxu0
      %6456 = vmatpush.bf16.msra.mxu0 0
      %6457 = vmatpush.bf16.msra.mxu0 0
      %6458 = vmatpush.bf16.msra.mxu0 0
      %6459 = vmatpush.bf16.msra.mxu0 0
      %6460 = vmatpush.bf16.msra.mxu0 %v1022
      %6461 = vmatpush.bf16.msra.mxu0 %v981
      %6462 = vmatpush.bf16.msra.mxu0 %v979
      %6463 = vmatpush.bf16.msra.mxu0 %v977
      %6464 = vmatmul.bf16.gmra.mxu0 %v5556
      %v6465 = vpop.f32.mrf.mxu0
      %v6466 = vadd.f32 %v6437, %v6465
      %v6467 = vpop.f32.mrf.mxu0
      %v6468 = vadd.f32 %v6439, %v6467
      %6469 = vmatmul.bf16.gmra.mxu0 %v5559
      %v6470 = vpop.f32.mrf.mxu0
      %v6471 = vadd.f32 %v6442, %v6470
      %v6472 = vpop.f32.mrf.mxu0
      %v6473 = vadd.f32 %v6444, %v6472
      %6474 = vmatmul.bf16.gmra.mxu0 %v5562
      %v6475 = vpop.f32.mrf.mxu0
      %v6476 = vadd.f32 %v6447, %v6475
      %v6477 = vpop.f32.mrf.mxu0
      %v6478 = vadd.f32 %v6449, %v6477
      %6479 = vmatmul.bf16.gmra.mxu0 %v5565
      %v6480 = vpop.f32.mrf.mxu0
      %v6481 = vadd.f32 %v6452, %v6480
      %v6482 = vpop.f32.mrf.mxu0
      %v6483 = vadd.f32 %v6454, %v6482
      %6484 = vdwg.mxu0
      %v6485 = vadd.f32 %v6292, %v6408
      %v6486 = vadd.f32 %v6350, %v6466
      %v6487 = vadd.f32 %v6294, %v6410
      %v6488 = vadd.f32 %v6352, %v6468
      %v6489 = vadd.f32 %v6297, %v6413
      %v6490 = vadd.f32 %v6355, %v6471
      %v6491 = vadd.f32 %v6299, %v6415
      %v6492 = vadd.f32 %v6357, %v6473
      %v6493 = vadd.f32 %v6302, %v6418
      %v6494 = vadd.f32 %v6360, %v6476
      %v6495 = vadd.f32 %v6304, %v6420
      %v6496 = vadd.f32 %v6362, %v6478
      %v6497 = vadd.f32 %v6307, %v6423
      %v6498 = vadd.f32 %v6365, %v6481
      %v6499 = vadd.f32 %v6309, %v6425
      %v6500 = vadd.f32 %v6367, %v6483
      %6501 = vmatpush.bf16.msra.mxu0 %v1312
      %6502 = vmatpush.bf16.msra.mxu0 %v1310
      %6503 = vmatpush.bf16.msra.mxu0 %v1308
      %6504 = vmatpush.bf16.msra.mxu0 %v1306
      %6505 = vmatpush.bf16.msra.mxu0 %v1304
      %6506 = vmatpush.bf16.msra.mxu0 %v1302
      %6507 = vmatpush.bf16.msra.mxu0 %v1300
      %6508 = vmatpush.bf16.msra.mxu0 %v1298
      %6509 = vmatmul.bf16.gmra.mxu0 %v5732
      %v6510 = vpop.f32.mrf.mxu0
      %v6511 = vadd.f32 0.0, %v6510
      %v6512 = vpop.f32.mrf.mxu0
      %v6513 = vadd.f32 0.0, %v6512
      %6514 = vmatmul.bf16.gmra.mxu0 %v5734
      %v6515 = vpop.f32.mrf.mxu0
      %v6516 = vadd.f32 0.0, %v6515
      %v6517 = vpop.f32.mrf.mxu0
      %v6518 = vadd.f32 0.0, %v6517
      %6519 = vmatmul.bf16.gmra.mxu0 %v5736
      %v6520 = vpop.f32.mrf.mxu0
      %v6521 = vadd.f32 0.0, %v6520
      %v6522 = vpop.f32.mrf.mxu0
      %v6523 = vadd.f32 0.0, %v6522
      %6524 = vmatmul.bf16.gmra.mxu0 %v5738
      %v6525 = vpop.f32.mrf.mxu0
      %v6526 = vadd.f32 0.0, %v6525
      %v6527 = vpop.f32.mrf.mxu0
      %v6528 = vadd.f32 0.0, %v6527
      %6529 = vdwg.mxu0
      %6530 = vmatpush.bf16.msra.mxu0 0
      %6531 = vmatpush.bf16.msra.mxu0 0
      %6532 = vmatpush.bf16.msra.mxu0 0
      %6533 = vmatpush.bf16.msra.mxu0 0
      %6534 = vmatpush.bf16.msra.mxu0 %v1357
      %6535 = vmatpush.bf16.msra.mxu0 %v1318
      %6536 = vmatpush.bf16.msra.mxu0 %v1316
      %6537 = vmatpush.bf16.msra.mxu0 %v1314
      %6538 = vmatmul.bf16.gmra.mxu0 %v5745
      %v6539 = vpop.f32.mrf.mxu0
      %v6540 = vadd.f32 %v6511, %v6539
      %v6541 = vpop.f32.mrf.mxu0
      %v6542 = vadd.f32 %v6513, %v6541
      %6543 = vmatmul.bf16.gmra.mxu0 %v5748
      %v6544 = vpop.f32.mrf.mxu0
      %v6545 = vadd.f32 %v6516, %v6544
      %v6546 = vpop.f32.mrf.mxu0
      %v6547 = vadd.f32 %v6518, %v6546
      %6548 = vmatmul.bf16.gmra.mxu0 %v5751
      %v6549 = vpop.f32.mrf.mxu0
      %v6550 = vadd.f32 %v6521, %v6549
      %v6551 = vpop.f32.mrf.mxu0
      %v6552 = vadd.f32 %v6523, %v6551
      %6553 = vmatmul.bf16.gmra.mxu0 %v5754
      %v6554 = vpop.f32.mrf.mxu0
      %v6555 = vadd.f32 %v6526, %v6554
      %v6556 = vpop.f32.mrf.mxu0
      %v6557 = vadd.f32 %v6528, %v6556
      %6558 = vdwg.mxu0
      %6559 = vmatpush.bf16.msra.mxu0 %v1313
      %6560 = vmatpush.bf16.msra.mxu0 %v1311
      %6561 = vmatpush.bf16.msra.mxu0 %v1309
      %6562 = vmatpush.bf16.msra.mxu0 %v1307
      %6563 = vmatpush.bf16.msra.mxu0 %v1305
      %6564 = vmatpush.bf16.msra.mxu0 %v1303
      %6565 = vmatpush.bf16.msra.mxu0 %v1301
      %6566 = vmatpush.bf16.msra.mxu0 %v1299
      %6567 = vmatmul.bf16.gmra.mxu0 %v5732
      %v6568 = vpop.f32.mrf.mxu0
      %v6569 = vadd.f32 0.0, %v6568
      %v6570 = vpop.f32.mrf.mxu0
      %v6571 = vadd.f32 0.0, %v6570
      %6572 = vmatmul.bf16.gmra.mxu0 %v5734
      %v6573 = vpop.f32.mrf.mxu0
      %v6574 = vadd.f32 0.0, %v6573
      %v6575 = vpop.f32.mrf.mxu0
      %v6576 = vadd.f32 0.0, %v6575
      %6577 = vmatmul.bf16.gmra.mxu0 %v5736
      %v6578 = vpop.f32.mrf.mxu0
      %v6579 = vadd.f32 0.0, %v6578
      %v6580 = vpop.f32.mrf.mxu0
      %v6581 = vadd.f32 0.0, %v6580
      %6582 = vmatmul.bf16.gmra.mxu0 %v5738
      %v6583 = vpop.f32.mrf.mxu0
      %v6584 = vadd.f32 0.0, %v6583
      %v6585 = vpop.f32.mrf.mxu0
      %v6586 = vadd.f32 0.0, %v6585
      %6587 = vdwg.mxu0
      %6588 = vmatpush.bf16.msra.mxu0 0
      %6589 = vmatpush.bf16.msra.mxu0 0
      %6590 = vmatpush.bf16.msra.mxu0 0
      %6591 = vmatpush.bf16.msra.mxu0 0
      %6592 = vmatpush.bf16.msra.mxu0 %v1360
      %6593 = vmatpush.bf16.msra.mxu0 %v1319
      %6594 = vmatpush.bf16.msra.mxu0 %v1317
      %6595 = vmatpush.bf16.msra.mxu0 %v1315
      %6596 = vmatmul.bf16.gmra.mxu0 %v5745
      %v6597 = vpop.f32.mrf.mxu0
      %v6598 = vadd.f32 %v6569, %v6597
      %v6599 = vpop.f32.mrf.mxu0
      %v6600 = vadd.f32 %v6571, %v6599
      %6601 = vmatmul.bf16.gmra.mxu0 %v5748
      %v6602 = vpop.f32.mrf.mxu0
      %v6603 = vadd.f32 %v6574, %v6602
      %v6604 = vpop.f32.mrf.mxu0
      %v6605 = vadd.f32 %v6576, %v6604
      %6606 = vmatmul.bf16.gmra.mxu0 %v5751
      %v6607 = vpop.f32.mrf.mxu0
      %v6608 = vadd.f32 %v6579, %v6607
      %v6609 = vpop.f32.mrf.mxu0
      %v6610 = vadd.f32 %v6581, %v6609
      %6611 = vmatmul.bf16.gmra.mxu0 %v5754
      %v6612 = vpop.f32.mrf.mxu0
      %v6613 = vadd.f32 %v6584, %v6612
      %v6614 = vpop.f32.mrf.mxu0
      %v6615 = vadd.f32 %v6586, %v6614
      %6616 = vdwg.mxu0
      %v6617 = vadd.f32 %v6485, %v6540
      %v6618 = vadd.f32 %v6486, %v6598
      %v6619 = vadd.f32 %v6487, %v6542
      %v6620 = vadd.f32 %v6488, %v6600
      %v6621 = vadd.f32 %v6489, %v6545
      %v6622 = vadd.f32 %v6490, %v6603
      %v6623 = vadd.f32 %v6491, %v6547
      %v6624 = vadd.f32 %v6492, %v6605
      %v6625 = vadd.f32 %v6493, %v6550
      %v6626 = vadd.f32 %v6494, %v6608
      %v6627 = vadd.f32 %v6495, %v6552
      %v6628 = vadd.f32 %v6496, %v6610
      %v6629 = vadd.f32 %v6497, %v6555
      %v6630 = vadd.f32 %v6498, %v6613
      %v6631 = vadd.f32 %v6499, %v6557
      %v6632 = vadd.f32 %v6500, %v6615
      %6633 = vmatpush.bf16.msra.mxu0 %v1650
      %6634 = vmatpush.bf16.msra.mxu0 %v1648
      %6635 = vmatpush.bf16.msra.mxu0 %v1646
      %6636 = vmatpush.bf16.msra.mxu0 %v1644
      %6637 = vmatpush.bf16.msra.mxu0 %v1642
      %6638 = vmatpush.bf16.msra.mxu0 %v1640
      %6639 = vmatpush.bf16.msra.mxu0 %v1638
      %6640 = vmatpush.bf16.msra.mxu0 %v1636
      %6641 = vmatmul.bf16.gmra.mxu0 %v5921
      %v6642 = vpop.f32.mrf.mxu0
      %v6643 = vadd.f32 0.0, %v6642
      %v6644 = vpop.f32.mrf.mxu0
      %v6645 = vadd.f32 0.0, %v6644
      %6646 = vmatmul.bf16.gmra.mxu0 %v5923
      %v6647 = vpop.f32.mrf.mxu0
      %v6648 = vadd.f32 0.0, %v6647
      %v6649 = vpop.f32.mrf.mxu0
      %v6650 = vadd.f32 0.0, %v6649
      %6651 = vmatmul.bf16.gmra.mxu0 %v5925
      %v6652 = vpop.f32.mrf.mxu0
      %v6653 = vadd.f32 0.0, %v6652
      %v6654 = vpop.f32.mrf.mxu0
      %v6655 = vadd.f32 0.0, %v6654
      %6656 = vmatmul.bf16.gmra.mxu0 %v5927
      %v6657 = vpop.f32.mrf.mxu0
      %v6658 = vadd.f32 0.0, %v6657
      %v6659 = vpop.f32.mrf.mxu0
      %v6660 = vadd.f32 0.0, %v6659
      %6661 = vdwg.mxu0
      %6662 = vmatpush.bf16.msra.mxu0 0
      %6663 = vmatpush.bf16.msra.mxu0 0
      %6664 = vmatpush.bf16.msra.mxu0 0
      %6665 = vmatpush.bf16.msra.mxu0 0
      %6666 = vmatpush.bf16.msra.mxu0 %v1695
      %6667 = vmatpush.bf16.msra.mxu0 %v1656
      %6668 = vmatpush.bf16.msra.mxu0 %v1654
      %6669 = vmatpush.bf16.msra.mxu0 %v1652
      %6670 = vmatmul.bf16.gmra.mxu0 %v5934
      %v6671 = vpop.f32.mrf.mxu0
      %v6672 = vadd.f32 %v6643, %v6671
      %v6673 = vpop.f32.mrf.mxu0
      %v6674 = vadd.f32 %v6645, %v6673
      %6675 = vmatmul.bf16.gmra.mxu0 %v5937
      %v6676 = vpop.f32.mrf.mxu0
      %v6677 = vadd.f32 %v6648, %v6676
      %v6678 = vpop.f32.mrf.mxu0
      %v6679 = vadd.f32 %v6650, %v6678
      %6680 = vmatmul.bf16.gmra.mxu0 %v5940
      %v6681 = vpop.f32.mrf.mxu0
      %v6682 = vadd.f32 %v6653, %v6681
      %v6683 = vpop.f32.mrf.mxu0
      %v6684 = vadd.f32 %v6655, %v6683
      %6685 = vmatmul.bf16.gmra.mxu0 %v5943
      %v6686 = vpop.f32.mrf.mxu0
      %v6687 = vadd.f32 %v6658, %v6686
      %v6688 = vpop.f32.mrf.mxu0
      %v6689 = vadd.f32 %v6660, %v6688
      %6690 = vdwg.mxu0
      %6691 = vmatpush.bf16.msra.mxu0 %v1651
      %6692 = vmatpush.bf16.msra.mxu0 %v1649
      %6693 = vmatpush.bf16.msra.mxu0 %v1647
      %6694 = vmatpush.bf16.msra.mxu0 %v1645
      %6695 = vmatpush.bf16.msra.mxu0 %v1643
      %6696 = vmatpush.bf16.msra.mxu0 %v1641
      %6697 = vmatpush.bf16.msra.mxu0 %v1639
      %6698 = vmatpush.bf16.msra.mxu0 %v1637
      %6699 = vmatmul.bf16.gmra.mxu0 %v5921
      %v6700 = vpop.f32.mrf.mxu0
      %v6701 = vadd.f32 0.0, %v6700
      %v6702 = vpop.f32.mrf.mxu0
      %v6703 = vadd.f32 0.0, %v6702
      %6704 = vmatmul.bf16.gmra.mxu0 %v5923
      %v6705 = vpop.f32.mrf.mxu0
      %v6706 = vadd.f32 0.0, %v6705
      %v6707 = vpop.f32.mrf.mxu0
      %v6708 = vadd.f32 0.0, %v6707
      %6709 = vmatmul.bf16.gmra.mxu0 %v5925
      %v6710 = vpop.f32.mrf.mxu0
      %v6711 = vadd.f32 0.0, %v6710
      %v6712 = vpop.f32.mrf.mxu0
      %v6713 = vadd.f32 0.0, %v6712
      %6714 = vmatmul.bf16.gmra.mxu0 %v5927
      %v6715 = vpop.f32.mrf.mxu0
      %v6716 = vadd.f32 0.0, %v6715
      %v6717 = vpop.f32.mrf.mxu0
      %v6718 = vadd.f32 0.0, %v6717
      %6719 = vdwg.mxu0
      %6720 = vmatpush.bf16.msra.mxu0 0
      %6721 = vmatpush.bf16.msra.mxu0 0
      %6722 = vmatpush.bf16.msra.mxu0 0
      %6723 = vmatpush.bf16.msra.mxu0 0
      %6724 = vmatpush.bf16.msra.mxu0 %v1698
      %6725 = vmatpush.bf16.msra.mxu0 %v1657
      %6726 = vmatpush.bf16.msra.mxu0 %v1655
      %6727 = vmatpush.bf16.msra.mxu0 %v1653
      %6728 = vmatmul.bf16.gmra.mxu0 %v5934
      %v6729 = vpop.f32.mrf.mxu0
      %v6730 = vadd.f32 %v6701, %v6729
      %v6731 = vpop.f32.mrf.mxu0
      %v6732 = vadd.f32 %v6703, %v6731
      %6733 = vmatmul.bf16.gmra.mxu0 %v5937
      %v6734 = vpop.f32.mrf.mxu0
      %v6735 = vadd.f32 %v6706, %v6734
      %v6736 = vpop.f32.mrf.mxu0
      %v6737 = vadd.f32 %v6708, %v6736
      %6738 = vmatmul.bf16.gmra.mxu0 %v5940
      %v6739 = vpop.f32.mrf.mxu0
      %v6740 = vadd.f32 %v6711, %v6739
      %v6741 = vpop.f32.mrf.mxu0
      %v6742 = vadd.f32 %v6713, %v6741
      %6743 = vmatmul.bf16.gmra.mxu0 %v5943
      %v6744 = vpop.f32.mrf.mxu0
      %v6745 = vadd.f32 %v6716, %v6744
      %v6746 = vpop.f32.mrf.mxu0
      %v6747 = vadd.f32 %v6718, %v6746
      %6748 = vdwg.mxu0
      %v6749 = vadd.f32 %v6617, %v6672
      %v6750 = vadd.f32 %v6618, %v6730
      %v6751 = vadd.f32 %v6619, %v6674
      %v6752 = vadd.f32 %v6620, %v6732
      %v6753 = vadd.f32 %v6621, %v6677
      %v6754 = vadd.f32 %v6622, %v6735
      %v6755 = vadd.f32 %v6623, %v6679
      %v6756 = vadd.f32 %v6624, %v6737
      %v6757 = vadd.f32 %v6625, %v6682
      %v6758 = vadd.f32 %v6626, %v6740
      %v6759 = vadd.f32 %v6627, %v6684
      %v6760 = vadd.f32 %v6628, %v6742
      %v6761 = vadd.f32 %v6629, %v6687
      %v6762 = vadd.f32 %v6630, %v6745
      %v6763 = vadd.f32 %v6631, %v6689
      %v6764 = vadd.f32 %v6632, %v6747
      %s6765 = scalar_lea.vmem %s164, 272
      %v6766 = vld [vmem:[%s6765] sm:$0xff]
      %v6767 = vld [vmem:[%s6765 + $0x8] sm:$0xff]
      %v6768 = vld [vmem:[%s6765 + $0x10] sm:$0xff]
      %v6769 = vld [vmem:[%s6765 + $0x18] sm:$0xff]
      %v6770 = vld [vmem:[%s6765 + $0x20] sm:$0xff]
      %v6771 = vld [vmem:[%s6765 + $0x28] sm:$0xff]
      %v6772 = vld [vmem:[%s6765 + $0x30] sm:$0xff]
      %v6773 = vld [vmem:[%s6765 + $0x38] sm:$0xff]
      %v6782 = vunpack.c.l.b16 %v6766
      %v6783 = vunpack.c.h.b16 %v6766
      %v6784 = vunpack.c.l.b16 %v6767
      %v6785 = vunpack.c.h.b16 %v6767
      %v6786 = vunpack.c.l.b16 %v6768
      %v6787 = vunpack.c.h.b16 %v6768
      %v6788 = vunpack.c.l.b16 %v6769
      %v6789 = vunpack.c.h.b16 %v6769
      %v6790 = vunpack.c.l.b16 %v6770
      %v6791 = vunpack.c.h.b16 %v6770
      %v6792 = vunpack.c.l.b16 %v6771
      %v6793 = vunpack.c.h.b16 %v6771
      %v6794 = vunpack.c.l.b16 %v6772
      %v6795 = vunpack.c.h.b16 %v6772
      %v6796 = vunpack.c.l.b16 %v6773
      %v6797 = vunpack.c.h.b16 %v6773
      %v6798 = vpack.c.b16 %v6784, %v6782
      %v6799 = vpack.c.b16 %v6785, %v6783
      %v6800 = vpack.c.b16 %v6788, %v6786
      %v6801 = vpack.c.b16 %v6789, %v6787
      %v6802 = vpack.c.b16 %v6792, %v6790
      %v6803 = vpack.c.b16 %v6793, %v6791
      %v6804 = vpack.c.b16 %v6796, %v6794
      %v6805 = vpack.c.b16 %v6797, %v6795
      %v6811 = vsel %vm391, %v6799, 0
      %v6814 = vsel %vm391, %v6801, 0
      %v6817 = vsel %vm391, %v6803, 0
      %v6820 = vsel %vm391, %v6805, 0
      %6822 = vmatpush.bf16.msra.mxu0 %v1988
      %6823 = vmatpush.bf16.msra.mxu0 %v1986
      %6824 = vmatpush.bf16.msra.mxu0 %v1984
      %6825 = vmatpush.bf16.msra.mxu0 %v1982
      %6826 = vmatpush.bf16.msra.mxu0 %v1980
      %6827 = vmatpush.bf16.msra.mxu0 %v1978
      %6828 = vmatpush.bf16.msra.mxu0 %v1976
      %6829 = vmatpush.bf16.msra.mxu0 %v1974
      %6830 = vmatmul.bf16.gmra.mxu0 %v6798
      %v6831 = vpop.f32.mrf.mxu0
      %v6832 = vadd.f32 0.0, %v6831
      %v6833 = vpop.f32.mrf.mxu0
      %v6834 = vadd.f32 0.0, %v6833
      %6835 = vmatmul.bf16.gmra.mxu0 %v6800
      %v6836 = vpop.f32.mrf.mxu0
      %v6837 = vadd.f32 0.0, %v6836
      %v6838 = vpop.f32.mrf.mxu0
      %v6839 = vadd.f32 0.0, %v6838
      %6840 = vmatmul.bf16.gmra.mxu0 %v6802
      %v6841 = vpop.f32.mrf.mxu0
      %v6842 = vadd.f32 0.0, %v6841
      %v6843 = vpop.f32.mrf.mxu0
      %v6844 = vadd.f32 0.0, %v6843
      %6845 = vmatmul.bf16.gmra.mxu0 %v6804
      %v6846 = vpop.f32.mrf.mxu0
      %v6847 = vadd.f32 0.0, %v6846
      %v6848 = vpop.f32.mrf.mxu0
      %v6849 = vadd.f32 0.0, %v6848
      %6850 = vdwg.mxu0
      %6851 = vmatpush.bf16.msra.mxu0 0
      %6852 = vmatpush.bf16.msra.mxu0 0
      %6853 = vmatpush.bf16.msra.mxu0 0
      %6854 = vmatpush.bf16.msra.mxu0 0
      %6855 = vmatpush.bf16.msra.mxu0 %v2033
      %6856 = vmatpush.bf16.msra.mxu0 %v1994
      %6857 = vmatpush.bf16.msra.mxu0 %v1992
      %6858 = vmatpush.bf16.msra.mxu0 %v1990
      %6859 = vmatmul.bf16.gmra.mxu0 %v6811
      %v6860 = vpop.f32.mrf.mxu0
      %v6861 = vadd.f32 %v6832, %v6860
      %v6862 = vpop.f32.mrf.mxu0
      %v6863 = vadd.f32 %v6834, %v6862
      %6864 = vmatmul.bf16.gmra.mxu0 %v6814
      %v6865 = vpop.f32.mrf.mxu0
      %v6866 = vadd.f32 %v6837, %v6865
      %v6867 = vpop.f32.mrf.mxu0
      %v6868 = vadd.f32 %v6839, %v6867
      %6869 = vmatmul.bf16.gmra.mxu0 %v6817
      %v6870 = vpop.f32.mrf.mxu0
      %v6871 = vadd.f32 %v6842, %v6870
      %v6872 = vpop.f32.mrf.mxu0
      %v6873 = vadd.f32 %v6844, %v6872
      %6874 = vmatmul.bf16.gmra.mxu0 %v6820
      %v6875 = vpop.f32.mrf.mxu0
      %v6876 = vadd.f32 %v6847, %v6875
      %v6877 = vpop.f32.mrf.mxu0
      %v6878 = vadd.f32 %v6849, %v6877
      %6879 = vdwg.mxu0
      %6880 = vmatpush.bf16.msra.mxu0 %v1989
      %6881 = vmatpush.bf16.msra.mxu0 %v1987
      %6882 = vmatpush.bf16.msra.mxu0 %v1985
      %6883 = vmatpush.bf16.msra.mxu0 %v1983
      %6884 = vmatpush.bf16.msra.mxu0 %v1981
      %6885 = vmatpush.bf16.msra.mxu0 %v1979
      %6886 = vmatpush.bf16.msra.mxu0 %v1977
      %6887 = vmatpush.bf16.msra.mxu0 %v1975
      %6888 = vmatmul.bf16.gmra.mxu0 %v6798
      %v6889 = vpop.f32.mrf.mxu0
      %v6890 = vadd.f32 0.0, %v6889
      %v6891 = vpop.f32.mrf.mxu0
      %v6892 = vadd.f32 0.0, %v6891
      %6893 = vmatmul.bf16.gmra.mxu0 %v6800
      %v6894 = vpop.f32.mrf.mxu0
      %v6895 = vadd.f32 0.0, %v6894
      %v6896 = vpop.f32.mrf.mxu0
      %v6897 = vadd.f32 0.0, %v6896
      %6898 = vmatmul.bf16.gmra.mxu0 %v6802
      %v6899 = vpop.f32.mrf.mxu0
      %v6900 = vadd.f32 0.0, %v6899
      %v6901 = vpop.f32.mrf.mxu0
      %v6902 = vadd.f32 0.0, %v6901
      %6903 = vmatmul.bf16.gmra.mxu0 %v6804
      %v6904 = vpop.f32.mrf.mxu0
      %v6905 = vadd.f32 0.0, %v6904
      %v6906 = vpop.f32.mrf.mxu0
      %v6907 = vadd.f32 0.0, %v6906
      %6908 = vdwg.mxu0
      %6909 = vmatpush.bf16.msra.mxu0 0
      %6910 = vmatpush.bf16.msra.mxu0 0
      %6911 = vmatpush.bf16.msra.mxu0 0
      %6912 = vmatpush.bf16.msra.mxu0 0
      %6913 = vmatpush.bf16.msra.mxu0 %v2036
      %6914 = vmatpush.bf16.msra.mxu0 %v1995
      %6915 = vmatpush.bf16.msra.mxu0 %v1993
      %6916 = vmatpush.bf16.msra.mxu0 %v1991
      %6917 = vmatmul.bf16.gmra.mxu0 %v6811
      %v6918 = vpop.f32.mrf.mxu0
      %v6919 = vadd.f32 %v6890, %v6918
      %v6920 = vpop.f32.mrf.mxu0
      %v6921 = vadd.f32 %v6892, %v6920
      %6922 = vmatmul.bf16.gmra.mxu0 %v6814
      %v6923 = vpop.f32.mrf.mxu0
      %v6924 = vadd.f32 %v6895, %v6923
      %v6925 = vpop.f32.mrf.mxu0
      %v6926 = vadd.f32 %v6897, %v6925
      %6927 = vmatmul.bf16.gmra.mxu0 %v6817
      %v6928 = vpop.f32.mrf.mxu0
      %v6929 = vadd.f32 %v6900, %v6928
      %v6930 = vpop.f32.mrf.mxu0
      %v6931 = vadd.f32 %v6902, %v6930
      %6932 = vmatmul.bf16.gmra.mxu0 %v6820
      %v6933 = vpop.f32.mrf.mxu0
      %v6934 = vadd.f32 %v6905, %v6933
      %v6935 = vpop.f32.mrf.mxu0
      %v6936 = vadd.f32 %v6907, %v6935
      %6937 = vdwg.mxu0
      %v6938 = vadd.f32 %v6749, %v6861
      %v6939 = vadd.f32 %v6750, %v6919
      %v6940 = vadd.f32 %v6751, %v6863
      %v6941 = vadd.f32 %v6752, %v6921
      %v6942 = vadd.f32 %v6753, %v6866
      %v6943 = vadd.f32 %v6754, %v6924
      %v6944 = vadd.f32 %v6755, %v6868
      %v6945 = vadd.f32 %v6756, %v6926
      %v6946 = vadd.f32 %v6757, %v6871
      %v6947 = vadd.f32 %v6758, %v6929
      %v6948 = vadd.f32 %v6759, %v6873
      %v6949 = vadd.f32 %v6760, %v6931
      %v6950 = vadd.f32 %v6761, %v6876
      %v6951 = vadd.f32 %v6762, %v6934
      %v6952 = vadd.f32 %v6763, %v6878
      %v6953 = vadd.f32 %v6764, %v6936
      %s6954 = scalar_lea.vmem %s164, 288
      %v6955 = vld [vmem:[%s6954] sm:$0xff]
      %v6956 = vld [vmem:[%s6954 + $0x8] sm:$0xff]
      %v6957 = vld [vmem:[%s6954 + $0x10] sm:$0xff]
      %v6958 = vld [vmem:[%s6954 + $0x18] sm:$0xff]
      %v6959 = vld [vmem:[%s6954 + $0x20] sm:$0xff]
      %v6960 = vld [vmem:[%s6954 + $0x28] sm:$0xff]
      %v6961 = vld [vmem:[%s6954 + $0x30] sm:$0xff]
      %v6962 = vld [vmem:[%s6954 + $0x38] sm:$0xff]
      %v6971 = vunpack.c.l.b16 %v6955
      %v6972 = vunpack.c.h.b16 %v6955
      %v6973 = vunpack.c.l.b16 %v6956
      %v6974 = vunpack.c.h.b16 %v6956
      %v6975 = vunpack.c.l.b16 %v6957
      %v6976 = vunpack.c.h.b16 %v6957
      %v6977 = vunpack.c.l.b16 %v6958
      %v6978 = vunpack.c.h.b16 %v6958
      %v6979 = vunpack.c.l.b16 %v6959
      %v6980 = vunpack.c.h.b16 %v6959
      %v6981 = vunpack.c.l.b16 %v6960
      %v6982 = vunpack.c.h.b16 %v6960
      %v6983 = vunpack.c.l.b16 %v6961
      %v6984 = vunpack.c.h.b16 %v6961
      %v6985 = vunpack.c.l.b16 %v6962
      %v6986 = vunpack.c.h.b16 %v6962
      %v6987 = vpack.c.b16 %v6973, %v6971
      %v6988 = vpack.c.b16 %v6974, %v6972
      %v6989 = vpack.c.b16 %v6977, %v6975
      %v6990 = vpack.c.b16 %v6978, %v6976
      %v6991 = vpack.c.b16 %v6981, %v6979
      %v6992 = vpack.c.b16 %v6982, %v6980
      %v6993 = vpack.c.b16 %v6985, %v6983
      %v6994 = vpack.c.b16 %v6986, %v6984
      %v7000 = vsel %vm391, %v6988, 0
      %v7003 = vsel %vm391, %v6990, 0
      %v7006 = vsel %vm391, %v6992, 0
      %v7009 = vsel %vm391, %v6994, 0
      %7011 = vmatpush.bf16.msra.mxu0 %v2326
      %7012 = vmatpush.bf16.msra.mxu0 %v2324
      %7013 = vmatpush.bf16.msra.mxu0 %v2322
      %7014 = vmatpush.bf16.msra.mxu0 %v2320
      %7015 = vmatpush.bf16.msra.mxu0 %v2318
      %7016 = vmatpush.bf16.msra.mxu0 %v2316
      %7017 = vmatpush.bf16.msra.mxu0 %v2314
      %7018 = vmatpush.bf16.msra.mxu0 %v2312
      %7019 = vmatmul.bf16.gmra.mxu0 %v6987
      %v7020 = vpop.f32.mrf.mxu0
      %v7021 = vadd.f32 0.0, %v7020
      %v7022 = vpop.f32.mrf.mxu0
      %v7023 = vadd.f32 0.0, %v7022
      %7024 = vmatmul.bf16.gmra.mxu0 %v6989
      %v7025 = vpop.f32.mrf.mxu0
      %v7026 = vadd.f32 0.0, %v7025
      %v7027 = vpop.f32.mrf.mxu0
      %v7028 = vadd.f32 0.0, %v7027
      %7029 = vmatmul.bf16.gmra.mxu0 %v6991
      %v7030 = vpop.f32.mrf.mxu0
      %v7031 = vadd.f32 0.0, %v7030
      %v7032 = vpop.f32.mrf.mxu0
      %v7033 = vadd.f32 0.0, %v7032
      %7034 = vmatmul.bf16.gmra.mxu0 %v6993
      %v7035 = vpop.f32.mrf.mxu0
      %v7036 = vadd.f32 0.0, %v7035
      %v7037 = vpop.f32.mrf.mxu0
      %v7038 = vadd.f32 0.0, %v7037
      %7039 = vdwg.mxu0
      %7040 = vmatpush.bf16.msra.mxu0 0
      %7041 = vmatpush.bf16.msra.mxu0 0
      %7042 = vmatpush.bf16.msra.mxu0 0
      %7043 = vmatpush.bf16.msra.mxu0 0
      %7044 = vmatpush.bf16.msra.mxu0 %v2371
      %7045 = vmatpush.bf16.msra.mxu0 %v2332
      %7046 = vmatpush.bf16.msra.mxu0 %v2330
      %7047 = vmatpush.bf16.msra.mxu0 %v2328
      %7048 = vmatmul.bf16.gmra.mxu0 %v7000
      %v7049 = vpop.f32.mrf.mxu0
      %v7050 = vadd.f32 %v7021, %v7049
      %v7051 = vpop.f32.mrf.mxu0
      %v7052 = vadd.f32 %v7023, %v7051
      %7053 = vmatmul.bf16.gmra.mxu0 %v7003
      %v7054 = vpop.f32.mrf.mxu0
      %v7055 = vadd.f32 %v7026, %v7054
      %v7056 = vpop.f32.mrf.mxu0
      %v7057 = vadd.f32 %v7028, %v7056
      %7058 = vmatmul.bf16.gmra.mxu0 %v7006
      %v7059 = vpop.f32.mrf.mxu0
      %v7060 = vadd.f32 %v7031, %v7059
      %v7061 = vpop.f32.mrf.mxu0
      %v7062 = vadd.f32 %v7033, %v7061
      %7063 = vmatmul.bf16.gmra.mxu0 %v7009
      %v7064 = vpop.f32.mrf.mxu0
      %v7065 = vadd.f32 %v7036, %v7064
      %v7066 = vpop.f32.mrf.mxu0
      %v7067 = vadd.f32 %v7038, %v7066
      %7068 = vdwg.mxu0
      %7069 = vmatpush.bf16.msra.mxu0 %v2327
      %7070 = vmatpush.bf16.msra.mxu0 %v2325
      %7071 = vmatpush.bf16.msra.mxu0 %v2323
      %7072 = vmatpush.bf16.msra.mxu0 %v2321
      %7073 = vmatpush.bf16.msra.mxu0 %v2319
      %7074 = vmatpush.bf16.msra.mxu0 %v2317
      %7075 = vmatpush.bf16.msra.mxu0 %v2315
      %7076 = vmatpush.bf16.msra.mxu0 %v2313
      %7077 = vmatmul.bf16.gmra.mxu0 %v6987
      %v7078 = vpop.f32.mrf.mxu0
      %v7079 = vadd.f32 0.0, %v7078
      %v7080 = vpop.f32.mrf.mxu0
      %v7081 = vadd.f32 0.0, %v7080
      %7082 = vmatmul.bf16.gmra.mxu0 %v6989
      %v7083 = vpop.f32.mrf.mxu0
      %v7084 = vadd.f32 0.0, %v7083
      %v7085 = vpop.f32.mrf.mxu0
      %v7086 = vadd.f32 0.0, %v7085
      %7087 = vmatmul.bf16.gmra.mxu0 %v6991
      %v7088 = vpop.f32.mrf.mxu0
      %v7089 = vadd.f32 0.0, %v7088
      %v7090 = vpop.f32.mrf.mxu0
      %v7091 = vadd.f32 0.0, %v7090
      %7092 = vmatmul.bf16.gmra.mxu0 %v6993
      %v7093 = vpop.f32.mrf.mxu0
      %v7094 = vadd.f32 0.0, %v7093
      %v7095 = vpop.f32.mrf.mxu0
      %v7096 = vadd.f32 0.0, %v7095
      %7097 = vdwg.mxu0
      %7098 = vmatpush.bf16.msra.mxu0 0
      %7099 = vmatpush.bf16.msra.mxu0 0
      %7100 = vmatpush.bf16.msra.mxu0 0
      %7101 = vmatpush.bf16.msra.mxu0 0
      %7102 = vmatpush.bf16.msra.mxu0 %v2374
      %7103 = vmatpush.bf16.msra.mxu0 %v2333
      %7104 = vmatpush.bf16.msra.mxu0 %v2331
      %7105 = vmatpush.bf16.msra.mxu0 %v2329
      %7106 = vmatmul.bf16.gmra.mxu0 %v7000
      %v7107 = vpop.f32.mrf.mxu0
      %v7108 = vadd.f32 %v7079, %v7107
      %v7109 = vpop.f32.mrf.mxu0
      %v7110 = vadd.f32 %v7081, %v7109
      %7111 = vmatmul.bf16.gmra.mxu0 %v7003
      %v7112 = vpop.f32.mrf.mxu0
      %v7113 = vadd.f32 %v7084, %v7112
      %v7114 = vpop.f32.mrf.mxu0
      %v7115 = vadd.f32 %v7086, %v7114
      %7116 = vmatmul.bf16.gmra.mxu0 %v7006
      %v7117 = vpop.f32.mrf.mxu0
      %v7118 = vadd.f32 %v7089, %v7117
      %v7119 = vpop.f32.mrf.mxu0
      %v7120 = vadd.f32 %v7091, %v7119
      %7121 = vmatmul.bf16.gmra.mxu0 %v7009
      %v7122 = vpop.f32.mrf.mxu0
      %v7123 = vadd.f32 %v7094, %v7122
      %v7124 = vpop.f32.mrf.mxu0
      %v7125 = vadd.f32 %v7096, %v7124
      %7126 = vdwg.mxu0
      %v7127 = vadd.f32 %v6938, %v7050
      %v7128 = vadd.f32 %v6939, %v7108
      %v7129 = vadd.f32 %v6940, %v7052
      %v7130 = vadd.f32 %v6941, %v7110
      %v7131 = vadd.f32 %v6942, %v7055
      %v7132 = vadd.f32 %v6943, %v7113
      %v7133 = vadd.f32 %v6944, %v7057
      %v7134 = vadd.f32 %v6945, %v7115
      %v7135 = vadd.f32 %v6946, %v7060
      %v7136 = vadd.f32 %v6947, %v7118
      %v7137 = vadd.f32 %v6948, %v7062
      %v7138 = vadd.f32 %v6949, %v7120
      %v7139 = vadd.f32 %v6950, %v7065
      %v7140 = vadd.f32 %v6951, %v7123
      %v7141 = vadd.f32 %v6952, %v7067
      %v7142 = vadd.f32 %v6953, %v7125
      %s7143 = scalar_lea.vmem %s164, 304
      %v7144 = vld [vmem:[%s7143] sm:$0xff]
      %v7145 = vld [vmem:[%s7143 + $0x8] sm:$0xff]
      %v7146 = vld [vmem:[%s7143 + $0x10] sm:$0xff]
      %v7147 = vld [vmem:[%s7143 + $0x18] sm:$0xff]
      %v7148 = vld [vmem:[%s7143 + $0x20] sm:$0xff]
      %v7149 = vld [vmem:[%s7143 + $0x28] sm:$0xff]
      %v7150 = vld [vmem:[%s7143 + $0x30] sm:$0xff]
      %v7151 = vld [vmem:[%s7143 + $0x38] sm:$0xff]
      %v7160 = vunpack.c.l.b16 %v7144
      %v7161 = vunpack.c.h.b16 %v7144
      %v7162 = vunpack.c.l.b16 %v7145
      %v7163 = vunpack.c.h.b16 %v7145
      %v7164 = vunpack.c.l.b16 %v7146
      %v7165 = vunpack.c.h.b16 %v7146
      %v7166 = vunpack.c.l.b16 %v7147
      %v7167 = vunpack.c.h.b16 %v7147
      %v7168 = vunpack.c.l.b16 %v7148
      %v7169 = vunpack.c.h.b16 %v7148
      %v7170 = vunpack.c.l.b16 %v7149
      %v7171 = vunpack.c.h.b16 %v7149
      %v7172 = vunpack.c.l.b16 %v7150
      %v7173 = vunpack.c.h.b16 %v7150
      %v7174 = vunpack.c.l.b16 %v7151
      %v7175 = vunpack.c.h.b16 %v7151
      %v7176 = vpack.c.b16 %v7162, %v7160
      %v7177 = vpack.c.b16 %v7163, %v7161
      %v7178 = vpack.c.b16 %v7166, %v7164
      %v7179 = vpack.c.b16 %v7167, %v7165
      %v7180 = vpack.c.b16 %v7170, %v7168
      %v7181 = vpack.c.b16 %v7171, %v7169
      %v7182 = vpack.c.b16 %v7174, %v7172
      %v7183 = vpack.c.b16 %v7175, %v7173
      %v7189 = vsel %vm391, %v7177, 0
      %v7192 = vsel %vm391, %v7179, 0
      %v7195 = vsel %vm391, %v7181, 0
      %v7198 = vsel %vm391, %v7183, 0
      %7200 = vmatpush.bf16.msra.mxu0 %v2664
      %7201 = vmatpush.bf16.msra.mxu0 %v2662
      %7202 = vmatpush.bf16.msra.mxu0 %v2660
      %7203 = vmatpush.bf16.msra.mxu0 %v2658
      %7204 = vmatpush.bf16.msra.mxu0 %v2656
      %7205 = vmatpush.bf16.msra.mxu0 %v2654
      %7206 = vmatpush.bf16.msra.mxu0 %v2652
      %7207 = vmatpush.bf16.msra.mxu0 %v2650
      %7208 = vmatmul.bf16.gmra.mxu0 %v7176
      %v7209 = vpop.f32.mrf.mxu0
      %v7210 = vadd.f32 0.0, %v7209
      %v7211 = vpop.f32.mrf.mxu0
      %v7212 = vadd.f32 0.0, %v7211
      %7213 = vmatmul.bf16.gmra.mxu0 %v7178
      %v7214 = vpop.f32.mrf.mxu0
      %v7215 = vadd.f32 0.0, %v7214
      %v7216 = vpop.f32.mrf.mxu0
      %v7217 = vadd.f32 0.0, %v7216
      %7218 = vmatmul.bf16.gmra.mxu0 %v7180
      %v7219 = vpop.f32.mrf.mxu0
      %v7220 = vadd.f32 0.0, %v7219
      %v7221 = vpop.f32.mrf.mxu0
      %v7222 = vadd.f32 0.0, %v7221
      %7223 = vmatmul.bf16.gmra.mxu0 %v7182
      %v7224 = vpop.f32.mrf.mxu0
      %v7225 = vadd.f32 0.0, %v7224
      %v7226 = vpop.f32.mrf.mxu0
      %v7227 = vadd.f32 0.0, %v7226
      %7228 = vdwg.mxu0
      %7229 = vmatpush.bf16.msra.mxu0 0
      %7230 = vmatpush.bf16.msra.mxu0 0
      %7231 = vmatpush.bf16.msra.mxu0 0
      %7232 = vmatpush.bf16.msra.mxu0 0
      %7233 = vmatpush.bf16.msra.mxu0 %v2709
      %7234 = vmatpush.bf16.msra.mxu0 %v2670
      %7235 = vmatpush.bf16.msra.mxu0 %v2668
      %7236 = vmatpush.bf16.msra.mxu0 %v2666
      %7237 = vmatmul.bf16.gmra.mxu0 %v7189
      %v7238 = vpop.f32.mrf.mxu0
      %v7239 = vadd.f32 %v7210, %v7238
      %v7240 = vpop.f32.mrf.mxu0
      %v7241 = vadd.f32 %v7212, %v7240
      %7242 = vmatmul.bf16.gmra.mxu0 %v7192
      %v7243 = vpop.f32.mrf.mxu0
      %v7244 = vadd.f32 %v7215, %v7243
      %v7245 = vpop.f32.mrf.mxu0
      %v7246 = vadd.f32 %v7217, %v7245
      %7247 = vmatmul.bf16.gmra.mxu0 %v7195
      %v7248 = vpop.f32.mrf.mxu0
      %v7249 = vadd.f32 %v7220, %v7248
      %v7250 = vpop.f32.mrf.mxu0
      %v7251 = vadd.f32 %v7222, %v7250
      %7252 = vmatmul.bf16.gmra.mxu0 %v7198
      %v7253 = vpop.f32.mrf.mxu0
      %v7254 = vadd.f32 %v7225, %v7253
      %v7255 = vpop.f32.mrf.mxu0
      %v7256 = vadd.f32 %v7227, %v7255
      %7257 = vdwg.mxu0
      %7258 = vmatpush.bf16.msra.mxu0 %v2665
      %7259 = vmatpush.bf16.msra.mxu0 %v2663
      %7260 = vmatpush.bf16.msra.mxu0 %v2661
      %7261 = vmatpush.bf16.msra.mxu0 %v2659
      %7262 = vmatpush.bf16.msra.mxu0 %v2657
      %7263 = vmatpush.bf16.msra.mxu0 %v2655
      %7264 = vmatpush.bf16.msra.mxu0 %v2653
      %7265 = vmatpush.bf16.msra.mxu0 %v2651
      %7266 = vmatmul.bf16.gmra.mxu0 %v7176
      %v7267 = vpop.f32.mrf.mxu0
      %v7268 = vadd.f32 0.0, %v7267
      %v7269 = vpop.f32.mrf.mxu0
      %v7270 = vadd.f32 0.0, %v7269
      %7271 = vmatmul.bf16.gmra.mxu0 %v7178
      %v7272 = vpop.f32.mrf.mxu0
      %v7273 = vadd.f32 0.0, %v7272
      %v7274 = vpop.f32.mrf.mxu0
      %v7275 = vadd.f32 0.0, %v7274
      %7276 = vmatmul.bf16.gmra.mxu0 %v7180
      %v7277 = vpop.f32.mrf.mxu0
      %v7278 = vadd.f32 0.0, %v7277
      %v7279 = vpop.f32.mrf.mxu0
      %v7280 = vadd.f32 0.0, %v7279
      %7281 = vmatmul.bf16.gmra.mxu0 %v7182
      %v7282 = vpop.f32.mrf.mxu0
      %v7283 = vadd.f32 0.0, %v7282
      %v7284 = vpop.f32.mrf.mxu0
      %v7285 = vadd.f32 0.0, %v7284
      %7286 = vdwg.mxu0
      %7287 = vmatpush.bf16.msra.mxu0 0
      %7288 = vmatpush.bf16.msra.mxu0 0
      %7289 = vmatpush.bf16.msra.mxu0 0
      %7290 = vmatpush.bf16.msra.mxu0 0
      %7291 = vmatpush.bf16.msra.mxu0 %v2712
      %7292 = vmatpush.bf16.msra.mxu0 %v2671
      %7293 = vmatpush.bf16.msra.mxu0 %v2669
      %7294 = vmatpush.bf16.msra.mxu0 %v2667
      %7295 = vmatmul.bf16.gmra.mxu0 %v7189
      %v7296 = vpop.f32.mrf.mxu0
      %v7297 = vadd.f32 %v7268, %v7296
      %v7298 = vpop.f32.mrf.mxu0
      %v7299 = vadd.f32 %v7270, %v7298
      %7300 = vmatmul.bf16.gmra.mxu0 %v7192
      %v7301 = vpop.f32.mrf.mxu0
      %v7302 = vadd.f32 %v7273, %v7301
      %v7303 = vpop.f32.mrf.mxu0
      %v7304 = vadd.f32 %v7275, %v7303
      %7305 = vmatmul.bf16.gmra.mxu0 %v7195
      %v7306 = vpop.f32.mrf.mxu0
      %v7307 = vadd.f32 %v7278, %v7306
      %v7308 = vpop.f32.mrf.mxu0
      %v7309 = vadd.f32 %v7280, %v7308
      %7310 = vmatmul.bf16.gmra.mxu0 %v7198
      %v7311 = vpop.f32.mrf.mxu0
      %v7312 = vadd.f32 %v7283, %v7311
      %v7313 = vpop.f32.mrf.mxu0
      %v7314 = vadd.f32 %v7285, %v7313
      %7315 = vdwg.mxu0
      %v7316 = vadd.f32 %v7127, %v7239
      %v7317 = vadd.f32 %v7128, %v7297
      %v7318 = vadd.f32 %v7129, %v7241
      %v7319 = vadd.f32 %v7130, %v7299
      %v7320 = vadd.f32 %v7131, %v7244
      %v7321 = vadd.f32 %v7132, %v7302
      %v7322 = vadd.f32 %v7133, %v7246
      %v7323 = vadd.f32 %v7134, %v7304
      %v7324 = vadd.f32 %v7135, %v7249
      %v7325 = vadd.f32 %v7136, %v7307
      %v7326 = vadd.f32 %v7137, %v7251
      %v7327 = vadd.f32 %v7138, %v7309
      %v7328 = vadd.f32 %v7139, %v7254
      %v7329 = vadd.f32 %v7140, %v7312
      %v7330 = vadd.f32 %v7141, %v7256
      %v7331 = vadd.f32 %v7142, %v7314
      %s7332 = scalar_lea.vmem %s164, 320
      %v7333 = vld [vmem:[%s7332] sm:$0xff]
      %v7334 = vld [vmem:[%s7332 + $0x8] sm:$0xff]
      %v7335 = vld [vmem:[%s7332 + $0x10] sm:$0xff]
      %v7336 = vld [vmem:[%s7332 + $0x18] sm:$0xff]
      %v7337 = vld [vmem:[%s7332 + $0x20] sm:$0xff]
      %v7338 = vld [vmem:[%s7332 + $0x28] sm:$0xff]
      %v7339 = vld [vmem:[%s7332 + $0x30] sm:$0xff]
      %v7340 = vld [vmem:[%s7332 + $0x38] sm:$0xff]
      %v7349 = vunpack.c.l.b16 %v7333
      %v7350 = vunpack.c.h.b16 %v7333
      %v7351 = vunpack.c.l.b16 %v7334
      %v7352 = vunpack.c.h.b16 %v7334
      %v7353 = vunpack.c.l.b16 %v7335
      %v7354 = vunpack.c.h.b16 %v7335
      %v7355 = vunpack.c.l.b16 %v7336
      %v7356 = vunpack.c.h.b16 %v7336
      %v7357 = vunpack.c.l.b16 %v7337
      %v7358 = vunpack.c.h.b16 %v7337
      %v7359 = vunpack.c.l.b16 %v7338
      %v7360 = vunpack.c.h.b16 %v7338
      %v7361 = vunpack.c.l.b16 %v7339
      %v7362 = vunpack.c.h.b16 %v7339
      %v7363 = vunpack.c.l.b16 %v7340
      %v7364 = vunpack.c.h.b16 %v7340
      %v7365 = vpack.c.b16 %v7351, %v7349
      %v7366 = vpack.c.b16 %v7352, %v7350
      %v7367 = vpack.c.b16 %v7355, %v7353
      %v7368 = vpack.c.b16 %v7356, %v7354
      %v7369 = vpack.c.b16 %v7359, %v7357
      %v7370 = vpack.c.b16 %v7360, %v7358
      %v7371 = vpack.c.b16 %v7363, %v7361
      %v7372 = vpack.c.b16 %v7364, %v7362
      %v7378 = vsel %vm391, %v7366, 0
      %v7381 = vsel %vm391, %v7368, 0
      %v7384 = vsel %vm391, %v7370, 0
      %v7387 = vsel %vm391, %v7372, 0
      %7389 = vmatpush.bf16.msra.mxu0 %v3002
      %7390 = vmatpush.bf16.msra.mxu0 %v3000
      %7391 = vmatpush.bf16.msra.mxu0 %v2998
      %7392 = vmatpush.bf16.msra.mxu0 %v2996
      %7393 = vmatpush.bf16.msra.mxu0 %v2994
      %7394 = vmatpush.bf16.msra.mxu0 %v2992
      %7395 = vmatpush.bf16.msra.mxu0 %v2990
      %7396 = vmatpush.bf16.msra.mxu0 %v2988
      %7397 = vmatmul.bf16.gmra.mxu0 %v7365
      %v7398 = vpop.f32.mrf.mxu0
      %v7399 = vadd.f32 0.0, %v7398
      %v7400 = vpop.f32.mrf.mxu0
      %v7401 = vadd.f32 0.0, %v7400
      %7402 = vmatmul.bf16.gmra.mxu0 %v7367
      %v7403 = vpop.f32.mrf.mxu0
      %v7404 = vadd.f32 0.0, %v7403
      %v7405 = vpop.f32.mrf.mxu0
      %v7406 = vadd.f32 0.0, %v7405
      %7407 = vmatmul.bf16.gmra.mxu0 %v7369
      %v7408 = vpop.f32.mrf.mxu0
      %v7409 = vadd.f32 0.0, %v7408
      %v7410 = vpop.f32.mrf.mxu0
      %v7411 = vadd.f32 0.0, %v7410
      %7412 = vmatmul.bf16.gmra.mxu0 %v7371
      %v7413 = vpop.f32.mrf.mxu0
      %v7414 = vadd.f32 0.0, %v7413
      %v7415 = vpop.f32.mrf.mxu0
      %v7416 = vadd.f32 0.0, %v7415
      %7417 = vdwg.mxu0
      %7418 = vmatpush.bf16.msra.mxu0 0
      %7419 = vmatpush.bf16.msra.mxu0 0
      %7420 = vmatpush.bf16.msra.mxu0 0
      %7421 = vmatpush.bf16.msra.mxu0 0
      %7422 = vmatpush.bf16.msra.mxu0 %v3047
      %7423 = vmatpush.bf16.msra.mxu0 %v3008
      %7424 = vmatpush.bf16.msra.mxu0 %v3006
      %7425 = vmatpush.bf16.msra.mxu0 %v3004
      %7426 = vmatmul.bf16.gmra.mxu0 %v7378
      %v7427 = vpop.f32.mrf.mxu0
      %v7428 = vadd.f32 %v7399, %v7427
      %v7429 = vpop.f32.mrf.mxu0
      %v7430 = vadd.f32 %v7401, %v7429
      %7431 = vmatmul.bf16.gmra.mxu0 %v7381
      %v7432 = vpop.f32.mrf.mxu0
      %v7433 = vadd.f32 %v7404, %v7432
      %v7434 = vpop.f32.mrf.mxu0
      %v7435 = vadd.f32 %v7406, %v7434
      %7436 = vmatmul.bf16.gmra.mxu0 %v7384
      %v7437 = vpop.f32.mrf.mxu0
      %v7438 = vadd.f32 %v7409, %v7437
      %v7439 = vpop.f32.mrf.mxu0
      %v7440 = vadd.f32 %v7411, %v7439
      %7441 = vmatmul.bf16.gmra.mxu0 %v7387
      %v7442 = vpop.f32.mrf.mxu0
      %v7443 = vadd.f32 %v7414, %v7442
      %v7444 = vpop.f32.mrf.mxu0
      %v7445 = vadd.f32 %v7416, %v7444
      %7446 = vdwg.mxu0
      %7447 = vmatpush.bf16.msra.mxu0 %v3003
      %7448 = vmatpush.bf16.msra.mxu0 %v3001
      %7449 = vmatpush.bf16.msra.mxu0 %v2999
      %7450 = vmatpush.bf16.msra.mxu0 %v2997
      %7451 = vmatpush.bf16.msra.mxu0 %v2995
      %7452 = vmatpush.bf16.msra.mxu0 %v2993
      %7453 = vmatpush.bf16.msra.mxu0 %v2991
      %7454 = vmatpush.bf16.msra.mxu0 %v2989
      %7455 = vmatmul.bf16.gmra.mxu0 %v7365
      %v7456 = vpop.f32.mrf.mxu0
      %v7457 = vadd.f32 0.0, %v7456
      %v7458 = vpop.f32.mrf.mxu0
      %v7459 = vadd.f32 0.0, %v7458
      %7460 = vmatmul.bf16.gmra.mxu0 %v7367
      %v7461 = vpop.f32.mrf.mxu0
      %v7462 = vadd.f32 0.0, %v7461
      %v7463 = vpop.f32.mrf.mxu0
      %v7464 = vadd.f32 0.0, %v7463
      %7465 = vmatmul.bf16.gmra.mxu0 %v7369
      %v7466 = vpop.f32.mrf.mxu0
      %v7467 = vadd.f32 0.0, %v7466
      %v7468 = vpop.f32.mrf.mxu0
      %v7469 = vadd.f32 0.0, %v7468
      %7470 = vmatmul.bf16.gmra.mxu0 %v7371
      %v7471 = vpop.f32.mrf.mxu0
      %v7472 = vadd.f32 0.0, %v7471
      %v7473 = vpop.f32.mrf.mxu0
      %v7474 = vadd.f32 0.0, %v7473
      %7475 = vdwg.mxu0
      %7476 = vmatpush.bf16.msra.mxu0 0
      %7477 = vmatpush.bf16.msra.mxu0 0
      %7478 = vmatpush.bf16.msra.mxu0 0
      %7479 = vmatpush.bf16.msra.mxu0 0
      %7480 = vmatpush.bf16.msra.mxu0 %v3050
      %7481 = vmatpush.bf16.msra.mxu0 %v3009
      %7482 = vmatpush.bf16.msra.mxu0 %v3007
      %7483 = vmatpush.bf16.msra.mxu0 %v3005
      %7484 = vmatmul.bf16.gmra.mxu0 %v7378
      %v7485 = vpop.f32.mrf.mxu0
      %v7486 = vadd.f32 %v7457, %v7485
      %v7487 = vpop.f32.mrf.mxu0
      %v7488 = vadd.f32 %v7459, %v7487
      %7489 = vmatmul.bf16.gmra.mxu0 %v7381
      %v7490 = vpop.f32.mrf.mxu0
      %v7491 = vadd.f32 %v7462, %v7490
      %v7492 = vpop.f32.mrf.mxu0
      %v7493 = vadd.f32 %v7464, %v7492
      %7494 = vmatmul.bf16.gmra.mxu0 %v7384
      %v7495 = vpop.f32.mrf.mxu0
      %v7496 = vadd.f32 %v7467, %v7495
      %v7497 = vpop.f32.mrf.mxu0
      %v7498 = vadd.f32 %v7469, %v7497
      %7499 = vmatmul.bf16.gmra.mxu0 %v7387
      %v7500 = vpop.f32.mrf.mxu0
      %v7501 = vadd.f32 %v7472, %v7500
      %v7502 = vpop.f32.mrf.mxu0
      %v7503 = vadd.f32 %v7474, %v7502
      %7504 = vdwg.mxu0
      %v7505 = vadd.f32 %v7316, %v7428
      %v7506 = vadd.f32 %v7317, %v7486
      %v7507 = vadd.f32 %v7318, %v7430
      %v7508 = vadd.f32 %v7319, %v7488
      %v7509 = vadd.f32 %v7320, %v7433
      %v7510 = vadd.f32 %v7321, %v7491
      %v7511 = vadd.f32 %v7322, %v7435
      %v7512 = vadd.f32 %v7323, %v7493
      %v7513 = vadd.f32 %v7324, %v7438
      %v7514 = vadd.f32 %v7325, %v7496
      %v7515 = vadd.f32 %v7326, %v7440
      %v7516 = vadd.f32 %v7327, %v7498
      %v7517 = vadd.f32 %v7328, %v7443
      %v7518 = vadd.f32 %v7329, %v7501
      %v7519 = vadd.f32 %v7330, %v7445
      %v7520 = vadd.f32 %v7331, %v7503
      %v7521 = vadd.f32 %v7505, %v3185
      %v7522 = vadd.f32 %v7506, %v3186
      %v7523 = vadd.f32 %v7507, %v3185
      %v7524 = vadd.f32 %v7508, %v3186
      %v7525 = vadd.f32 %v7509, %v3185
      %v7526 = vadd.f32 %v7510, %v3186
      %v7527 = vadd.f32 %v7511, %v3185
      %v7528 = vadd.f32 %v7512, %v3186
      %v7529 = vadd.f32 %v7513, %v3185
      %v7530 = vadd.f32 %v7514, %v3186
      %v7531 = vadd.f32 %v7515, %v3185
      %v7532 = vadd.f32 %v7516, %v3186
      %v7533 = vadd.f32 %v7517, %v3185
      %v7534 = vadd.f32 %v7518, %v3186
      %v7535 = vadd.f32 %v7519, %v3185
      %v7536 = vadd.f32 %v7520, %v3186
      %v7537 = vmax.f32 %v7521, 0.0
      %v7538 = vmax.f32 %v7522, 0.0
      %v7539 = vmax.f32 %v7523, 0.0
      %v7540 = vmax.f32 %v7524, 0.0
      %v7541 = vmax.f32 %v7525, 0.0
      %v7542 = vmax.f32 %v7526, 0.0
      %v7543 = vmax.f32 %v7527, 0.0
      %v7544 = vmax.f32 %v7528, 0.0
      %v7545 = vmax.f32 %v7529, 0.0
      %v7546 = vmax.f32 %v7530, 0.0
      %v7547 = vmax.f32 %v7531, 0.0
      %v7548 = vmax.f32 %v7532, 0.0
      %v7549 = vmax.f32 %v7533, 0.0
      %v7550 = vmax.f32 %v7534, 0.0
      %v7551 = vmax.f32 %v7535, 0.0
      %v7552 = vmax.f32 %v7536, 0.0
      %v7553 = vadd.f32 %v7537, %v7539
      %v7554 = vadd.f32 %v7553, %v7541
      %v7555 = vadd.f32 %v7554, %v7543
      %v7556 = vadd.f32 %v7555, %v7545
      %v7557 = vadd.f32 %v7556, %v7547
      %v7558 = vadd.f32 %v7557, %v7549
      %v7559 = vadd.f32 %v7558, %v7551
      %v7560 = vrot.slane %v7559, 4
      %v7561 = vadd.f32 %v7559, %v7560
      %v7562 = vrot.slane %v7561, 2
      %v7563 = vadd.f32 %v7561, %v7562
      %v7564 = vrot.slane %v7563, 1
      %v7565 = vadd.f32 %v7563, %v7564
      %v7566 = vadd.f32 %v7538, %v7540
      %v7567 = vadd.f32 %v7566, %v7542
      %v7568 = vadd.f32 %v7567, %v7544
      %v7569 = vadd.f32 %v7568, %v7546
      %v7570 = vadd.f32 %v7569, %v7548
      %v7571 = vadd.f32 %v7570, %v7550
      %v7572 = vadd.f32 %v7571, %v7552
      %v7573 = vrot.slane %v7572, 4
      %v7574 = vadd.f32 %v7572, %v7573
      %v7575 = vrot.slane %v7574, 2
      %v7576 = vadd.f32 %v7574, %v7575
      %v7577 = vrot.slane %v7576, 1
      %v7578 = vadd.f32 %v7576, %v7577
      %v7579 = vadd.f32 %v6135, %v7565
      %v7580 = vadd.f32 %v6136, %v7578
      %v7581 = vmul.f32 %v7579, 0.00390625
      %v7582 = vmul.f32 %v7580, 0.00390625
      %v7585 = vrot.slane %v7582, 7
      %vm7586 = vcmask 1040384
      %v7587 = vsel %vm7586, %v7581, %v7585
      %v7589 = vlaneseq
      %vm7590 = vcmp.ge.s32.totalorder %v7589, 0
      %vm7591 = vcmp.lt.s32.totalorder %v7589, 256
      %vm7592 = vmand %vm7590, %vm7591
      %7593 = vst.msk [vmem:[%s168] sm:$0x3] %vm7592, %v7587
      %p7594 = scmp.lt.s32.totalorder %s14, 1
      %s7595 = scalar_select %p7594, %s14, 1
      %s7596 = smul.addr %s7595, 2
      %s7597 = scalar_lea.vmem %s3, %s7596
      // Predicated region
      $region33: #{structural_forward.2} parent=31 // pred_check
        %p7598 = pneg %p100
      $region34: #{structural_forward.2} parent=31 // pred_check_branch
        %7600 = sbr.rel (%p7598) target = $region36
      $region35: #{structural_forward.2} parent=31 // pred_region
        _
      $region36: #{structural_forward.2} parent=31 // pred_fallthru
        _
    $region32: #{structural_forward.2} parent=5 // pred_fallthru
      _
    %p7601 = scmp.le.s32.totalorder 2, %s9
    // Predicated region
    $region37: #{structural_forward.2} parent=5 // pred_check
      %p7602 = pneg %p7601
    $region38: #{structural_forward.2} parent=5 // pred_check_branch
      %7604 = sbr.rel (%p7602) target = $region40
    $region39: #{structural_forward.2} parent=5 // pred_region
      %s7605 = ssub.s32 %s9, 2
      // Predicated region
      $region41: #{structural_forward.2} parent=39 // pred_check
        %p7606 = pneg %p106
      $region42: #{structural_forward.2} parent=39 // pred_check_branch
        %7608 = sbr.rel (%p7606) target = $region44
      $region43: #{structural_forward.2} parent=39 // pred_region
        %p7609 = scmp.lt.s32.totalorder %s15, 1
        %s7610 = scalar_select %p7609, %s15, 1
        %s7611 = smul.addr %s7610, 2
        %s7612 = scalar_lea.vmem %s3, %s7611
      $region44: #{structural_forward.2} parent=39 // pred_fallthru
        _
    $region40: #{structural_forward.2} parent=5 // pred_fallthru
      _
  $region6: #{structural_forward.2} parent=0 // loop_footer
    %s13 = sadd.s32 1, %s9
  $region7: #{structural_forward.2} parent=0 // loop_footer_branch
    %8 = sbr.rel target = $region3
  $region8: #{structural_forward.2} parent=0 // loop_exit
    _

</llo_original>
